<compile_context>
chip_gen: v6e
topology: v6e:2x2x1
jax: 0.10.0
libtpu: 0.0.40
codegen_flags: <defaults>
</compile_context>

<pallas_src>
import math

import jax
import jax.numpy as jnp
from jax import lax
from jax.experimental import pallas as pl
from jax.experimental.pallas import tpu as pltpu


# ---------------------------------------------------------------------------
# Small helpers
# ---------------------------------------------------------------------------
def _pick_tile(dim, target, align):
    """Largest multiple of `align` that divides `dim` and is <= max(target, align).

    Falls back to the full dimension (always a legal Pallas block size), so no
    partial/padded blocks ever occur (padding garbage would corrupt the
    min/max group reductions and the K accumulation).
    """
    target = max(target, align)
    if dim <= target:
        return dim
    t = (target // align) * align
    while t >= align:
        if dim % t == 0:
            return t
        t -= align
    return dim


def _tpu_vmem_capacity_bytes():
    """Physical per-core VMEM; conservative (v7x) fallback if the query fails."""
    try:
        return int(pltpu.get_tpu_info().vmem_capacity_bytes)
    except Exception:  # pragma: no cover - query unavailable off-device
        return 64 * 1024 * 1024


def _vmem_limit(bytes_needed, capacity_bytes):
    # Scoped-VMEM budget: headroom over the estimate, floored at the usual
    # default, capped at ~0.75x physical (48 MiB on v7x, 96 MiB on v5e/v6e).
    cap = min(int(capacity_bytes * 0.75), 100 * 1024 * 1024)
    return int(min(max(2 * bytes_needed, 32 * 1024 * 1024), cap))


# ---------------------------------------------------------------------------
# Fake-quantization kernel (lane-dense blocks, natural (N, K) layout, bf16 out)
# ---------------------------------------------------------------------------
def _make_quant_kernel(num_bits, schema, group_size, groups_per_block,
                       grad_mode, const_grad):
    if schema == "sym":
        if num_bits == 1:
            maxq = float(2 ** (num_bits - 1))
            minq = float(2 ** (num_bits - 1) - 1)
        else:
            maxq = float(2 ** (num_bits - 1) - 1)
            minq = float(-(2 ** (num_bits - 1)))
        half_span_inv = 2.0 / (maxq - minq)   # constant folded at trace time
    else:
        maxq = float(2 ** num_bits - 1)
        inv_maxq = 1.0 / maxq                 # constant folded at trace time

    # Skip the "+ grad" VPU op entirely for the common scalar grad==0 path.
    add_grad = not (grad_mode == "const" and const_grad == 0.0)

    def kernel(*refs):
        if grad_mode == "tensor":
            w_ref, g_ref, out_ref = refs
        else:
            w_ref, out_ref = refs
        rows, cols = w_ref.shape

        # All quant arithmetic in float32 regardless of weight dtype.
        # TODO(synk): for group_size < 128 the (rows, gpb, group) reshape puts
        # a sub-128 dim on lanes (relayout copies); a roll-based segment
        # reduction would stay lane-dense but is not implemented here.
        w = w_ref[...].astype(jnp.float32).reshape(rows, groups_per_block,
                                                   group_size)
        if grad_mode == "tensor":
            grad = g_ref[...].astype(jnp.float32).reshape(
                rows, groups_per_block, group_size)
        else:
            grad = const_grad

        if schema == "sym":
            wmax = jnp.max(jnp.abs(w), axis=-1, keepdims=True)
            wmax = jnp.where(wmax == 0.0, 1.0, wmax)
            scale = wmax * half_span_inv
            # Per-group exact reciprocal (NOT approx: round() boundary safety);
            # the per-element op below becomes a cheap vmul.
            inv_scale = 1.0 / scale
            t = w * inv_scale
            if add_grad:
                t = t + grad
            q = jnp.clip(jnp.round(t), minq, maxq)
            dq = scale * q
        else:
            wmin = jnp.minimum(jnp.min(w, axis=-1, keepdims=True), 0.0)
            wmax = jnp.maximum(jnp.max(w, axis=-1, keepdims=True), 0.0)
            both_zero = jnp.logical_and(wmin == 0.0, wmax == 0.0)
            wmin = jnp.where(both_zero, -1.0, wmin)
            wmax = jnp.where(both_zero, 1.0, wmax)
            scale = (wmax - wmin) * inv_maxq
            inv_scale = 1.0 / scale           # per-group exact reciprocal
            zp = jnp.round(-wmin * inv_scale)
            t = w * inv_scale
            if add_grad:
                t = t + grad
            q = jnp.clip(jnp.round(t) + zp, 0.0, maxq)
            dq = scale * (q - zp)

        # Natural (N, K) layout out; matmul consumes it K-minor via dot_general,
        # so no transpose is ever materialized here.
        out_ref[...] = dq.reshape(rows, cols).astype(out_ref.dtype)

    return kernel


def _quant_2d(w2d, grad, num_bits, group_size_eff, schema,
              out_dtype=jnp.bfloat16):
    """Fake-quantize w2d (rows=N slice, cols=K slice; contiguous groups of
    `group_size_eff` along cols). Returns (rows, cols) in `out_dtype`."""
    rows, cols = w2d.shape
    assert cols % group_size_eff == 0

    if isinstance(grad, (int, float)):
        grad_mode, const_grad, grad_arr = "const", float(grad), None
    else:
        g = jnp.asarray(grad)
        if g.ndim == 0:
            # Rare path: traced scalar grad. Broadcasting is acceptable here.
            g = jnp.broadcast_to(g, w2d.shape)
        grad_mode, const_grad, grad_arr = "tensor", 0.0, g.astype(jnp.float32)

    # K tiles must be lane-dense (multiple of 128) AND group-aligned so no
    # quant group straddles a block; fall back to the full dim otherwise.
    # Row tiles kept small (<=128) to bound vreg live ranges / spills, and
    # multiples of 16 so the bf16 output block is sublane-legal.
    align_k = (group_size_eff * 128) // math.gcd(group_size_eff, 128)
    tkq = _pick_tile(cols, 1024, align_k)
    tnq = _pick_tile(rows, 128, 16)
    grid = (rows // tnq, cols // tkq)
    gpb = tkq // group_size_eff

    kernel = _make_quant_kernel(num_bits, schema, group_size_eff, gpb,
                                grad_mode, const_grad)

    in_specs = [pl.BlockSpec((tnq, tkq), lambda i, j: (i, j))]
    args = [w2d]
    if grad_mode == "tensor":
        in_specs.append(pl.BlockSpec((tnq, tkq), lambda i, j: (i, j)))
        args.append(grad_arr)

    w_item = jnp.dtype(w2d.dtype).itemsize
    o_item = jnp.dtype(out_dtype).itemsize
    n_in = 2 if grad_mode == "tensor" else 1
    needed = (2 * n_in * tnq * tkq * w_item    # double-buffered inputs
              + 2 * tnq * tkq * o_item         # double-buffered output
              + 4 * tnq * tkq * 4)             # f32 temporaries

    return pl.pallas_call(
        kernel,
        out_shape=jax.ShapeDtypeStruct((rows, cols), out_dtype),
        grid=grid,
        in_specs=in_specs,
        out_specs=pl.BlockSpec((tnq, tkq), lambda i, j: (i, j)),
        compiler_params=pltpu.CompilerParams(
            dimension_semantics=("parallel", "parallel"),
            vmem_limit_bytes=_vmem_limit(needed, _tpu_vmem_capacity_bytes())),
    )(*args)


def quant_weight_pallas(weight, num_bits=4, group_size=-1, schema="asym",
                        grad=0, out_dtype=jnp.bfloat16):
    """quant_weight() of the PyTorch reference, emitted in `out_dtype`,
    natural (out_features, in_features) layout.

    For inference with static weight/grad, cache this result and skip
    re-quantizing on every forward call.
    """
    out_f, in_f = weight.shape

    if group_size == -1 or in_f < group_size:
        return _quant_2d(weight, grad, num_bits, in_f, schema, out_dtype)
    if in_f % group_size == 0:
        return _quant_2d(weight, grad, num_bits, group_size, schema, out_dtype)

    # Ragged tail: divisible part grouped, tail quantized per-row as one group.
    split = in_f // group_size * group_size
    if hasattr(grad, "ndim") and getattr(grad, "ndim", 0) >= 2:
        g1, g2 = grad[:, :split], grad[:, split:]
    else:
        # Matches the PyTorch reference: non-tensor grad is dropped to 0 here.
        g1 = g2 = 0
    q1 = _quant_2d(weight[:, :split], g1, num_bits, group_size, schema,
                   out_dtype)
    q2 = _quant_2d(weight[:, split:], g2, num_bits, in_f - split, schema,
                   out_dtype)
    return jnp.concatenate([q1, q2], axis=1)


# ---------------------------------------------------------------------------
# Tiled matmul + bias kernel: (M, K) x (N, K)^T + (1, N), bf16 MXU, fp32 acc
# ---------------------------------------------------------------------------
def _matmul_kernel(x_ref, w_ref, b_ref, o_ref, acc_ref):
    @pl.when(pl.program_id(2) == 0)
    def _():
        acc_ref[...] = jnp.zeros_like(acc_ref)

    # Cast x tile to bf16 so the MXU runs at bf16 peak; weight is already bf16.
    # K-minor RHS (flash-attention q@k.T orientation) -> no transpose needed.
    acc_ref[...] += lax.dot_general(
        x_ref[...].astype(jnp.bfloat16), w_ref[...],
        dimension_numbers=(((1,), (1,)), ((), ())),
        preferred_element_type=jnp.float32)

    @pl.when(pl.program_id(2) == pl.num_programs(2) - 1)
    def _():
        o_ref[...] = (acc_ref[...] + b_ref[...]).astype(o_ref.dtype)


def _linear_wq(x2d, wq, bias):
    m, k = x2d.shape
    n, k2 = wq.shape
    assert k == k2
    if bias is None:
        b2d = jnp.zeros((1, n), dtype=jnp.float32)
    else:
        b2d = bias.reshape(1, n).astype(jnp.float32)

    vmem_cap = _tpu_vmem_capacity_bytes()
    if vmem_cap >= 100 * 1024 * 1024:
        tm_t, tn_t, tk_t = 512, 1024, 2048   # v5e/v6e: 128 MiB VMEM, push tiles
    else:
        tm_t, tn_t, tk_t = 512, 512, 1024    # v7x: 64 MiB VMEM, stay modest

    tm = _pick_tile(m, tm_t, 8)      # x / output are fp32 -> sublane align 8
    tn = _pick_tile(n, tn_t, 128)    # lane-dense; multiple of 128 >= bf16's 16
    tk = _pick_tile(k, tk_t, 128)

    # v7x megacore: ensure >=2 steps land on a parallel axis when M fits one
    # tile, by splitting N (harmless on single-TC v5e/v6e).
    if (m // tm) * (n // tn) < 2 and n // tn == 1:
        cand = _pick_tile(n, max(n // 2, 128), 128)
        if n // cand >= 2:
            tn = cand

    grid = (m // tm, n // tn, k // tk)

    x_item = jnp.dtype(x2d.dtype).itemsize
    w_item = jnp.dtype(wq.dtype).itemsize
    o_item = jnp.dtype(x2d.dtype).itemsize
    needed = (2 * (tm * tk * x_item + tn * tk * w_item + tn * 4)  # dbl-buf in
              + 2 * tm * tn * o_item                              # dbl-buf out
              + tm * tn * 4)                                      # f32 acc

    return pl.pallas_call(
        _matmul_kernel,
        out_shape=jax.ShapeDtypeStruct((m, n), x2d.dtype),
        grid=grid,
        in_specs=[
            pl.BlockSpec((tm, tk), lambda i, j, kk: (i, kk)),
            pl.BlockSpec((tn, tk), lambda i, j, kk: (j, kk)),
            pl.BlockSpec((1, tn), lambda i, j, kk: (0, j)),
        ],
        out_specs=pl.BlockSpec((tm, tn), lambda i, j, kk: (i, j)),
        scratch_shapes=[pltpu.VMEM((tm, tn), jnp.float32)],
        compiler_params=pltpu.CompilerParams(
            dimension_semantics=("parallel", "parallel", "arbitrary"),
            vmem_limit_bytes=_vmem_limit(needed, vmem_cap)),
    )(x2d, wq, b2d)


# ---------------------------------------------------------------------------
# WrapperLinear forward.
# ---------------------------------------------------------------------------
def wrapper_linear_forward(x, weight, bias=None, *, num_bits=4, group_size=-1,
                           schema="asym", grad=0):
    out_f, in_f = weight.shape
    # NOTE: for static weight/grad (inference) hoist/cache this quant pass.
    wq = quant_weight_pallas(weight, num_bits, group_size, schema, grad)
    lead = x.shape[:-1]
    x2d = x.reshape(-1, in_f)
    y2d = _linear_wq(x2d, wq, bias)
    return y2d.reshape(*lead, out_f)


# ---------------------------------------------------------------------------
# Pure-JAX reference for correctness checks.
# Mirrors the PyTorch math; the only deliberate deviations (shared with the
# kernel) are (a) per-group reciprocal-multiply instead of per-element divide
# (identical up to 1 ulp of the scale reciprocal) and (b) bf16 matmul operands
# with fp32 accumulation.
# ---------------------------------------------------------------------------
def _ref_quant_asym(w, num_bits, grad):
    maxq = float(2 ** num_bits - 1)
    inv_maxq = 1.0 / maxq
    wmin = jnp.minimum(jnp.min(w, axis=1), 0.0)
    wmax = jnp.maximum(jnp.max(w, axis=1), 0.0)
    both = (wmin == 0.0) & (wmax == 0.0)
    wmin = jnp.where(both, -1.0, wmin)
    wmax = jnp.where(both, 1.0, wmax)
    scale = ((wmax - wmin) * inv_maxq)[:, None]
    inv_scale = 1.0 / scale
    zp = jnp.round(-wmin[:, None] * inv_scale)
    q = jnp.clip(jnp.round(w * inv_scale + grad) + zp, 0.0, maxq)
    return scale * (q - zp)


def _ref_quant_sym(w, num_bits, grad):
    if num_bits == 1:
        maxq, minq = float(2 ** (num_bits - 1)), float(2 ** (num_bits - 1) - 1)
    else:
        maxq, minq = float(2 ** (num_bits - 1) - 1), float(-(2 ** (num_bits - 1)))
    half_span_inv = 2.0 / (maxq - minq)
    wmax = jnp.max(jnp.abs(w), axis=1)
    wmax = jnp.where(wmax == 0.0, 1.0, wmax)
    scale = (wmax * half_span_inv)[:, None]
    inv_scale = 1.0 / scale
    q = jnp.clip(jnp.round(w * inv_scale + grad), minq, maxq)
    return scale * q


def _ref_quant_weight(weight, num_bits, group_size, schema, grad):
    actor = _ref_quant_sym if schema == "sym" else _ref_quant_asym
    out_f, in_f = weight.shape
    if group_size == -1 or in_f < group_size:
        return actor(weight, num_bits, grad)
    if in_f % group_size == 0:
        g = (grad.reshape(-1, group_size)
             if hasattr(grad, "ndim") and getattr(grad, "ndim", 0) >= 2 else grad)
        return actor(weight.reshape(-1, group_size), num_bits, g
                     ).reshape(out_f, in_f)
    split = in_f // group_size * group_size
    if hasattr(grad, "ndim") and getattr(grad, "ndim", 0) >= 2:
        g1, g2 = grad[:, :split].reshape(-1, group_size), grad[:, split:]
    else:
        g1 = g2 = 0
    q1 = actor(weight[:, :split].reshape(-1, group_size), num_bits, g1
               ).reshape(out_f, split)
    q2 = actor(weight[:, split:], num_bits, g2)
    return jnp.concatenate([q1, q2], axis=1)


def _ref_forward(x, weight, bias, num_bits, group_size, schema, grad):
    wq = _ref_quant_weight(weight, num_bits, group_size, schema,
                           grad).astype(jnp.bfloat16)
    y = jnp.einsum("...k,nk->...n", x.astype(jnp.bfloat16), wq,
                   preferred_element_type=jnp.float32).astype(x.dtype)
    return y if bias is None else y + bias


if __name__ == "__main__":
    key = jax.random.PRNGKey(0)
    kx, kw, kb, kg = jax.random.split(key, 4)

    # Small but tiling-exercising shapes: M = batch*seq = 16, K = 1024, N = 256.
    batch, seq, in_features, out_features = 2, 8, 1024, 256
    x = jax.random.normal(kx, (batch, seq, in_features), dtype=jnp.float32)
    weight = jax.random.normal(kw, (out_features, in_features),
                               dtype=jnp.float32) * 0.1
    bias = jax.random.normal(kb, (out_features,), dtype=jnp.float32) * 0.01

    def check(name, x_, w_, b_, **kw_):
        y = jax.block_until_ready(wrapper_linear_forward(x_, w_, b_, **kw_))
        y_ref = _ref_forward(x_, w_, b_, kw_["num_bits"], kw_["group_size"],
                             kw_["schema"], kw_["grad"])
        assert y.shape == y_ref.shape, name
        err = float(jnp.max(jnp.abs(y - y_ref)))
        assert err < 5e-3, (name, err)

    # 1) grouped asym, scalar grad (the common signround configuration)
    check("asym_g128", x, weight, bias,
          num_bits=4, group_size=128, schema="asym", grad=0)
    # 2) per-row sym quantization (group_size == -1)
    check("sym_row", x, weight, bias,
          num_bits=4, group_size=-1, schema="sym", grad=0)
    # 3) ragged tail + full-tensor grad (training path with learned sign grad)
    w_r = weight[:64, :80]
    x_r = x[..., :80]
    b_r = bias[:64]
    g_r = (jax.random.uniform(kg, w_r.shape, dtype=jnp.float32) - 0.5) * 0.6
    check("asym_ragged_grad", x_r, w_r, b_r,
          num_bits=4, group_size=32, schema="asym", grad=g_r)

    print("KERNEL_OK")
</pallas_src>

<mosaic_0001>
module attributes {stable_mosaic.version = 11 : i64} {
  func.func @kernel(%arg0: i32, %arg1: i32, %arg2: memref<128x1024xf32, #tpu.memory_space<vmem>>, %arg3: memref<128x1024xbf16, #tpu.memory_space<vmem>>) attributes {dimension_semantics = [#tpu.dimension_semantics<parallel>, #tpu.dimension_semantics<parallel>], iteration_bounds = array<i64: 2, 1>, scalar_prefetch = 0 : i64, scratch_operands = 0 : i64, tpu.core_type = #tpu.core_type<tc>, window_params = [{transform_indices = @transform_0, window_bounds = array<i64: 128, 1024>}, {transform_indices = @transform_1, window_bounds = array<i64: 128, 1024>}]} {
    %c0 = arith.constant 0 : index
    %c0_0 = arith.constant 0 : index
    %0 = vector.load %arg2[%c0, %c0_0] : memref<128x1024xf32, #tpu.memory_space<vmem>>, vector<128x1024xf32>
    %1 = vector.shape_cast %0 : vector<128x1024xf32> to vector<128x8x128xf32>
    %cst = arith.constant dense<0x7F800000> : vector<128x8xf32>
    %2 = vector.multi_reduction <minimumf>, %1, %cst [2] : vector<128x8x128xf32> to vector<128x8xf32>
    %3 = vector.shape_cast %2 : vector<128x8xf32> to vector<128x8x1xf32>
    %cst_1 = arith.constant 0.000000e+00 : f32
    %4 = vector.broadcast %cst_1 : f32 to vector<128x8x1xf32>
    %5 = arith.minimumf %3, %4 : vector<128x8x1xf32>
    %cst_2 = arith.constant dense<0xFF800000> : vector<128x8xf32>
    %6 = vector.multi_reduction <maximumf>, %1, %cst_2 [2] : vector<128x8x128xf32> to vector<128x8xf32>
    %7 = vector.shape_cast %6 : vector<128x8xf32> to vector<128x8x1xf32>
    %cst_3 = arith.constant 0.000000e+00 : f32
    %8 = vector.broadcast %cst_3 : f32 to vector<128x8x1xf32>
    %9 = arith.maximumf %7, %8 : vector<128x8x1xf32>
    %cst_4 = arith.constant 0.000000e+00 : f32
    %10 = vector.broadcast %cst_4 : f32 to vector<128x8x1xf32>
    %11 = arith.cmpf oeq, %5, %10 : vector<128x8x1xf32>
    %cst_5 = arith.constant 0.000000e+00 : f32
    %12 = vector.broadcast %cst_5 : f32 to vector<128x8x1xf32>
    %13 = arith.cmpf oeq, %9, %12 : vector<128x8x1xf32>
    %14 = arith.andi %11, %13 : vector<128x8x1xi1>
    %cst_6 = arith.constant -1.000000e+00 : f32
    %15 = vector.broadcast %cst_6 : f32 to vector<128x8x1xf32>
    %16 = arith.select %14, %15, %5 : vector<128x8x1xi1>, vector<128x8x1xf32>
    %cst_7 = arith.constant 1.000000e+00 : f32
    %17 = vector.broadcast %cst_7 : f32 to vector<128x8x1xf32>
    %18 = arith.select %14, %17, %9 : vector<128x8x1xi1>, vector<128x8x1xf32>
    %19 = arith.subf %18, %16 : vector<128x8x1xf32>
    %cst_8 = arith.constant 0.0666666701 : f32
    %20 = vector.broadcast %cst_8 : f32 to vector<128x8x1xf32>
    %21 = arith.mulf %19, %20 : vector<128x8x1xf32>
    %cst_9 = arith.constant 1.000000e+00 : f32
    %22 = vector.broadcast %cst_9 : f32 to vector<128x8x1xf32>
    %23 = arith.divf %22, %21 : vector<128x8x1xf32>
    %cst_10 = arith.constant 0.000000e+00 : f32
    %24 = vector.broadcast %cst_10 : f32 to vector<128x8x1xf32>
    %25 = arith.subf %24, %16 : vector<128x8x1xf32>
    %26 = arith.mulf %25, %23 : vector<128x8x1xf32>
    %27 = math.roundeven %26 : vector<128x8x1xf32>
    %28 = vector.broadcast %23 : vector<128x8x1xf32> to vector<128x8x128xf32>
    %29 = arith.mulf %1, %28 : vector<128x8x128xf32>
    %30 = math.roundeven %29 : vector<128x8x128xf32>
    %31 = vector.broadcast %27 : vector<128x8x1xf32> to vector<128x8x128xf32>
    %32 = arith.addf %30, %31 : vector<128x8x128xf32>
    %cst_11 = arith.constant 0.000000e+00 : f32
    %cst_12 = arith.constant 1.500000e+01 : f32
    %33 = vector.broadcast %cst_11 : f32 to vector<128x8x128xf32>
    %34 = arith.maximumf %33, %32 : vector<128x8x128xf32>
    %35 = vector.broadcast %cst_12 : f32 to vector<128x8x128xf32>
    %36 = arith.minimumf %35, %34 : vector<128x8x128xf32>
    %37 = vector.broadcast %27 : vector<128x8x1xf32> to vector<128x8x128xf32>
    %38 = arith.subf %36, %37 : vector<128x8x128xf32>
    %39 = vector.broadcast %21 : vector<128x8x1xf32> to vector<128x8x128xf32>
    %40 = arith.mulf %39, %38 : vector<128x8x128xf32>
    %41 = vector.shape_cast %40 : vector<128x8x128xf32> to vector<128x1024xf32>
    %42 = arith.truncf %41 : vector<128x1024xf32> to vector<128x1024xbf16>
    %c0_13 = arith.constant 0 : index
    %c0_14 = arith.constant 0 : index
    %43 = vector.load %arg3[%c0_13, %c0_14] : memref<128x1024xbf16, #tpu.memory_space<vmem>>, vector<128x1024xbf16>
    tpu.vector_store %arg3[%c0_13, %c0_14], %42 {strides = array<i32>} : memref<128x1024xbf16, #tpu.memory_space<vmem>>, vector<128x1024xbf16>,
    return
  }
  func.func @transform_0(%arg0: i32, %arg1: i32) -> (i32, i32) {
    %c0_i32 = arith.constant 0 : i32
    return %arg0, %arg1 : i32, i32
  }
  func.func @transform_1(%arg0: i32, %arg1: i32) -> (i32, i32) {
    %c0_i32 = arith.constant 0 : i32
    return %arg0, %arg1 : i32, i32
  }
}

</mosaic_0001>

<llo_original>
// kernel: tpu_custom_call.1
$region0: #{tpu_custom_call.1}
  #allocation0 [shape = 'u32[]', space=smem, size = 0x4, offset = 0x4, fixed_abs, tag = 'smem constant byte address 0x4 - core index']
  #allocation1 [shape = 'u32[144,128]{1,0:T(1,128)}', space=vmem, size = 0x12000, scoped, tag = 'internal scratch']
  %s0 = inlined_call_operand.hbm [shape: f32[256,1024], index: 0, kind: input, shape index: {}]
  %s1 = inlined_call_operand.hbm [shape: bf16[256,1024], index: 1, kind: output, shape index: {}]
  %s2 = sld [smem:[#allocation0]]
  $region41: #{tpu_custom_call.1} parent=0
    _
  %s4 = ssub.s32 1, %s2
  %s5 = scalar_select 0, %s4, %s2
  $region1: #{tpu_custom_call.1} parent=0
    #allocation2 [shape = 'u8[1048576]{0}', space=vmem, size = 0x100000, scoped, tag = 'input window, operand 0']
    #allocation3 [shape = 's32[2]{0}', space=sflag, size = 0x8, scoped, tag = 'scoped memory for tpu_custom_call.1']
    #allocation4 [shape = 's32[2]{0}', space=sflag, size = 0x8, scoped, tag = 'scoped memory for tpu_custom_call.1']
    #allocation5 [shape = 'u8[524288]{0}', space=vmem, size = 0x80000, scoped, tag = 'output window, operand 0']
    %6 = vsyncpa [#allocation3], 0
    %s7 = scalar_lea.sflag [#allocation3], 1
    %8 = vsyncpa %s7, 0
    %9 = vsyncpa [#allocation4], 0
    %s10 = scalar_lea.sflag [#allocation4], 1
    %11 = vsyncpa %s10, 0
    loop: start=0, step=1, limit=4
    $region2: #{tpu_custom_call.1} parent=1 // loop_pre_header
      _
    $region3: #{tpu_custom_call.1} parent=1 // loop_header
      %s13 = sphi 0, %s17
      %p14 = scmp.ge.s32.totalorder %s13, 4
      %s20 = sphi 0, %s32
      %s21 = sphi 0, %s28
      %s22 = sphi 0, %s20
      %s23 = sphi 0, %s21
      %s24 = sphi 0, %s22
      %s25 = sphi 0, %s23
      %s37 = sphi 0, %s39
      %s40 = sphi 0, %s37
      %s41 = sphi 0, %s40
      %s57 = sphi 0, %s41
      %s65 = sphi 0, %s67
      %s68 = sphi 0, %s65
      %s69 = sphi 0, %s68
      %s85 = sphi 0, %s69
    $region4: #{tpu_custom_call.1} parent=1 // loop_header_branch
      %16 = sbr.rel (%p14) target = $region8
    $region5: #{tpu_custom_call.1} parent=1 // loop_body
      %s18 = ssub.s32 %s13, 1
      %s19 = ssub.s32 %s13, 2
      %s26 = sadd.s32 1, %s21
      %p27 = scmp.ge.s32.totalorder %s26, 1
      %s28 = scalar_select %p27, 0, %s26
      %s29 = sadd.s32 1, %s20
      %s30 = scalar_select %p27, %s29, %s20
      %p31 = scmp.ge.s32.totalorder %s30, 2
      %s32 = scalar_select %p31, 0, %s30
      %s33 = ssub.s32 %s20, %s32
      %s34 = ssub.s32 %s21, %s28
      %s35 = sor.u32 %s33, %s34
      %p36 = scmp.eq.s32.totalorder %s35, 0
      %s38 = sadd.s32 %s37, 1
      %s39 = scalar_select %p36, %s37, %s38
      %p42 = pneg %p36
      %p43 = scmp.eq.s32.totalorder %s13, 1
      %p44 = por %p42, %p43
      %p45 = scmp.ne.s32.totalorder %s37, %s40
      %p46 = scmp.eq.s32.totalorder %s13, 0
      %p47 = por %p45, %p46
      %p48 = scmp.ne.s32.totalorder %s37, %s40
      %p49 = scmp.eq.s32.totalorder %s18, 1
      %p50 = por %p48, %p49
      %p51 = scmp.ne.s32.totalorder %s40, %s41
      %p52 = scmp.eq.s32.totalorder %s18, 0
      %p53 = por %p51, %p52
      %p54 = scmp.ne.s32.totalorder %s40, %s41
      %p55 = scmp.eq.s32.totalorder %s19, 1
      %p56 = por %p54, %p55
      %p58 = scmp.ne.s32.totalorder %s41, %s57
      %p59 = scmp.eq.s32.totalorder %s19, 0
      %p60 = por %p58, %p59
      %s61 = ssub.s32 %s20, %s32
      %s62 = ssub.s32 %s21, %s28
      %s63 = sor.u32 %s61, %s62
      %p64 = scmp.eq.s32.totalorder %s63, 0
      %s66 = sadd.s32 %s65, 1
      %s67 = scalar_select %p64, %s65, %s66
      %p70 = pneg %p64
      %p71 = scmp.eq.s32.totalorder %s13, 1
      %p72 = por %p70, %p71
      %p73 = scmp.ne.s32.totalorder %s65, %s68
      %p74 = scmp.eq.s32.totalorder %s13, 0
      %p75 = por %p73, %p74
      %p76 = scmp.ne.s32.totalorder %s65, %s68
      %p77 = scmp.eq.s32.totalorder %s18, 1
      %p78 = por %p76, %p77
      %p79 = scmp.ne.s32.totalorder %s68, %s69
      %p80 = scmp.eq.s32.totalorder %s18, 0
      %p81 = por %p79, %p80
      %p82 = scmp.ne.s32.totalorder %s68, %s69
      %p83 = scmp.eq.s32.totalorder %s19, 1
      %p84 = por %p82, %p83
      %p86 = scmp.ne.s32.totalorder %s69, %s85
      %p87 = scmp.eq.s32.totalorder %s19, 0
      %p88 = por %p86, %p87
      %p89 = scmp.le.s32.totalorder 1, %s13
      %p90 = scmp.lt.s32.totalorder %s13, 3
      %p91 = pnand %p89, %p90
      %p92 = pneg %p91
      // Predicated region
      $region9: #{tpu_custom_call.1} parent=5 // pred_check
        _
      $region10: #{tpu_custom_call.1} parent=5 // pred_check_branch
        %94 = sbr.rel (%p91) target = $region12
      $region11: #{tpu_custom_call.1} parent=5 // pred_region
        %s95 = ssub.s32 %s13, 1
      $region12: #{tpu_custom_call.1} parent=5 // pred_fallthru
        _
      %p96 = scmp.lt.s32.totalorder %s13, 2
      // Predicated region
      $region13: #{tpu_custom_call.1} parent=5 // pred_check
        %p97 = pneg %p96
      $region14: #{tpu_custom_call.1} parent=5 // pred_check_branch
        %99 = sbr.rel (%p97) target = $region16
      $region15: #{tpu_custom_call.1} parent=5 // pred_region
        // Predicated region
        $region17: #{tpu_custom_call.1} parent=15 // pred_check
          %p100 = pneg %p47
        $region18: #{tpu_custom_call.1} parent=15 // pred_check_branch
          %102 = sbr.rel (%p100) target = $region20
        $region19: #{tpu_custom_call.1} parent=15 // pred_region
          %s103 = sand.u32 %s37, 1
          %s104 = scalar_lea.sflag [#allocation3], %s103
          %s105 = sand.u32 %s37, 1
          %s106 = smul.addr %s105, 1024
          %s107 = scalar_lea.vmem [#allocation2], %s106
          %s108 = smul.u32 16, %s20
          %s109 = smul.u32 8, %s21
          %s111 = ssub.s32 16384, 16384
          %112 = vsyncadd %s104, %s111
          %s113 = smul.addr %s108, 8
          %s114 = sadd.s32 %s109, %s113
          %s115 = smul.addr %s114, 128
          %s116 = scalar_lea.hbm %s0, %s115
          %s117 = sshll.u32 %s107, 4
          %s118 = int_to_ptr.vmem [resolvable:$true] %s117
          %123 = dma.hbm_to_vmem [thread:$0]  %s116, 16384, %s118, %s104, 1024, 1024, 64
        $region20: #{tpu_custom_call.1} parent=15 // pred_fallthru
          _
      $region16: #{tpu_custom_call.1} parent=5 // pred_fallthru
        _
      %p124 = scmp.le.s32.totalorder 1, %s13
      %p125 = scmp.lt.s32.totalorder %s13, 3
      %p126 = pnand %p124, %p125
      %p127 = pneg %p126
      // Predicated region
      $region21: #{tpu_custom_call.1} parent=5 // pred_check
        _
      $region22: #{tpu_custom_call.1} parent=5 // pred_check_branch
        %129 = sbr.rel (%p126) target = $region24
      $region23: #{tpu_custom_call.1} parent=5 // pred_region
        %s130 = ssub.s32 %s13, 1
        %s131 = sand.u32 %s40, 1
        %s132 = scalar_lea.sflag [#allocation3], %s131
        %s133 = sand.u32 %s40, 1
        %s134 = smul.addr %s133, 1024
        %s135 = scalar_lea.vmem [#allocation2], %s134
        // Predicated region
        $region25: #{tpu_custom_call.1} parent=23 // pred_check
          %p136 = pneg %p53
        $region26: #{tpu_custom_call.1} parent=23 // pred_check_branch
          %138 = sbr.rel (%p136) target = $region28
        $region27: #{tpu_custom_call.1} parent=23 // pred_region
          %139 = dma.done %s132, 16384
        $region28: #{tpu_custom_call.1} parent=23 // pred_fallthru
          _
        %s140 = sand.u32 %s40, 1
        %s141 = scalar_lea.sflag [#allocation3], %s140
        %s142 = sand.u32 %s40, 1
        %s143 = smul.addr %s142, 1024
        %s144 = scalar_lea.vmem [#allocation2], %s143
        %p145 = pneg %p53
        %p146 = pneg %p50
        %p147 = pneg %p81
        %p148 = pneg %p78
        %s149 = sand.u32 %s68, 1
        %s150 = scalar_lea.sflag [#allocation4], %s149
        %s151 = sand.u32 %s68, 1
        %s152 = smul.addr %s151, 512
        %s153 = scalar_lea.vmem [#allocation5], %s152
        %s154 = smul.u32 16, %s22
        %s155 = smul.u32 8, %s23
        %s156 = smul.u32 16, %s22
        %s157 = smul.u32 8, %s23
        %v158 = vld [vmem:[%s135] sm:$0xff]
        %v159 = vld [vmem:[%s135 + $0x8] sm:$0xff]
        %v160 = vld [vmem:[%s135 + $0x10] sm:$0xff]
        %v161 = vld [vmem:[%s135 + $0x18] sm:$0xff]
        %v162 = vld [vmem:[%s135 + $0x20] sm:$0xff]
        %v163 = vld [vmem:[%s135 + $0x28] sm:$0xff]
        %v164 = vld [vmem:[%s135 + $0x30] sm:$0xff]
        %v165 = vld [vmem:[%s135 + $0x38] sm:$0xff]
        %v166 = vld [vmem:[%s135 + $0x40] sm:$0xff]
        %v167 = vld [vmem:[%s135 + $0x48] sm:$0xff]
        %v168 = vld [vmem:[%s135 + $0x50] sm:$0xff]
        %v169 = vld [vmem:[%s135 + $0x58] sm:$0xff]
        %v170 = vld [vmem:[%s135 + $0x60] sm:$0xff]
        %v171 = vld [vmem:[%s135 + $0x68] sm:$0xff]
        %v172 = vld [vmem:[%s135 + $0x70] sm:$0xff]
        %v173 = vld [vmem:[%s135 + $0x78] sm:$0xff]
        %v174 = vld [vmem:[%s135 + $0x80] sm:$0xff]
        %v175 = vld [vmem:[%s135 + $0x88] sm:$0xff]
        %v176 = vld [vmem:[%s135 + $0x90] sm:$0xff]
        %v177 = vld [vmem:[%s135 + $0x98] sm:$0xff]
        %v178 = vld [vmem:[%s135 + $0xa0] sm:$0xff]
        %v179 = vld [vmem:[%s135 + $0xa8] sm:$0xff]
        %v180 = vld [vmem:[%s135 + $0xb0] sm:$0xff]
        %v181 = vld [vmem:[%s135 + $0xb8] sm:$0xff]
        %v182 = vld [vmem:[%s135 + $0xc0] sm:$0xff]
        %v183 = vld [vmem:[%s135 + $0xc8] sm:$0xff]
        %v184 = vld [vmem:[%s135 + $0xd0] sm:$0xff]
        %v185 = vld [vmem:[%s135 + $0xd8] sm:$0xff]
        %v186 = vld [vmem:[%s135 + $0xe0] sm:$0xff]
        %v187 = vld [vmem:[%s135 + $0xe8] sm:$0xff]
        %v188 = vld [vmem:[%s135 + $0xf0] sm:$0xff]
        %v189 = vld [vmem:[%s135 + $0xf8] sm:$0xff]
        %v190 = vld [vmem:[%s135 + $0x100] sm:$0xff]
        %v191 = vld [vmem:[%s135 + $0x108] sm:$0xff]
        %v192 = vld [vmem:[%s135 + $0x110] sm:$0xff]
        %v193 = vld [vmem:[%s135 + $0x118] sm:$0xff]
        %v194 = vld [vmem:[%s135 + $0x120] sm:$0xff]
        %v195 = vld [vmem:[%s135 + $0x128] sm:$0xff]
        %v196 = vld [vmem:[%s135 + $0x130] sm:$0xff]
        %v197 = vld [vmem:[%s135 + $0x138] sm:$0xff]
        %v198 = vld [vmem:[%s135 + $0x140] sm:$0xff]
        %v199 = vld [vmem:[%s135 + $0x148] sm:$0xff]
        %v200 = vld [vmem:[%s135 + $0x150] sm:$0xff]
        %v201 = vld [vmem:[%s135 + $0x158] sm:$0xff]
        %v202 = vld [vmem:[%s135 + $0x160] sm:$0xff]
        %v203 = vld [vmem:[%s135 + $0x168] sm:$0xff]
        %v204 = vld [vmem:[%s135 + $0x170] sm:$0xff]
        %v205 = vld [vmem:[%s135 + $0x178] sm:$0xff]
        %v206 = vld [vmem:[%s135 + $0x180] sm:$0xff]
        %v207 = vld [vmem:[%s135 + $0x188] sm:$0xff]
        %v208 = vld [vmem:[%s135 + $0x190] sm:$0xff]
        %v209 = vld [vmem:[%s135 + $0x198] sm:$0xff]
        %v210 = vld [vmem:[%s135 + $0x1a0] sm:$0xff]
        %v211 = vld [vmem:[%s135 + $0x1a8] sm:$0xff]
        %v212 = vld [vmem:[%s135 + $0x1b0] sm:$0xff]
        %v213 = vld [vmem:[%s135 + $0x1b8] sm:$0xff]
        %v214 = vld [vmem:[%s135 + $0x1c0] sm:$0xff]
        %v215 = vld [vmem:[%s135 + $0x1c8] sm:$0xff]
        %v216 = vld [vmem:[%s135 + $0x1d0] sm:$0xff]
        %v217 = vld [vmem:[%s135 + $0x1d8] sm:$0xff]
        %v218 = vld [vmem:[%s135 + $0x1e0] sm:$0xff]
        %v219 = vld [vmem:[%s135 + $0x1e8] sm:$0xff]
        %v220 = vld [vmem:[%s135 + $0x1f0] sm:$0xff]
        %v221 = vld [vmem:[%s135 + $0x1f8] sm:$0xff]
        %v222 = vld [vmem:[%s135 + $0x200] sm:$0xff]
        %v223 = vld [vmem:[%s135 + $0x208] sm:$0xff]
        %v224 = vld [vmem:[%s135 + $0x210] sm:$0xff]
        %v225 = vld [vmem:[%s135 + $0x218] sm:$0xff]
        %v226 = vld [vmem:[%s135 + $0x220] sm:$0xff]
        %v227 = vld [vmem:[%s135 + $0x228] sm:$0xff]
        %v228 = vld [vmem:[%s135 + $0x230] sm:$0xff]
        %v229 = vld [vmem:[%s135 + $0x238] sm:$0xff]
        %v230 = vld [vmem:[%s135 + $0x240] sm:$0xff]
        %v231 = vld [vmem:[%s135 + $0x248] sm:$0xff]
        %v232 = vld [vmem:[%s135 + $0x250] sm:$0xff]
        %v233 = vld [vmem:[%s135 + $0x258] sm:$0xff]
        %v234 = vld [vmem:[%s135 + $0x260] sm:$0xff]
        %v235 = vld [vmem:[%s135 + $0x268] sm:$0xff]
        %v236 = vld [vmem:[%s135 + $0x270] sm:$0xff]
        %v237 = vld [vmem:[%s135 + $0x278] sm:$0xff]
        %v238 = vld [vmem:[%s135 + $0x280] sm:$0xff]
        %v239 = vld [vmem:[%s135 + $0x288] sm:$0xff]
        %v240 = vld [vmem:[%s135 + $0x290] sm:$0xff]
        %v241 = vld [vmem:[%s135 + $0x298] sm:$0xff]
        %v242 = vld [vmem:[%s135 + $0x2a0] sm:$0xff]
        %v243 = vld [vmem:[%s135 + $0x2a8] sm:$0xff]
        %v244 = vld [vmem:[%s135 + $0x2b0] sm:$0xff]
        %v245 = vld [vmem:[%s135 + $0x2b8] sm:$0xff]
        %v246 = vld [vmem:[%s135 + $0x2c0] sm:$0xff]
        %v247 = vld [vmem:[%s135 + $0x2c8] sm:$0xff]
        %v248 = vld [vmem:[%s135 + $0x2d0] sm:$0xff]
        %v249 = vld [vmem:[%s135 + $0x2d8] sm:$0xff]
        %v250 = vld [vmem:[%s135 + $0x2e0] sm:$0xff]
        %v251 = vld [vmem:[%s135 + $0x2e8] sm:$0xff]
        %v252 = vld [vmem:[%s135 + $0x2f0] sm:$0xff]
        %v253 = vld [vmem:[%s135 + $0x2f8] sm:$0xff]
        %v254 = vld [vmem:[%s135 + $0x300] sm:$0xff]
        %v255 = vld [vmem:[%s135 + $0x308] sm:$0xff]
        %v256 = vld [vmem:[%s135 + $0x310] sm:$0xff]
        %v257 = vld [vmem:[%s135 + $0x318] sm:$0xff]
        %v258 = vld [vmem:[%s135 + $0x320] sm:$0xff]
        %v259 = vld [vmem:[%s135 + $0x328] sm:$0xff]
        %v260 = vld [vmem:[%s135 + $0x330] sm:$0xff]
        %v261 = vld [vmem:[%s135 + $0x338] sm:$0xff]
        %v262 = vld [vmem:[%s135 + $0x340] sm:$0xff]
        %v263 = vld [vmem:[%s135 + $0x348] sm:$0xff]
        %v264 = vld [vmem:[%s135 + $0x350] sm:$0xff]
        %v265 = vld [vmem:[%s135 + $0x358] sm:$0xff]
        %v266 = vld [vmem:[%s135 + $0x360] sm:$0xff]
        %v267 = vld [vmem:[%s135 + $0x368] sm:$0xff]
        %v268 = vld [vmem:[%s135 + $0x370] sm:$0xff]
        %v269 = vld [vmem:[%s135 + $0x378] sm:$0xff]
        %v270 = vld [vmem:[%s135 + $0x380] sm:$0xff]
        %v271 = vld [vmem:[%s135 + $0x388] sm:$0xff]
        %v272 = vld [vmem:[%s135 + $0x390] sm:$0xff]
        %v273 = vld [vmem:[%s135 + $0x398] sm:$0xff]
        %v274 = vld [vmem:[%s135 + $0x3a0] sm:$0xff]
        %v275 = vld [vmem:[%s135 + $0x3a8] sm:$0xff]
        %v276 = vld [vmem:[%s135 + $0x3b0] sm:$0xff]
        %v277 = vld [vmem:[%s135 + $0x3b8] sm:$0xff]
        %v278 = vld [vmem:[%s135 + $0x3c0] sm:$0xff]
        %v279 = vld [vmem:[%s135 + $0x3c8] sm:$0xff]
        %v280 = vld [vmem:[%s135 + $0x3d0] sm:$0xff]
        %v281 = vld [vmem:[%s135 + $0x3d8] sm:$0xff]
        %v282 = vld [vmem:[%s135 + $0x3e0] sm:$0xff]
        %v283 = vld [vmem:[%s135 + $0x3e8] sm:$0xff]
        %v284 = vld [vmem:[%s135 + $0x3f0] sm:$0xff]
        %v285 = vld [vmem:[%s135 + $0x3f8] sm:$0xff]
        %v286 = vcombine.low %v158, %v160
        %v287 = vcombine.high %v158, %v160
        %v289 = vunpack.c.l.s4 1983009808
        %v290 = vunpack.c.0.s8 %v289
        %v291 = vlaneseq
        %v292 = vshrl.u32 %v291, 7
        %v293 = vsub.s32 %v290, %v292
        %v294 = vrot.slane %v286, %v293
        %v296 = vunpack.c.l.s4 1983009808
        %v297 = vunpack.c.0.s8 %v296
        %v298 = vlaneseq
        %v299 = vshrl.u32 %v298, 7
        %v300 = vsub.s32 %v297, %v299
        %v301 = vrot.slane %v287, %v300
        %v302 = vcombine.low %v159, %v161
        %v303 = vcombine.high %v159, %v161
        %v305 = vunpack.c.l.s4 1983009808
        %v306 = vunpack.c.0.s8 %v305
        %v307 = vlaneseq
        %v308 = vshrl.u32 %v307, 7
        %v309 = vsub.s32 %v306, %v308
        %v310 = vrot.slane %v302, %v309
        %v312 = vunpack.c.l.s4 1983009808
        %v313 = vunpack.c.0.s8 %v312
        %v314 = vlaneseq
        %v315 = vshrl.u32 %v314, 7
        %v316 = vsub.s32 %v313, %v315
        %v317 = vrot.slane %v303, %v316
        %v318 = vcombine.low %v162, %v164
        %v319 = vcombine.high %v162, %v164
        %v321 = vunpack.c.l.s4 1983009808
        %v322 = vunpack.c.0.s8 %v321
        %v323 = vlaneseq
        %v324 = vshrl.u32 %v323, 7
        %v325 = vsub.s32 %v322, %v324
        %v326 = vrot.slane %v318, %v325
        %v328 = vunpack.c.l.s4 1983009808
        %v329 = vunpack.c.0.s8 %v328
        %v330 = vlaneseq
        %v331 = vshrl.u32 %v330, 7
        %v332 = vsub.s32 %v329, %v331
        %v333 = vrot.slane %v319, %v332
        %v334 = vcombine.low %v163, %v165
        %v335 = vcombine.high %v163, %v165
        %v337 = vunpack.c.l.s4 1983009808
        %v338 = vunpack.c.0.s8 %v337
        %v339 = vlaneseq
        %v340 = vshrl.u32 %v339, 7
        %v341 = vsub.s32 %v338, %v340
        %v342 = vrot.slane %v334, %v341
        %v344 = vunpack.c.l.s4 1983009808
        %v345 = vunpack.c.0.s8 %v344
        %v346 = vlaneseq
        %v347 = vshrl.u32 %v346, 7
        %v348 = vsub.s32 %v345, %v347
        %v349 = vrot.slane %v335, %v348
        %v350 = vcombine.low %v294, %v310
        %v351 = vcombine.high %v294, %v310
        %v353 = vunpack.c.l.s4 1934713408
        %v354 = vunpack.c.0.s8 %v353
        %v355 = vlaneseq
        %v356 = vshrl.u32 %v355, 7
        %v357 = vsub.s32 %v354, %v356
        %v358 = vrot.slane %v350, %v357
        %v360 = vunpack.c.l.s4 1934713408
        %v361 = vunpack.c.0.s8 %v360
        %v362 = vlaneseq
        %v363 = vshrl.u32 %v362, 7
        %v364 = vsub.s32 %v361, %v363
        %v365 = vrot.slane %v351, %v364
        %v366 = vcombine.low %v301, %v317
        %v367 = vcombine.high %v301, %v317
        %v369 = vunpack.c.l.s4 1934713408
        %v370 = vunpack.c.0.s8 %v369
        %v371 = vlaneseq
        %v372 = vshrl.u32 %v371, 7
        %v373 = vsub.s32 %v370, %v372
        %v374 = vrot.slane %v366, %v373
        %v376 = vunpack.c.l.s4 1934713408
        %v377 = vunpack.c.0.s8 %v376
        %v378 = vlaneseq
        %v379 = vshrl.u32 %v378, 7
        %v380 = vsub.s32 %v377, %v379
        %v381 = vrot.slane %v367, %v380
        %v382 = vcombine.low %v326, %v342
        %v383 = vcombine.high %v326, %v342
        %v385 = vunpack.c.l.s4 1934713408
        %v386 = vunpack.c.0.s8 %v385
        %v387 = vlaneseq
        %v388 = vshrl.u32 %v387, 7
        %v389 = vsub.s32 %v386, %v388
        %v390 = vrot.slane %v382, %v389
        %v392 = vunpack.c.l.s4 1934713408
        %v393 = vunpack.c.0.s8 %v392
        %v394 = vlaneseq
        %v395 = vshrl.u32 %v394, 7
        %v396 = vsub.s32 %v393, %v395
        %v397 = vrot.slane %v383, %v396
        %v398 = vcombine.low %v333, %v349
        %v399 = vcombine.high %v333, %v349
        %v401 = vunpack.c.l.s4 1934713408
        %v402 = vunpack.c.0.s8 %v401
        %v403 = vlaneseq
        %v404 = vshrl.u32 %v403, 7
        %v405 = vsub.s32 %v402, %v404
        %v406 = vrot.slane %v398, %v405
        %v408 = vunpack.c.l.s4 1934713408
        %v409 = vunpack.c.0.s8 %v408
        %v410 = vlaneseq
        %v411 = vshrl.u32 %v410, 7
        %v412 = vsub.s32 %v409, %v411
        %v413 = vrot.slane %v399, %v412
        %v414 = vcombine.low %v358, %v390
        %v415 = vcombine.high %v358, %v390
        %v416 = vcombine.low %v365, %v397
        %v417 = vcombine.high %v365, %v397
        %v418 = vcombine.low %v374, %v406
        %v419 = vcombine.high %v374, %v406
        %v420 = vcombine.low %v381, %v413
        %v421 = vcombine.high %v381, %v413
        %v422 = vcombine.low %v166, %v168
        %v423 = vcombine.high %v166, %v168
        %v425 = vunpack.c.l.s4 1983009808
        %v426 = vunpack.c.0.s8 %v425
        %v427 = vlaneseq
        %v428 = vshrl.u32 %v427, 7
        %v429 = vsub.s32 %v426, %v428
        %v430 = vrot.slane %v422, %v429
        %v432 = vunpack.c.l.s4 1983009808
        %v433 = vunpack.c.0.s8 %v432
        %v434 = vlaneseq
        %v435 = vshrl.u32 %v434, 7
        %v436 = vsub.s32 %v433, %v435
        %v437 = vrot.slane %v423, %v436
        %v438 = vcombine.low %v167, %v169
        %v439 = vcombine.high %v167, %v169
        %v441 = vunpack.c.l.s4 1983009808
        %v442 = vunpack.c.0.s8 %v441
        %v443 = vlaneseq
        %v444 = vshrl.u32 %v443, 7
        %v445 = vsub.s32 %v442, %v444
        %v446 = vrot.slane %v438, %v445
        %v448 = vunpack.c.l.s4 1983009808
        %v449 = vunpack.c.0.s8 %v448
        %v450 = vlaneseq
        %v451 = vshrl.u32 %v450, 7
        %v452 = vsub.s32 %v449, %v451
        %v453 = vrot.slane %v439, %v452
        %v454 = vcombine.low %v170, %v172
        %v455 = vcombine.high %v170, %v172
        %v457 = vunpack.c.l.s4 1983009808
        %v458 = vunpack.c.0.s8 %v457
        %v459 = vlaneseq
        %v460 = vshrl.u32 %v459, 7
        %v461 = vsub.s32 %v458, %v460
        %v462 = vrot.slane %v454, %v461
        %v464 = vunpack.c.l.s4 1983009808
        %v465 = vunpack.c.0.s8 %v464
        %v466 = vlaneseq
        %v467 = vshrl.u32 %v466, 7
        %v468 = vsub.s32 %v465, %v467
        %v469 = vrot.slane %v455, %v468
        %v470 = vcombine.low %v171, %v173
        %v471 = vcombine.high %v171, %v173
        %v473 = vunpack.c.l.s4 1983009808
        %v474 = vunpack.c.0.s8 %v473
        %v475 = vlaneseq
        %v476 = vshrl.u32 %v475, 7
        %v477 = vsub.s32 %v474, %v476
        %v478 = vrot.slane %v470, %v477
        %v480 = vunpack.c.l.s4 1983009808
        %v481 = vunpack.c.0.s8 %v480
        %v482 = vlaneseq
        %v483 = vshrl.u32 %v482, 7
        %v484 = vsub.s32 %v481, %v483
        %v485 = vrot.slane %v471, %v484
        %v486 = vcombine.low %v430, %v446
        %v487 = vcombine.high %v430, %v446
        %v489 = vunpack.c.l.s4 1934713408
        %v490 = vunpack.c.0.s8 %v489
        %v491 = vlaneseq
        %v492 = vshrl.u32 %v491, 7
        %v493 = vsub.s32 %v490, %v492
        %v494 = vrot.slane %v486, %v493
        %v496 = vunpack.c.l.s4 1934713408
        %v497 = vunpack.c.0.s8 %v496
        %v498 = vlaneseq
        %v499 = vshrl.u32 %v498, 7
        %v500 = vsub.s32 %v497, %v499
        %v501 = vrot.slane %v487, %v500
        %v502 = vcombine.low %v437, %v453
        %v503 = vcombine.high %v437, %v453
        %v505 = vunpack.c.l.s4 1934713408
        %v506 = vunpack.c.0.s8 %v505
        %v507 = vlaneseq
        %v508 = vshrl.u32 %v507, 7
        %v509 = vsub.s32 %v506, %v508
        %v510 = vrot.slane %v502, %v509
        %v512 = vunpack.c.l.s4 1934713408
        %v513 = vunpack.c.0.s8 %v512
        %v514 = vlaneseq
        %v515 = vshrl.u32 %v514, 7
        %v516 = vsub.s32 %v513, %v515
        %v517 = vrot.slane %v503, %v516
        %v518 = vcombine.low %v462, %v478
        %v519 = vcombine.high %v462, %v478
        %v521 = vunpack.c.l.s4 1934713408
        %v522 = vunpack.c.0.s8 %v521
        %v523 = vlaneseq
        %v524 = vshrl.u32 %v523, 7
        %v525 = vsub.s32 %v522, %v524
        %v526 = vrot.slane %v518, %v525
        %v528 = vunpack.c.l.s4 1934713408
        %v529 = vunpack.c.0.s8 %v528
        %v530 = vlaneseq
        %v531 = vshrl.u32 %v530, 7
        %v532 = vsub.s32 %v529, %v531
        %v533 = vrot.slane %v519, %v532
        %v534 = vcombine.low %v469, %v485
        %v535 = vcombine.high %v469, %v485
        %v537 = vunpack.c.l.s4 1934713408
        %v538 = vunpack.c.0.s8 %v537
        %v539 = vlaneseq
        %v540 = vshrl.u32 %v539, 7
        %v541 = vsub.s32 %v538, %v540
        %v542 = vrot.slane %v534, %v541
        %v544 = vunpack.c.l.s4 1934713408
        %v545 = vunpack.c.0.s8 %v544
        %v546 = vlaneseq
        %v547 = vshrl.u32 %v546, 7
        %v548 = vsub.s32 %v545, %v547
        %v549 = vrot.slane %v535, %v548
        %v550 = vcombine.low %v494, %v526
        %v551 = vcombine.high %v494, %v526
        %v552 = vcombine.low %v501, %v533
        %v553 = vcombine.high %v501, %v533
        %v554 = vcombine.low %v510, %v542
        %v555 = vcombine.high %v510, %v542
        %v556 = vcombine.low %v517, %v549
        %v557 = vcombine.high %v517, %v549
        %v558 = vcombine.low %v174, %v176
        %v559 = vcombine.high %v174, %v176
        %v561 = vunpack.c.l.s4 1983009808
        %v562 = vunpack.c.0.s8 %v561
        %v563 = vlaneseq
        %v564 = vshrl.u32 %v563, 7
        %v565 = vsub.s32 %v562, %v564
        %v566 = vrot.slane %v558, %v565
        %v568 = vunpack.c.l.s4 1983009808
        %v569 = vunpack.c.0.s8 %v568
        %v570 = vlaneseq
        %v571 = vshrl.u32 %v570, 7
        %v572 = vsub.s32 %v569, %v571
        %v573 = vrot.slane %v559, %v572
        %v574 = vcombine.low %v175, %v177
        %v575 = vcombine.high %v175, %v177
        %v577 = vunpack.c.l.s4 1983009808
        %v578 = vunpack.c.0.s8 %v577
        %v579 = vlaneseq
        %v580 = vshrl.u32 %v579, 7
        %v581 = vsub.s32 %v578, %v580
        %v582 = vrot.slane %v574, %v581
        %v584 = vunpack.c.l.s4 1983009808
        %v585 = vunpack.c.0.s8 %v584
        %v586 = vlaneseq
        %v587 = vshrl.u32 %v586, 7
        %v588 = vsub.s32 %v585, %v587
        %v589 = vrot.slane %v575, %v588
        %v590 = vcombine.low %v178, %v180
        %v591 = vcombine.high %v178, %v180
        %v593 = vunpack.c.l.s4 1983009808
        %v594 = vunpack.c.0.s8 %v593
        %v595 = vlaneseq
        %v596 = vshrl.u32 %v595, 7
        %v597 = vsub.s32 %v594, %v596
        %v598 = vrot.slane %v590, %v597
        %v600 = vunpack.c.l.s4 1983009808
        %v601 = vunpack.c.0.s8 %v600
        %v602 = vlaneseq
        %v603 = vshrl.u32 %v602, 7
        %v604 = vsub.s32 %v601, %v603
        %v605 = vrot.slane %v591, %v604
        %v606 = vcombine.low %v179, %v181
        %v607 = vcombine.high %v179, %v181
        %v609 = vunpack.c.l.s4 1983009808
        %v610 = vunpack.c.0.s8 %v609
        %v611 = vlaneseq
        %v612 = vshrl.u32 %v611, 7
        %v613 = vsub.s32 %v610, %v612
        %v614 = vrot.slane %v606, %v613
        %v616 = vunpack.c.l.s4 1983009808
        %v617 = vunpack.c.0.s8 %v616
        %v618 = vlaneseq
        %v619 = vshrl.u32 %v618, 7
        %v620 = vsub.s32 %v617, %v619
        %v621 = vrot.slane %v607, %v620
        %v622 = vcombine.low %v566, %v582
        %v623 = vcombine.high %v566, %v582
        %v625 = vunpack.c.l.s4 1934713408
        %v626 = vunpack.c.0.s8 %v625
        %v627 = vlaneseq
        %v628 = vshrl.u32 %v627, 7
        %v629 = vsub.s32 %v626, %v628
        %v630 = vrot.slane %v622, %v629
        %v632 = vunpack.c.l.s4 1934713408
        %v633 = vunpack.c.0.s8 %v632
        %v634 = vlaneseq
        %v635 = vshrl.u32 %v634, 7
        %v636 = vsub.s32 %v633, %v635
        %v637 = vrot.slane %v623, %v636
        %v638 = vcombine.low %v573, %v589
        %v639 = vcombine.high %v573, %v589
        %v641 = vunpack.c.l.s4 1934713408
        %v642 = vunpack.c.0.s8 %v641
        %v643 = vlaneseq
        %v644 = vshrl.u32 %v643, 7
        %v645 = vsub.s32 %v642, %v644
        %v646 = vrot.slane %v638, %v645
        %v648 = vunpack.c.l.s4 1934713408
        %v649 = vunpack.c.0.s8 %v648
        %v650 = vlaneseq
        %v651 = vshrl.u32 %v650, 7
        %v652 = vsub.s32 %v649, %v651
        %v653 = vrot.slane %v639, %v652
        %v654 = vcombine.low %v598, %v614
        %v655 = vcombine.high %v598, %v614
        %v657 = vunpack.c.l.s4 1934713408
        %v658 = vunpack.c.0.s8 %v657
        %v659 = vlaneseq
        %v660 = vshrl.u32 %v659, 7
        %v661 = vsub.s32 %v658, %v660
        %v662 = vrot.slane %v654, %v661
        %v664 = vunpack.c.l.s4 1934713408
        %v665 = vunpack.c.0.s8 %v664
        %v666 = vlaneseq
        %v667 = vshrl.u32 %v666, 7
        %v668 = vsub.s32 %v665, %v667
        %v669 = vrot.slane %v655, %v668
        %v670 = vcombine.low %v605, %v621
        %v671 = vcombine.high %v605, %v621
        %v673 = vunpack.c.l.s4 1934713408
        %v674 = vunpack.c.0.s8 %v673
        %v675 = vlaneseq
        %v676 = vshrl.u32 %v675, 7
        %v677 = vsub.s32 %v674, %v676
        %v678 = vrot.slane %v670, %v677
        %v680 = vunpack.c.l.s4 1934713408
        %v681 = vunpack.c.0.s8 %v680
        %v682 = vlaneseq
        %v683 = vshrl.u32 %v682, 7
        %v684 = vsub.s32 %v681, %v683
        %v685 = vrot.slane %v671, %v684
        %v686 = vcombine.low %v630, %v662
        %v687 = vcombine.high %v630, %v662
        %v688 = vcombine.low %v637, %v669
        %v689 = vcombine.high %v637, %v669
        %v690 = vcombine.low %v646, %v678
        %v691 = vcombine.high %v646, %v678
        %v692 = vcombine.low %v653, %v685
        %v693 = vcombine.high %v653, %v685
        %v694 = vcombine.low %v182, %v184
        %v695 = vcombine.high %v182, %v184
        %v697 = vunpack.c.l.s4 1983009808
        %v698 = vunpack.c.0.s8 %v697
        %v699 = vlaneseq
        %v700 = vshrl.u32 %v699, 7
        %v701 = vsub.s32 %v698, %v700
        %v702 = vrot.slane %v694, %v701
        %v704 = vunpack.c.l.s4 1983009808
        %v705 = vunpack.c.0.s8 %v704
        %v706 = vlaneseq
        %v707 = vshrl.u32 %v706, 7
        %v708 = vsub.s32 %v705, %v707
        %v709 = vrot.slane %v695, %v708
        %v710 = vcombine.low %v183, %v185
        %v711 = vcombine.high %v183, %v185
        %v713 = vunpack.c.l.s4 1983009808
        %v714 = vunpack.c.0.s8 %v713
        %v715 = vlaneseq
        %v716 = vshrl.u32 %v715, 7
        %v717 = vsub.s32 %v714, %v716
        %v718 = vrot.slane %v710, %v717
        %v720 = vunpack.c.l.s4 1983009808
        %v721 = vunpack.c.0.s8 %v720
        %v722 = vlaneseq
        %v723 = vshrl.u32 %v722, 7
        %v724 = vsub.s32 %v721, %v723
        %v725 = vrot.slane %v711, %v724
        %v726 = vcombine.low %v186, %v188
        %v727 = vcombine.high %v186, %v188
        %v729 = vunpack.c.l.s4 1983009808
        %v730 = vunpack.c.0.s8 %v729
        %v731 = vlaneseq
        %v732 = vshrl.u32 %v731, 7
        %v733 = vsub.s32 %v730, %v732
        %v734 = vrot.slane %v726, %v733
        %v736 = vunpack.c.l.s4 1983009808
        %v737 = vunpack.c.0.s8 %v736
        %v738 = vlaneseq
        %v739 = vshrl.u32 %v738, 7
        %v740 = vsub.s32 %v737, %v739
        %v741 = vrot.slane %v727, %v740
        %v742 = vcombine.low %v187, %v189
        %v743 = vcombine.high %v187, %v189
        %v745 = vunpack.c.l.s4 1983009808
        %v746 = vunpack.c.0.s8 %v745
        %v747 = vlaneseq
        %v748 = vshrl.u32 %v747, 7
        %v749 = vsub.s32 %v746, %v748
        %v750 = vrot.slane %v742, %v749
        %v752 = vunpack.c.l.s4 1983009808
        %v753 = vunpack.c.0.s8 %v752
        %v754 = vlaneseq
        %v755 = vshrl.u32 %v754, 7
        %v756 = vsub.s32 %v753, %v755
        %v757 = vrot.slane %v743, %v756
        %v758 = vcombine.low %v702, %v718
        %v759 = vcombine.high %v702, %v718
        %v761 = vunpack.c.l.s4 1934713408
        %v762 = vunpack.c.0.s8 %v761
        %v763 = vlaneseq
        %v764 = vshrl.u32 %v763, 7
        %v765 = vsub.s32 %v762, %v764
        %v766 = vrot.slane %v758, %v765
        %v768 = vunpack.c.l.s4 1934713408
        %v769 = vunpack.c.0.s8 %v768
        %v770 = vlaneseq
        %v771 = vshrl.u32 %v770, 7
        %v772 = vsub.s32 %v769, %v771
        %v773 = vrot.slane %v759, %v772
        %v774 = vcombine.low %v709, %v725
        %v775 = vcombine.high %v709, %v725
        %v777 = vunpack.c.l.s4 1934713408
        %v778 = vunpack.c.0.s8 %v777
        %v779 = vlaneseq
        %v780 = vshrl.u32 %v779, 7
        %v781 = vsub.s32 %v778, %v780
        %v782 = vrot.slane %v774, %v781
        %v784 = vunpack.c.l.s4 1934713408
        %v785 = vunpack.c.0.s8 %v784
        %v786 = vlaneseq
        %v787 = vshrl.u32 %v786, 7
        %v788 = vsub.s32 %v785, %v787
        %v789 = vrot.slane %v775, %v788
        %v790 = vcombine.low %v734, %v750
        %v791 = vcombine.high %v734, %v750
        %v793 = vunpack.c.l.s4 1934713408
        %v794 = vunpack.c.0.s8 %v793
        %v795 = vlaneseq
        %v796 = vshrl.u32 %v795, 7
        %v797 = vsub.s32 %v794, %v796
        %v798 = vrot.slane %v790, %v797
        %v800 = vunpack.c.l.s4 1934713408
        %v801 = vunpack.c.0.s8 %v800
        %v802 = vlaneseq
        %v803 = vshrl.u32 %v802, 7
        %v804 = vsub.s32 %v801, %v803
        %v805 = vrot.slane %v791, %v804
        %v806 = vcombine.low %v741, %v757
        %v807 = vcombine.high %v741, %v757
        %v809 = vunpack.c.l.s4 1934713408
        %v810 = vunpack.c.0.s8 %v809
        %v811 = vlaneseq
        %v812 = vshrl.u32 %v811, 7
        %v813 = vsub.s32 %v810, %v812
        %v814 = vrot.slane %v806, %v813
        %v816 = vunpack.c.l.s4 1934713408
        %v817 = vunpack.c.0.s8 %v816
        %v818 = vlaneseq
        %v819 = vshrl.u32 %v818, 7
        %v820 = vsub.s32 %v817, %v819
        %v821 = vrot.slane %v807, %v820
        %v822 = vcombine.low %v766, %v798
        %v823 = vcombine.high %v766, %v798
        %v824 = vcombine.low %v773, %v805
        %v825 = vcombine.high %v773, %v805
        %v826 = vcombine.low %v782, %v814
        %v827 = vcombine.high %v782, %v814
        %v828 = vcombine.low %v789, %v821
        %v829 = vcombine.high %v789, %v821
        %v830 = vcombine.low %v190, %v192
        %v831 = vcombine.high %v190, %v192
        %v833 = vunpack.c.l.s4 1983009808
        %v834 = vunpack.c.0.s8 %v833
        %v835 = vlaneseq
        %v836 = vshrl.u32 %v835, 7
        %v837 = vsub.s32 %v834, %v836
        %v838 = vrot.slane %v830, %v837
        %v840 = vunpack.c.l.s4 1983009808
        %v841 = vunpack.c.0.s8 %v840
        %v842 = vlaneseq
        %v843 = vshrl.u32 %v842, 7
        %v844 = vsub.s32 %v841, %v843
        %v845 = vrot.slane %v831, %v844
        %v846 = vcombine.low %v191, %v193
        %v847 = vcombine.high %v191, %v193
        %v849 = vunpack.c.l.s4 1983009808
        %v850 = vunpack.c.0.s8 %v849
        %v851 = vlaneseq
        %v852 = vshrl.u32 %v851, 7
        %v853 = vsub.s32 %v850, %v852
        %v854 = vrot.slane %v846, %v853
        %v856 = vunpack.c.l.s4 1983009808
        %v857 = vunpack.c.0.s8 %v856
        %v858 = vlaneseq
        %v859 = vshrl.u32 %v858, 7
        %v860 = vsub.s32 %v857, %v859
        %v861 = vrot.slane %v847, %v860
        %v862 = vcombine.low %v194, %v196
        %v863 = vcombine.high %v194, %v196
        %v865 = vunpack.c.l.s4 1983009808
        %v866 = vunpack.c.0.s8 %v865
        %v867 = vlaneseq
        %v868 = vshrl.u32 %v867, 7
        %v869 = vsub.s32 %v866, %v868
        %v870 = vrot.slane %v862, %v869
        %v872 = vunpack.c.l.s4 1983009808
        %v873 = vunpack.c.0.s8 %v872
        %v874 = vlaneseq
        %v875 = vshrl.u32 %v874, 7
        %v876 = vsub.s32 %v873, %v875
        %v877 = vrot.slane %v863, %v876
        %v878 = vcombine.low %v195, %v197
        %v879 = vcombine.high %v195, %v197
        %v881 = vunpack.c.l.s4 1983009808
        %v882 = vunpack.c.0.s8 %v881
        %v883 = vlaneseq
        %v884 = vshrl.u32 %v883, 7
        %v885 = vsub.s32 %v882, %v884
        %v886 = vrot.slane %v878, %v885
        %v888 = vunpack.c.l.s4 1983009808
        %v889 = vunpack.c.0.s8 %v888
        %v890 = vlaneseq
        %v891 = vshrl.u32 %v890, 7
        %v892 = vsub.s32 %v889, %v891
        %v893 = vrot.slane %v879, %v892
        %v894 = vcombine.low %v838, %v854
        %v895 = vcombine.high %v838, %v854
        %v897 = vunpack.c.l.s4 1934713408
        %v898 = vunpack.c.0.s8 %v897
        %v899 = vlaneseq
        %v900 = vshrl.u32 %v899, 7
        %v901 = vsub.s32 %v898, %v900
        %v902 = vrot.slane %v894, %v901
        %v904 = vunpack.c.l.s4 1934713408
        %v905 = vunpack.c.0.s8 %v904
        %v906 = vlaneseq
        %v907 = vshrl.u32 %v906, 7
        %v908 = vsub.s32 %v905, %v907
        %v909 = vrot.slane %v895, %v908
        %v910 = vcombine.low %v845, %v861
        %v911 = vcombine.high %v845, %v861
        %v913 = vunpack.c.l.s4 1934713408
        %v914 = vunpack.c.0.s8 %v913
        %v915 = vlaneseq
        %v916 = vshrl.u32 %v915, 7
        %v917 = vsub.s32 %v914, %v916
        %v918 = vrot.slane %v910, %v917
        %v920 = vunpack.c.l.s4 1934713408
        %v921 = vunpack.c.0.s8 %v920
        %v922 = vlaneseq
        %v923 = vshrl.u32 %v922, 7
        %v924 = vsub.s32 %v921, %v923
        %v925 = vrot.slane %v911, %v924
        %v926 = vcombine.low %v870, %v886
        %v927 = vcombine.high %v870, %v886
        %v929 = vunpack.c.l.s4 1934713408
        %v930 = vunpack.c.0.s8 %v929
        %v931 = vlaneseq
        %v932 = vshrl.u32 %v931, 7
        %v933 = vsub.s32 %v930, %v932
        %v934 = vrot.slane %v926, %v933
        %v936 = vunpack.c.l.s4 1934713408
        %v937 = vunpack.c.0.s8 %v936
        %v938 = vlaneseq
        %v939 = vshrl.u32 %v938, 7
        %v940 = vsub.s32 %v937, %v939
        %v941 = vrot.slane %v927, %v940
        %v942 = vcombine.low %v877, %v893
        %v943 = vcombine.high %v877, %v893
        %v945 = vunpack.c.l.s4 1934713408
        %v946 = vunpack.c.0.s8 %v945
        %v947 = vlaneseq
        %v948 = vshrl.u32 %v947, 7
        %v949 = vsub.s32 %v946, %v948
        %v950 = vrot.slane %v942, %v949
        %v952 = vunpack.c.l.s4 1934713408
        %v953 = vunpack.c.0.s8 %v952
        %v954 = vlaneseq
        %v955 = vshrl.u32 %v954, 7
        %v956 = vsub.s32 %v953, %v955
        %v957 = vrot.slane %v943, %v956
        %v958 = vcombine.low %v902, %v934
        %v959 = vcombine.high %v902, %v934
        %v960 = vcombine.low %v909, %v941
        %v961 = vcombine.high %v909, %v941
        %v962 = vcombine.low %v918, %v950
        %v963 = vcombine.high %v918, %v950
        %v964 = vcombine.low %v925, %v957
        %v965 = vcombine.high %v925, %v957
        %v966 = vcombine.low %v198, %v200
        %v967 = vcombine.high %v198, %v200
        %v969 = vunpack.c.l.s4 1983009808
        %v970 = vunpack.c.0.s8 %v969
        %v971 = vlaneseq
        %v972 = vshrl.u32 %v971, 7
        %v973 = vsub.s32 %v970, %v972
        %v974 = vrot.slane %v966, %v973
        %v976 = vunpack.c.l.s4 1983009808
        %v977 = vunpack.c.0.s8 %v976
        %v978 = vlaneseq
        %v979 = vshrl.u32 %v978, 7
        %v980 = vsub.s32 %v977, %v979
        %v981 = vrot.slane %v967, %v980
        %v982 = vcombine.low %v199, %v201
        %v983 = vcombine.high %v199, %v201
        %v985 = vunpack.c.l.s4 1983009808
        %v986 = vunpack.c.0.s8 %v985
        %v987 = vlaneseq
        %v988 = vshrl.u32 %v987, 7
        %v989 = vsub.s32 %v986, %v988
        %v990 = vrot.slane %v982, %v989
        %v992 = vunpack.c.l.s4 1983009808
        %v993 = vunpack.c.0.s8 %v992
        %v994 = vlaneseq
        %v995 = vshrl.u32 %v994, 7
        %v996 = vsub.s32 %v993, %v995
        %v997 = vrot.slane %v983, %v996
        %v998 = vcombine.low %v202, %v204
        %v999 = vcombine.high %v202, %v204
        %v1001 = vunpack.c.l.s4 1983009808
        %v1002 = vunpack.c.0.s8 %v1001
        %v1003 = vlaneseq
        %v1004 = vshrl.u32 %v1003, 7
        %v1005 = vsub.s32 %v1002, %v1004
        %v1006 = vrot.slane %v998, %v1005
        %v1008 = vunpack.c.l.s4 1983009808
        %v1009 = vunpack.c.0.s8 %v1008
        %v1010 = vlaneseq
        %v1011 = vshrl.u32 %v1010, 7
        %v1012 = vsub.s32 %v1009, %v1011
        %v1013 = vrot.slane %v999, %v1012
        %v1014 = vcombine.low %v203, %v205
        %v1015 = vcombine.high %v203, %v205
        %v1017 = vunpack.c.l.s4 1983009808
        %v1018 = vunpack.c.0.s8 %v1017
        %v1019 = vlaneseq
        %v1020 = vshrl.u32 %v1019, 7
        %v1021 = vsub.s32 %v1018, %v1020
        %v1022 = vrot.slane %v1014, %v1021
        %v1024 = vunpack.c.l.s4 1983009808
        %v1025 = vunpack.c.0.s8 %v1024
        %v1026 = vlaneseq
        %v1027 = vshrl.u32 %v1026, 7
        %v1028 = vsub.s32 %v1025, %v1027
        %v1029 = vrot.slane %v1015, %v1028
        %v1030 = vcombine.low %v974, %v990
        %v1031 = vcombine.high %v974, %v990
        %v1033 = vunpack.c.l.s4 1934713408
        %v1034 = vunpack.c.0.s8 %v1033
        %v1035 = vlaneseq
        %v1036 = vshrl.u32 %v1035, 7
        %v1037 = vsub.s32 %v1034, %v1036
        %v1038 = vrot.slane %v1030, %v1037
        %v1040 = vunpack.c.l.s4 1934713408
        %v1041 = vunpack.c.0.s8 %v1040
        %v1042 = vlaneseq
        %v1043 = vshrl.u32 %v1042, 7
        %v1044 = vsub.s32 %v1041, %v1043
        %v1045 = vrot.slane %v1031, %v1044
        %v1046 = vcombine.low %v981, %v997
        %v1047 = vcombine.high %v981, %v997
        %v1049 = vunpack.c.l.s4 1934713408
        %v1050 = vunpack.c.0.s8 %v1049
        %v1051 = vlaneseq
        %v1052 = vshrl.u32 %v1051, 7
        %v1053 = vsub.s32 %v1050, %v1052
        %v1054 = vrot.slane %v1046, %v1053
        %v1056 = vunpack.c.l.s4 1934713408
        %v1057 = vunpack.c.0.s8 %v1056
        %v1058 = vlaneseq
        %v1059 = vshrl.u32 %v1058, 7
        %v1060 = vsub.s32 %v1057, %v1059
        %v1061 = vrot.slane %v1047, %v1060
        %v1062 = vcombine.low %v1006, %v1022
        %v1063 = vcombine.high %v1006, %v1022
        %v1065 = vunpack.c.l.s4 1934713408
        %v1066 = vunpack.c.0.s8 %v1065
        %v1067 = vlaneseq
        %v1068 = vshrl.u32 %v1067, 7
        %v1069 = vsub.s32 %v1066, %v1068
        %v1070 = vrot.slane %v1062, %v1069
        %v1072 = vunpack.c.l.s4 1934713408
        %v1073 = vunpack.c.0.s8 %v1072
        %v1074 = vlaneseq
        %v1075 = vshrl.u32 %v1074, 7
        %v1076 = vsub.s32 %v1073, %v1075
        %v1077 = vrot.slane %v1063, %v1076
        %v1078 = vcombine.low %v1013, %v1029
        %v1079 = vcombine.high %v1013, %v1029
        %v1081 = vunpack.c.l.s4 1934713408
        %v1082 = vunpack.c.0.s8 %v1081
        %v1083 = vlaneseq
        %v1084 = vshrl.u32 %v1083, 7
        %v1085 = vsub.s32 %v1082, %v1084
        %v1086 = vrot.slane %v1078, %v1085
        %v1088 = vunpack.c.l.s4 1934713408
        %v1089 = vunpack.c.0.s8 %v1088
        %v1090 = vlaneseq
        %v1091 = vshrl.u32 %v1090, 7
        %v1092 = vsub.s32 %v1089, %v1091
        %v1093 = vrot.slane %v1079, %v1092
        %v1094 = vcombine.low %v1038, %v1070
        %v1095 = vcombine.high %v1038, %v1070
        %v1096 = vcombine.low %v1045, %v1077
        %v1097 = vcombine.high %v1045, %v1077
        %v1098 = vcombine.low %v1054, %v1086
        %v1099 = vcombine.high %v1054, %v1086
        %v1100 = vcombine.low %v1061, %v1093
        %v1101 = vcombine.high %v1061, %v1093
        %v1102 = vcombine.low %v206, %v208
        %v1103 = vcombine.high %v206, %v208
        %v1105 = vunpack.c.l.s4 1983009808
        %v1106 = vunpack.c.0.s8 %v1105
        %v1107 = vlaneseq
        %v1108 = vshrl.u32 %v1107, 7
        %v1109 = vsub.s32 %v1106, %v1108
        %v1110 = vrot.slane %v1102, %v1109
        %v1112 = vunpack.c.l.s4 1983009808
        %v1113 = vunpack.c.0.s8 %v1112
        %v1114 = vlaneseq
        %v1115 = vshrl.u32 %v1114, 7
        %v1116 = vsub.s32 %v1113, %v1115
        %v1117 = vrot.slane %v1103, %v1116
        %v1118 = vcombine.low %v207, %v209
        %v1119 = vcombine.high %v207, %v209
        %v1121 = vunpack.c.l.s4 1983009808
        %v1122 = vunpack.c.0.s8 %v1121
        %v1123 = vlaneseq
        %v1124 = vshrl.u32 %v1123, 7
        %v1125 = vsub.s32 %v1122, %v1124
        %v1126 = vrot.slane %v1118, %v1125
        %v1128 = vunpack.c.l.s4 1983009808
        %v1129 = vunpack.c.0.s8 %v1128
        %v1130 = vlaneseq
        %v1131 = vshrl.u32 %v1130, 7
        %v1132 = vsub.s32 %v1129, %v1131
        %v1133 = vrot.slane %v1119, %v1132
        %v1134 = vcombine.low %v210, %v212
        %v1135 = vcombine.high %v210, %v212
        %v1137 = vunpack.c.l.s4 1983009808
        %v1138 = vunpack.c.0.s8 %v1137
        %v1139 = vlaneseq
        %v1140 = vshrl.u32 %v1139, 7
        %v1141 = vsub.s32 %v1138, %v1140
        %v1142 = vrot.slane %v1134, %v1141
        %v1144 = vunpack.c.l.s4 1983009808
        %v1145 = vunpack.c.0.s8 %v1144
        %v1146 = vlaneseq
        %v1147 = vshrl.u32 %v1146, 7
        %v1148 = vsub.s32 %v1145, %v1147
        %v1149 = vrot.slane %v1135, %v1148
        %v1150 = vcombine.low %v211, %v213
        %v1151 = vcombine.high %v211, %v213
        %v1153 = vunpack.c.l.s4 1983009808
        %v1154 = vunpack.c.0.s8 %v1153
        %v1155 = vlaneseq
        %v1156 = vshrl.u32 %v1155, 7
        %v1157 = vsub.s32 %v1154, %v1156
        %v1158 = vrot.slane %v1150, %v1157
        %v1160 = vunpack.c.l.s4 1983009808
        %v1161 = vunpack.c.0.s8 %v1160
        %v1162 = vlaneseq
        %v1163 = vshrl.u32 %v1162, 7
        %v1164 = vsub.s32 %v1161, %v1163
        %v1165 = vrot.slane %v1151, %v1164
        %v1166 = vcombine.low %v1110, %v1126
        %v1167 = vcombine.high %v1110, %v1126
        %v1169 = vunpack.c.l.s4 1934713408
        %v1170 = vunpack.c.0.s8 %v1169
        %v1171 = vlaneseq
        %v1172 = vshrl.u32 %v1171, 7
        %v1173 = vsub.s32 %v1170, %v1172
        %v1174 = vrot.slane %v1166, %v1173
        %v1176 = vunpack.c.l.s4 1934713408
        %v1177 = vunpack.c.0.s8 %v1176
        %v1178 = vlaneseq
        %v1179 = vshrl.u32 %v1178, 7
        %v1180 = vsub.s32 %v1177, %v1179
        %v1181 = vrot.slane %v1167, %v1180
        %v1182 = vcombine.low %v1117, %v1133
        %v1183 = vcombine.high %v1117, %v1133
        %v1185 = vunpack.c.l.s4 1934713408
        %v1186 = vunpack.c.0.s8 %v1185
        %v1187 = vlaneseq
        %v1188 = vshrl.u32 %v1187, 7
        %v1189 = vsub.s32 %v1186, %v1188
        %v1190 = vrot.slane %v1182, %v1189
        %v1192 = vunpack.c.l.s4 1934713408
        %v1193 = vunpack.c.0.s8 %v1192
        %v1194 = vlaneseq
        %v1195 = vshrl.u32 %v1194, 7
        %v1196 = vsub.s32 %v1193, %v1195
        %v1197 = vrot.slane %v1183, %v1196
        %v1198 = vcombine.low %v1142, %v1158
        %v1199 = vcombine.high %v1142, %v1158
        %v1201 = vunpack.c.l.s4 1934713408
        %v1202 = vunpack.c.0.s8 %v1201
        %v1203 = vlaneseq
        %v1204 = vshrl.u32 %v1203, 7
        %v1205 = vsub.s32 %v1202, %v1204
        %v1206 = vrot.slane %v1198, %v1205
        %v1208 = vunpack.c.l.s4 1934713408
        %v1209 = vunpack.c.0.s8 %v1208
        %v1210 = vlaneseq
        %v1211 = vshrl.u32 %v1210, 7
        %v1212 = vsub.s32 %v1209, %v1211
        %v1213 = vrot.slane %v1199, %v1212
        %v1214 = vcombine.low %v1149, %v1165
        %v1215 = vcombine.high %v1149, %v1165
        %v1217 = vunpack.c.l.s4 1934713408
        %v1218 = vunpack.c.0.s8 %v1217
        %v1219 = vlaneseq
        %v1220 = vshrl.u32 %v1219, 7
        %v1221 = vsub.s32 %v1218, %v1220
        %v1222 = vrot.slane %v1214, %v1221
        %v1224 = vunpack.c.l.s4 1934713408
        %v1225 = vunpack.c.0.s8 %v1224
        %v1226 = vlaneseq
        %v1227 = vshrl.u32 %v1226, 7
        %v1228 = vsub.s32 %v1225, %v1227
        %v1229 = vrot.slane %v1215, %v1228
        %v1230 = vcombine.low %v1174, %v1206
        %v1231 = vcombine.high %v1174, %v1206
        %v1232 = vcombine.low %v1181, %v1213
        %v1233 = vcombine.high %v1181, %v1213
        %v1234 = vcombine.low %v1190, %v1222
        %v1235 = vcombine.high %v1190, %v1222
        %v1236 = vcombine.low %v1197, %v1229
        %v1237 = vcombine.high %v1197, %v1229
        %v1238 = vcombine.low %v214, %v216
        %v1239 = vcombine.high %v214, %v216
        %v1241 = vunpack.c.l.s4 1983009808
        %v1242 = vunpack.c.0.s8 %v1241
        %v1243 = vlaneseq
        %v1244 = vshrl.u32 %v1243, 7
        %v1245 = vsub.s32 %v1242, %v1244
        %v1246 = vrot.slane %v1238, %v1245
        %v1248 = vunpack.c.l.s4 1983009808
        %v1249 = vunpack.c.0.s8 %v1248
        %v1250 = vlaneseq
        %v1251 = vshrl.u32 %v1250, 7
        %v1252 = vsub.s32 %v1249, %v1251
        %v1253 = vrot.slane %v1239, %v1252
        %v1254 = vcombine.low %v215, %v217
        %v1255 = vcombine.high %v215, %v217
        %v1257 = vunpack.c.l.s4 1983009808
        %v1258 = vunpack.c.0.s8 %v1257
        %v1259 = vlaneseq
        %v1260 = vshrl.u32 %v1259, 7
        %v1261 = vsub.s32 %v1258, %v1260
        %v1262 = vrot.slane %v1254, %v1261
        %v1264 = vunpack.c.l.s4 1983009808
        %v1265 = vunpack.c.0.s8 %v1264
        %v1266 = vlaneseq
        %v1267 = vshrl.u32 %v1266, 7
        %v1268 = vsub.s32 %v1265, %v1267
        %v1269 = vrot.slane %v1255, %v1268
        %v1270 = vcombine.low %v218, %v220
        %v1271 = vcombine.high %v218, %v220
        %v1273 = vunpack.c.l.s4 1983009808
        %v1274 = vunpack.c.0.s8 %v1273
        %v1275 = vlaneseq
        %v1276 = vshrl.u32 %v1275, 7
        %v1277 = vsub.s32 %v1274, %v1276
        %v1278 = vrot.slane %v1270, %v1277
        %v1280 = vunpack.c.l.s4 1983009808
        %v1281 = vunpack.c.0.s8 %v1280
        %v1282 = vlaneseq
        %v1283 = vshrl.u32 %v1282, 7
        %v1284 = vsub.s32 %v1281, %v1283
        %v1285 = vrot.slane %v1271, %v1284
        %v1286 = vcombine.low %v219, %v221
        %v1287 = vcombine.high %v219, %v221
        %v1289 = vunpack.c.l.s4 1983009808
        %v1290 = vunpack.c.0.s8 %v1289
        %v1291 = vlaneseq
        %v1292 = vshrl.u32 %v1291, 7
        %v1293 = vsub.s32 %v1290, %v1292
        %v1294 = vrot.slane %v1286, %v1293
        %v1296 = vunpack.c.l.s4 1983009808
        %v1297 = vunpack.c.0.s8 %v1296
        %v1298 = vlaneseq
        %v1299 = vshrl.u32 %v1298, 7
        %v1300 = vsub.s32 %v1297, %v1299
        %v1301 = vrot.slane %v1287, %v1300
        %v1302 = vcombine.low %v1246, %v1262
        %v1303 = vcombine.high %v1246, %v1262
        %v1305 = vunpack.c.l.s4 1934713408
        %v1306 = vunpack.c.0.s8 %v1305
        %v1307 = vlaneseq
        %v1308 = vshrl.u32 %v1307, 7
        %v1309 = vsub.s32 %v1306, %v1308
        %v1310 = vrot.slane %v1302, %v1309
        %v1312 = vunpack.c.l.s4 1934713408
        %v1313 = vunpack.c.0.s8 %v1312
        %v1314 = vlaneseq
        %v1315 = vshrl.u32 %v1314, 7
        %v1316 = vsub.s32 %v1313, %v1315
        %v1317 = vrot.slane %v1303, %v1316
        %v1318 = vcombine.low %v1253, %v1269
        %v1319 = vcombine.high %v1253, %v1269
        %v1321 = vunpack.c.l.s4 1934713408
        %v1322 = vunpack.c.0.s8 %v1321
        %v1323 = vlaneseq
        %v1324 = vshrl.u32 %v1323, 7
        %v1325 = vsub.s32 %v1322, %v1324
        %v1326 = vrot.slane %v1318, %v1325
        %v1328 = vunpack.c.l.s4 1934713408
        %v1329 = vunpack.c.0.s8 %v1328
        %v1330 = vlaneseq
        %v1331 = vshrl.u32 %v1330, 7
        %v1332 = vsub.s32 %v1329, %v1331
        %v1333 = vrot.slane %v1319, %v1332
        %v1334 = vcombine.low %v1278, %v1294
        %v1335 = vcombine.high %v1278, %v1294
        %v1337 = vunpack.c.l.s4 1934713408
        %v1338 = vunpack.c.0.s8 %v1337
        %v1339 = vlaneseq
        %v1340 = vshrl.u32 %v1339, 7
        %v1341 = vsub.s32 %v1338, %v1340
        %v1342 = vrot.slane %v1334, %v1341
        %v1344 = vunpack.c.l.s4 1934713408
        %v1345 = vunpack.c.0.s8 %v1344
        %v1346 = vlaneseq
        %v1347 = vshrl.u32 %v1346, 7
        %v1348 = vsub.s32 %v1345, %v1347
        %v1349 = vrot.slane %v1335, %v1348
        %v1350 = vcombine.low %v1285, %v1301
        %v1351 = vcombine.high %v1285, %v1301
        %v1353 = vunpack.c.l.s4 1934713408
        %v1354 = vunpack.c.0.s8 %v1353
        %v1355 = vlaneseq
        %v1356 = vshrl.u32 %v1355, 7
        %v1357 = vsub.s32 %v1354, %v1356
        %v1358 = vrot.slane %v1350, %v1357
        %v1360 = vunpack.c.l.s4 1934713408
        %v1361 = vunpack.c.0.s8 %v1360
        %v1362 = vlaneseq
        %v1363 = vshrl.u32 %v1362, 7
        %v1364 = vsub.s32 %v1361, %v1363
        %v1365 = vrot.slane %v1351, %v1364
        %v1366 = vcombine.low %v1310, %v1342
        %v1367 = vcombine.high %v1310, %v1342
        %v1368 = vcombine.low %v1317, %v1349
        %v1369 = vcombine.high %v1317, %v1349
        %v1370 = vcombine.low %v1326, %v1358
        %v1371 = vcombine.high %v1326, %v1358
        %v1372 = vcombine.low %v1333, %v1365
        %v1373 = vcombine.high %v1333, %v1365
        %v1374 = vcombine.low %v222, %v224
        %v1375 = vcombine.high %v222, %v224
        %v1377 = vunpack.c.l.s4 1983009808
        %v1378 = vunpack.c.0.s8 %v1377
        %v1379 = vlaneseq
        %v1380 = vshrl.u32 %v1379, 7
        %v1381 = vsub.s32 %v1378, %v1380
        %v1382 = vrot.slane %v1374, %v1381
        %v1384 = vunpack.c.l.s4 1983009808
        %v1385 = vunpack.c.0.s8 %v1384
        %v1386 = vlaneseq
        %v1387 = vshrl.u32 %v1386, 7
        %v1388 = vsub.s32 %v1385, %v1387
        %v1389 = vrot.slane %v1375, %v1388
        %v1390 = vcombine.low %v223, %v225
        %v1391 = vcombine.high %v223, %v225
        %v1393 = vunpack.c.l.s4 1983009808
        %v1394 = vunpack.c.0.s8 %v1393
        %v1395 = vlaneseq
        %v1396 = vshrl.u32 %v1395, 7
        %v1397 = vsub.s32 %v1394, %v1396
        %v1398 = vrot.slane %v1390, %v1397
        %v1400 = vunpack.c.l.s4 1983009808
        %v1401 = vunpack.c.0.s8 %v1400
        %v1402 = vlaneseq
        %v1403 = vshrl.u32 %v1402, 7
        %v1404 = vsub.s32 %v1401, %v1403
        %v1405 = vrot.slane %v1391, %v1404
        %v1406 = vcombine.low %v226, %v228
        %v1407 = vcombine.high %v226, %v228
        %v1409 = vunpack.c.l.s4 1983009808
        %v1410 = vunpack.c.0.s8 %v1409
        %v1411 = vlaneseq
        %v1412 = vshrl.u32 %v1411, 7
        %v1413 = vsub.s32 %v1410, %v1412
        %v1414 = vrot.slane %v1406, %v1413
        %v1416 = vunpack.c.l.s4 1983009808
        %v1417 = vunpack.c.0.s8 %v1416
        %v1418 = vlaneseq
        %v1419 = vshrl.u32 %v1418, 7
        %v1420 = vsub.s32 %v1417, %v1419
        %v1421 = vrot.slane %v1407, %v1420
        %v1422 = vcombine.low %v227, %v229
        %v1423 = vcombine.high %v227, %v229
        %v1425 = vunpack.c.l.s4 1983009808
        %v1426 = vunpack.c.0.s8 %v1425
        %v1427 = vlaneseq
        %v1428 = vshrl.u32 %v1427, 7
        %v1429 = vsub.s32 %v1426, %v1428
        %v1430 = vrot.slane %v1422, %v1429
        %v1432 = vunpack.c.l.s4 1983009808
        %v1433 = vunpack.c.0.s8 %v1432
        %v1434 = vlaneseq
        %v1435 = vshrl.u32 %v1434, 7
        %v1436 = vsub.s32 %v1433, %v1435
        %v1437 = vrot.slane %v1423, %v1436
        %v1438 = vcombine.low %v1382, %v1398
        %v1439 = vcombine.high %v1382, %v1398
        %v1441 = vunpack.c.l.s4 1934713408
        %v1442 = vunpack.c.0.s8 %v1441
        %v1443 = vlaneseq
        %v1444 = vshrl.u32 %v1443, 7
        %v1445 = vsub.s32 %v1442, %v1444
        %v1446 = vrot.slane %v1438, %v1445
        %v1448 = vunpack.c.l.s4 1934713408
        %v1449 = vunpack.c.0.s8 %v1448
        %v1450 = vlaneseq
        %v1451 = vshrl.u32 %v1450, 7
        %v1452 = vsub.s32 %v1449, %v1451
        %v1453 = vrot.slane %v1439, %v1452
        %v1454 = vcombine.low %v1389, %v1405
        %v1455 = vcombine.high %v1389, %v1405
        %v1457 = vunpack.c.l.s4 1934713408
        %v1458 = vunpack.c.0.s8 %v1457
        %v1459 = vlaneseq
        %v1460 = vshrl.u32 %v1459, 7
        %v1461 = vsub.s32 %v1458, %v1460
        %v1462 = vrot.slane %v1454, %v1461
        %v1464 = vunpack.c.l.s4 1934713408
        %v1465 = vunpack.c.0.s8 %v1464
        %v1466 = vlaneseq
        %v1467 = vshrl.u32 %v1466, 7
        %v1468 = vsub.s32 %v1465, %v1467
        %v1469 = vrot.slane %v1455, %v1468
        %v1470 = vcombine.low %v1414, %v1430
        %v1471 = vcombine.high %v1414, %v1430
        %v1473 = vunpack.c.l.s4 1934713408
        %v1474 = vunpack.c.0.s8 %v1473
        %v1475 = vlaneseq
        %v1476 = vshrl.u32 %v1475, 7
        %v1477 = vsub.s32 %v1474, %v1476
        %v1478 = vrot.slane %v1470, %v1477
        %v1480 = vunpack.c.l.s4 1934713408
        %v1481 = vunpack.c.0.s8 %v1480
        %v1482 = vlaneseq
        %v1483 = vshrl.u32 %v1482, 7
        %v1484 = vsub.s32 %v1481, %v1483
        %v1485 = vrot.slane %v1471, %v1484
        %v1486 = vcombine.low %v1421, %v1437
        %v1487 = vcombine.high %v1421, %v1437
        %v1489 = vunpack.c.l.s4 1934713408
        %v1490 = vunpack.c.0.s8 %v1489
        %v1491 = vlaneseq
        %v1492 = vshrl.u32 %v1491, 7
        %v1493 = vsub.s32 %v1490, %v1492
        %v1494 = vrot.slane %v1486, %v1493
        %v1496 = vunpack.c.l.s4 1934713408
        %v1497 = vunpack.c.0.s8 %v1496
        %v1498 = vlaneseq
        %v1499 = vshrl.u32 %v1498, 7
        %v1500 = vsub.s32 %v1497, %v1499
        %v1501 = vrot.slane %v1487, %v1500
        %v1502 = vcombine.low %v1446, %v1478
        %v1503 = vcombine.high %v1446, %v1478
        %v1504 = vcombine.low %v1453, %v1485
        %v1505 = vcombine.high %v1453, %v1485
        %v1506 = vcombine.low %v1462, %v1494
        %v1507 = vcombine.high %v1462, %v1494
        %v1508 = vcombine.low %v1469, %v1501
        %v1509 = vcombine.high %v1469, %v1501
        %v1510 = vcombine.low %v230, %v232
        %v1511 = vcombine.high %v230, %v232
        %v1513 = vunpack.c.l.s4 1983009808
        %v1514 = vunpack.c.0.s8 %v1513
        %v1515 = vlaneseq
        %v1516 = vshrl.u32 %v1515, 7
        %v1517 = vsub.s32 %v1514, %v1516
        %v1518 = vrot.slane %v1510, %v1517
        %v1520 = vunpack.c.l.s4 1983009808
        %v1521 = vunpack.c.0.s8 %v1520
        %v1522 = vlaneseq
        %v1523 = vshrl.u32 %v1522, 7
        %v1524 = vsub.s32 %v1521, %v1523
        %v1525 = vrot.slane %v1511, %v1524
        %v1526 = vcombine.low %v231, %v233
        %v1527 = vcombine.high %v231, %v233
        %v1529 = vunpack.c.l.s4 1983009808
        %v1530 = vunpack.c.0.s8 %v1529
        %v1531 = vlaneseq
        %v1532 = vshrl.u32 %v1531, 7
        %v1533 = vsub.s32 %v1530, %v1532
        %v1534 = vrot.slane %v1526, %v1533
        %v1536 = vunpack.c.l.s4 1983009808
        %v1537 = vunpack.c.0.s8 %v1536
        %v1538 = vlaneseq
        %v1539 = vshrl.u32 %v1538, 7
        %v1540 = vsub.s32 %v1537, %v1539
        %v1541 = vrot.slane %v1527, %v1540
        %v1542 = vcombine.low %v234, %v236
        %v1543 = vcombine.high %v234, %v236
        %v1545 = vunpack.c.l.s4 1983009808
        %v1546 = vunpack.c.0.s8 %v1545
        %v1547 = vlaneseq
        %v1548 = vshrl.u32 %v1547, 7
        %v1549 = vsub.s32 %v1546, %v1548
        %v1550 = vrot.slane %v1542, %v1549
        %v1552 = vunpack.c.l.s4 1983009808
        %v1553 = vunpack.c.0.s8 %v1552
        %v1554 = vlaneseq
        %v1555 = vshrl.u32 %v1554, 7
        %v1556 = vsub.s32 %v1553, %v1555
        %v1557 = vrot.slane %v1543, %v1556
        %v1558 = vcombine.low %v235, %v237
        %v1559 = vcombine.high %v235, %v237
        %v1561 = vunpack.c.l.s4 1983009808
        %v1562 = vunpack.c.0.s8 %v1561
        %v1563 = vlaneseq
        %v1564 = vshrl.u32 %v1563, 7
        %v1565 = vsub.s32 %v1562, %v1564
        %v1566 = vrot.slane %v1558, %v1565
        %v1568 = vunpack.c.l.s4 1983009808
        %v1569 = vunpack.c.0.s8 %v1568
        %v1570 = vlaneseq
        %v1571 = vshrl.u32 %v1570, 7
        %v1572 = vsub.s32 %v1569, %v1571
        %v1573 = vrot.slane %v1559, %v1572
        %v1574 = vcombine.low %v1518, %v1534
        %v1575 = vcombine.high %v1518, %v1534
        %v1577 = vunpack.c.l.s4 1934713408
        %v1578 = vunpack.c.0.s8 %v1577
        %v1579 = vlaneseq
        %v1580 = vshrl.u32 %v1579, 7
        %v1581 = vsub.s32 %v1578, %v1580
        %v1582 = vrot.slane %v1574, %v1581
        %v1584 = vunpack.c.l.s4 1934713408
        %v1585 = vunpack.c.0.s8 %v1584
        %v1586 = vlaneseq
        %v1587 = vshrl.u32 %v1586, 7
        %v1588 = vsub.s32 %v1585, %v1587
        %v1589 = vrot.slane %v1575, %v1588
        %v1590 = vcombine.low %v1525, %v1541
        %v1591 = vcombine.high %v1525, %v1541
        %v1593 = vunpack.c.l.s4 1934713408
        %v1594 = vunpack.c.0.s8 %v1593
        %v1595 = vlaneseq
        %v1596 = vshrl.u32 %v1595, 7
        %v1597 = vsub.s32 %v1594, %v1596
        %v1598 = vrot.slane %v1590, %v1597
        %v1600 = vunpack.c.l.s4 1934713408
        %v1601 = vunpack.c.0.s8 %v1600
        %v1602 = vlaneseq
        %v1603 = vshrl.u32 %v1602, 7
        %v1604 = vsub.s32 %v1601, %v1603
        %v1605 = vrot.slane %v1591, %v1604
        %v1606 = vcombine.low %v1550, %v1566
        %v1607 = vcombine.high %v1550, %v1566
        %v1609 = vunpack.c.l.s4 1934713408
        %v1610 = vunpack.c.0.s8 %v1609
        %v1611 = vlaneseq
        %v1612 = vshrl.u32 %v1611, 7
        %v1613 = vsub.s32 %v1610, %v1612
        %v1614 = vrot.slane %v1606, %v1613
        %v1616 = vunpack.c.l.s4 1934713408
        %v1617 = vunpack.c.0.s8 %v1616
        %v1618 = vlaneseq
        %v1619 = vshrl.u32 %v1618, 7
        %v1620 = vsub.s32 %v1617, %v1619
        %v1621 = vrot.slane %v1607, %v1620
        %v1622 = vcombine.low %v1557, %v1573
        %v1623 = vcombine.high %v1557, %v1573
        %v1625 = vunpack.c.l.s4 1934713408
        %v1626 = vunpack.c.0.s8 %v1625
        %v1627 = vlaneseq
        %v1628 = vshrl.u32 %v1627, 7
        %v1629 = vsub.s32 %v1626, %v1628
        %v1630 = vrot.slane %v1622, %v1629
        %v1632 = vunpack.c.l.s4 1934713408
        %v1633 = vunpack.c.0.s8 %v1632
        %v1634 = vlaneseq
        %v1635 = vshrl.u32 %v1634, 7
        %v1636 = vsub.s32 %v1633, %v1635
        %v1637 = vrot.slane %v1623, %v1636
        %v1638 = vcombine.low %v1582, %v1614
        %v1639 = vcombine.high %v1582, %v1614
        %v1640 = vcombine.low %v1589, %v1621
        %v1641 = vcombine.high %v1589, %v1621
        %v1642 = vcombine.low %v1598, %v1630
        %v1643 = vcombine.high %v1598, %v1630
        %v1644 = vcombine.low %v1605, %v1637
        %v1645 = vcombine.high %v1605, %v1637
        %v1646 = vcombine.low %v238, %v240
        %v1647 = vcombine.high %v238, %v240
        %v1649 = vunpack.c.l.s4 1983009808
        %v1650 = vunpack.c.0.s8 %v1649
        %v1651 = vlaneseq
        %v1652 = vshrl.u32 %v1651, 7
        %v1653 = vsub.s32 %v1650, %v1652
        %v1654 = vrot.slane %v1646, %v1653
        %v1656 = vunpack.c.l.s4 1983009808
        %v1657 = vunpack.c.0.s8 %v1656
        %v1658 = vlaneseq
        %v1659 = vshrl.u32 %v1658, 7
        %v1660 = vsub.s32 %v1657, %v1659
        %v1661 = vrot.slane %v1647, %v1660
        %v1662 = vcombine.low %v239, %v241
        %v1663 = vcombine.high %v239, %v241
        %v1665 = vunpack.c.l.s4 1983009808
        %v1666 = vunpack.c.0.s8 %v1665
        %v1667 = vlaneseq
        %v1668 = vshrl.u32 %v1667, 7
        %v1669 = vsub.s32 %v1666, %v1668
        %v1670 = vrot.slane %v1662, %v1669
        %v1672 = vunpack.c.l.s4 1983009808
        %v1673 = vunpack.c.0.s8 %v1672
        %v1674 = vlaneseq
        %v1675 = vshrl.u32 %v1674, 7
        %v1676 = vsub.s32 %v1673, %v1675
        %v1677 = vrot.slane %v1663, %v1676
        %v1678 = vcombine.low %v242, %v244
        %v1679 = vcombine.high %v242, %v244
        %v1681 = vunpack.c.l.s4 1983009808
        %v1682 = vunpack.c.0.s8 %v1681
        %v1683 = vlaneseq
        %v1684 = vshrl.u32 %v1683, 7
        %v1685 = vsub.s32 %v1682, %v1684
        %v1686 = vrot.slane %v1678, %v1685
        %v1688 = vunpack.c.l.s4 1983009808
        %v1689 = vunpack.c.0.s8 %v1688
        %v1690 = vlaneseq
        %v1691 = vshrl.u32 %v1690, 7
        %v1692 = vsub.s32 %v1689, %v1691
        %v1693 = vrot.slane %v1679, %v1692
        %v1694 = vcombine.low %v243, %v245
        %v1695 = vcombine.high %v243, %v245
        %v1697 = vunpack.c.l.s4 1983009808
        %v1698 = vunpack.c.0.s8 %v1697
        %v1699 = vlaneseq
        %v1700 = vshrl.u32 %v1699, 7
        %v1701 = vsub.s32 %v1698, %v1700
        %v1702 = vrot.slane %v1694, %v1701
        %v1704 = vunpack.c.l.s4 1983009808
        %v1705 = vunpack.c.0.s8 %v1704
        %v1706 = vlaneseq
        %v1707 = vshrl.u32 %v1706, 7
        %v1708 = vsub.s32 %v1705, %v1707
        %v1709 = vrot.slane %v1695, %v1708
        %v1710 = vcombine.low %v1654, %v1670
        %v1711 = vcombine.high %v1654, %v1670
        %v1713 = vunpack.c.l.s4 1934713408
        %v1714 = vunpack.c.0.s8 %v1713
        %v1715 = vlaneseq
        %v1716 = vshrl.u32 %v1715, 7
        %v1717 = vsub.s32 %v1714, %v1716
        %v1718 = vrot.slane %v1710, %v1717
        %v1720 = vunpack.c.l.s4 1934713408
        %v1721 = vunpack.c.0.s8 %v1720
        %v1722 = vlaneseq
        %v1723 = vshrl.u32 %v1722, 7
        %v1724 = vsub.s32 %v1721, %v1723
        %v1725 = vrot.slane %v1711, %v1724
        %v1726 = vcombine.low %v1661, %v1677
        %v1727 = vcombine.high %v1661, %v1677
        %v1729 = vunpack.c.l.s4 1934713408
        %v1730 = vunpack.c.0.s8 %v1729
        %v1731 = vlaneseq
        %v1732 = vshrl.u32 %v1731, 7
        %v1733 = vsub.s32 %v1730, %v1732
        %v1734 = vrot.slane %v1726, %v1733
        %v1736 = vunpack.c.l.s4 1934713408
        %v1737 = vunpack.c.0.s8 %v1736
        %v1738 = vlaneseq
        %v1739 = vshrl.u32 %v1738, 7
        %v1740 = vsub.s32 %v1737, %v1739
        %v1741 = vrot.slane %v1727, %v1740
        %v1742 = vcombine.low %v1686, %v1702
        %v1743 = vcombine.high %v1686, %v1702
        %v1745 = vunpack.c.l.s4 1934713408
        %v1746 = vunpack.c.0.s8 %v1745
        %v1747 = vlaneseq
        %v1748 = vshrl.u32 %v1747, 7
        %v1749 = vsub.s32 %v1746, %v1748
        %v1750 = vrot.slane %v1742, %v1749
        %v1752 = vunpack.c.l.s4 1934713408
        %v1753 = vunpack.c.0.s8 %v1752
        %v1754 = vlaneseq
        %v1755 = vshrl.u32 %v1754, 7
        %v1756 = vsub.s32 %v1753, %v1755
        %v1757 = vrot.slane %v1743, %v1756
        %v1758 = vcombine.low %v1693, %v1709
        %v1759 = vcombine.high %v1693, %v1709
        %v1761 = vunpack.c.l.s4 1934713408
        %v1762 = vunpack.c.0.s8 %v1761
        %v1763 = vlaneseq
        %v1764 = vshrl.u32 %v1763, 7
        %v1765 = vsub.s32 %v1762, %v1764
        %v1766 = vrot.slane %v1758, %v1765
        %v1768 = vunpack.c.l.s4 1934713408
        %v1769 = vunpack.c.0.s8 %v1768
        %v1770 = vlaneseq
        %v1771 = vshrl.u32 %v1770, 7
        %v1772 = vsub.s32 %v1769, %v1771
        %v1773 = vrot.slane %v1759, %v1772
        %v1774 = vcombine.low %v1718, %v1750
        %v1775 = vcombine.high %v1718, %v1750
        %v1776 = vcombine.low %v1725, %v1757
        %v1777 = vcombine.high %v1725, %v1757
        %v1778 = vcombine.low %v1734, %v1766
        %v1779 = vcombine.high %v1734, %v1766
        %v1780 = vcombine.low %v1741, %v1773
        %v1781 = vcombine.high %v1741, %v1773
        %v1782 = vcombine.low %v246, %v248
        %v1783 = vcombine.high %v246, %v248
        %v1785 = vunpack.c.l.s4 1983009808
        %v1786 = vunpack.c.0.s8 %v1785
        %v1787 = vlaneseq
        %v1788 = vshrl.u32 %v1787, 7
        %v1789 = vsub.s32 %v1786, %v1788
        %v1790 = vrot.slane %v1782, %v1789
        %v1792 = vunpack.c.l.s4 1983009808
        %v1793 = vunpack.c.0.s8 %v1792
        %v1794 = vlaneseq
        %v1795 = vshrl.u32 %v1794, 7
        %v1796 = vsub.s32 %v1793, %v1795
        %v1797 = vrot.slane %v1783, %v1796
        %v1798 = vcombine.low %v247, %v249
        %v1799 = vcombine.high %v247, %v249
        %v1801 = vunpack.c.l.s4 1983009808
        %v1802 = vunpack.c.0.s8 %v1801
        %v1803 = vlaneseq
        %v1804 = vshrl.u32 %v1803, 7
        %v1805 = vsub.s32 %v1802, %v1804
        %v1806 = vrot.slane %v1798, %v1805
        %v1808 = vunpack.c.l.s4 1983009808
        %v1809 = vunpack.c.0.s8 %v1808
        %v1810 = vlaneseq
        %v1811 = vshrl.u32 %v1810, 7
        %v1812 = vsub.s32 %v1809, %v1811
        %v1813 = vrot.slane %v1799, %v1812
        %v1814 = vcombine.low %v250, %v252
        %v1815 = vcombine.high %v250, %v252
        %v1817 = vunpack.c.l.s4 1983009808
        %v1818 = vunpack.c.0.s8 %v1817
        %v1819 = vlaneseq
        %v1820 = vshrl.u32 %v1819, 7
        %v1821 = vsub.s32 %v1818, %v1820
        %v1822 = vrot.slane %v1814, %v1821
        %v1824 = vunpack.c.l.s4 1983009808
        %v1825 = vunpack.c.0.s8 %v1824
        %v1826 = vlaneseq
        %v1827 = vshrl.u32 %v1826, 7
        %v1828 = vsub.s32 %v1825, %v1827
        %v1829 = vrot.slane %v1815, %v1828
        %v1830 = vcombine.low %v251, %v253
        %v1831 = vcombine.high %v251, %v253
        %v1833 = vunpack.c.l.s4 1983009808
        %v1834 = vunpack.c.0.s8 %v1833
        %v1835 = vlaneseq
        %v1836 = vshrl.u32 %v1835, 7
        %v1837 = vsub.s32 %v1834, %v1836
        %v1838 = vrot.slane %v1830, %v1837
        %v1840 = vunpack.c.l.s4 1983009808
        %v1841 = vunpack.c.0.s8 %v1840
        %v1842 = vlaneseq
        %v1843 = vshrl.u32 %v1842, 7
        %v1844 = vsub.s32 %v1841, %v1843
        %v1845 = vrot.slane %v1831, %v1844
        %v1846 = vcombine.low %v1790, %v1806
        %v1847 = vcombine.high %v1790, %v1806
        %v1849 = vunpack.c.l.s4 1934713408
        %v1850 = vunpack.c.0.s8 %v1849
        %v1851 = vlaneseq
        %v1852 = vshrl.u32 %v1851, 7
        %v1853 = vsub.s32 %v1850, %v1852
        %v1854 = vrot.slane %v1846, %v1853
        %v1856 = vunpack.c.l.s4 1934713408
        %v1857 = vunpack.c.0.s8 %v1856
        %v1858 = vlaneseq
        %v1859 = vshrl.u32 %v1858, 7
        %v1860 = vsub.s32 %v1857, %v1859
        %v1861 = vrot.slane %v1847, %v1860
        %v1862 = vcombine.low %v1797, %v1813
        %v1863 = vcombine.high %v1797, %v1813
        %v1865 = vunpack.c.l.s4 1934713408
        %v1866 = vunpack.c.0.s8 %v1865
        %v1867 = vlaneseq
        %v1868 = vshrl.u32 %v1867, 7
        %v1869 = vsub.s32 %v1866, %v1868
        %v1870 = vrot.slane %v1862, %v1869
        %v1872 = vunpack.c.l.s4 1934713408
        %v1873 = vunpack.c.0.s8 %v1872
        %v1874 = vlaneseq
        %v1875 = vshrl.u32 %v1874, 7
        %v1876 = vsub.s32 %v1873, %v1875
        %v1877 = vrot.slane %v1863, %v1876
        %v1878 = vcombine.low %v1822, %v1838
        %v1879 = vcombine.high %v1822, %v1838
        %v1881 = vunpack.c.l.s4 1934713408
        %v1882 = vunpack.c.0.s8 %v1881
        %v1883 = vlaneseq
        %v1884 = vshrl.u32 %v1883, 7
        %v1885 = vsub.s32 %v1882, %v1884
        %v1886 = vrot.slane %v1878, %v1885
        %v1888 = vunpack.c.l.s4 1934713408
        %v1889 = vunpack.c.0.s8 %v1888
        %v1890 = vlaneseq
        %v1891 = vshrl.u32 %v1890, 7
        %v1892 = vsub.s32 %v1889, %v1891
        %v1893 = vrot.slane %v1879, %v1892
        %v1894 = vcombine.low %v1829, %v1845
        %v1895 = vcombine.high %v1829, %v1845
        %v1897 = vunpack.c.l.s4 1934713408
        %v1898 = vunpack.c.0.s8 %v1897
        %v1899 = vlaneseq
        %v1900 = vshrl.u32 %v1899, 7
        %v1901 = vsub.s32 %v1898, %v1900
        %v1902 = vrot.slane %v1894, %v1901
        %v1904 = vunpack.c.l.s4 1934713408
        %v1905 = vunpack.c.0.s8 %v1904
        %v1906 = vlaneseq
        %v1907 = vshrl.u32 %v1906, 7
        %v1908 = vsub.s32 %v1905, %v1907
        %v1909 = vrot.slane %v1895, %v1908
        %v1910 = vcombine.low %v1854, %v1886
        %v1911 = vcombine.high %v1854, %v1886
        %v1912 = vcombine.low %v1861, %v1893
        %v1913 = vcombine.high %v1861, %v1893
        %v1914 = vcombine.low %v1870, %v1902
        %v1915 = vcombine.high %v1870, %v1902
        %v1916 = vcombine.low %v1877, %v1909
        %v1917 = vcombine.high %v1877, %v1909
        %v1918 = vcombine.low %v254, %v256
        %v1919 = vcombine.high %v254, %v256
        %v1921 = vunpack.c.l.s4 1983009808
        %v1922 = vunpack.c.0.s8 %v1921
        %v1923 = vlaneseq
        %v1924 = vshrl.u32 %v1923, 7
        %v1925 = vsub.s32 %v1922, %v1924
        %v1926 = vrot.slane %v1918, %v1925
        %v1928 = vunpack.c.l.s4 1983009808
        %v1929 = vunpack.c.0.s8 %v1928
        %v1930 = vlaneseq
        %v1931 = vshrl.u32 %v1930, 7
        %v1932 = vsub.s32 %v1929, %v1931
        %v1933 = vrot.slane %v1919, %v1932
        %v1934 = vcombine.low %v255, %v257
        %v1935 = vcombine.high %v255, %v257
        %v1937 = vunpack.c.l.s4 1983009808
        %v1938 = vunpack.c.0.s8 %v1937
        %v1939 = vlaneseq
        %v1940 = vshrl.u32 %v1939, 7
        %v1941 = vsub.s32 %v1938, %v1940
        %v1942 = vrot.slane %v1934, %v1941
        %v1944 = vunpack.c.l.s4 1983009808
        %v1945 = vunpack.c.0.s8 %v1944
        %v1946 = vlaneseq
        %v1947 = vshrl.u32 %v1946, 7
        %v1948 = vsub.s32 %v1945, %v1947
        %v1949 = vrot.slane %v1935, %v1948
        %v1950 = vcombine.low %v258, %v260
        %v1951 = vcombine.high %v258, %v260
        %v1953 = vunpack.c.l.s4 1983009808
        %v1954 = vunpack.c.0.s8 %v1953
        %v1955 = vlaneseq
        %v1956 = vshrl.u32 %v1955, 7
        %v1957 = vsub.s32 %v1954, %v1956
        %v1958 = vrot.slane %v1950, %v1957
        %v1960 = vunpack.c.l.s4 1983009808
        %v1961 = vunpack.c.0.s8 %v1960
        %v1962 = vlaneseq
        %v1963 = vshrl.u32 %v1962, 7
        %v1964 = vsub.s32 %v1961, %v1963
        %v1965 = vrot.slane %v1951, %v1964
        %v1966 = vcombine.low %v259, %v261
        %v1967 = vcombine.high %v259, %v261
        %v1969 = vunpack.c.l.s4 1983009808
        %v1970 = vunpack.c.0.s8 %v1969
        %v1971 = vlaneseq
        %v1972 = vshrl.u32 %v1971, 7
        %v1973 = vsub.s32 %v1970, %v1972
        %v1974 = vrot.slane %v1966, %v1973
        %v1976 = vunpack.c.l.s4 1983009808
        %v1977 = vunpack.c.0.s8 %v1976
        %v1978 = vlaneseq
        %v1979 = vshrl.u32 %v1978, 7
        %v1980 = vsub.s32 %v1977, %v1979
        %v1981 = vrot.slane %v1967, %v1980
        %v1982 = vcombine.low %v1926, %v1942
        %v1983 = vcombine.high %v1926, %v1942
        %v1985 = vunpack.c.l.s4 1934713408
        %v1986 = vunpack.c.0.s8 %v1985
        %v1987 = vlaneseq
        %v1988 = vshrl.u32 %v1987, 7
        %v1989 = vsub.s32 %v1986, %v1988
        %v1990 = vrot.slane %v1982, %v1989
        %v1992 = vunpack.c.l.s4 1934713408
        %v1993 = vunpack.c.0.s8 %v1992
        %v1994 = vlaneseq
        %v1995 = vshrl.u32 %v1994, 7
        %v1996 = vsub.s32 %v1993, %v1995
        %v1997 = vrot.slane %v1983, %v1996
        %v1998 = vcombine.low %v1933, %v1949
        %v1999 = vcombine.high %v1933, %v1949
        %v2001 = vunpack.c.l.s4 1934713408
        %v2002 = vunpack.c.0.s8 %v2001
        %v2003 = vlaneseq
        %v2004 = vshrl.u32 %v2003, 7
        %v2005 = vsub.s32 %v2002, %v2004
        %v2006 = vrot.slane %v1998, %v2005
        %v2008 = vunpack.c.l.s4 1934713408
        %v2009 = vunpack.c.0.s8 %v2008
        %v2010 = vlaneseq
        %v2011 = vshrl.u32 %v2010, 7
        %v2012 = vsub.s32 %v2009, %v2011
        %v2013 = vrot.slane %v1999, %v2012
        %v2014 = vcombine.low %v1958, %v1974
        %v2015 = vcombine.high %v1958, %v1974
        %v2017 = vunpack.c.l.s4 1934713408
        %v2018 = vunpack.c.0.s8 %v2017
        %v2019 = vlaneseq
        %v2020 = vshrl.u32 %v2019, 7
        %v2021 = vsub.s32 %v2018, %v2020
        %v2022 = vrot.slane %v2014, %v2021
        %v2024 = vunpack.c.l.s4 1934713408
        %v2025 = vunpack.c.0.s8 %v2024
        %v2026 = vlaneseq
        %v2027 = vshrl.u32 %v2026, 7
        %v2028 = vsub.s32 %v2025, %v2027
        %v2029 = vrot.slane %v2015, %v2028
        %v2030 = vcombine.low %v1965, %v1981
        %v2031 = vcombine.high %v1965, %v1981
        %v2033 = vunpack.c.l.s4 1934713408
        %v2034 = vunpack.c.0.s8 %v2033
        %v2035 = vlaneseq
        %v2036 = vshrl.u32 %v2035, 7
        %v2037 = vsub.s32 %v2034, %v2036
        %v2038 = vrot.slane %v2030, %v2037
        %v2040 = vunpack.c.l.s4 1934713408
        %v2041 = vunpack.c.0.s8 %v2040
        %v2042 = vlaneseq
        %v2043 = vshrl.u32 %v2042, 7
        %v2044 = vsub.s32 %v2041, %v2043
        %v2045 = vrot.slane %v2031, %v2044
        %v2046 = vcombine.low %v1990, %v2022
        %v2047 = vcombine.high %v1990, %v2022
        %v2048 = vcombine.low %v1997, %v2029
        %v2049 = vcombine.high %v1997, %v2029
        %v2050 = vcombine.low %v2006, %v2038
        %v2051 = vcombine.high %v2006, %v2038
        %v2052 = vcombine.low %v2013, %v2045
        %v2053 = vcombine.high %v2013, %v2045
        %v2054 = vcombine.low %v262, %v264
        %v2055 = vcombine.high %v262, %v264
        %v2057 = vunpack.c.l.s4 1983009808
        %v2058 = vunpack.c.0.s8 %v2057
        %v2059 = vlaneseq
        %v2060 = vshrl.u32 %v2059, 7
        %v2061 = vsub.s32 %v2058, %v2060
        %v2062 = vrot.slane %v2054, %v2061
        %v2064 = vunpack.c.l.s4 1983009808
        %v2065 = vunpack.c.0.s8 %v2064
        %v2066 = vlaneseq
        %v2067 = vshrl.u32 %v2066, 7
        %v2068 = vsub.s32 %v2065, %v2067
        %v2069 = vrot.slane %v2055, %v2068
        %v2070 = vcombine.low %v263, %v265
        %v2071 = vcombine.high %v263, %v265
        %v2073 = vunpack.c.l.s4 1983009808
        %v2074 = vunpack.c.0.s8 %v2073
        %v2075 = vlaneseq
        %v2076 = vshrl.u32 %v2075, 7
        %v2077 = vsub.s32 %v2074, %v2076
        %v2078 = vrot.slane %v2070, %v2077
        %v2080 = vunpack.c.l.s4 1983009808
        %v2081 = vunpack.c.0.s8 %v2080
        %v2082 = vlaneseq
        %v2083 = vshrl.u32 %v2082, 7
        %v2084 = vsub.s32 %v2081, %v2083
        %v2085 = vrot.slane %v2071, %v2084
        %v2086 = vcombine.low %v266, %v268
        %v2087 = vcombine.high %v266, %v268
        %v2089 = vunpack.c.l.s4 1983009808
        %v2090 = vunpack.c.0.s8 %v2089
        %v2091 = vlaneseq
        %v2092 = vshrl.u32 %v2091, 7
        %v2093 = vsub.s32 %v2090, %v2092
        %v2094 = vrot.slane %v2086, %v2093
        %v2096 = vunpack.c.l.s4 1983009808
        %v2097 = vunpack.c.0.s8 %v2096
        %v2098 = vlaneseq
        %v2099 = vshrl.u32 %v2098, 7
        %v2100 = vsub.s32 %v2097, %v2099
        %v2101 = vrot.slane %v2087, %v2100
        %v2102 = vcombine.low %v267, %v269
        %v2103 = vcombine.high %v267, %v269
        %v2105 = vunpack.c.l.s4 1983009808
        %v2106 = vunpack.c.0.s8 %v2105
        %v2107 = vlaneseq
        %v2108 = vshrl.u32 %v2107, 7
        %v2109 = vsub.s32 %v2106, %v2108
        %v2110 = vrot.slane %v2102, %v2109
        %v2112 = vunpack.c.l.s4 1983009808
        %v2113 = vunpack.c.0.s8 %v2112
        %v2114 = vlaneseq
        %v2115 = vshrl.u32 %v2114, 7
        %v2116 = vsub.s32 %v2113, %v2115
        %v2117 = vrot.slane %v2103, %v2116
        %v2118 = vcombine.low %v2062, %v2078
        %v2119 = vcombine.high %v2062, %v2078
        %v2121 = vunpack.c.l.s4 1934713408
        %v2122 = vunpack.c.0.s8 %v2121
        %v2123 = vlaneseq
        %v2124 = vshrl.u32 %v2123, 7
        %v2125 = vsub.s32 %v2122, %v2124
        %v2126 = vrot.slane %v2118, %v2125
        %v2128 = vunpack.c.l.s4 1934713408
        %v2129 = vunpack.c.0.s8 %v2128
        %v2130 = vlaneseq
        %v2131 = vshrl.u32 %v2130, 7
        %v2132 = vsub.s32 %v2129, %v2131
        %v2133 = vrot.slane %v2119, %v2132
        %v2134 = vcombine.low %v2069, %v2085
        %v2135 = vcombine.high %v2069, %v2085
        %v2137 = vunpack.c.l.s4 1934713408
        %v2138 = vunpack.c.0.s8 %v2137
        %v2139 = vlaneseq
        %v2140 = vshrl.u32 %v2139, 7
        %v2141 = vsub.s32 %v2138, %v2140
        %v2142 = vrot.slane %v2134, %v2141
        %v2144 = vunpack.c.l.s4 1934713408
        %v2145 = vunpack.c.0.s8 %v2144
        %v2146 = vlaneseq
        %v2147 = vshrl.u32 %v2146, 7
        %v2148 = vsub.s32 %v2145, %v2147
        %v2149 = vrot.slane %v2135, %v2148
        %v2150 = vcombine.low %v2094, %v2110
        %v2151 = vcombine.high %v2094, %v2110
        %v2153 = vunpack.c.l.s4 1934713408
        %v2154 = vunpack.c.0.s8 %v2153
        %v2155 = vlaneseq
        %v2156 = vshrl.u32 %v2155, 7
        %v2157 = vsub.s32 %v2154, %v2156
        %v2158 = vrot.slane %v2150, %v2157
        %v2160 = vunpack.c.l.s4 1934713408
        %v2161 = vunpack.c.0.s8 %v2160
        %v2162 = vlaneseq
        %v2163 = vshrl.u32 %v2162, 7
        %v2164 = vsub.s32 %v2161, %v2163
        %v2165 = vrot.slane %v2151, %v2164
        %v2166 = vcombine.low %v2101, %v2117
        %v2167 = vcombine.high %v2101, %v2117
        %v2169 = vunpack.c.l.s4 1934713408
        %v2170 = vunpack.c.0.s8 %v2169
        %v2171 = vlaneseq
        %v2172 = vshrl.u32 %v2171, 7
        %v2173 = vsub.s32 %v2170, %v2172
        %v2174 = vrot.slane %v2166, %v2173
        %v2176 = vunpack.c.l.s4 1934713408
        %v2177 = vunpack.c.0.s8 %v2176
        %v2178 = vlaneseq
        %v2179 = vshrl.u32 %v2178, 7
        %v2180 = vsub.s32 %v2177, %v2179
        %v2181 = vrot.slane %v2167, %v2180
        %v2182 = vcombine.low %v2126, %v2158
        %v2183 = vcombine.high %v2126, %v2158
        %v2184 = vcombine.low %v2133, %v2165
        %v2185 = vcombine.high %v2133, %v2165
        %v2186 = vcombine.low %v2142, %v2174
        %v2187 = vcombine.high %v2142, %v2174
        %v2188 = vcombine.low %v2149, %v2181
        %v2189 = vcombine.high %v2149, %v2181
        %v2190 = vcombine.low %v270, %v272
        %v2191 = vcombine.high %v270, %v272
        %v2193 = vunpack.c.l.s4 1983009808
        %v2194 = vunpack.c.0.s8 %v2193
        %v2195 = vlaneseq
        %v2196 = vshrl.u32 %v2195, 7
        %v2197 = vsub.s32 %v2194, %v2196
        %v2198 = vrot.slane %v2190, %v2197
        %v2200 = vunpack.c.l.s4 1983009808
        %v2201 = vunpack.c.0.s8 %v2200
        %v2202 = vlaneseq
        %v2203 = vshrl.u32 %v2202, 7
        %v2204 = vsub.s32 %v2201, %v2203
        %v2205 = vrot.slane %v2191, %v2204
        %v2206 = vcombine.low %v271, %v273
        %v2207 = vcombine.high %v271, %v273
        %v2209 = vunpack.c.l.s4 1983009808
        %v2210 = vunpack.c.0.s8 %v2209
        %v2211 = vlaneseq
        %v2212 = vshrl.u32 %v2211, 7
        %v2213 = vsub.s32 %v2210, %v2212
        %v2214 = vrot.slane %v2206, %v2213
        %v2216 = vunpack.c.l.s4 1983009808
        %v2217 = vunpack.c.0.s8 %v2216
        %v2218 = vlaneseq
        %v2219 = vshrl.u32 %v2218, 7
        %v2220 = vsub.s32 %v2217, %v2219
        %v2221 = vrot.slane %v2207, %v2220
        %v2222 = vcombine.low %v274, %v276
        %v2223 = vcombine.high %v274, %v276
        %v2225 = vunpack.c.l.s4 1983009808
        %v2226 = vunpack.c.0.s8 %v2225
        %v2227 = vlaneseq
        %v2228 = vshrl.u32 %v2227, 7
        %v2229 = vsub.s32 %v2226, %v2228
        %v2230 = vrot.slane %v2222, %v2229
        %v2232 = vunpack.c.l.s4 1983009808
        %v2233 = vunpack.c.0.s8 %v2232
        %v2234 = vlaneseq
        %v2235 = vshrl.u32 %v2234, 7
        %v2236 = vsub.s32 %v2233, %v2235
        %v2237 = vrot.slane %v2223, %v2236
        %v2238 = vcombine.low %v275, %v277
        %v2239 = vcombine.high %v275, %v277
        %v2241 = vunpack.c.l.s4 1983009808
        %v2242 = vunpack.c.0.s8 %v2241
        %v2243 = vlaneseq
        %v2244 = vshrl.u32 %v2243, 7
        %v2245 = vsub.s32 %v2242, %v2244
        %v2246 = vrot.slane %v2238, %v2245
        %v2248 = vunpack.c.l.s4 1983009808
        %v2249 = vunpack.c.0.s8 %v2248
        %v2250 = vlaneseq
        %v2251 = vshrl.u32 %v2250, 7
        %v2252 = vsub.s32 %v2249, %v2251
        %v2253 = vrot.slane %v2239, %v2252
        %v2254 = vcombine.low %v2198, %v2214
        %v2255 = vcombine.high %v2198, %v2214
        %v2257 = vunpack.c.l.s4 1934713408
        %v2258 = vunpack.c.0.s8 %v2257
        %v2259 = vlaneseq
        %v2260 = vshrl.u32 %v2259, 7
        %v2261 = vsub.s32 %v2258, %v2260
        %v2262 = vrot.slane %v2254, %v2261
        %v2264 = vunpack.c.l.s4 1934713408
        %v2265 = vunpack.c.0.s8 %v2264
        %v2266 = vlaneseq
        %v2267 = vshrl.u32 %v2266, 7
        %v2268 = vsub.s32 %v2265, %v2267
        %v2269 = vrot.slane %v2255, %v2268
        %v2270 = vcombine.low %v2205, %v2221
        %v2271 = vcombine.high %v2205, %v2221
        %v2273 = vunpack.c.l.s4 1934713408
        %v2274 = vunpack.c.0.s8 %v2273
        %v2275 = vlaneseq
        %v2276 = vshrl.u32 %v2275, 7
        %v2277 = vsub.s32 %v2274, %v2276
        %v2278 = vrot.slane %v2270, %v2277
        %v2280 = vunpack.c.l.s4 1934713408
        %v2281 = vunpack.c.0.s8 %v2280
        %v2282 = vlaneseq
        %v2283 = vshrl.u32 %v2282, 7
        %v2284 = vsub.s32 %v2281, %v2283
        %v2285 = vrot.slane %v2271, %v2284
        %v2286 = vcombine.low %v2230, %v2246
        %v2287 = vcombine.high %v2230, %v2246
        %v2289 = vunpack.c.l.s4 1934713408
        %v2290 = vunpack.c.0.s8 %v2289
        %v2291 = vlaneseq
        %v2292 = vshrl.u32 %v2291, 7
        %v2293 = vsub.s32 %v2290, %v2292
        %v2294 = vrot.slane %v2286, %v2293
        %v2296 = vunpack.c.l.s4 1934713408
        %v2297 = vunpack.c.0.s8 %v2296
        %v2298 = vlaneseq
        %v2299 = vshrl.u32 %v2298, 7
        %v2300 = vsub.s32 %v2297, %v2299
        %v2301 = vrot.slane %v2287, %v2300
        %v2302 = vcombine.low %v2237, %v2253
        %v2303 = vcombine.high %v2237, %v2253
        %v2305 = vunpack.c.l.s4 1934713408
        %v2306 = vunpack.c.0.s8 %v2305
        %v2307 = vlaneseq
        %v2308 = vshrl.u32 %v2307, 7
        %v2309 = vsub.s32 %v2306, %v2308
        %v2310 = vrot.slane %v2302, %v2309
        %v2312 = vunpack.c.l.s4 1934713408
        %v2313 = vunpack.c.0.s8 %v2312
        %v2314 = vlaneseq
        %v2315 = vshrl.u32 %v2314, 7
        %v2316 = vsub.s32 %v2313, %v2315
        %v2317 = vrot.slane %v2303, %v2316
        %v2318 = vcombine.low %v2262, %v2294
        %v2319 = vcombine.high %v2262, %v2294
        %v2320 = vcombine.low %v2269, %v2301
        %v2321 = vcombine.high %v2269, %v2301
        %v2322 = vcombine.low %v2278, %v2310
        %v2323 = vcombine.high %v2278, %v2310
        %v2324 = vcombine.low %v2285, %v2317
        %v2325 = vcombine.high %v2285, %v2317
        %v2326 = vcombine.low %v278, %v280
        %v2327 = vcombine.high %v278, %v280
        %v2329 = vunpack.c.l.s4 1983009808
        %v2330 = vunpack.c.0.s8 %v2329
        %v2331 = vlaneseq
        %v2332 = vshrl.u32 %v2331, 7
        %v2333 = vsub.s32 %v2330, %v2332
        %v2334 = vrot.slane %v2326, %v2333
        %v2336 = vunpack.c.l.s4 1983009808
        %v2337 = vunpack.c.0.s8 %v2336
        %v2338 = vlaneseq
        %v2339 = vshrl.u32 %v2338, 7
        %v2340 = vsub.s32 %v2337, %v2339
        %v2341 = vrot.slane %v2327, %v2340
        %v2342 = vcombine.low %v279, %v281
        %v2343 = vcombine.high %v279, %v281
        %v2345 = vunpack.c.l.s4 1983009808
        %v2346 = vunpack.c.0.s8 %v2345
        %v2347 = vlaneseq
        %v2348 = vshrl.u32 %v2347, 7
        %v2349 = vsub.s32 %v2346, %v2348
        %v2350 = vrot.slane %v2342, %v2349
        %v2352 = vunpack.c.l.s4 1983009808
        %v2353 = vunpack.c.0.s8 %v2352
        %v2354 = vlaneseq
        %v2355 = vshrl.u32 %v2354, 7
        %v2356 = vsub.s32 %v2353, %v2355
        %v2357 = vrot.slane %v2343, %v2356
        %v2358 = vcombine.low %v282, %v284
        %v2359 = vcombine.high %v282, %v284
        %v2361 = vunpack.c.l.s4 1983009808
        %v2362 = vunpack.c.0.s8 %v2361
        %v2363 = vlaneseq
        %v2364 = vshrl.u32 %v2363, 7
        %v2365 = vsub.s32 %v2362, %v2364
        %v2366 = vrot.slane %v2358, %v2365
        %v2368 = vunpack.c.l.s4 1983009808
        %v2369 = vunpack.c.0.s8 %v2368
        %v2370 = vlaneseq
        %v2371 = vshrl.u32 %v2370, 7
        %v2372 = vsub.s32 %v2369, %v2371
        %v2373 = vrot.slane %v2359, %v2372
        %v2374 = vcombine.low %v283, %v285
        %v2375 = vcombine.high %v283, %v285
        %v2377 = vunpack.c.l.s4 1983009808
        %v2378 = vunpack.c.0.s8 %v2377
        %v2379 = vlaneseq
        %v2380 = vshrl.u32 %v2379, 7
        %v2381 = vsub.s32 %v2378, %v2380
        %v2382 = vrot.slane %v2374, %v2381
        %v2384 = vunpack.c.l.s4 1983009808
        %v2385 = vunpack.c.0.s8 %v2384
        %v2386 = vlaneseq
        %v2387 = vshrl.u32 %v2386, 7
        %v2388 = vsub.s32 %v2385, %v2387
        %v2389 = vrot.slane %v2375, %v2388
        %v2390 = vcombine.low %v2334, %v2350
        %v2391 = vcombine.high %v2334, %v2350
        %v2393 = vunpack.c.l.s4 1934713408
        %v2394 = vunpack.c.0.s8 %v2393
        %v2395 = vlaneseq
        %v2396 = vshrl.u32 %v2395, 7
        %v2397 = vsub.s32 %v2394, %v2396
        %v2398 = vrot.slane %v2390, %v2397
        %v2400 = vunpack.c.l.s4 1934713408
        %v2401 = vunpack.c.0.s8 %v2400
        %v2402 = vlaneseq
        %v2403 = vshrl.u32 %v2402, 7
        %v2404 = vsub.s32 %v2401, %v2403
        %v2405 = vrot.slane %v2391, %v2404
        %v2406 = vcombine.low %v2341, %v2357
        %v2407 = vcombine.high %v2341, %v2357
        %v2409 = vunpack.c.l.s4 1934713408
        %v2410 = vunpack.c.0.s8 %v2409
        %v2411 = vlaneseq
        %v2412 = vshrl.u32 %v2411, 7
        %v2413 = vsub.s32 %v2410, %v2412
        %v2414 = vrot.slane %v2406, %v2413
        %v2416 = vunpack.c.l.s4 1934713408
        %v2417 = vunpack.c.0.s8 %v2416
        %v2418 = vlaneseq
        %v2419 = vshrl.u32 %v2418, 7
        %v2420 = vsub.s32 %v2417, %v2419
        %v2421 = vrot.slane %v2407, %v2420
        %v2422 = vcombine.low %v2366, %v2382
        %v2423 = vcombine.high %v2366, %v2382
        %v2425 = vunpack.c.l.s4 1934713408
        %v2426 = vunpack.c.0.s8 %v2425
        %v2427 = vlaneseq
        %v2428 = vshrl.u32 %v2427, 7
        %v2429 = vsub.s32 %v2426, %v2428
        %v2430 = vrot.slane %v2422, %v2429
        %v2432 = vunpack.c.l.s4 1934713408
        %v2433 = vunpack.c.0.s8 %v2432
        %v2434 = vlaneseq
        %v2435 = vshrl.u32 %v2434, 7
        %v2436 = vsub.s32 %v2433, %v2435
        %v2437 = vrot.slane %v2423, %v2436
        %v2438 = vcombine.low %v2373, %v2389
        %v2439 = vcombine.high %v2373, %v2389
        %v2441 = vunpack.c.l.s4 1934713408
        %v2442 = vunpack.c.0.s8 %v2441
        %v2443 = vlaneseq
        %v2444 = vshrl.u32 %v2443, 7
        %v2445 = vsub.s32 %v2442, %v2444
        %v2446 = vrot.slane %v2438, %v2445
        %v2448 = vunpack.c.l.s4 1934713408
        %v2449 = vunpack.c.0.s8 %v2448
        %v2450 = vlaneseq
        %v2451 = vshrl.u32 %v2450, 7
        %v2452 = vsub.s32 %v2449, %v2451
        %v2453 = vrot.slane %v2439, %v2452
        %v2454 = vcombine.low %v2398, %v2430
        %v2455 = vcombine.high %v2398, %v2430
        %v2456 = vcombine.low %v2405, %v2437
        %v2457 = vcombine.high %v2405, %v2437
        %v2458 = vcombine.low %v2414, %v2446
        %v2459 = vcombine.high %v2414, %v2446
        %v2460 = vcombine.low %v2421, %v2453
        %v2461 = vcombine.high %v2421, %v2453
        %2462 = vmin.xlane.f32.xlu0 %v414
        %v2463 = vpop.xlane.xlu0 %2462
        %2464 = vmin.xlane.f32.xlu0 %v415
        %v2465 = vpop.xlane.xlu0 %2464
        %2466 = vmin.xlane.f32.xlu0 %v416
        %v2467 = vpop.xlane.xlu0 %2466
        %2468 = vmin.xlane.f32.xlu0 %v417
        %v2469 = vpop.xlane.xlu0 %2468
        %2470 = vmin.xlane.f32.xlu0 %v418
        %v2471 = vpop.xlane.xlu0 %2470
        %2472 = vmin.xlane.f32.xlu0 %v419
        %v2473 = vpop.xlane.xlu0 %2472
        %2474 = vmin.xlane.f32.xlu0 %v420
        %v2475 = vpop.xlane.xlu0 %2474
        %2476 = vmin.xlane.f32.xlu0 %v421
        %v2477 = vpop.xlane.xlu0 %2476
        %2478 = vmin.xlane.f32.xlu0 %v550
        %v2479 = vpop.xlane.xlu0 %2478
        %2480 = vmin.xlane.f32.xlu0 %v551
        %v2481 = vpop.xlane.xlu0 %2480
        %2482 = vmin.xlane.f32.xlu0 %v552
        %v2483 = vpop.xlane.xlu0 %2482
        %2484 = vmin.xlane.f32.xlu0 %v553
        %v2485 = vpop.xlane.xlu0 %2484
        %2486 = vmin.xlane.f32.xlu0 %v554
        %v2487 = vpop.xlane.xlu0 %2486
        %2488 = vmin.xlane.f32.xlu0 %v555
        %v2489 = vpop.xlane.xlu0 %2488
        %2490 = vmin.xlane.f32.xlu0 %v556
        %v2491 = vpop.xlane.xlu0 %2490
        %2492 = vmin.xlane.f32.xlu0 %v557
        %v2493 = vpop.xlane.xlu0 %2492
        %2494 = vmin.xlane.f32.xlu0 %v686
        %v2495 = vpop.xlane.xlu0 %2494
        %2496 = vmin.xlane.f32.xlu0 %v687
        %v2497 = vpop.xlane.xlu0 %2496
        %2498 = vmin.xlane.f32.xlu0 %v688
        %v2499 = vpop.xlane.xlu0 %2498
        %2500 = vmin.xlane.f32.xlu0 %v689
        %v2501 = vpop.xlane.xlu0 %2500
        %2502 = vmin.xlane.f32.xlu0 %v690
        %v2503 = vpop.xlane.xlu0 %2502
        %2504 = vmin.xlane.f32.xlu0 %v691
        %v2505 = vpop.xlane.xlu0 %2504
        %2506 = vmin.xlane.f32.xlu0 %v692
        %v2507 = vpop.xlane.xlu0 %2506
        %2508 = vmin.xlane.f32.xlu0 %v693
        %v2509 = vpop.xlane.xlu0 %2508
        %2510 = vmin.xlane.f32.xlu0 %v822
        %v2511 = vpop.xlane.xlu0 %2510
        %2512 = vmin.xlane.f32.xlu0 %v823
        %v2513 = vpop.xlane.xlu0 %2512
        %2514 = vmin.xlane.f32.xlu0 %v824
        %v2515 = vpop.xlane.xlu0 %2514
        %2516 = vmin.xlane.f32.xlu0 %v825
        %v2517 = vpop.xlane.xlu0 %2516
        %2518 = vmin.xlane.f32.xlu0 %v826
        %v2519 = vpop.xlane.xlu0 %2518
        %2520 = vmin.xlane.f32.xlu0 %v827
        %v2521 = vpop.xlane.xlu0 %2520
        %2522 = vmin.xlane.f32.xlu0 %v828
        %v2523 = vpop.xlane.xlu0 %2522
        %2524 = vmin.xlane.f32.xlu0 %v829
        %v2525 = vpop.xlane.xlu0 %2524
        %2526 = vmin.xlane.f32.xlu0 %v958
        %v2527 = vpop.xlane.xlu0 %2526
        %2528 = vmin.xlane.f32.xlu0 %v959
        %v2529 = vpop.xlane.xlu0 %2528
        %2530 = vmin.xlane.f32.xlu0 %v960
        %v2531 = vpop.xlane.xlu0 %2530
        %2532 = vmin.xlane.f32.xlu0 %v961
        %v2533 = vpop.xlane.xlu0 %2532
        %2534 = vmin.xlane.f32.xlu0 %v962
        %v2535 = vpop.xlane.xlu0 %2534
        %2536 = vmin.xlane.f32.xlu0 %v963
        %v2537 = vpop.xlane.xlu0 %2536
        %2538 = vmin.xlane.f32.xlu0 %v964
        %v2539 = vpop.xlane.xlu0 %2538
        %2540 = vmin.xlane.f32.xlu0 %v965
        %v2541 = vpop.xlane.xlu0 %2540
        %2542 = vmin.xlane.f32.xlu0 %v1094
        %v2543 = vpop.xlane.xlu0 %2542
        %2544 = vmin.xlane.f32.xlu0 %v1095
        %v2545 = vpop.xlane.xlu0 %2544
        %2546 = vmin.xlane.f32.xlu0 %v1096
        %v2547 = vpop.xlane.xlu0 %2546
        %2548 = vmin.xlane.f32.xlu0 %v1097
        %v2549 = vpop.xlane.xlu0 %2548
        %2550 = vmin.xlane.f32.xlu0 %v1098
        %v2551 = vpop.xlane.xlu0 %2550
        %2552 = vmin.xlane.f32.xlu0 %v1099
        %v2553 = vpop.xlane.xlu0 %2552
        %2554 = vmin.xlane.f32.xlu0 %v1100
        %v2555 = vpop.xlane.xlu0 %2554
        %2556 = vmin.xlane.f32.xlu0 %v1101
        %v2557 = vpop.xlane.xlu0 %2556
        %2558 = vmin.xlane.f32.xlu0 %v1230
        %v2559 = vpop.xlane.xlu0 %2558
        %2560 = vmin.xlane.f32.xlu0 %v1231
        %v2561 = vpop.xlane.xlu0 %2560
        %2562 = vmin.xlane.f32.xlu0 %v1232
        %v2563 = vpop.xlane.xlu0 %2562
        %2564 = vmin.xlane.f32.xlu0 %v1233
        %v2565 = vpop.xlane.xlu0 %2564
        %2566 = vmin.xlane.f32.xlu0 %v1234
        %v2567 = vpop.xlane.xlu0 %2566
        %2568 = vmin.xlane.f32.xlu0 %v1235
        %v2569 = vpop.xlane.xlu0 %2568
        %2570 = vmin.xlane.f32.xlu0 %v1236
        %v2571 = vpop.xlane.xlu0 %2570
        %2572 = vmin.xlane.f32.xlu0 %v1237
        %v2573 = vpop.xlane.xlu0 %2572
        %2574 = vmin.xlane.f32.xlu0 %v1366
        %v2575 = vpop.xlane.xlu0 %2574
        %2576 = vmin.xlane.f32.xlu0 %v1367
        %v2577 = vpop.xlane.xlu0 %2576
        %2578 = vmin.xlane.f32.xlu0 %v1368
        %v2579 = vpop.xlane.xlu0 %2578
        %2580 = vmin.xlane.f32.xlu0 %v1369
        %v2581 = vpop.xlane.xlu0 %2580
        %2582 = vmin.xlane.f32.xlu0 %v1370
        %v2583 = vpop.xlane.xlu0 %2582
        %2584 = vmin.xlane.f32.xlu0 %v1371
        %v2585 = vpop.xlane.xlu0 %2584
        %2586 = vmin.xlane.f32.xlu0 %v1372
        %v2587 = vpop.xlane.xlu0 %2586
        %2588 = vmin.xlane.f32.xlu0 %v1373
        %v2589 = vpop.xlane.xlu0 %2588
        %2590 = vmin.xlane.f32.xlu0 %v1502
        %v2591 = vpop.xlane.xlu0 %2590
        %2592 = vmin.xlane.f32.xlu0 %v1503
        %v2593 = vpop.xlane.xlu0 %2592
        %2594 = vmin.xlane.f32.xlu0 %v1504
        %v2595 = vpop.xlane.xlu0 %2594
        %2596 = vmin.xlane.f32.xlu0 %v1505
        %v2597 = vpop.xlane.xlu0 %2596
        %2598 = vmin.xlane.f32.xlu0 %v1506
        %v2599 = vpop.xlane.xlu0 %2598
        %2600 = vmin.xlane.f32.xlu0 %v1507
        %v2601 = vpop.xlane.xlu0 %2600
        %2602 = vmin.xlane.f32.xlu0 %v1508
        %v2603 = vpop.xlane.xlu0 %2602
        %2604 = vmin.xlane.f32.xlu0 %v1509
        %v2605 = vpop.xlane.xlu0 %2604
        %2606 = vmin.xlane.f32.xlu0 %v1638
        %v2607 = vpop.xlane.xlu0 %2606
        %2608 = vmin.xlane.f32.xlu0 %v1639
        %v2609 = vpop.xlane.xlu0 %2608
        %2610 = vmin.xlane.f32.xlu0 %v1640
        %v2611 = vpop.xlane.xlu0 %2610
        %2612 = vmin.xlane.f32.xlu0 %v1641
        %v2613 = vpop.xlane.xlu0 %2612
        %2614 = vmin.xlane.f32.xlu0 %v1642
        %v2615 = vpop.xlane.xlu0 %2614
        %2616 = vmin.xlane.f32.xlu0 %v1643
        %v2617 = vpop.xlane.xlu0 %2616
        %2618 = vmin.xlane.f32.xlu0 %v1644
        %v2619 = vpop.xlane.xlu0 %2618
        %2620 = vmin.xlane.f32.xlu0 %v1645
        %v2621 = vpop.xlane.xlu0 %2620
        %2622 = vmin.xlane.f32.xlu0 %v1774
        %v2623 = vpop.xlane.xlu0 %2622
        %2624 = vmin.xlane.f32.xlu0 %v1775
        %v2625 = vpop.xlane.xlu0 %2624
        %2626 = vmin.xlane.f32.xlu0 %v1776
        %v2627 = vpop.xlane.xlu0 %2626
        %2628 = vmin.xlane.f32.xlu0 %v1777
        %v2629 = vpop.xlane.xlu0 %2628
        %2630 = vmin.xlane.f32.xlu0 %v1778
        %v2631 = vpop.xlane.xlu0 %2630
        %2632 = vmin.xlane.f32.xlu0 %v1779
        %v2633 = vpop.xlane.xlu0 %2632
        %2634 = vmin.xlane.f32.xlu0 %v1780
        %v2635 = vpop.xlane.xlu0 %2634
        %2636 = vmin.xlane.f32.xlu0 %v1781
        %v2637 = vpop.xlane.xlu0 %2636
        %2638 = vmin.xlane.f32.xlu0 %v1910
        %v2639 = vpop.xlane.xlu0 %2638
        %2640 = vmin.xlane.f32.xlu0 %v1911
        %v2641 = vpop.xlane.xlu0 %2640
        %2642 = vmin.xlane.f32.xlu0 %v1912
        %v2643 = vpop.xlane.xlu0 %2642
        %2644 = vmin.xlane.f32.xlu0 %v1913
        %v2645 = vpop.xlane.xlu0 %2644
        %2646 = vmin.xlane.f32.xlu0 %v1914
        %v2647 = vpop.xlane.xlu0 %2646
        %2648 = vmin.xlane.f32.xlu0 %v1915
        %v2649 = vpop.xlane.xlu0 %2648
        %2650 = vmin.xlane.f32.xlu0 %v1916
        %v2651 = vpop.xlane.xlu0 %2650
        %2652 = vmin.xlane.f32.xlu0 %v1917
        %v2653 = vpop.xlane.xlu0 %2652
        %2654 = vmin.xlane.f32.xlu0 %v2046
        %v2655 = vpop.xlane.xlu0 %2654
        %2656 = vmin.xlane.f32.xlu0 %v2047
        %v2657 = vpop.xlane.xlu0 %2656
        %2658 = vmin.xlane.f32.xlu0 %v2048
        %v2659 = vpop.xlane.xlu0 %2658
        %2660 = vmin.xlane.f32.xlu0 %v2049
        %v2661 = vpop.xlane.xlu0 %2660
        %2662 = vmin.xlane.f32.xlu0 %v2050
        %v2663 = vpop.xlane.xlu0 %2662
        %2664 = vmin.xlane.f32.xlu0 %v2051
        %v2665 = vpop.xlane.xlu0 %2664
        %2666 = vmin.xlane.f32.xlu0 %v2052
        %v2667 = vpop.xlane.xlu0 %2666
        %2668 = vmin.xlane.f32.xlu0 %v2053
        %v2669 = vpop.xlane.xlu0 %2668
        %2670 = vmin.xlane.f32.xlu0 %v2182
        %v2671 = vpop.xlane.xlu0 %2670
        %2672 = vmin.xlane.f32.xlu0 %v2183
        %v2673 = vpop.xlane.xlu0 %2672
        %2674 = vmin.xlane.f32.xlu0 %v2184
        %v2675 = vpop.xlane.xlu0 %2674
        %2676 = vmin.xlane.f32.xlu0 %v2185
        %v2677 = vpop.xlane.xlu0 %2676
        %2678 = vmin.xlane.f32.xlu0 %v2186
        %v2679 = vpop.xlane.xlu0 %2678
        %2680 = vmin.xlane.f32.xlu0 %v2187
        %v2681 = vpop.xlane.xlu0 %2680
        %2682 = vmin.xlane.f32.xlu0 %v2188
        %v2683 = vpop.xlane.xlu0 %2682
        %2684 = vmin.xlane.f32.xlu0 %v2189
        %v2685 = vpop.xlane.xlu0 %2684
        %2686 = vmin.xlane.f32.xlu0 %v2318
        %v2687 = vpop.xlane.xlu0 %2686
        %2688 = vmin.xlane.f32.xlu0 %v2319
        %v2689 = vpop.xlane.xlu0 %2688
        %2690 = vmin.xlane.f32.xlu0 %v2320
        %v2691 = vpop.xlane.xlu0 %2690
        %2692 = vmin.xlane.f32.xlu0 %v2321
        %v2693 = vpop.xlane.xlu0 %2692
        %2694 = vmin.xlane.f32.xlu0 %v2322
        %v2695 = vpop.xlane.xlu0 %2694
        %2696 = vmin.xlane.f32.xlu0 %v2323
        %v2697 = vpop.xlane.xlu0 %2696
        %2698 = vmin.xlane.f32.xlu0 %v2324
        %v2699 = vpop.xlane.xlu0 %2698
        %2700 = vmin.xlane.f32.xlu0 %v2325
        %v2701 = vpop.xlane.xlu0 %2700
        %2702 = vmin.xlane.f32.xlu0 %v2454
        %v2703 = vpop.xlane.xlu0 %2702
        %2704 = vmin.xlane.f32.xlu0 %v2455
        %v2705 = vpop.xlane.xlu0 %2704
        %2706 = vmin.xlane.f32.xlu0 %v2456
        %v2707 = vpop.xlane.xlu0 %2706
        %2708 = vmin.xlane.f32.xlu0 %v2457
        %v2709 = vpop.xlane.xlu0 %2708
        %2710 = vmin.xlane.f32.xlu0 %v2458
        %v2711 = vpop.xlane.xlu0 %2710
        %2712 = vmin.xlane.f32.xlu0 %v2459
        %v2713 = vpop.xlane.xlu0 %2712
        %2714 = vmin.xlane.f32.xlu0 %v2460
        %v2715 = vpop.xlane.xlu0 %2714
        %2716 = vmin.xlane.f32.xlu0 %v2461
        %v2717 = vpop.xlane.xlu0 %2716
        %v2718 = vmin.f32 %v2463, 0.0
        %v2719 = vmin.f32 %v2465, 0.0
        %v2720 = vmin.f32 %v2467, 0.0
        %v2721 = vmin.f32 %v2469, 0.0
        %v2722 = vmin.f32 %v2471, 0.0
        %v2723 = vmin.f32 %v2473, 0.0
        %v2724 = vmin.f32 %v2475, 0.0
        %v2725 = vmin.f32 %v2477, 0.0
        %v2726 = vmin.f32 %v2479, 0.0
        %v2727 = vmin.f32 %v2481, 0.0
        %v2728 = vmin.f32 %v2483, 0.0
        %v2729 = vmin.f32 %v2485, 0.0
        %v2730 = vmin.f32 %v2487, 0.0
        %v2731 = vmin.f32 %v2489, 0.0
        %v2732 = vmin.f32 %v2491, 0.0
        %v2733 = vmin.f32 %v2493, 0.0
        %v2734 = vmin.f32 %v2495, 0.0
        %v2735 = vmin.f32 %v2497, 0.0
        %v2736 = vmin.f32 %v2499, 0.0
        %v2737 = vmin.f32 %v2501, 0.0
        %v2738 = vmin.f32 %v2503, 0.0
        %v2739 = vmin.f32 %v2505, 0.0
        %v2740 = vmin.f32 %v2507, 0.0
        %v2741 = vmin.f32 %v2509, 0.0
        %v2742 = vmin.f32 %v2511, 0.0
        %v2743 = vmin.f32 %v2513, 0.0
        %v2744 = vmin.f32 %v2515, 0.0
        %v2745 = vmin.f32 %v2517, 0.0
        %v2746 = vmin.f32 %v2519, 0.0
        %v2747 = vmin.f32 %v2521, 0.0
        %v2748 = vmin.f32 %v2523, 0.0
        %v2749 = vmin.f32 %v2525, 0.0
        %v2750 = vmin.f32 %v2527, 0.0
        %v2751 = vmin.f32 %v2529, 0.0
        %v2752 = vmin.f32 %v2531, 0.0
        %v2753 = vmin.f32 %v2533, 0.0
        %v2754 = vmin.f32 %v2535, 0.0
        %v2755 = vmin.f32 %v2537, 0.0
        %v2756 = vmin.f32 %v2539, 0.0
        %v2757 = vmin.f32 %v2541, 0.0
        %v2758 = vmin.f32 %v2543, 0.0
        %v2759 = vmin.f32 %v2545, 0.0
        %v2760 = vmin.f32 %v2547, 0.0
        %v2761 = vmin.f32 %v2549, 0.0
        %v2762 = vmin.f32 %v2551, 0.0
        %v2763 = vmin.f32 %v2553, 0.0
        %v2764 = vmin.f32 %v2555, 0.0
        %v2765 = vmin.f32 %v2557, 0.0
        %v2766 = vmin.f32 %v2559, 0.0
        %v2767 = vmin.f32 %v2561, 0.0
        %v2768 = vmin.f32 %v2563, 0.0
        %v2769 = vmin.f32 %v2565, 0.0
        %v2770 = vmin.f32 %v2567, 0.0
        %v2771 = vmin.f32 %v2569, 0.0
        %v2772 = vmin.f32 %v2571, 0.0
        %v2773 = vmin.f32 %v2573, 0.0
        %v2774 = vmin.f32 %v2575, 0.0
        %v2775 = vmin.f32 %v2577, 0.0
        %v2776 = vmin.f32 %v2579, 0.0
        %v2777 = vmin.f32 %v2581, 0.0
        %v2778 = vmin.f32 %v2583, 0.0
        %v2779 = vmin.f32 %v2585, 0.0
        %v2780 = vmin.f32 %v2587, 0.0
        %v2781 = vmin.f32 %v2589, 0.0
        %v2782 = vmin.f32 %v2591, 0.0
        %v2783 = vmin.f32 %v2593, 0.0
        %v2784 = vmin.f32 %v2595, 0.0
        %v2785 = vmin.f32 %v2597, 0.0
        %v2786 = vmin.f32 %v2599, 0.0
        %v2787 = vmin.f32 %v2601, 0.0
        %v2788 = vmin.f32 %v2603, 0.0
        %v2789 = vmin.f32 %v2605, 0.0
        %v2790 = vmin.f32 %v2607, 0.0
        %v2791 = vmin.f32 %v2609, 0.0
        %v2792 = vmin.f32 %v2611, 0.0
        %v2793 = vmin.f32 %v2613, 0.0
        %v2794 = vmin.f32 %v2615, 0.0
        %v2795 = vmin.f32 %v2617, 0.0
        %v2796 = vmin.f32 %v2619, 0.0
        %v2797 = vmin.f32 %v2621, 0.0
        %v2798 = vmin.f32 %v2623, 0.0
        %v2799 = vmin.f32 %v2625, 0.0
        %v2800 = vmin.f32 %v2627, 0.0
        %v2801 = vmin.f32 %v2629, 0.0
        %v2802 = vmin.f32 %v2631, 0.0
        %v2803 = vmin.f32 %v2633, 0.0
        %v2804 = vmin.f32 %v2635, 0.0
        %v2805 = vmin.f32 %v2637, 0.0
        %v2806 = vmin.f32 %v2639, 0.0
        %v2807 = vmin.f32 %v2641, 0.0
        %v2808 = vmin.f32 %v2643, 0.0
        %v2809 = vmin.f32 %v2645, 0.0
        %v2810 = vmin.f32 %v2647, 0.0
        %v2811 = vmin.f32 %v2649, 0.0
        %v2812 = vmin.f32 %v2651, 0.0
        %v2813 = vmin.f32 %v2653, 0.0
        %v2814 = vmin.f32 %v2655, 0.0
        %v2815 = vmin.f32 %v2657, 0.0
        %v2816 = vmin.f32 %v2659, 0.0
        %v2817 = vmin.f32 %v2661, 0.0
        %v2818 = vmin.f32 %v2663, 0.0
        %v2819 = vmin.f32 %v2665, 0.0
        %v2820 = vmin.f32 %v2667, 0.0
        %v2821 = vmin.f32 %v2669, 0.0
        %v2822 = vmin.f32 %v2671, 0.0
        %v2823 = vmin.f32 %v2673, 0.0
        %v2824 = vmin.f32 %v2675, 0.0
        %v2825 = vmin.f32 %v2677, 0.0
        %v2826 = vmin.f32 %v2679, 0.0
        %v2827 = vmin.f32 %v2681, 0.0
        %v2828 = vmin.f32 %v2683, 0.0
        %v2829 = vmin.f32 %v2685, 0.0
        %v2830 = vmin.f32 %v2687, 0.0
        %v2831 = vmin.f32 %v2689, 0.0
        %v2832 = vmin.f32 %v2691, 0.0
        %v2833 = vmin.f32 %v2693, 0.0
        %v2834 = vmin.f32 %v2695, 0.0
        %v2835 = vmin.f32 %v2697, 0.0
        %v2836 = vmin.f32 %v2699, 0.0
        %v2837 = vmin.f32 %v2701, 0.0
        %v2838 = vmin.f32 %v2703, 0.0
        %v2839 = vmin.f32 %v2705, 0.0
        %v2840 = vmin.f32 %v2707, 0.0
        %v2841 = vmin.f32 %v2709, 0.0
        %v2842 = vmin.f32 %v2711, 0.0
        %v2843 = vmin.f32 %v2713, 0.0
        %v2844 = vmin.f32 %v2715, 0.0
        %v2845 = vmin.f32 %v2717, 0.0
        %2846 = vmax.xlane.f32.xlu0 %v414
        %v2847 = vpop.xlane.xlu0 %2846
        %2848 = vmax.xlane.f32.xlu0 %v415
        %v2849 = vpop.xlane.xlu0 %2848
        %2850 = vmax.xlane.f32.xlu0 %v416
        %v2851 = vpop.xlane.xlu0 %2850
        %2852 = vmax.xlane.f32.xlu0 %v417
        %v2853 = vpop.xlane.xlu0 %2852
        %2854 = vmax.xlane.f32.xlu0 %v418
        %v2855 = vpop.xlane.xlu0 %2854
        %2856 = vmax.xlane.f32.xlu0 %v419
        %v2857 = vpop.xlane.xlu0 %2856
        %2858 = vmax.xlane.f32.xlu0 %v420
        %v2859 = vpop.xlane.xlu0 %2858
        %2860 = vmax.xlane.f32.xlu0 %v421
        %v2861 = vpop.xlane.xlu0 %2860
        %2862 = vmax.xlane.f32.xlu0 %v550
        %v2863 = vpop.xlane.xlu0 %2862
        %2864 = vmax.xlane.f32.xlu0 %v551
        %v2865 = vpop.xlane.xlu0 %2864
        %2866 = vmax.xlane.f32.xlu0 %v552
        %v2867 = vpop.xlane.xlu0 %2866
        %2868 = vmax.xlane.f32.xlu0 %v553
        %v2869 = vpop.xlane.xlu0 %2868
        %2870 = vmax.xlane.f32.xlu0 %v554
        %v2871 = vpop.xlane.xlu0 %2870
        %2872 = vmax.xlane.f32.xlu0 %v555
        %v2873 = vpop.xlane.xlu0 %2872
        %2874 = vmax.xlane.f32.xlu0 %v556
        %v2875 = vpop.xlane.xlu0 %2874
        %2876 = vmax.xlane.f32.xlu0 %v557
        %v2877 = vpop.xlane.xlu0 %2876
        %2878 = vmax.xlane.f32.xlu0 %v686
        %v2879 = vpop.xlane.xlu0 %2878
        %2880 = vmax.xlane.f32.xlu0 %v687
        %v2881 = vpop.xlane.xlu0 %2880
        %2882 = vmax.xlane.f32.xlu0 %v688
        %v2883 = vpop.xlane.xlu0 %2882
        %2884 = vmax.xlane.f32.xlu0 %v689
        %v2885 = vpop.xlane.xlu0 %2884
        %2886 = vmax.xlane.f32.xlu0 %v690
        %v2887 = vpop.xlane.xlu0 %2886
        %2888 = vmax.xlane.f32.xlu0 %v691
        %v2889 = vpop.xlane.xlu0 %2888
        %2890 = vmax.xlane.f32.xlu0 %v692
        %v2891 = vpop.xlane.xlu0 %2890
        %2892 = vmax.xlane.f32.xlu0 %v693
        %v2893 = vpop.xlane.xlu0 %2892
        %2894 = vmax.xlane.f32.xlu0 %v822
        %v2895 = vpop.xlane.xlu0 %2894
        %2896 = vmax.xlane.f32.xlu0 %v823
        %v2897 = vpop.xlane.xlu0 %2896
        %2898 = vmax.xlane.f32.xlu0 %v824
        %v2899 = vpop.xlane.xlu0 %2898
        %2900 = vmax.xlane.f32.xlu0 %v825
        %v2901 = vpop.xlane.xlu0 %2900
        %2902 = vmax.xlane.f32.xlu0 %v826
        %v2903 = vpop.xlane.xlu0 %2902
        %2904 = vmax.xlane.f32.xlu0 %v827
        %v2905 = vpop.xlane.xlu0 %2904
        %2906 = vmax.xlane.f32.xlu0 %v828
        %v2907 = vpop.xlane.xlu0 %2906
        %2908 = vmax.xlane.f32.xlu0 %v829
        %v2909 = vpop.xlane.xlu0 %2908
        %2910 = vmax.xlane.f32.xlu0 %v958
        %v2911 = vpop.xlane.xlu0 %2910
        %2912 = vmax.xlane.f32.xlu0 %v959
        %v2913 = vpop.xlane.xlu0 %2912
        %2914 = vmax.xlane.f32.xlu0 %v960
        %v2915 = vpop.xlane.xlu0 %2914
        %2916 = vmax.xlane.f32.xlu0 %v961
        %v2917 = vpop.xlane.xlu0 %2916
        %2918 = vmax.xlane.f32.xlu0 %v962
        %v2919 = vpop.xlane.xlu0 %2918
        %2920 = vmax.xlane.f32.xlu0 %v963
        %v2921 = vpop.xlane.xlu0 %2920
        %2922 = vmax.xlane.f32.xlu0 %v964
        %v2923 = vpop.xlane.xlu0 %2922
        %2924 = vmax.xlane.f32.xlu0 %v965
        %v2925 = vpop.xlane.xlu0 %2924
        %2926 = vmax.xlane.f32.xlu0 %v1094
        %v2927 = vpop.xlane.xlu0 %2926
        %2928 = vmax.xlane.f32.xlu0 %v1095
        %v2929 = vpop.xlane.xlu0 %2928
        %2930 = vmax.xlane.f32.xlu0 %v1096
        %v2931 = vpop.xlane.xlu0 %2930
        %2932 = vmax.xlane.f32.xlu0 %v1097
        %v2933 = vpop.xlane.xlu0 %2932
        %2934 = vmax.xlane.f32.xlu0 %v1098
        %v2935 = vpop.xlane.xlu0 %2934
        %2936 = vmax.xlane.f32.xlu0 %v1099
        %v2937 = vpop.xlane.xlu0 %2936
        %2938 = vmax.xlane.f32.xlu0 %v1100
        %v2939 = vpop.xlane.xlu0 %2938
        %2940 = vmax.xlane.f32.xlu0 %v1101
        %v2941 = vpop.xlane.xlu0 %2940
        %2942 = vmax.xlane.f32.xlu0 %v1230
        %v2943 = vpop.xlane.xlu0 %2942
        %2944 = vmax.xlane.f32.xlu0 %v1231
        %v2945 = vpop.xlane.xlu0 %2944
        %2946 = vmax.xlane.f32.xlu0 %v1232
        %v2947 = vpop.xlane.xlu0 %2946
        %2948 = vmax.xlane.f32.xlu0 %v1233
        %v2949 = vpop.xlane.xlu0 %2948
        %2950 = vmax.xlane.f32.xlu0 %v1234
        %v2951 = vpop.xlane.xlu0 %2950
        %2952 = vmax.xlane.f32.xlu0 %v1235
        %v2953 = vpop.xlane.xlu0 %2952
        %2954 = vmax.xlane.f32.xlu0 %v1236
        %v2955 = vpop.xlane.xlu0 %2954
        %2956 = vmax.xlane.f32.xlu0 %v1237
        %v2957 = vpop.xlane.xlu0 %2956
        %2958 = vmax.xlane.f32.xlu0 %v1366
        %v2959 = vpop.xlane.xlu0 %2958
        %2960 = vmax.xlane.f32.xlu0 %v1367
        %v2961 = vpop.xlane.xlu0 %2960
        %2962 = vmax.xlane.f32.xlu0 %v1368
        %v2963 = vpop.xlane.xlu0 %2962
        %2964 = vmax.xlane.f32.xlu0 %v1369
        %v2965 = vpop.xlane.xlu0 %2964
        %2966 = vmax.xlane.f32.xlu0 %v1370
        %v2967 = vpop.xlane.xlu0 %2966
        %2968 = vmax.xlane.f32.xlu0 %v1371
        %v2969 = vpop.xlane.xlu0 %2968
        %2970 = vmax.xlane.f32.xlu0 %v1372
        %v2971 = vpop.xlane.xlu0 %2970
        %2972 = vmax.xlane.f32.xlu0 %v1373
        %v2973 = vpop.xlane.xlu0 %2972
        %2974 = vmax.xlane.f32.xlu0 %v1502
        %v2975 = vpop.xlane.xlu0 %2974
        %2976 = vmax.xlane.f32.xlu0 %v1503
        %v2977 = vpop.xlane.xlu0 %2976
        %2978 = vmax.xlane.f32.xlu0 %v1504
        %v2979 = vpop.xlane.xlu0 %2978
        %2980 = vmax.xlane.f32.xlu0 %v1505
        %v2981 = vpop.xlane.xlu0 %2980
        %2982 = vmax.xlane.f32.xlu0 %v1506
        %v2983 = vpop.xlane.xlu0 %2982
        %2984 = vmax.xlane.f32.xlu0 %v1507
        %v2985 = vpop.xlane.xlu0 %2984
        %2986 = vmax.xlane.f32.xlu0 %v1508
        %v2987 = vpop.xlane.xlu0 %2986
        %2988 = vmax.xlane.f32.xlu0 %v1509
        %v2989 = vpop.xlane.xlu0 %2988
        %2990 = vmax.xlane.f32.xlu0 %v1638
        %v2991 = vpop.xlane.xlu0 %2990
        %2992 = vmax.xlane.f32.xlu0 %v1639
        %v2993 = vpop.xlane.xlu0 %2992
        %2994 = vmax.xlane.f32.xlu0 %v1640
        %v2995 = vpop.xlane.xlu0 %2994
        %2996 = vmax.xlane.f32.xlu0 %v1641
        %v2997 = vpop.xlane.xlu0 %2996
        %2998 = vmax.xlane.f32.xlu0 %v1642
        %v2999 = vpop.xlane.xlu0 %2998
        %3000 = vmax.xlane.f32.xlu0 %v1643
        %v3001 = vpop.xlane.xlu0 %3000
        %3002 = vmax.xlane.f32.xlu0 %v1644
        %v3003 = vpop.xlane.xlu0 %3002
        %3004 = vmax.xlane.f32.xlu0 %v1645
        %v3005 = vpop.xlane.xlu0 %3004
        %3006 = vmax.xlane.f32.xlu0 %v1774
        %v3007 = vpop.xlane.xlu0 %3006
        %3008 = vmax.xlane.f32.xlu0 %v1775
        %v3009 = vpop.xlane.xlu0 %3008
        %3010 = vmax.xlane.f32.xlu0 %v1776
        %v3011 = vpop.xlane.xlu0 %3010
        %3012 = vmax.xlane.f32.xlu0 %v1777
        %v3013 = vpop.xlane.xlu0 %3012
        %3014 = vmax.xlane.f32.xlu0 %v1778
        %v3015 = vpop.xlane.xlu0 %3014
        %3016 = vmax.xlane.f32.xlu0 %v1779
        %v3017 = vpop.xlane.xlu0 %3016
        %3018 = vmax.xlane.f32.xlu0 %v1780
        %v3019 = vpop.xlane.xlu0 %3018
        %3020 = vmax.xlane.f32.xlu0 %v1781
        %v3021 = vpop.xlane.xlu0 %3020
        %3022 = vmax.xlane.f32.xlu0 %v1910
        %v3023 = vpop.xlane.xlu0 %3022
        %3024 = vmax.xlane.f32.xlu0 %v1911
        %v3025 = vpop.xlane.xlu0 %3024
        %3026 = vmax.xlane.f32.xlu0 %v1912
        %v3027 = vpop.xlane.xlu0 %3026
        %3028 = vmax.xlane.f32.xlu0 %v1913
        %v3029 = vpop.xlane.xlu0 %3028
        %3030 = vmax.xlane.f32.xlu0 %v1914
        %v3031 = vpop.xlane.xlu0 %3030
        %3032 = vmax.xlane.f32.xlu0 %v1915
        %v3033 = vpop.xlane.xlu0 %3032
        %3034 = vmax.xlane.f32.xlu0 %v1916
        %v3035 = vpop.xlane.xlu0 %3034
        %3036 = vmax.xlane.f32.xlu0 %v1917
        %v3037 = vpop.xlane.xlu0 %3036
        %3038 = vmax.xlane.f32.xlu0 %v2046
        %v3039 = vpop.xlane.xlu0 %3038
        %3040 = vmax.xlane.f32.xlu0 %v2047
        %v3041 = vpop.xlane.xlu0 %3040
        %3042 = vmax.xlane.f32.xlu0 %v2048
        %v3043 = vpop.xlane.xlu0 %3042
        %3044 = vmax.xlane.f32.xlu0 %v2049
        %v3045 = vpop.xlane.xlu0 %3044
        %3046 = vmax.xlane.f32.xlu0 %v2050
        %v3047 = vpop.xlane.xlu0 %3046
        %3048 = vmax.xlane.f32.xlu0 %v2051
        %v3049 = vpop.xlane.xlu0 %3048
        %3050 = vmax.xlane.f32.xlu0 %v2052
        %v3051 = vpop.xlane.xlu0 %3050
        %3052 = vmax.xlane.f32.xlu0 %v2053
        %v3053 = vpop.xlane.xlu0 %3052
        %3054 = vmax.xlane.f32.xlu0 %v2182
        %v3055 = vpop.xlane.xlu0 %3054
        %3056 = vmax.xlane.f32.xlu0 %v2183
        %v3057 = vpop.xlane.xlu0 %3056
        %3058 = vmax.xlane.f32.xlu0 %v2184
        %v3059 = vpop.xlane.xlu0 %3058
        %3060 = vmax.xlane.f32.xlu0 %v2185
        %v3061 = vpop.xlane.xlu0 %3060
        %3062 = vmax.xlane.f32.xlu0 %v2186
        %v3063 = vpop.xlane.xlu0 %3062
        %3064 = vmax.xlane.f32.xlu0 %v2187
        %v3065 = vpop.xlane.xlu0 %3064
        %3066 = vmax.xlane.f32.xlu0 %v2188
        %v3067 = vpop.xlane.xlu0 %3066
        %3068 = vmax.xlane.f32.xlu0 %v2189
        %v3069 = vpop.xlane.xlu0 %3068
        %3070 = vmax.xlane.f32.xlu0 %v2318
        %v3071 = vpop.xlane.xlu0 %3070
        %3072 = vmax.xlane.f32.xlu0 %v2319
        %v3073 = vpop.xlane.xlu0 %3072
        %3074 = vmax.xlane.f32.xlu0 %v2320
        %v3075 = vpop.xlane.xlu0 %3074
        %3076 = vmax.xlane.f32.xlu0 %v2321
        %v3077 = vpop.xlane.xlu0 %3076
        %3078 = vmax.xlane.f32.xlu0 %v2322
        %v3079 = vpop.xlane.xlu0 %3078
        %3080 = vmax.xlane.f32.xlu0 %v2323
        %v3081 = vpop.xlane.xlu0 %3080
        %3082 = vmax.xlane.f32.xlu0 %v2324
        %v3083 = vpop.xlane.xlu0 %3082
        %3084 = vmax.xlane.f32.xlu0 %v2325
        %v3085 = vpop.xlane.xlu0 %3084
        %3086 = vmax.xlane.f32.xlu0 %v2454
        %v3087 = vpop.xlane.xlu0 %3086
        %3088 = vmax.xlane.f32.xlu0 %v2455
        %v3089 = vpop.xlane.xlu0 %3088
        %3090 = vmax.xlane.f32.xlu0 %v2456
        %v3091 = vpop.xlane.xlu0 %3090
        %3092 = vmax.xlane.f32.xlu0 %v2457
        %v3093 = vpop.xlane.xlu0 %3092
        %3094 = vmax.xlane.f32.xlu0 %v2458
        %v3095 = vpop.xlane.xlu0 %3094
        %3096 = vmax.xlane.f32.xlu0 %v2459
        %v3097 = vpop.xlane.xlu0 %3096
        %3098 = vmax.xlane.f32.xlu0 %v2460
        %v3099 = vpop.xlane.xlu0 %3098
        %3100 = vmax.xlane.f32.xlu0 %v2461
        %v3101 = vpop.xlane.xlu0 %3100
        %v3102 = vmax.f32 %v2847, 0.0
        %v3103 = vmax.f32 %v2849, 0.0
        %v3104 = vmax.f32 %v2851, 0.0
        %v3105 = vmax.f32 %v2853, 0.0
        %v3106 = vmax.f32 %v2855, 0.0
        %v3107 = vmax.f32 %v2857, 0.0
        %v3108 = vmax.f32 %v2859, 0.0
        %v3109 = vmax.f32 %v2861, 0.0
        %v3110 = vmax.f32 %v2863, 0.0
        %v3111 = vmax.f32 %v2865, 0.0
        %v3112 = vmax.f32 %v2867, 0.0
        %v3113 = vmax.f32 %v2869, 0.0
        %v3114 = vmax.f32 %v2871, 0.0
        %v3115 = vmax.f32 %v2873, 0.0
        %v3116 = vmax.f32 %v2875, 0.0
        %v3117 = vmax.f32 %v2877, 0.0
        %v3118 = vmax.f32 %v2879, 0.0
        %v3119 = vmax.f32 %v2881, 0.0
        %v3120 = vmax.f32 %v2883, 0.0
        %v3121 = vmax.f32 %v2885, 0.0
        %v3122 = vmax.f32 %v2887, 0.0
        %v3123 = vmax.f32 %v2889, 0.0
        %v3124 = vmax.f32 %v2891, 0.0
        %v3125 = vmax.f32 %v2893, 0.0
        %v3126 = vmax.f32 %v2895, 0.0
        %v3127 = vmax.f32 %v2897, 0.0
        %v3128 = vmax.f32 %v2899, 0.0
        %v3129 = vmax.f32 %v2901, 0.0
        %v3130 = vmax.f32 %v2903, 0.0
        %v3131 = vmax.f32 %v2905, 0.0
        %v3132 = vmax.f32 %v2907, 0.0
        %v3133 = vmax.f32 %v2909, 0.0
        %v3134 = vmax.f32 %v2911, 0.0
        %v3135 = vmax.f32 %v2913, 0.0
        %v3136 = vmax.f32 %v2915, 0.0
        %v3137 = vmax.f32 %v2917, 0.0
        %v3138 = vmax.f32 %v2919, 0.0
        %v3139 = vmax.f32 %v2921, 0.0
        %v3140 = vmax.f32 %v2923, 0.0
        %v3141 = vmax.f32 %v2925, 0.0
        %v3142 = vmax.f32 %v2927, 0.0
        %v3143 = vmax.f32 %v2929, 0.0
        %v3144 = vmax.f32 %v2931, 0.0
        %v3145 = vmax.f32 %v2933, 0.0
        %v3146 = vmax.f32 %v2935, 0.0
        %v3147 = vmax.f32 %v2937, 0.0
        %v3148 = vmax.f32 %v2939, 0.0
        %v3149 = vmax.f32 %v2941, 0.0
        %v3150 = vmax.f32 %v2943, 0.0
        %v3151 = vmax.f32 %v2945, 0.0
        %v3152 = vmax.f32 %v2947, 0.0
        %v3153 = vmax.f32 %v2949, 0.0
        %v3154 = vmax.f32 %v2951, 0.0
        %v3155 = vmax.f32 %v2953, 0.0
        %v3156 = vmax.f32 %v2955, 0.0
        %v3157 = vmax.f32 %v2957, 0.0
        %v3158 = vmax.f32 %v2959, 0.0
        %v3159 = vmax.f32 %v2961, 0.0
        %v3160 = vmax.f32 %v2963, 0.0
        %v3161 = vmax.f32 %v2965, 0.0
        %v3162 = vmax.f32 %v2967, 0.0
        %v3163 = vmax.f32 %v2969, 0.0
        %v3164 = vmax.f32 %v2971, 0.0
        %v3165 = vmax.f32 %v2973, 0.0
        %v3166 = vmax.f32 %v2975, 0.0
        %v3167 = vmax.f32 %v2977, 0.0
        %v3168 = vmax.f32 %v2979, 0.0
        %v3169 = vmax.f32 %v2981, 0.0
        %v3170 = vmax.f32 %v2983, 0.0
        %v3171 = vmax.f32 %v2985, 0.0
        %v3172 = vmax.f32 %v2987, 0.0
        %v3173 = vmax.f32 %v2989, 0.0
        %v3174 = vmax.f32 %v2991, 0.0
        %v3175 = vmax.f32 %v2993, 0.0
        %v3176 = vmax.f32 %v2995, 0.0
        %v3177 = vmax.f32 %v2997, 0.0
        %v3178 = vmax.f32 %v2999, 0.0
        %v3179 = vmax.f32 %v3001, 0.0
        %v3180 = vmax.f32 %v3003, 0.0
        %v3181 = vmax.f32 %v3005, 0.0
        %v3182 = vmax.f32 %v3007, 0.0
        %v3183 = vmax.f32 %v3009, 0.0
        %v3184 = vmax.f32 %v3011, 0.0
        %v3185 = vmax.f32 %v3013, 0.0
        %v3186 = vmax.f32 %v3015, 0.0
        %v3187 = vmax.f32 %v3017, 0.0
        %v3188 = vmax.f32 %v3019, 0.0
        %v3189 = vmax.f32 %v3021, 0.0
        %v3190 = vmax.f32 %v3023, 0.0
        %v3191 = vmax.f32 %v3025, 0.0
        %v3192 = vmax.f32 %v3027, 0.0
        %v3193 = vmax.f32 %v3029, 0.0
        %v3194 = vmax.f32 %v3031, 0.0
        %v3195 = vmax.f32 %v3033, 0.0
        %v3196 = vmax.f32 %v3035, 0.0
        %v3197 = vmax.f32 %v3037, 0.0
        %v3198 = vmax.f32 %v3039, 0.0
        %v3199 = vmax.f32 %v3041, 0.0
        %v3200 = vmax.f32 %v3043, 0.0
        %v3201 = vmax.f32 %v3045, 0.0
        %v3202 = vmax.f32 %v3047, 0.0
        %v3203 = vmax.f32 %v3049, 0.0
        %v3204 = vmax.f32 %v3051, 0.0
        %v3205 = vmax.f32 %v3053, 0.0
        %v3206 = vmax.f32 %v3055, 0.0
        %v3207 = vmax.f32 %v3057, 0.0
        %v3208 = vmax.f32 %v3059, 0.0
        %v3209 = vmax.f32 %v3061, 0.0
        %v3210 = vmax.f32 %v3063, 0.0
        %v3211 = vmax.f32 %v3065, 0.0
        %v3212 = vmax.f32 %v3067, 0.0
        %v3213 = vmax.f32 %v3069, 0.0
        %v3214 = vmax.f32 %v3071, 0.0
        %v3215 = vmax.f32 %v3073, 0.0
        %v3216 = vmax.f32 %v3075, 0.0
        %v3217 = vmax.f32 %v3077, 0.0
        %v3218 = vmax.f32 %v3079, 0.0
        %v3219 = vmax.f32 %v3081, 0.0
        %v3220 = vmax.f32 %v3083, 0.0
        %v3221 = vmax.f32 %v3085, 0.0
        %v3222 = vmax.f32 %v3087, 0.0
        %v3223 = vmax.f32 %v3089, 0.0
        %v3224 = vmax.f32 %v3091, 0.0
        %v3225 = vmax.f32 %v3093, 0.0
        %v3226 = vmax.f32 %v3095, 0.0
        %v3227 = vmax.f32 %v3097, 0.0
        %v3228 = vmax.f32 %v3099, 0.0
        %v3229 = vmax.f32 %v3101, 0.0
        %vm3230 = vcmp.eq.f32.partialorder %v2718, 0.0
        %vm3231 = vcmp.eq.f32.partialorder %v2719, 0.0
        %vm3232 = vcmp.eq.f32.partialorder %v2720, 0.0
        %vm3233 = vcmp.eq.f32.partialorder %v2721, 0.0
        %vm3234 = vcmp.eq.f32.partialorder %v2722, 0.0
        %vm3235 = vcmp.eq.f32.partialorder %v2723, 0.0
        %vm3236 = vcmp.eq.f32.partialorder %v2724, 0.0
        %vm3237 = vcmp.eq.f32.partialorder %v2725, 0.0
        %vm3238 = vcmp.eq.f32.partialorder %v2726, 0.0
        %vm3239 = vcmp.eq.f32.partialorder %v2727, 0.0
        %vm3240 = vcmp.eq.f32.partialorder %v2728, 0.0
        %vm3241 = vcmp.eq.f32.partialorder %v2729, 0.0
        %vm3242 = vcmp.eq.f32.partialorder %v2730, 0.0
        %vm3243 = vcmp.eq.f32.partialorder %v2731, 0.0
        %vm3244 = vcmp.eq.f32.partialorder %v2732, 0.0
        %vm3245 = vcmp.eq.f32.partialorder %v2733, 0.0
        %vm3246 = vcmp.eq.f32.partialorder %v2734, 0.0
        %vm3247 = vcmp.eq.f32.partialorder %v2735, 0.0
        %vm3248 = vcmp.eq.f32.partialorder %v2736, 0.0
        %vm3249 = vcmp.eq.f32.partialorder %v2737, 0.0
        %vm3250 = vcmp.eq.f32.partialorder %v2738, 0.0
        %vm3251 = vcmp.eq.f32.partialorder %v2739, 0.0
        %vm3252 = vcmp.eq.f32.partialorder %v2740, 0.0
        %vm3253 = vcmp.eq.f32.partialorder %v2741, 0.0
        %vm3254 = vcmp.eq.f32.partialorder %v2742, 0.0
        %vm3255 = vcmp.eq.f32.partialorder %v2743, 0.0
        %vm3256 = vcmp.eq.f32.partialorder %v2744, 0.0
        %vm3257 = vcmp.eq.f32.partialorder %v2745, 0.0
        %vm3258 = vcmp.eq.f32.partialorder %v2746, 0.0
        %vm3259 = vcmp.eq.f32.partialorder %v2747, 0.0
        %vm3260 = vcmp.eq.f32.partialorder %v2748, 0.0
        %vm3261 = vcmp.eq.f32.partialorder %v2749, 0.0
        %vm3262 = vcmp.eq.f32.partialorder %v2750, 0.0
        %vm3263 = vcmp.eq.f32.partialorder %v2751, 0.0
        %vm3264 = vcmp.eq.f32.partialorder %v2752, 0.0
        %vm3265 = vcmp.eq.f32.partialorder %v2753, 0.0
        %vm3266 = vcmp.eq.f32.partialorder %v2754, 0.0
        %vm3267 = vcmp.eq.f32.partialorder %v2755, 0.0
        %vm3268 = vcmp.eq.f32.partialorder %v2756, 0.0
        %vm3269 = vcmp.eq.f32.partialorder %v2757, 0.0
        %vm3270 = vcmp.eq.f32.partialorder %v2758, 0.0
        %vm3271 = vcmp.eq.f32.partialorder %v2759, 0.0
        %vm3272 = vcmp.eq.f32.partialorder %v2760, 0.0
        %vm3273 = vcmp.eq.f32.partialorder %v2761, 0.0
        %vm3274 = vcmp.eq.f32.partialorder %v2762, 0.0
        %vm3275 = vcmp.eq.f32.partialorder %v2763, 0.0
        %vm3276 = vcmp.eq.f32.partialorder %v2764, 0.0
        %vm3277 = vcmp.eq.f32.partialorder %v2765, 0.0
        %vm3278 = vcmp.eq.f32.partialorder %v2766, 0.0
        %vm3279 = vcmp.eq.f32.partialorder %v2767, 0.0
        %vm3280 = vcmp.eq.f32.partialorder %v2768, 0.0
        %vm3281 = vcmp.eq.f32.partialorder %v2769, 0.0
        %vm3282 = vcmp.eq.f32.partialorder %v2770, 0.0
        %vm3283 = vcmp.eq.f32.partialorder %v2771, 0.0
        %vm3284 = vcmp.eq.f32.partialorder %v2772, 0.0
        %vm3285 = vcmp.eq.f32.partialorder %v2773, 0.0
        %vm3286 = vcmp.eq.f32.partialorder %v2774, 0.0
        %vm3287 = vcmp.eq.f32.partialorder %v2775, 0.0
        %vm3288 = vcmp.eq.f32.partialorder %v2776, 0.0
        %vm3289 = vcmp.eq.f32.partialorder %v2777, 0.0
        %vm3290 = vcmp.eq.f32.partialorder %v2778, 0.0
        %vm3291 = vcmp.eq.f32.partialorder %v2779, 0.0
        %vm3292 = vcmp.eq.f32.partialorder %v2780, 0.0
        %vm3293 = vcmp.eq.f32.partialorder %v2781, 0.0
        %vm3294 = vcmp.eq.f32.partialorder %v2782, 0.0
        %vm3295 = vcmp.eq.f32.partialorder %v2783, 0.0
        %vm3296 = vcmp.eq.f32.partialorder %v2784, 0.0
        %vm3297 = vcmp.eq.f32.partialorder %v2785, 0.0
        %vm3298 = vcmp.eq.f32.partialorder %v2786, 0.0
        %vm3299 = vcmp.eq.f32.partialorder %v2787, 0.0
        %vm3300 = vcmp.eq.f32.partialorder %v2788, 0.0
        %vm3301 = vcmp.eq.f32.partialorder %v2789, 0.0
        %vm3302 = vcmp.eq.f32.partialorder %v2790, 0.0
        %vm3303 = vcmp.eq.f32.partialorder %v2791, 0.0
        %vm3304 = vcmp.eq.f32.partialorder %v2792, 0.0
        %vm3305 = vcmp.eq.f32.partialorder %v2793, 0.0
        %vm3306 = vcmp.eq.f32.partialorder %v2794, 0.0
        %vm3307 = vcmp.eq.f32.partialorder %v2795, 0.0
        %vm3308 = vcmp.eq.f32.partialorder %v2796, 0.0
        %vm3309 = vcmp.eq.f32.partialorder %v2797, 0.0
        %vm3310 = vcmp.eq.f32.partialorder %v2798, 0.0
        %vm3311 = vcmp.eq.f32.partialorder %v2799, 0.0
        %vm3312 = vcmp.eq.f32.partialorder %v2800, 0.0
        %vm3313 = vcmp.eq.f32.partialorder %v2801, 0.0
        %vm3314 = vcmp.eq.f32.partialorder %v2802, 0.0
        %vm3315 = vcmp.eq.f32.partialorder %v2803, 0.0
        %vm3316 = vcmp.eq.f32.partialorder %v2804, 0.0
        %vm3317 = vcmp.eq.f32.partialorder %v2805, 0.0
        %vm3318 = vcmp.eq.f32.partialorder %v2806, 0.0
        %vm3319 = vcmp.eq.f32.partialorder %v2807, 0.0
        %vm3320 = vcmp.eq.f32.partialorder %v2808, 0.0
        %vm3321 = vcmp.eq.f32.partialorder %v2809, 0.0
        %vm3322 = vcmp.eq.f32.partialorder %v2810, 0.0
        %vm3323 = vcmp.eq.f32.partialorder %v2811, 0.0
        %vm3324 = vcmp.eq.f32.partialorder %v2812, 0.0
        %vm3325 = vcmp.eq.f32.partialorder %v2813, 0.0
        %vm3326 = vcmp.eq.f32.partialorder %v2814, 0.0
        %vm3327 = vcmp.eq.f32.partialorder %v2815, 0.0
        %vm3328 = vcmp.eq.f32.partialorder %v2816, 0.0
        %vm3329 = vcmp.eq.f32.partialorder %v2817, 0.0
        %vm3330 = vcmp.eq.f32.partialorder %v2818, 0.0
        %vm3331 = vcmp.eq.f32.partialorder %v2819, 0.0
        %vm3332 = vcmp.eq.f32.partialorder %v2820, 0.0
        %vm3333 = vcmp.eq.f32.partialorder %v2821, 0.0
        %vm3334 = vcmp.eq.f32.partialorder %v2822, 0.0
        %vm3335 = vcmp.eq.f32.partialorder %v2823, 0.0
        %vm3336 = vcmp.eq.f32.partialorder %v2824, 0.0
        %vm3337 = vcmp.eq.f32.partialorder %v2825, 0.0
        %vm3338 = vcmp.eq.f32.partialorder %v2826, 0.0
        %vm3339 = vcmp.eq.f32.partialorder %v2827, 0.0
        %vm3340 = vcmp.eq.f32.partialorder %v2828, 0.0
        %vm3341 = vcmp.eq.f32.partialorder %v2829, 0.0
        %vm3342 = vcmp.eq.f32.partialorder %v2830, 0.0
        %vm3343 = vcmp.eq.f32.partialorder %v2831, 0.0
        %vm3344 = vcmp.eq.f32.partialorder %v2832, 0.0
        %vm3345 = vcmp.eq.f32.partialorder %v2833, 0.0
        %vm3346 = vcmp.eq.f32.partialorder %v2834, 0.0
        %vm3347 = vcmp.eq.f32.partialorder %v2835, 0.0
        %vm3348 = vcmp.eq.f32.partialorder %v2836, 0.0
        %vm3349 = vcmp.eq.f32.partialorder %v2837, 0.0
        %vm3350 = vcmp.eq.f32.partialorder %v2838, 0.0
        %vm3351 = vcmp.eq.f32.partialorder %v2839, 0.0
        %vm3352 = vcmp.eq.f32.partialorder %v2840, 0.0
        %vm3353 = vcmp.eq.f32.partialorder %v2841, 0.0
        %vm3354 = vcmp.eq.f32.partialorder %v2842, 0.0
        %vm3355 = vcmp.eq.f32.partialorder %v2843, 0.0
        %vm3356 = vcmp.eq.f32.partialorder %v2844, 0.0
        %vm3357 = vcmp.eq.f32.partialorder %v2845, 0.0
        %vm3358 = vcmp.eq.f32.partialorder %v3102, 0.0
        %vm3359 = vcmp.eq.f32.partialorder %v3103, 0.0
        %vm3360 = vcmp.eq.f32.partialorder %v3104, 0.0
        %vm3361 = vcmp.eq.f32.partialorder %v3105, 0.0
        %vm3362 = vcmp.eq.f32.partialorder %v3106, 0.0
        %vm3363 = vcmp.eq.f32.partialorder %v3107, 0.0
        %vm3364 = vcmp.eq.f32.partialorder %v3108, 0.0
        %vm3365 = vcmp.eq.f32.partialorder %v3109, 0.0
        %vm3366 = vcmp.eq.f32.partialorder %v3110, 0.0
        %vm3367 = vcmp.eq.f32.partialorder %v3111, 0.0
        %vm3368 = vcmp.eq.f32.partialorder %v3112, 0.0
        %vm3369 = vcmp.eq.f32.partialorder %v3113, 0.0
        %vm3370 = vcmp.eq.f32.partialorder %v3114, 0.0
        %vm3371 = vcmp.eq.f32.partialorder %v3115, 0.0
        %vm3372 = vcmp.eq.f32.partialorder %v3116, 0.0
        %vm3373 = vcmp.eq.f32.partialorder %v3117, 0.0
        %vm3374 = vcmp.eq.f32.partialorder %v3118, 0.0
        %vm3375 = vcmp.eq.f32.partialorder %v3119, 0.0
        %vm3376 = vcmp.eq.f32.partialorder %v3120, 0.0
        %vm3377 = vcmp.eq.f32.partialorder %v3121, 0.0
        %vm3378 = vcmp.eq.f32.partialorder %v3122, 0.0
        %vm3379 = vcmp.eq.f32.partialorder %v3123, 0.0
        %vm3380 = vcmp.eq.f32.partialorder %v3124, 0.0
        %vm3381 = vcmp.eq.f32.partialorder %v3125, 0.0
        %vm3382 = vcmp.eq.f32.partialorder %v3126, 0.0
        %vm3383 = vcmp.eq.f32.partialorder %v3127, 0.0
        %vm3384 = vcmp.eq.f32.partialorder %v3128, 0.0
        %vm3385 = vcmp.eq.f32.partialorder %v3129, 0.0
        %vm3386 = vcmp.eq.f32.partialorder %v3130, 0.0
        %vm3387 = vcmp.eq.f32.partialorder %v3131, 0.0
        %vm3388 = vcmp.eq.f32.partialorder %v3132, 0.0
        %vm3389 = vcmp.eq.f32.partialorder %v3133, 0.0
        %vm3390 = vcmp.eq.f32.partialorder %v3134, 0.0
        %vm3391 = vcmp.eq.f32.partialorder %v3135, 0.0
        %vm3392 = vcmp.eq.f32.partialorder %v3136, 0.0
        %vm3393 = vcmp.eq.f32.partialorder %v3137, 0.0
        %vm3394 = vcmp.eq.f32.partialorder %v3138, 0.0
        %vm3395 = vcmp.eq.f32.partialorder %v3139, 0.0
        %vm3396 = vcmp.eq.f32.partialorder %v3140, 0.0
        %vm3397 = vcmp.eq.f32.partialorder %v3141, 0.0
        %vm3398 = vcmp.eq.f32.partialorder %v3142, 0.0
        %vm3399 = vcmp.eq.f32.partialorder %v3143, 0.0
        %vm3400 = vcmp.eq.f32.partialorder %v3144, 0.0
        %vm3401 = vcmp.eq.f32.partialorder %v3145, 0.0
        %vm3402 = vcmp.eq.f32.partialorder %v3146, 0.0
        %vm3403 = vcmp.eq.f32.partialorder %v3147, 0.0
        %vm3404 = vcmp.eq.f32.partialorder %v3148, 0.0
        %vm3405 = vcmp.eq.f32.partialorder %v3149, 0.0
        %vm3406 = vcmp.eq.f32.partialorder %v3150, 0.0
        %vm3407 = vcmp.eq.f32.partialorder %v3151, 0.0
        %vm3408 = vcmp.eq.f32.partialorder %v3152, 0.0
        %vm3409 = vcmp.eq.f32.partialorder %v3153, 0.0
        %vm3410 = vcmp.eq.f32.partialorder %v3154, 0.0
        %vm3411 = vcmp.eq.f32.partialorder %v3155, 0.0
        %vm3412 = vcmp.eq.f32.partialorder %v3156, 0.0
        %vm3413 = vcmp.eq.f32.partialorder %v3157, 0.0
        %vm3414 = vcmp.eq.f32.partialorder %v3158, 0.0
        %vm3415 = vcmp.eq.f32.partialorder %v3159, 0.0
        %vm3416 = vcmp.eq.f32.partialorder %v3160, 0.0
        %vm3417 = vcmp.eq.f32.partialorder %v3161, 0.0
        %vm3418 = vcmp.eq.f32.partialorder %v3162, 0.0
        %vm3419 = vcmp.eq.f32.partialorder %v3163, 0.0
        %vm3420 = vcmp.eq.f32.partialorder %v3164, 0.0
        %vm3421 = vcmp.eq.f32.partialorder %v3165, 0.0
        %vm3422 = vcmp.eq.f32.partialorder %v3166, 0.0
        %vm3423 = vcmp.eq.f32.partialorder %v3167, 0.0
        %vm3424 = vcmp.eq.f32.partialorder %v3168, 0.0
        %vm3425 = vcmp.eq.f32.partialorder %v3169, 0.0
        %vm3426 = vcmp.eq.f32.partialorder %v3170, 0.0
        %vm3427 = vcmp.eq.f32.partialorder %v3171, 0.0
        %vm3428 = vcmp.eq.f32.partialorder %v3172, 0.0
        %vm3429 = vcmp.eq.f32.partialorder %v3173, 0.0
        %vm3430 = vcmp.eq.f32.partialorder %v3174, 0.0
        %vm3431 = vcmp.eq.f32.partialorder %v3175, 0.0
        %vm3432 = vcmp.eq.f32.partialorder %v3176, 0.0
        %vm3433 = vcmp.eq.f32.partialorder %v3177, 0.0
        %vm3434 = vcmp.eq.f32.partialorder %v3178, 0.0
        %vm3435 = vcmp.eq.f32.partialorder %v3179, 0.0
        %vm3436 = vcmp.eq.f32.partialorder %v3180, 0.0
        %vm3437 = vcmp.eq.f32.partialorder %v3181, 0.0
        %vm3438 = vcmp.eq.f32.partialorder %v3182, 0.0
        %vm3439 = vcmp.eq.f32.partialorder %v3183, 0.0
        %vm3440 = vcmp.eq.f32.partialorder %v3184, 0.0
        %vm3441 = vcmp.eq.f32.partialorder %v3185, 0.0
        %vm3442 = vcmp.eq.f32.partialorder %v3186, 0.0
        %vm3443 = vcmp.eq.f32.partialorder %v3187, 0.0
        %vm3444 = vcmp.eq.f32.partialorder %v3188, 0.0
        %vm3445 = vcmp.eq.f32.partialorder %v3189, 0.0
        %vm3446 = vcmp.eq.f32.partialorder %v3190, 0.0
        %vm3447 = vcmp.eq.f32.partialorder %v3191, 0.0
        %vm3448 = vcmp.eq.f32.partialorder %v3192, 0.0
        %vm3449 = vcmp.eq.f32.partialorder %v3193, 0.0
        %vm3450 = vcmp.eq.f32.partialorder %v3194, 0.0
        %vm3451 = vcmp.eq.f32.partialorder %v3195, 0.0
        %vm3452 = vcmp.eq.f32.partialorder %v3196, 0.0
        %vm3453 = vcmp.eq.f32.partialorder %v3197, 0.0
        %vm3454 = vcmp.eq.f32.partialorder %v3198, 0.0
        %vm3455 = vcmp.eq.f32.partialorder %v3199, 0.0
        %vm3456 = vcmp.eq.f32.partialorder %v3200, 0.0
        %vm3457 = vcmp.eq.f32.partialorder %v3201, 0.0
        %vm3458 = vcmp.eq.f32.partialorder %v3202, 0.0
        %vm3459 = vcmp.eq.f32.partialorder %v3203, 0.0
        %vm3460 = vcmp.eq.f32.partialorder %v3204, 0.0
        %vm3461 = vcmp.eq.f32.partialorder %v3205, 0.0
        %vm3462 = vcmp.eq.f32.partialorder %v3206, 0.0
        %vm3463 = vcmp.eq.f32.partialorder %v3207, 0.0
        %vm3464 = vcmp.eq.f32.partialorder %v3208, 0.0
        %vm3465 = vcmp.eq.f32.partialorder %v3209, 0.0
        %vm3466 = vcmp.eq.f32.partialorder %v3210, 0.0
        %vm3467 = vcmp.eq.f32.partialorder %v3211, 0.0
        %vm3468 = vcmp.eq.f32.partialorder %v3212, 0.0
        %vm3469 = vcmp.eq.f32.partialorder %v3213, 0.0
        %vm3470 = vcmp.eq.f32.partialorder %v3214, 0.0
        %vm3471 = vcmp.eq.f32.partialorder %v3215, 0.0
        %vm3472 = vcmp.eq.f32.partialorder %v3216, 0.0
        %vm3473 = vcmp.eq.f32.partialorder %v3217, 0.0
        %vm3474 = vcmp.eq.f32.partialorder %v3218, 0.0
        %vm3475 = vcmp.eq.f32.partialorder %v3219, 0.0
        %vm3476 = vcmp.eq.f32.partialorder %v3220, 0.0
        %vm3477 = vcmp.eq.f32.partialorder %v3221, 0.0
        %vm3478 = vcmp.eq.f32.partialorder %v3222, 0.0
        %vm3479 = vcmp.eq.f32.partialorder %v3223, 0.0
        %vm3480 = vcmp.eq.f32.partialorder %v3224, 0.0
        %vm3481 = vcmp.eq.f32.partialorder %v3225, 0.0
        %vm3482 = vcmp.eq.f32.partialorder %v3226, 0.0
        %vm3483 = vcmp.eq.f32.partialorder %v3227, 0.0
        %vm3484 = vcmp.eq.f32.partialorder %v3228, 0.0
        %vm3485 = vcmp.eq.f32.partialorder %v3229, 0.0
        %vm3486 = vmand %vm3230, %vm3358
        %vm3487 = vmand %vm3231, %vm3359
        %vm3488 = vmand %vm3232, %vm3360
        %vm3489 = vmand %vm3233, %vm3361
        %vm3490 = vmand %vm3234, %vm3362
        %vm3491 = vmand %vm3235, %vm3363
        %vm3492 = vmand %vm3236, %vm3364
        %vm3493 = vmand %vm3237, %vm3365
        %vm3494 = vmand %vm3238, %vm3366
        %vm3495 = vmand %vm3239, %vm3367
        %vm3496 = vmand %vm3240, %vm3368
        %vm3497 = vmand %vm3241, %vm3369
        %vm3498 = vmand %vm3242, %vm3370
        %vm3499 = vmand %vm3243, %vm3371
        %vm3500 = vmand %vm3244, %vm3372
        %vm3501 = vmand %vm3245, %vm3373
        %vm3502 = vmand %vm3246, %vm3374
        %vm3503 = vmand %vm3247, %vm3375
        %vm3504 = vmand %vm3248, %vm3376
        %vm3505 = vmand %vm3249, %vm3377
        %vm3506 = vmand %vm3250, %vm3378
        %vm3507 = vmand %vm3251, %vm3379
        %vm3508 = vmand %vm3252, %vm3380
        %vm3509 = vmand %vm3253, %vm3381
        %vm3510 = vmand %vm3254, %vm3382
        %vm3511 = vmand %vm3255, %vm3383
        %vm3512 = vmand %vm3256, %vm3384
        %vm3513 = vmand %vm3257, %vm3385
        %vm3514 = vmand %vm3258, %vm3386
        %vm3515 = vmand %vm3259, %vm3387
        %vm3516 = vmand %vm3260, %vm3388
        %vm3517 = vmand %vm3261, %vm3389
        %vm3518 = vmand %vm3262, %vm3390
        %vm3519 = vmand %vm3263, %vm3391
        %vm3520 = vmand %vm3264, %vm3392
        %vm3521 = vmand %vm3265, %vm3393
        %vm3522 = vmand %vm3266, %vm3394
        %vm3523 = vmand %vm3267, %vm3395
        %vm3524 = vmand %vm3268, %vm3396
        %vm3525 = vmand %vm3269, %vm3397
        %vm3526 = vmand %vm3270, %vm3398
        %vm3527 = vmand %vm3271, %vm3399
        %vm3528 = vmand %vm3272, %vm3400
        %vm3529 = vmand %vm3273, %vm3401
        %vm3530 = vmand %vm3274, %vm3402
        %vm3531 = vmand %vm3275, %vm3403
        %vm3532 = vmand %vm3276, %vm3404
        %vm3533 = vmand %vm3277, %vm3405
        %vm3534 = vmand %vm3278, %vm3406
        %vm3535 = vmand %vm3279, %vm3407
        %vm3536 = vmand %vm3280, %vm3408
        %vm3537 = vmand %vm3281, %vm3409
        %vm3538 = vmand %vm3282, %vm3410
        %vm3539 = vmand %vm3283, %vm3411
        %vm3540 = vmand %vm3284, %vm3412
        %vm3541 = vmand %vm3285, %vm3413
        %vm3542 = vmand %vm3286, %vm3414
        %vm3543 = vmand %vm3287, %vm3415
        %vm3544 = vmand %vm3288, %vm3416
        %vm3545 = vmand %vm3289, %vm3417
        %vm3546 = vmand %vm3290, %vm3418
        %vm3547 = vmand %vm3291, %vm3419
        %vm3548 = vmand %vm3292, %vm3420
        %vm3549 = vmand %vm3293, %vm3421
        %vm3550 = vmand %vm3294, %vm3422
        %vm3551 = vmand %vm3295, %vm3423
        %vm3552 = vmand %vm3296, %vm3424
        %vm3553 = vmand %vm3297, %vm3425
        %vm3554 = vmand %vm3298, %vm3426
        %vm3555 = vmand %vm3299, %vm3427
        %vm3556 = vmand %vm3300, %vm3428
        %vm3557 = vmand %vm3301, %vm3429
        %vm3558 = vmand %vm3302, %vm3430
        %vm3559 = vmand %vm3303, %vm3431
        %vm3560 = vmand %vm3304, %vm3432
        %vm3561 = vmand %vm3305, %vm3433
        %vm3562 = vmand %vm3306, %vm3434
        %vm3563 = vmand %vm3307, %vm3435
        %vm3564 = vmand %vm3308, %vm3436
        %vm3565 = vmand %vm3309, %vm3437
        %vm3566 = vmand %vm3310, %vm3438
        %vm3567 = vmand %vm3311, %vm3439
        %vm3568 = vmand %vm3312, %vm3440
        %vm3569 = vmand %vm3313, %vm3441
        %vm3570 = vmand %vm3314, %vm3442
        %vm3571 = vmand %vm3315, %vm3443
        %vm3572 = vmand %vm3316, %vm3444
        %vm3573 = vmand %vm3317, %vm3445
        %vm3574 = vmand %vm3318, %vm3446
        %vm3575 = vmand %vm3319, %vm3447
        %vm3576 = vmand %vm3320, %vm3448
        %vm3577 = vmand %vm3321, %vm3449
        %vm3578 = vmand %vm3322, %vm3450
        %vm3579 = vmand %vm3323, %vm3451
        %vm3580 = vmand %vm3324, %vm3452
        %vm3581 = vmand %vm3325, %vm3453
        %vm3582 = vmand %vm3326, %vm3454
        %vm3583 = vmand %vm3327, %vm3455
        %vm3584 = vmand %vm3328, %vm3456
        %vm3585 = vmand %vm3329, %vm3457
        %vm3586 = vmand %vm3330, %vm3458
        %vm3587 = vmand %vm3331, %vm3459
        %vm3588 = vmand %vm3332, %vm3460
        %vm3589 = vmand %vm3333, %vm3461
        %vm3590 = vmand %vm3334, %vm3462
        %vm3591 = vmand %vm3335, %vm3463
        %vm3592 = vmand %vm3336, %vm3464
        %vm3593 = vmand %vm3337, %vm3465
        %vm3594 = vmand %vm3338, %vm3466
        %vm3595 = vmand %vm3339, %vm3467
        %vm3596 = vmand %vm3340, %vm3468
        %vm3597 = vmand %vm3341, %vm3469
        %vm3598 = vmand %vm3342, %vm3470
        %vm3599 = vmand %vm3343, %vm3471
        %vm3600 = vmand %vm3344, %vm3472
        %vm3601 = vmand %vm3345, %vm3473
        %vm3602 = vmand %vm3346, %vm3474
        %vm3603 = vmand %vm3347, %vm3475
        %vm3604 = vmand %vm3348, %vm3476
        %vm3605 = vmand %vm3349, %vm3477
        %vm3606 = vmand %vm3350, %vm3478
        %vm3607 = vmand %vm3351, %vm3479
        %vm3608 = vmand %vm3352, %vm3480
        %vm3609 = vmand %vm3353, %vm3481
        %vm3610 = vmand %vm3354, %vm3482
        %vm3611 = vmand %vm3355, %vm3483
        %vm3612 = vmand %vm3356, %vm3484
        %vm3613 = vmand %vm3357, %vm3485
        %v3614 = vsel %vm3486, -1.0, %v2718
        %v3615 = vsel %vm3487, -1.0, %v2719
        %v3616 = vsel %vm3488, -1.0, %v2720
        %v3617 = vsel %vm3489, -1.0, %v2721
        %v3618 = vsel %vm3490, -1.0, %v2722
        %v3619 = vsel %vm3491, -1.0, %v2723
        %v3620 = vsel %vm3492, -1.0, %v2724
        %v3621 = vsel %vm3493, -1.0, %v2725
        %v3622 = vsel %vm3494, -1.0, %v2726
        %v3623 = vsel %vm3495, -1.0, %v2727
        %v3624 = vsel %vm3496, -1.0, %v2728
        %v3625 = vsel %vm3497, -1.0, %v2729
        %v3626 = vsel %vm3498, -1.0, %v2730
        %v3627 = vsel %vm3499, -1.0, %v2731
        %v3628 = vsel %vm3500, -1.0, %v2732
        %v3629 = vsel %vm3501, -1.0, %v2733
        %v3630 = vsel %vm3502, -1.0, %v2734
        %v3631 = vsel %vm3503, -1.0, %v2735
        %v3632 = vsel %vm3504, -1.0, %v2736
        %v3633 = vsel %vm3505, -1.0, %v2737
        %v3634 = vsel %vm3506, -1.0, %v2738
        %v3635 = vsel %vm3507, -1.0, %v2739
        %v3636 = vsel %vm3508, -1.0, %v2740
        %v3637 = vsel %vm3509, -1.0, %v2741
        %v3638 = vsel %vm3510, -1.0, %v2742
        %v3639 = vsel %vm3511, -1.0, %v2743
        %v3640 = vsel %vm3512, -1.0, %v2744
        %v3641 = vsel %vm3513, -1.0, %v2745
        %v3642 = vsel %vm3514, -1.0, %v2746
        %v3643 = vsel %vm3515, -1.0, %v2747
        %v3644 = vsel %vm3516, -1.0, %v2748
        %v3645 = vsel %vm3517, -1.0, %v2749
        %v3646 = vsel %vm3518, -1.0, %v2750
        %v3647 = vsel %vm3519, -1.0, %v2751
        %v3648 = vsel %vm3520, -1.0, %v2752
        %v3649 = vsel %vm3521, -1.0, %v2753
        %v3650 = vsel %vm3522, -1.0, %v2754
        %v3651 = vsel %vm3523, -1.0, %v2755
        %v3652 = vsel %vm3524, -1.0, %v2756
        %v3653 = vsel %vm3525, -1.0, %v2757
        %v3654 = vsel %vm3526, -1.0, %v2758
        %v3655 = vsel %vm3527, -1.0, %v2759
        %v3656 = vsel %vm3528, -1.0, %v2760
        %v3657 = vsel %vm3529, -1.0, %v2761
        %v3658 = vsel %vm3530, -1.0, %v2762
        %v3659 = vsel %vm3531, -1.0, %v2763
        %v3660 = vsel %vm3532, -1.0, %v2764
        %v3661 = vsel %vm3533, -1.0, %v2765
        %v3662 = vsel %vm3534, -1.0, %v2766
        %v3663 = vsel %vm3535, -1.0, %v2767
        %v3664 = vsel %vm3536, -1.0, %v2768
        %v3665 = vsel %vm3537, -1.0, %v2769
        %v3666 = vsel %vm3538, -1.0, %v2770
        %v3667 = vsel %vm3539, -1.0, %v2771
        %v3668 = vsel %vm3540, -1.0, %v2772
        %v3669 = vsel %vm3541, -1.0, %v2773
        %v3670 = vsel %vm3542, -1.0, %v2774
        %v3671 = vsel %vm3543, -1.0, %v2775
        %v3672 = vsel %vm3544, -1.0, %v2776
        %v3673 = vsel %vm3545, -1.0, %v2777
        %v3674 = vsel %vm3546, -1.0, %v2778
        %v3675 = vsel %vm3547, -1.0, %v2779
        %v3676 = vsel %vm3548, -1.0, %v2780
        %v3677 = vsel %vm3549, -1.0, %v2781
        %v3678 = vsel %vm3550, -1.0, %v2782
        %v3679 = vsel %vm3551, -1.0, %v2783
        %v3680 = vsel %vm3552, -1.0, %v2784
        %v3681 = vsel %vm3553, -1.0, %v2785
        %v3682 = vsel %vm3554, -1.0, %v2786
        %v3683 = vsel %vm3555, -1.0, %v2787
        %v3684 = vsel %vm3556, -1.0, %v2788
        %v3685 = vsel %vm3557, -1.0, %v2789
        %v3686 = vsel %vm3558, -1.0, %v2790
        %v3687 = vsel %vm3559, -1.0, %v2791
        %v3688 = vsel %vm3560, -1.0, %v2792
        %v3689 = vsel %vm3561, -1.0, %v2793
        %v3690 = vsel %vm3562, -1.0, %v2794
        %v3691 = vsel %vm3563, -1.0, %v2795
        %v3692 = vsel %vm3564, -1.0, %v2796
        %v3693 = vsel %vm3565, -1.0, %v2797
        %v3694 = vsel %vm3566, -1.0, %v2798
        %v3695 = vsel %vm3567, -1.0, %v2799
        %v3696 = vsel %vm3568, -1.0, %v2800
        %v3697 = vsel %vm3569, -1.0, %v2801
        %v3698 = vsel %vm3570, -1.0, %v2802
        %v3699 = vsel %vm3571, -1.0, %v2803
        %v3700 = vsel %vm3572, -1.0, %v2804
        %v3701 = vsel %vm3573, -1.0, %v2805
        %v3702 = vsel %vm3574, -1.0, %v2806
        %v3703 = vsel %vm3575, -1.0, %v2807
        %v3704 = vsel %vm3576, -1.0, %v2808
        %v3705 = vsel %vm3577, -1.0, %v2809
        %v3706 = vsel %vm3578, -1.0, %v2810
        %v3707 = vsel %vm3579, -1.0, %v2811
        %v3708 = vsel %vm3580, -1.0, %v2812
        %v3709 = vsel %vm3581, -1.0, %v2813
        %v3710 = vsel %vm3582, -1.0, %v2814
        %v3711 = vsel %vm3583, -1.0, %v2815
        %v3712 = vsel %vm3584, -1.0, %v2816
        %v3713 = vsel %vm3585, -1.0, %v2817
        %v3714 = vsel %vm3586, -1.0, %v2818
        %v3715 = vsel %vm3587, -1.0, %v2819
        %v3716 = vsel %vm3588, -1.0, %v2820
        %v3717 = vsel %vm3589, -1.0, %v2821
        %v3718 = vsel %vm3590, -1.0, %v2822
        %v3719 = vsel %vm3591, -1.0, %v2823
        %v3720 = vsel %vm3592, -1.0, %v2824
        %v3721 = vsel %vm3593, -1.0, %v2825
        %v3722 = vsel %vm3594, -1.0, %v2826
        %v3723 = vsel %vm3595, -1.0, %v2827
        %v3724 = vsel %vm3596, -1.0, %v2828
        %v3725 = vsel %vm3597, -1.0, %v2829
        %v3726 = vsel %vm3598, -1.0, %v2830
        %v3727 = vsel %vm3599, -1.0, %v2831
        %v3728 = vsel %vm3600, -1.0, %v2832
        %v3729 = vsel %vm3601, -1.0, %v2833
        %v3730 = vsel %vm3602, -1.0, %v2834
        %v3731 = vsel %vm3603, -1.0, %v2835
        %v3732 = vsel %vm3604, -1.0, %v2836
        %v3733 = vsel %vm3605, -1.0, %v2837
        %v3734 = vsel %vm3606, -1.0, %v2838
        %v3735 = vsel %vm3607, -1.0, %v2839
        %v3736 = vsel %vm3608, -1.0, %v2840
        %v3737 = vsel %vm3609, -1.0, %v2841
        %v3738 = vsel %vm3610, -1.0, %v2842
        %v3739 = vsel %vm3611, -1.0, %v2843
        %v3740 = vsel %vm3612, -1.0, %v2844
        %v3741 = vsel %vm3613, -1.0, %v2845
        %v3742 = vsel %vm3486, 1.0, %v3102
        %v3743 = vsel %vm3487, 1.0, %v3103
        %v3744 = vsel %vm3488, 1.0, %v3104
        %v3745 = vsel %vm3489, 1.0, %v3105
        %v3746 = vsel %vm3490, 1.0, %v3106
        %v3747 = vsel %vm3491, 1.0, %v3107
        %v3748 = vsel %vm3492, 1.0, %v3108
        %v3749 = vsel %vm3493, 1.0, %v3109
        %v3750 = vsel %vm3494, 1.0, %v3110
        %v3751 = vsel %vm3495, 1.0, %v3111
        %v3752 = vsel %vm3496, 1.0, %v3112
        %v3753 = vsel %vm3497, 1.0, %v3113
        %v3754 = vsel %vm3498, 1.0, %v3114
        %v3755 = vsel %vm3499, 1.0, %v3115
        %v3756 = vsel %vm3500, 1.0, %v3116
        %v3757 = vsel %vm3501, 1.0, %v3117
        %v3758 = vsel %vm3502, 1.0, %v3118
        %v3759 = vsel %vm3503, 1.0, %v3119
        %v3760 = vsel %vm3504, 1.0, %v3120
        %v3761 = vsel %vm3505, 1.0, %v3121
        %v3762 = vsel %vm3506, 1.0, %v3122
        %v3763 = vsel %vm3507, 1.0, %v3123
        %v3764 = vsel %vm3508, 1.0, %v3124
        %v3765 = vsel %vm3509, 1.0, %v3125
        %v3766 = vsel %vm3510, 1.0, %v3126
        %v3767 = vsel %vm3511, 1.0, %v3127
        %v3768 = vsel %vm3512, 1.0, %v3128
        %v3769 = vsel %vm3513, 1.0, %v3129
        %v3770 = vsel %vm3514, 1.0, %v3130
        %v3771 = vsel %vm3515, 1.0, %v3131
        %v3772 = vsel %vm3516, 1.0, %v3132
        %v3773 = vsel %vm3517, 1.0, %v3133
        %v3774 = vsel %vm3518, 1.0, %v3134
        %v3775 = vsel %vm3519, 1.0, %v3135
        %v3776 = vsel %vm3520, 1.0, %v3136
        %v3777 = vsel %vm3521, 1.0, %v3137
        %v3778 = vsel %vm3522, 1.0, %v3138
        %v3779 = vsel %vm3523, 1.0, %v3139
        %v3780 = vsel %vm3524, 1.0, %v3140
        %v3781 = vsel %vm3525, 1.0, %v3141
        %v3782 = vsel %vm3526, 1.0, %v3142
        %v3783 = vsel %vm3527, 1.0, %v3143
        %v3784 = vsel %vm3528, 1.0, %v3144
        %v3785 = vsel %vm3529, 1.0, %v3145
        %v3786 = vsel %vm3530, 1.0, %v3146
        %v3787 = vsel %vm3531, 1.0, %v3147
        %v3788 = vsel %vm3532, 1.0, %v3148
        %v3789 = vsel %vm3533, 1.0, %v3149
        %v3790 = vsel %vm3534, 1.0, %v3150
        %v3791 = vsel %vm3535, 1.0, %v3151
        %v3792 = vsel %vm3536, 1.0, %v3152
        %v3793 = vsel %vm3537, 1.0, %v3153
        %v3794 = vsel %vm3538, 1.0, %v3154
        %v3795 = vsel %vm3539, 1.0, %v3155
        %v3796 = vsel %vm3540, 1.0, %v3156
        %v3797 = vsel %vm3541, 1.0, %v3157
        %v3798 = vsel %vm3542, 1.0, %v3158
        %v3799 = vsel %vm3543, 1.0, %v3159
        %v3800 = vsel %vm3544, 1.0, %v3160
        %v3801 = vsel %vm3545, 1.0, %v3161
        %v3802 = vsel %vm3546, 1.0, %v3162
        %v3803 = vsel %vm3547, 1.0, %v3163
        %v3804 = vsel %vm3548, 1.0, %v3164
        %v3805 = vsel %vm3549, 1.0, %v3165
        %v3806 = vsel %vm3550, 1.0, %v3166
        %v3807 = vsel %vm3551, 1.0, %v3167
        %v3808 = vsel %vm3552, 1.0, %v3168
        %v3809 = vsel %vm3553, 1.0, %v3169
        %v3810 = vsel %vm3554, 1.0, %v3170
        %v3811 = vsel %vm3555, 1.0, %v3171
        %v3812 = vsel %vm3556, 1.0, %v3172
        %v3813 = vsel %vm3557, 1.0, %v3173
        %v3814 = vsel %vm3558, 1.0, %v3174
        %v3815 = vsel %vm3559, 1.0, %v3175
        %v3816 = vsel %vm3560, 1.0, %v3176
        %v3817 = vsel %vm3561, 1.0, %v3177
        %v3818 = vsel %vm3562, 1.0, %v3178
        %v3819 = vsel %vm3563, 1.0, %v3179
        %v3820 = vsel %vm3564, 1.0, %v3180
        %v3821 = vsel %vm3565, 1.0, %v3181
        %v3822 = vsel %vm3566, 1.0, %v3182
        %v3823 = vsel %vm3567, 1.0, %v3183
        %v3824 = vsel %vm3568, 1.0, %v3184
        %v3825 = vsel %vm3569, 1.0, %v3185
        %v3826 = vsel %vm3570, 1.0, %v3186
        %v3827 = vsel %vm3571, 1.0, %v3187
        %v3828 = vsel %vm3572, 1.0, %v3188
        %v3829 = vsel %vm3573, 1.0, %v3189
        %v3830 = vsel %vm3574, 1.0, %v3190
        %v3831 = vsel %vm3575, 1.0, %v3191
        %v3832 = vsel %vm3576, 1.0, %v3192
        %v3833 = vsel %vm3577, 1.0, %v3193
        %v3834 = vsel %vm3578, 1.0, %v3194
        %v3835 = vsel %vm3579, 1.0, %v3195
        %v3836 = vsel %vm3580, 1.0, %v3196
        %v3837 = vsel %vm3581, 1.0, %v3197
        %v3838 = vsel %vm3582, 1.0, %v3198
        %v3839 = vsel %vm3583, 1.0, %v3199
        %v3840 = vsel %vm3584, 1.0, %v3200
        %v3841 = vsel %vm3585, 1.0, %v3201
        %v3842 = vsel %vm3586, 1.0, %v3202
        %v3843 = vsel %vm3587, 1.0, %v3203
        %v3844 = vsel %vm3588, 1.0, %v3204
        %v3845 = vsel %vm3589, 1.0, %v3205
        %v3846 = vsel %vm3590, 1.0, %v3206
        %v3847 = vsel %vm3591, 1.0, %v3207
        %v3848 = vsel %vm3592, 1.0, %v3208
        %v3849 = vsel %vm3593, 1.0, %v3209
        %v3850 = vsel %vm3594, 1.0, %v3210
        %v3851 = vsel %vm3595, 1.0, %v3211
        %v3852 = vsel %vm3596, 1.0, %v3212
        %v3853 = vsel %vm3597, 1.0, %v3213
        %v3854 = vsel %vm3598, 1.0, %v3214
        %v3855 = vsel %vm3599, 1.0, %v3215
        %v3856 = vsel %vm3600, 1.0, %v3216
        %v3857 = vsel %vm3601, 1.0, %v3217
        %v3858 = vsel %vm3602, 1.0, %v3218
        %v3859 = vsel %vm3603, 1.0, %v3219
        %v3860 = vsel %vm3604, 1.0, %v3220
        %v3861 = vsel %vm3605, 1.0, %v3221
        %v3862 = vsel %vm3606, 1.0, %v3222
        %v3863 = vsel %vm3607, 1.0, %v3223
        %v3864 = vsel %vm3608, 1.0, %v3224
        %v3865 = vsel %vm3609, 1.0, %v3225
        %v3866 = vsel %vm3610, 1.0, %v3226
        %v3867 = vsel %vm3611, 1.0, %v3227
        %v3868 = vsel %vm3612, 1.0, %v3228
        %v3869 = vsel %vm3613, 1.0, %v3229
        %v3870 = vsub.f32 %v3742, %v3614
        %v3871 = vsub.f32 %v3743, %v3615
        %v3872 = vsub.f32 %v3744, %v3616
        %v3873 = vsub.f32 %v3745, %v3617
        %v3874 = vsub.f32 %v3746, %v3618
        %v3875 = vsub.f32 %v3747, %v3619
        %v3876 = vsub.f32 %v3748, %v3620
        %v3877 = vsub.f32 %v3749, %v3621
        %v3878 = vsub.f32 %v3750, %v3622
        %v3879 = vsub.f32 %v3751, %v3623
        %v3880 = vsub.f32 %v3752, %v3624
        %v3881 = vsub.f32 %v3753, %v3625
        %v3882 = vsub.f32 %v3754, %v3626
        %v3883 = vsub.f32 %v3755, %v3627
        %v3884 = vsub.f32 %v3756, %v3628
        %v3885 = vsub.f32 %v3757, %v3629
        %v3886 = vsub.f32 %v3758, %v3630
        %v3887 = vsub.f32 %v3759, %v3631
        %v3888 = vsub.f32 %v3760, %v3632
        %v3889 = vsub.f32 %v3761, %v3633
        %v3890 = vsub.f32 %v3762, %v3634
        %v3891 = vsub.f32 %v3763, %v3635
        %v3892 = vsub.f32 %v3764, %v3636
        %v3893 = vsub.f32 %v3765, %v3637
        %v3894 = vsub.f32 %v3766, %v3638
        %v3895 = vsub.f32 %v3767, %v3639
        %v3896 = vsub.f32 %v3768, %v3640
        %v3897 = vsub.f32 %v3769, %v3641
        %v3898 = vsub.f32 %v3770, %v3642
        %v3899 = vsub.f32 %v3771, %v3643
        %v3900 = vsub.f32 %v3772, %v3644
        %v3901 = vsub.f32 %v3773, %v3645
        %v3902 = vsub.f32 %v3774, %v3646
        %v3903 = vsub.f32 %v3775, %v3647
        %v3904 = vsub.f32 %v3776, %v3648
        %v3905 = vsub.f32 %v3777, %v3649
        %v3906 = vsub.f32 %v3778, %v3650
        %v3907 = vsub.f32 %v3779, %v3651
        %v3908 = vsub.f32 %v3780, %v3652
        %v3909 = vsub.f32 %v3781, %v3653
        %v3910 = vsub.f32 %v3782, %v3654
        %v3911 = vsub.f32 %v3783, %v3655
        %v3912 = vsub.f32 %v3784, %v3656
        %v3913 = vsub.f32 %v3785, %v3657
        %v3914 = vsub.f32 %v3786, %v3658
        %v3915 = vsub.f32 %v3787, %v3659
        %v3916 = vsub.f32 %v3788, %v3660
        %v3917 = vsub.f32 %v3789, %v3661
        %v3918 = vsub.f32 %v3790, %v3662
        %v3919 = vsub.f32 %v3791, %v3663
        %v3920 = vsub.f32 %v3792, %v3664
        %v3921 = vsub.f32 %v3793, %v3665
        %v3922 = vsub.f32 %v3794, %v3666
        %v3923 = vsub.f32 %v3795, %v3667
        %v3924 = vsub.f32 %v3796, %v3668
        %v3925 = vsub.f32 %v3797, %v3669
        %v3926 = vsub.f32 %v3798, %v3670
        %v3927 = vsub.f32 %v3799, %v3671
        %v3928 = vsub.f32 %v3800, %v3672
        %v3929 = vsub.f32 %v3801, %v3673
        %v3930 = vsub.f32 %v3802, %v3674
        %v3931 = vsub.f32 %v3803, %v3675
        %v3932 = vsub.f32 %v3804, %v3676
        %v3933 = vsub.f32 %v3805, %v3677
        %v3934 = vsub.f32 %v3806, %v3678
        %v3935 = vsub.f32 %v3807, %v3679
        %v3936 = vsub.f32 %v3808, %v3680
        %v3937 = vsub.f32 %v3809, %v3681
        %v3938 = vsub.f32 %v3810, %v3682
        %v3939 = vsub.f32 %v3811, %v3683
        %v3940 = vsub.f32 %v3812, %v3684
        %v3941 = vsub.f32 %v3813, %v3685
        %v3942 = vsub.f32 %v3814, %v3686
        %v3943 = vsub.f32 %v3815, %v3687
        %v3944 = vsub.f32 %v3816, %v3688
        %v3945 = vsub.f32 %v3817, %v3689
        %v3946 = vsub.f32 %v3818, %v3690
        %v3947 = vsub.f32 %v3819, %v3691
        %v3948 = vsub.f32 %v3820, %v3692
        %v3949 = vsub.f32 %v3821, %v3693
        %v3950 = vsub.f32 %v3822, %v3694
        %v3951 = vsub.f32 %v3823, %v3695
        %v3952 = vsub.f32 %v3824, %v3696
        %v3953 = vsub.f32 %v3825, %v3697
        %v3954 = vsub.f32 %v3826, %v3698
        %v3955 = vsub.f32 %v3827, %v3699
        %v3956 = vsub.f32 %v3828, %v3700
        %v3957 = vsub.f32 %v3829, %v3701
        %v3958 = vsub.f32 %v3830, %v3702
        %v3959 = vsub.f32 %v3831, %v3703
        %v3960 = vsub.f32 %v3832, %v3704
        %v3961 = vsub.f32 %v3833, %v3705
        %v3962 = vsub.f32 %v3834, %v3706
        %v3963 = vsub.f32 %v3835, %v3707
        %v3964 = vsub.f32 %v3836, %v3708
        %v3965 = vsub.f32 %v3837, %v3709
        %v3966 = vsub.f32 %v3838, %v3710
        %v3967 = vsub.f32 %v3839, %v3711
        %v3968 = vsub.f32 %v3840, %v3712
        %v3969 = vsub.f32 %v3841, %v3713
        %v3970 = vsub.f32 %v3842, %v3714
        %v3971 = vsub.f32 %v3843, %v3715
        %v3972 = vsub.f32 %v3844, %v3716
        %v3973 = vsub.f32 %v3845, %v3717
        %v3974 = vsub.f32 %v3846, %v3718
        %v3975 = vsub.f32 %v3847, %v3719
        %v3976 = vsub.f32 %v3848, %v3720
        %v3977 = vsub.f32 %v3849, %v3721
        %v3978 = vsub.f32 %v3850, %v3722
        %v3979 = vsub.f32 %v3851, %v3723
        %v3980 = vsub.f32 %v3852, %v3724
        %v3981 = vsub.f32 %v3853, %v3725
        %v3982 = vsub.f32 %v3854, %v3726
        %v3983 = vsub.f32 %v3855, %v3727
        %v3984 = vsub.f32 %v3856, %v3728
        %v3985 = vsub.f32 %v3857, %v3729
        %v3986 = vsub.f32 %v3858, %v3730
        %v3987 = vsub.f32 %v3859, %v3731
        %v3988 = vsub.f32 %v3860, %v3732
        %v3989 = vsub.f32 %v3861, %v3733
        %v3990 = vsub.f32 %v3862, %v3734
        %v3991 = vsub.f32 %v3863, %v3735
        %v3992 = vsub.f32 %v3864, %v3736
        %v3993 = vsub.f32 %v3865, %v3737
        %v3994 = vsub.f32 %v3866, %v3738
        %v3995 = vsub.f32 %v3867, %v3739
        %v3996 = vsub.f32 %v3868, %v3740
        %v3997 = vsub.f32 %v3869, %v3741
        %v3998 = vmul.f32 %v3870, 0.06666667
        %v3999 = vmul.f32 %v3871, 0.06666667
        %v4000 = vmul.f32 %v3872, 0.06666667
        %v4001 = vmul.f32 %v3873, 0.06666667
        %v4002 = vmul.f32 %v3874, 0.06666667
        %v4003 = vmul.f32 %v3875, 0.06666667
        %v4004 = vmul.f32 %v3876, 0.06666667
        %v4005 = vmul.f32 %v3877, 0.06666667
        %v4006 = vmul.f32 %v3878, 0.06666667
        %v4007 = vmul.f32 %v3879, 0.06666667
        %v4008 = vmul.f32 %v3880, 0.06666667
        %v4009 = vmul.f32 %v3881, 0.06666667
        %v4010 = vmul.f32 %v3882, 0.06666667
        %v4011 = vmul.f32 %v3883, 0.06666667
        %v4012 = vmul.f32 %v3884, 0.06666667
        %v4013 = vmul.f32 %v3885, 0.06666667
        %v4014 = vmul.f32 %v3886, 0.06666667
        %v4015 = vmul.f32 %v3887, 0.06666667
        %v4016 = vmul.f32 %v3888, 0.06666667
        %v4017 = vmul.f32 %v3889, 0.06666667
        %v4018 = vmul.f32 %v3890, 0.06666667
        %v4019 = vmul.f32 %v3891, 0.06666667
        %v4020 = vmul.f32 %v3892, 0.06666667
        %v4021 = vmul.f32 %v3893, 0.06666667
        %v4022 = vmul.f32 %v3894, 0.06666667
        %v4023 = vmul.f32 %v3895, 0.06666667
        %v4024 = vmul.f32 %v3896, 0.06666667
        %v4025 = vmul.f32 %v3897, 0.06666667
        %v4026 = vmul.f32 %v3898, 0.06666667
        %v4027 = vmul.f32 %v3899, 0.06666667
        %v4028 = vmul.f32 %v3900, 0.06666667
        %v4029 = vmul.f32 %v3901, 0.06666667
        %v4030 = vmul.f32 %v3902, 0.06666667
        %v4031 = vmul.f32 %v3903, 0.06666667
        %v4032 = vmul.f32 %v3904, 0.06666667
        %v4033 = vmul.f32 %v3905, 0.06666667
        %v4034 = vmul.f32 %v3906, 0.06666667
        %v4035 = vmul.f32 %v3907, 0.06666667
        %v4036 = vmul.f32 %v3908, 0.06666667
        %v4037 = vmul.f32 %v3909, 0.06666667
        %v4038 = vmul.f32 %v3910, 0.06666667
        %v4039 = vmul.f32 %v3911, 0.06666667
        %v4040 = vmul.f32 %v3912, 0.06666667
        %v4041 = vmul.f32 %v3913, 0.06666667
        %v4042 = vmul.f32 %v3914, 0.06666667
        %v4043 = vmul.f32 %v3915, 0.06666667
        %v4044 = vmul.f32 %v3916, 0.06666667
        %v4045 = vmul.f32 %v3917, 0.06666667
        %v4046 = vmul.f32 %v3918, 0.06666667
        %v4047 = vmul.f32 %v3919, 0.06666667
        %v4048 = vmul.f32 %v3920, 0.06666667
        %v4049 = vmul.f32 %v3921, 0.06666667
        %v4050 = vmul.f32 %v3922, 0.06666667
        %v4051 = vmul.f32 %v3923, 0.06666667
        %v4052 = vmul.f32 %v3924, 0.06666667
        %v4053 = vmul.f32 %v3925, 0.06666667
        %v4054 = vmul.f32 %v3926, 0.06666667
        %v4055 = vmul.f32 %v3927, 0.06666667
        %v4056 = vmul.f32 %v3928, 0.06666667
        %v4057 = vmul.f32 %v3929, 0.06666667
        %v4058 = vmul.f32 %v3930, 0.06666667
        %v4059 = vmul.f32 %v3931, 0.06666667
        %v4060 = vmul.f32 %v3932, 0.06666667
        %v4061 = vmul.f32 %v3933, 0.06666667
        %v4062 = vmul.f32 %v3934, 0.06666667
        %v4063 = vmul.f32 %v3935, 0.06666667
        %v4064 = vmul.f32 %v3936, 0.06666667
        %v4065 = vmul.f32 %v3937, 0.06666667
        %v4066 = vmul.f32 %v3938, 0.06666667
        %v4067 = vmul.f32 %v3939, 0.06666667
        %v4068 = vmul.f32 %v3940, 0.06666667
        %v4069 = vmul.f32 %v3941, 0.06666667
        %v4070 = vmul.f32 %v3942, 0.06666667
        %v4071 = vmul.f32 %v3943, 0.06666667
        %v4072 = vmul.f32 %v3944, 0.06666667
        %v4073 = vmul.f32 %v3945, 0.06666667
        %v4074 = vmul.f32 %v3946, 0.06666667
        %v4075 = vmul.f32 %v3947, 0.06666667
        %v4076 = vmul.f32 %v3948, 0.06666667
        %v4077 = vmul.f32 %v3949, 0.06666667
        %v4078 = vmul.f32 %v3950, 0.06666667
        %v4079 = vmul.f32 %v3951, 0.06666667
        %v4080 = vmul.f32 %v3952, 0.06666667
        %v4081 = vmul.f32 %v3953, 0.06666667
        %v4082 = vmul.f32 %v3954, 0.06666667
        %v4083 = vmul.f32 %v3955, 0.06666667
        %v4084 = vmul.f32 %v3956, 0.06666667
        %v4085 = vmul.f32 %v3957, 0.06666667
        %v4086 = vmul.f32 %v3958, 0.06666667
        %v4087 = vmul.f32 %v3959, 0.06666667
        %v4088 = vmul.f32 %v3960, 0.06666667
        %v4089 = vmul.f32 %v3961, 0.06666667
        %v4090 = vmul.f32 %v3962, 0.06666667
        %v4091 = vmul.f32 %v3963, 0.06666667
        %v4092 = vmul.f32 %v3964, 0.06666667
        %v4093 = vmul.f32 %v3965, 0.06666667
        %v4094 = vmul.f32 %v3966, 0.06666667
        %v4095 = vmul.f32 %v3967, 0.06666667
        %v4096 = vmul.f32 %v3968, 0.06666667
        %v4097 = vmul.f32 %v3969, 0.06666667
        %v4098 = vmul.f32 %v3970, 0.06666667
        %v4099 = vmul.f32 %v3971, 0.06666667
        %v4100 = vmul.f32 %v3972, 0.06666667
        %v4101 = vmul.f32 %v3973, 0.06666667
        %v4102 = vmul.f32 %v3974, 0.06666667
        %v4103 = vmul.f32 %v3975, 0.06666667
        %v4104 = vmul.f32 %v3976, 0.06666667
        %v4105 = vmul.f32 %v3977, 0.06666667
        %v4106 = vmul.f32 %v3978, 0.06666667
        %v4107 = vmul.f32 %v3979, 0.06666667
        %v4108 = vmul.f32 %v3980, 0.06666667
        %v4109 = vmul.f32 %v3981, 0.06666667
        %v4110 = vmul.f32 %v3982, 0.06666667
        %v4111 = vmul.f32 %v3983, 0.06666667
        %v4112 = vmul.f32 %v3984, 0.06666667
        %v4113 = vmul.f32 %v3985, 0.06666667
        %v4114 = vmul.f32 %v3986, 0.06666667
        %v4115 = vmul.f32 %v3987, 0.06666667
        %v4116 = vmul.f32 %v3988, 0.06666667
        %v4117 = vmul.f32 %v3989, 0.06666667
        %v4118 = vmul.f32 %v3990, 0.06666667
        %v4119 = vmul.f32 %v3991, 0.06666667
        %v4120 = vmul.f32 %v3992, 0.06666667
        %v4121 = vmul.f32 %v3993, 0.06666667
        %v4122 = vmul.f32 %v3994, 0.06666667
        %v4123 = vmul.f32 %v3995, 0.06666667
        %v4124 = vmul.f32 %v3996, 0.06666667
        %v4125 = vmul.f32 %v3997, 0.06666667
        %v4126 = vrcp.pop %v3998
        %v4127 = vmul.f32 1.0, %v4126
        %v4128 = vrcp.pop %v3999
        %v4129 = vmul.f32 1.0, %v4128
        %v4130 = vrcp.pop %v4000
        %v4131 = vmul.f32 1.0, %v4130
        %v4132 = vrcp.pop %v4001
        %v4133 = vmul.f32 1.0, %v4132
        %v4134 = vrcp.pop %v4002
        %v4135 = vmul.f32 1.0, %v4134
        %v4136 = vrcp.pop %v4003
        %v4137 = vmul.f32 1.0, %v4136
        %v4138 = vrcp.pop %v4004
        %v4139 = vmul.f32 1.0, %v4138
        %v4140 = vrcp.pop %v4005
        %v4141 = vmul.f32 1.0, %v4140
        %v4142 = vrcp.pop %v4006
        %v4143 = vmul.f32 1.0, %v4142
        %v4144 = vrcp.pop %v4007
        %v4145 = vmul.f32 1.0, %v4144
        %v4146 = vrcp.pop %v4008
        %v4147 = vmul.f32 1.0, %v4146
        %v4148 = vrcp.pop %v4009
        %v4149 = vmul.f32 1.0, %v4148
        %v4150 = vrcp.pop %v4010
        %v4151 = vmul.f32 1.0, %v4150
        %v4152 = vrcp.pop %v4011
        %v4153 = vmul.f32 1.0, %v4152
        %v4154 = vrcp.pop %v4012
        %v4155 = vmul.f32 1.0, %v4154
        %v4156 = vrcp.pop %v4013
        %v4157 = vmul.f32 1.0, %v4156
        %v4158 = vrcp.pop %v4014
        %v4159 = vmul.f32 1.0, %v4158
        %v4160 = vrcp.pop %v4015
        %v4161 = vmul.f32 1.0, %v4160
        %v4162 = vrcp.pop %v4016
        %v4163 = vmul.f32 1.0, %v4162
        %v4164 = vrcp.pop %v4017
        %v4165 = vmul.f32 1.0, %v4164
        %v4166 = vrcp.pop %v4018
        %v4167 = vmul.f32 1.0, %v4166
        %v4168 = vrcp.pop %v4019
        %v4169 = vmul.f32 1.0, %v4168
        %v4170 = vrcp.pop %v4020
        %v4171 = vmul.f32 1.0, %v4170
        %v4172 = vrcp.pop %v4021
        %v4173 = vmul.f32 1.0, %v4172
        %v4174 = vrcp.pop %v4022
        %v4175 = vmul.f32 1.0, %v4174
        %v4176 = vrcp.pop %v4023
        %v4177 = vmul.f32 1.0, %v4176
        %v4178 = vrcp.pop %v4024
        %v4179 = vmul.f32 1.0, %v4178
        %v4180 = vrcp.pop %v4025
        %v4181 = vmul.f32 1.0, %v4180
        %v4182 = vrcp.pop %v4026
        %v4183 = vmul.f32 1.0, %v4182
        %v4184 = vrcp.pop %v4027
        %v4185 = vmul.f32 1.0, %v4184
        %v4186 = vrcp.pop %v4028
        %v4187 = vmul.f32 1.0, %v4186
        %v4188 = vrcp.pop %v4029
        %v4189 = vmul.f32 1.0, %v4188
        %v4190 = vrcp.pop %v4030
        %v4191 = vmul.f32 1.0, %v4190
        %v4192 = vrcp.pop %v4031
        %v4193 = vmul.f32 1.0, %v4192
        %v4194 = vrcp.pop %v4032
        %v4195 = vmul.f32 1.0, %v4194
        %v4196 = vrcp.pop %v4033
        %v4197 = vmul.f32 1.0, %v4196
        %v4198 = vrcp.pop %v4034
        %v4199 = vmul.f32 1.0, %v4198
        %v4200 = vrcp.pop %v4035
        %v4201 = vmul.f32 1.0, %v4200
        %v4202 = vrcp.pop %v4036
        %v4203 = vmul.f32 1.0, %v4202
        %v4204 = vrcp.pop %v4037
        %v4205 = vmul.f32 1.0, %v4204
        %v4206 = vrcp.pop %v4038
        %v4207 = vmul.f32 1.0, %v4206
        %v4208 = vrcp.pop %v4039
        %v4209 = vmul.f32 1.0, %v4208
        %v4210 = vrcp.pop %v4040
        %v4211 = vmul.f32 1.0, %v4210
        %v4212 = vrcp.pop %v4041
        %v4213 = vmul.f32 1.0, %v4212
        %v4214 = vrcp.pop %v4042
        %v4215 = vmul.f32 1.0, %v4214
        %v4216 = vrcp.pop %v4043
        %v4217 = vmul.f32 1.0, %v4216
        %v4218 = vrcp.pop %v4044
        %v4219 = vmul.f32 1.0, %v4218
        %v4220 = vrcp.pop %v4045
        %v4221 = vmul.f32 1.0, %v4220
        %v4222 = vrcp.pop %v4046
        %v4223 = vmul.f32 1.0, %v4222
        %v4224 = vrcp.pop %v4047
        %v4225 = vmul.f32 1.0, %v4224
        %v4226 = vrcp.pop %v4048
        %v4227 = vmul.f32 1.0, %v4226
        %v4228 = vrcp.pop %v4049
        %v4229 = vmul.f32 1.0, %v4228
        %v4230 = vrcp.pop %v4050
        %v4231 = vmul.f32 1.0, %v4230
        %v4232 = vrcp.pop %v4051
        %v4233 = vmul.f32 1.0, %v4232
        %v4234 = vrcp.pop %v4052
        %v4235 = vmul.f32 1.0, %v4234
        %v4236 = vrcp.pop %v4053
        %v4237 = vmul.f32 1.0, %v4236
        %v4238 = vrcp.pop %v4054
        %v4239 = vmul.f32 1.0, %v4238
        %v4240 = vrcp.pop %v4055
        %v4241 = vmul.f32 1.0, %v4240
        %v4242 = vrcp.pop %v4056
        %v4243 = vmul.f32 1.0, %v4242
        %v4244 = vrcp.pop %v4057
        %v4245 = vmul.f32 1.0, %v4244
        %v4246 = vrcp.pop %v4058
        %v4247 = vmul.f32 1.0, %v4246
        %v4248 = vrcp.pop %v4059
        %v4249 = vmul.f32 1.0, %v4248
        %v4250 = vrcp.pop %v4060
        %v4251 = vmul.f32 1.0, %v4250
        %v4252 = vrcp.pop %v4061
        %v4253 = vmul.f32 1.0, %v4252
        %v4254 = vrcp.pop %v4062
        %v4255 = vmul.f32 1.0, %v4254
        %v4256 = vrcp.pop %v4063
        %v4257 = vmul.f32 1.0, %v4256
        %v4258 = vrcp.pop %v4064
        %v4259 = vmul.f32 1.0, %v4258
        %v4260 = vrcp.pop %v4065
        %v4261 = vmul.f32 1.0, %v4260
        %v4262 = vrcp.pop %v4066
        %v4263 = vmul.f32 1.0, %v4262
        %v4264 = vrcp.pop %v4067
        %v4265 = vmul.f32 1.0, %v4264
        %v4266 = vrcp.pop %v4068
        %v4267 = vmul.f32 1.0, %v4266
        %v4268 = vrcp.pop %v4069
        %v4269 = vmul.f32 1.0, %v4268
        %v4270 = vrcp.pop %v4070
        %v4271 = vmul.f32 1.0, %v4270
        %v4272 = vrcp.pop %v4071
        %v4273 = vmul.f32 1.0, %v4272
        %v4274 = vrcp.pop %v4072
        %v4275 = vmul.f32 1.0, %v4274
        %v4276 = vrcp.pop %v4073
        %v4277 = vmul.f32 1.0, %v4276
        %v4278 = vrcp.pop %v4074
        %v4279 = vmul.f32 1.0, %v4278
        %v4280 = vrcp.pop %v4075
        %v4281 = vmul.f32 1.0, %v4280
        %v4282 = vrcp.pop %v4076
        %v4283 = vmul.f32 1.0, %v4282
        %v4284 = vrcp.pop %v4077
        %v4285 = vmul.f32 1.0, %v4284
        %v4286 = vrcp.pop %v4078
        %v4287 = vmul.f32 1.0, %v4286
        %v4288 = vrcp.pop %v4079
        %v4289 = vmul.f32 1.0, %v4288
        %v4290 = vrcp.pop %v4080
        %v4291 = vmul.f32 1.0, %v4290
        %v4292 = vrcp.pop %v4081
        %v4293 = vmul.f32 1.0, %v4292
        %v4294 = vrcp.pop %v4082
        %v4295 = vmul.f32 1.0, %v4294
        %v4296 = vrcp.pop %v4083
        %v4297 = vmul.f32 1.0, %v4296
        %v4298 = vrcp.pop %v4084
        %v4299 = vmul.f32 1.0, %v4298
        %v4300 = vrcp.pop %v4085
        %v4301 = vmul.f32 1.0, %v4300
        %v4302 = vrcp.pop %v4086
        %v4303 = vmul.f32 1.0, %v4302
        %v4304 = vrcp.pop %v4087
        %v4305 = vmul.f32 1.0, %v4304
        %v4306 = vrcp.pop %v4088
        %v4307 = vmul.f32 1.0, %v4306
        %v4308 = vrcp.pop %v4089
        %v4309 = vmul.f32 1.0, %v4308
        %v4310 = vrcp.pop %v4090
        %v4311 = vmul.f32 1.0, %v4310
        %v4312 = vrcp.pop %v4091
        %v4313 = vmul.f32 1.0, %v4312
        %v4314 = vrcp.pop %v4092
        %v4315 = vmul.f32 1.0, %v4314
        %v4316 = vrcp.pop %v4093
        %v4317 = vmul.f32 1.0, %v4316
        %v4318 = vrcp.pop %v4094
        %v4319 = vmul.f32 1.0, %v4318
        %v4320 = vrcp.pop %v4095
        %v4321 = vmul.f32 1.0, %v4320
        %v4322 = vrcp.pop %v4096
        %v4323 = vmul.f32 1.0, %v4322
        %v4324 = vrcp.pop %v4097
        %v4325 = vmul.f32 1.0, %v4324
        %v4326 = vrcp.pop %v4098
        %v4327 = vmul.f32 1.0, %v4326
        %v4328 = vrcp.pop %v4099
        %v4329 = vmul.f32 1.0, %v4328
        %v4330 = vrcp.pop %v4100
        %v4331 = vmul.f32 1.0, %v4330
        %v4332 = vrcp.pop %v4101
        %v4333 = vmul.f32 1.0, %v4332
        %v4334 = vrcp.pop %v4102
        %v4335 = vmul.f32 1.0, %v4334
        %v4336 = vrcp.pop %v4103
        %v4337 = vmul.f32 1.0, %v4336
        %v4338 = vrcp.pop %v4104
        %v4339 = vmul.f32 1.0, %v4338
        %v4340 = vrcp.pop %v4105
        %v4341 = vmul.f32 1.0, %v4340
        %v4342 = vrcp.pop %v4106
        %v4343 = vmul.f32 1.0, %v4342
        %v4344 = vrcp.pop %v4107
        %v4345 = vmul.f32 1.0, %v4344
        %v4346 = vrcp.pop %v4108
        %v4347 = vmul.f32 1.0, %v4346
        %v4348 = vrcp.pop %v4109
        %v4349 = vmul.f32 1.0, %v4348
        %v4350 = vrcp.pop %v4110
        %v4351 = vmul.f32 1.0, %v4350
        %v4352 = vrcp.pop %v4111
        %v4353 = vmul.f32 1.0, %v4352
        %v4354 = vrcp.pop %v4112
        %v4355 = vmul.f32 1.0, %v4354
        %v4356 = vrcp.pop %v4113
        %v4357 = vmul.f32 1.0, %v4356
        %v4358 = vrcp.pop %v4114
        %v4359 = vmul.f32 1.0, %v4358
        %v4360 = vrcp.pop %v4115
        %v4361 = vmul.f32 1.0, %v4360
        %v4362 = vrcp.pop %v4116
        %v4363 = vmul.f32 1.0, %v4362
        %v4364 = vrcp.pop %v4117
        %v4365 = vmul.f32 1.0, %v4364
        %v4366 = vrcp.pop %v4118
        %v4367 = vmul.f32 1.0, %v4366
        %v4368 = vrcp.pop %v4119
        %v4369 = vmul.f32 1.0, %v4368
        %v4370 = vrcp.pop %v4120
        %v4371 = vmul.f32 1.0, %v4370
        %v4372 = vrcp.pop %v4121
        %v4373 = vmul.f32 1.0, %v4372
        %v4374 = vrcp.pop %v4122
        %v4375 = vmul.f32 1.0, %v4374
        %v4376 = vrcp.pop %v4123
        %v4377 = vmul.f32 1.0, %v4376
        %v4378 = vrcp.pop %v4124
        %v4379 = vmul.f32 1.0, %v4378
        %v4380 = vrcp.pop %v4125
        %v4381 = vmul.f32 1.0, %v4380
        %v4382 = vsub.f32 0.0, %v3614
        %v4383 = vsub.f32 0.0, %v3615
        %v4384 = vsub.f32 0.0, %v3616
        %v4385 = vsub.f32 0.0, %v3617
        %v4386 = vsub.f32 0.0, %v3618
        %v4387 = vsub.f32 0.0, %v3619
        %v4388 = vsub.f32 0.0, %v3620
        %v4389 = vsub.f32 0.0, %v3621
        %v4390 = vsub.f32 0.0, %v3622
        %v4391 = vsub.f32 0.0, %v3623
        %v4392 = vsub.f32 0.0, %v3624
        %v4393 = vsub.f32 0.0, %v3625
        %v4394 = vsub.f32 0.0, %v3626
        %v4395 = vsub.f32 0.0, %v3627
        %v4396 = vsub.f32 0.0, %v3628
        %v4397 = vsub.f32 0.0, %v3629
        %v4398 = vsub.f32 0.0, %v3630
        %v4399 = vsub.f32 0.0, %v3631
        %v4400 = vsub.f32 0.0, %v3632
        %v4401 = vsub.f32 0.0, %v3633
        %v4402 = vsub.f32 0.0, %v3634
        %v4403 = vsub.f32 0.0, %v3635
        %v4404 = vsub.f32 0.0, %v3636
        %v4405 = vsub.f32 0.0, %v3637
        %v4406 = vsub.f32 0.0, %v3638
        %v4407 = vsub.f32 0.0, %v3639
        %v4408 = vsub.f32 0.0, %v3640
        %v4409 = vsub.f32 0.0, %v3641
        %v4410 = vsub.f32 0.0, %v3642
        %v4411 = vsub.f32 0.0, %v3643
        %v4412 = vsub.f32 0.0, %v3644
        %v4413 = vsub.f32 0.0, %v3645
        %v4414 = vsub.f32 0.0, %v3646
        %v4415 = vsub.f32 0.0, %v3647
        %v4416 = vsub.f32 0.0, %v3648
        %v4417 = vsub.f32 0.0, %v3649
        %v4418 = vsub.f32 0.0, %v3650
        %v4419 = vsub.f32 0.0, %v3651
        %v4420 = vsub.f32 0.0, %v3652
        %v4421 = vsub.f32 0.0, %v3653
        %v4422 = vsub.f32 0.0, %v3654
        %v4423 = vsub.f32 0.0, %v3655
        %v4424 = vsub.f32 0.0, %v3656
        %v4425 = vsub.f32 0.0, %v3657
        %v4426 = vsub.f32 0.0, %v3658
        %v4427 = vsub.f32 0.0, %v3659
        %v4428 = vsub.f32 0.0, %v3660
        %v4429 = vsub.f32 0.0, %v3661
        %v4430 = vsub.f32 0.0, %v3662
        %v4431 = vsub.f32 0.0, %v3663
        %v4432 = vsub.f32 0.0, %v3664
        %v4433 = vsub.f32 0.0, %v3665
        %v4434 = vsub.f32 0.0, %v3666
        %v4435 = vsub.f32 0.0, %v3667
        %v4436 = vsub.f32 0.0, %v3668
        %v4437 = vsub.f32 0.0, %v3669
        %v4438 = vsub.f32 0.0, %v3670
        %v4439 = vsub.f32 0.0, %v3671
        %v4440 = vsub.f32 0.0, %v3672
        %v4441 = vsub.f32 0.0, %v3673
        %v4442 = vsub.f32 0.0, %v3674
        %v4443 = vsub.f32 0.0, %v3675
        %v4444 = vsub.f32 0.0, %v3676
        %v4445 = vsub.f32 0.0, %v3677
        %v4446 = vsub.f32 0.0, %v3678
        %v4447 = vsub.f32 0.0, %v3679
        %v4448 = vsub.f32 0.0, %v3680
        %v4449 = vsub.f32 0.0, %v3681
        %v4450 = vsub.f32 0.0, %v3682
        %v4451 = vsub.f32 0.0, %v3683
        %v4452 = vsub.f32 0.0, %v3684
        %v4453 = vsub.f32 0.0, %v3685
        %v4454 = vsub.f32 0.0, %v3686
        %v4455 = vsub.f32 0.0, %v3687
        %v4456 = vsub.f32 0.0, %v3688
        %v4457 = vsub.f32 0.0, %v3689
        %v4458 = vsub.f32 0.0, %v3690
        %v4459 = vsub.f32 0.0, %v3691
        %v4460 = vsub.f32 0.0, %v3692
        %v4461 = vsub.f32 0.0, %v3693
        %v4462 = vsub.f32 0.0, %v3694
        %v4463 = vsub.f32 0.0, %v3695
        %v4464 = vsub.f32 0.0, %v3696
        %v4465 = vsub.f32 0.0, %v3697
        %v4466 = vsub.f32 0.0, %v3698
        %v4467 = vsub.f32 0.0, %v3699
        %v4468 = vsub.f32 0.0, %v3700
        %v4469 = vsub.f32 0.0, %v3701
        %v4470 = vsub.f32 0.0, %v3702
        %v4471 = vsub.f32 0.0, %v3703
        %v4472 = vsub.f32 0.0, %v3704
        %v4473 = vsub.f32 0.0, %v3705
        %v4474 = vsub.f32 0.0, %v3706
        %v4475 = vsub.f32 0.0, %v3707
        %v4476 = vsub.f32 0.0, %v3708
        %v4477 = vsub.f32 0.0, %v3709
        %v4478 = vsub.f32 0.0, %v3710
        %v4479 = vsub.f32 0.0, %v3711
        %v4480 = vsub.f32 0.0, %v3712
        %v4481 = vsub.f32 0.0, %v3713
        %v4482 = vsub.f32 0.0, %v3714
        %v4483 = vsub.f32 0.0, %v3715
        %v4484 = vsub.f32 0.0, %v3716
        %v4485 = vsub.f32 0.0, %v3717
        %v4486 = vsub.f32 0.0, %v3718
        %v4487 = vsub.f32 0.0, %v3719
        %v4488 = vsub.f32 0.0, %v3720
        %v4489 = vsub.f32 0.0, %v3721
        %v4490 = vsub.f32 0.0, %v3722
        %v4491 = vsub.f32 0.0, %v3723
        %v4492 = vsub.f32 0.0, %v3724
        %v4493 = vsub.f32 0.0, %v3725
        %v4494 = vsub.f32 0.0, %v3726
        %v4495 = vsub.f32 0.0, %v3727
        %v4496 = vsub.f32 0.0, %v3728
        %v4497 = vsub.f32 0.0, %v3729
        %v4498 = vsub.f32 0.0, %v3730
        %v4499 = vsub.f32 0.0, %v3731
        %v4500 = vsub.f32 0.0, %v3732
        %v4501 = vsub.f32 0.0, %v3733
        %v4502 = vsub.f32 0.0, %v3734
        %v4503 = vsub.f32 0.0, %v3735
        %v4504 = vsub.f32 0.0, %v3736
        %v4505 = vsub.f32 0.0, %v3737
        %v4506 = vsub.f32 0.0, %v3738
        %v4507 = vsub.f32 0.0, %v3739
        %v4508 = vsub.f32 0.0, %v3740
        %v4509 = vsub.f32 0.0, %v3741
        %v4510 = vmul.f32 %v4382, %v4127
        %v4511 = vmul.f32 %v4383, %v4129
        %v4512 = vmul.f32 %v4384, %v4131
        %v4513 = vmul.f32 %v4385, %v4133
        %v4514 = vmul.f32 %v4386, %v4135
        %v4515 = vmul.f32 %v4387, %v4137
        %v4516 = vmul.f32 %v4388, %v4139
        %v4517 = vmul.f32 %v4389, %v4141
        %v4518 = vmul.f32 %v4390, %v4143
        %v4519 = vmul.f32 %v4391, %v4145
        %v4520 = vmul.f32 %v4392, %v4147
        %v4521 = vmul.f32 %v4393, %v4149
        %v4522 = vmul.f32 %v4394, %v4151
        %v4523 = vmul.f32 %v4395, %v4153
        %v4524 = vmul.f32 %v4396, %v4155
        %v4525 = vmul.f32 %v4397, %v4157
        %v4526 = vmul.f32 %v4398, %v4159
        %v4527 = vmul.f32 %v4399, %v4161
        %v4528 = vmul.f32 %v4400, %v4163
        %v4529 = vmul.f32 %v4401, %v4165
        %v4530 = vmul.f32 %v4402, %v4167
        %v4531 = vmul.f32 %v4403, %v4169
        %v4532 = vmul.f32 %v4404, %v4171
        %v4533 = vmul.f32 %v4405, %v4173
        %v4534 = vmul.f32 %v4406, %v4175
        %v4535 = vmul.f32 %v4407, %v4177
        %v4536 = vmul.f32 %v4408, %v4179
        %v4537 = vmul.f32 %v4409, %v4181
        %v4538 = vmul.f32 %v4410, %v4183
        %v4539 = vmul.f32 %v4411, %v4185
        %v4540 = vmul.f32 %v4412, %v4187
        %v4541 = vmul.f32 %v4413, %v4189
        %v4542 = vmul.f32 %v4414, %v4191
        %v4543 = vmul.f32 %v4415, %v4193
        %v4544 = vmul.f32 %v4416, %v4195
        %v4545 = vmul.f32 %v4417, %v4197
        %v4546 = vmul.f32 %v4418, %v4199
        %v4547 = vmul.f32 %v4419, %v4201
        %v4548 = vmul.f32 %v4420, %v4203
        %v4549 = vmul.f32 %v4421, %v4205
        %v4550 = vmul.f32 %v4422, %v4207
        %v4551 = vmul.f32 %v4423, %v4209
        %v4552 = vmul.f32 %v4424, %v4211
        %v4553 = vmul.f32 %v4425, %v4213
        %v4554 = vmul.f32 %v4426, %v4215
        %v4555 = vmul.f32 %v4427, %v4217
        %v4556 = vmul.f32 %v4428, %v4219
        %v4557 = vmul.f32 %v4429, %v4221
        %v4558 = vmul.f32 %v4430, %v4223
        %v4559 = vmul.f32 %v4431, %v4225
        %v4560 = vmul.f32 %v4432, %v4227
        %v4561 = vmul.f32 %v4433, %v4229
        %v4562 = vmul.f32 %v4434, %v4231
        %v4563 = vmul.f32 %v4435, %v4233
        %v4564 = vmul.f32 %v4436, %v4235
        %v4565 = vmul.f32 %v4437, %v4237
        %v4566 = vmul.f32 %v4438, %v4239
        %v4567 = vmul.f32 %v4439, %v4241
        %v4568 = vmul.f32 %v4440, %v4243
        %v4569 = vmul.f32 %v4441, %v4245
        %v4570 = vmul.f32 %v4442, %v4247
        %v4571 = vmul.f32 %v4443, %v4249
        %v4572 = vmul.f32 %v4444, %v4251
        %v4573 = vmul.f32 %v4445, %v4253
        %v4574 = vmul.f32 %v4446, %v4255
        %v4575 = vmul.f32 %v4447, %v4257
        %v4576 = vmul.f32 %v4448, %v4259
        %v4577 = vmul.f32 %v4449, %v4261
        %v4578 = vmul.f32 %v4450, %v4263
        %v4579 = vmul.f32 %v4451, %v4265
        %v4580 = vmul.f32 %v4452, %v4267
        %v4581 = vmul.f32 %v4453, %v4269
        %v4582 = vmul.f32 %v4454, %v4271
        %v4583 = vmul.f32 %v4455, %v4273
        %v4584 = vmul.f32 %v4456, %v4275
        %v4585 = vmul.f32 %v4457, %v4277
        %v4586 = vmul.f32 %v4458, %v4279
        %v4587 = vmul.f32 %v4459, %v4281
        %v4588 = vmul.f32 %v4460, %v4283
        %v4589 = vmul.f32 %v4461, %v4285
        %v4590 = vmul.f32 %v4462, %v4287
        %v4591 = vmul.f32 %v4463, %v4289
        %v4592 = vmul.f32 %v4464, %v4291
        %v4593 = vmul.f32 %v4465, %v4293
        %v4594 = vmul.f32 %v4466, %v4295
        %v4595 = vmul.f32 %v4467, %v4297
        %v4596 = vmul.f32 %v4468, %v4299
        %v4597 = vmul.f32 %v4469, %v4301
        %v4598 = vmul.f32 %v4470, %v4303
        %v4599 = vmul.f32 %v4471, %v4305
        %v4600 = vmul.f32 %v4472, %v4307
        %v4601 = vmul.f32 %v4473, %v4309
        %v4602 = vmul.f32 %v4474, %v4311
        %v4603 = vmul.f32 %v4475, %v4313
        %v4604 = vmul.f32 %v4476, %v4315
        %v4605 = vmul.f32 %v4477, %v4317
        %v4606 = vmul.f32 %v4478, %v4319
        %v4607 = vmul.f32 %v4479, %v4321
        %v4608 = vmul.f32 %v4480, %v4323
        %v4609 = vmul.f32 %v4481, %v4325
        %v4610 = vmul.f32 %v4482, %v4327
        %v4611 = vmul.f32 %v4483, %v4329
        %v4612 = vmul.f32 %v4484, %v4331
        %v4613 = vmul.f32 %v4485, %v4333
        %v4614 = vmul.f32 %v4486, %v4335
        %v4615 = vmul.f32 %v4487, %v4337
        %v4616 = vmul.f32 %v4488, %v4339
        %v4617 = vmul.f32 %v4489, %v4341
        %v4618 = vmul.f32 %v4490, %v4343
        %v4619 = vmul.f32 %v4491, %v4345
        %v4620 = vmul.f32 %v4492, %v4347
        %v4621 = vmul.f32 %v4493, %v4349
        %v4622 = vmul.f32 %v4494, %v4351
        %v4623 = vmul.f32 %v4495, %v4353
        %v4624 = vmul.f32 %v4496, %v4355
        %v4625 = vmul.f32 %v4497, %v4357
        %v4626 = vmul.f32 %v4498, %v4359
        %v4627 = vmul.f32 %v4499, %v4361
        %v4628 = vmul.f32 %v4500, %v4363
        %v4629 = vmul.f32 %v4501, %v4365
        %v4630 = vmul.f32 %v4502, %v4367
        %v4631 = vmul.f32 %v4503, %v4369
        %v4632 = vmul.f32 %v4504, %v4371
        %v4633 = vmul.f32 %v4505, %v4373
        %v4634 = vmul.f32 %v4506, %v4375
        %v4635 = vmul.f32 %v4507, %v4377
        %v4636 = vmul.f32 %v4508, %v4379
        %v4637 = vmul.f32 %v4509, %v4381
        %v4638 = vround.ne.pseudo %v4510
        %v4639 = vround.ne.pseudo %v4511
        %v4640 = vround.ne.pseudo %v4512
        %v4641 = vround.ne.pseudo %v4513
        %v4642 = vround.ne.pseudo %v4514
        %v4643 = vround.ne.pseudo %v4515
        %v4644 = vround.ne.pseudo %v4516
        %v4645 = vround.ne.pseudo %v4517
        %v4646 = vround.ne.pseudo %v4518
        %v4647 = vround.ne.pseudo %v4519
        %v4648 = vround.ne.pseudo %v4520
        %v4649 = vround.ne.pseudo %v4521
        %v4650 = vround.ne.pseudo %v4522
        %v4651 = vround.ne.pseudo %v4523
        %v4652 = vround.ne.pseudo %v4524
        %v4653 = vround.ne.pseudo %v4525
        %v4654 = vround.ne.pseudo %v4526
        %v4655 = vround.ne.pseudo %v4527
        %v4656 = vround.ne.pseudo %v4528
        %v4657 = vround.ne.pseudo %v4529
        %v4658 = vround.ne.pseudo %v4530
        %v4659 = vround.ne.pseudo %v4531
        %v4660 = vround.ne.pseudo %v4532
        %v4661 = vround.ne.pseudo %v4533
        %v4662 = vround.ne.pseudo %v4534
        %v4663 = vround.ne.pseudo %v4535
        %v4664 = vround.ne.pseudo %v4536
        %v4665 = vround.ne.pseudo %v4537
        %v4666 = vround.ne.pseudo %v4538
        %v4667 = vround.ne.pseudo %v4539
        %v4668 = vround.ne.pseudo %v4540
        %v4669 = vround.ne.pseudo %v4541
        %v4670 = vround.ne.pseudo %v4542
        %v4671 = vround.ne.pseudo %v4543
        %v4672 = vround.ne.pseudo %v4544
        %v4673 = vround.ne.pseudo %v4545
        %v4674 = vround.ne.pseudo %v4546
        %v4675 = vround.ne.pseudo %v4547
        %v4676 = vround.ne.pseudo %v4548
        %v4677 = vround.ne.pseudo %v4549
        %v4678 = vround.ne.pseudo %v4550
        %v4679 = vround.ne.pseudo %v4551
        %v4680 = vround.ne.pseudo %v4552
        %v4681 = vround.ne.pseudo %v4553
        %v4682 = vround.ne.pseudo %v4554
        %v4683 = vround.ne.pseudo %v4555
        %v4684 = vround.ne.pseudo %v4556
        %v4685 = vround.ne.pseudo %v4557
        %v4686 = vround.ne.pseudo %v4558
        %v4687 = vround.ne.pseudo %v4559
        %v4688 = vround.ne.pseudo %v4560
        %v4689 = vround.ne.pseudo %v4561
        %v4690 = vround.ne.pseudo %v4562
        %v4691 = vround.ne.pseudo %v4563
        %v4692 = vround.ne.pseudo %v4564
        %v4693 = vround.ne.pseudo %v4565
        %v4694 = vround.ne.pseudo %v4566
        %v4695 = vround.ne.pseudo %v4567
        %v4696 = vround.ne.pseudo %v4568
        %v4697 = vround.ne.pseudo %v4569
        %v4698 = vround.ne.pseudo %v4570
        %v4699 = vround.ne.pseudo %v4571
        %v4700 = vround.ne.pseudo %v4572
        %v4701 = vround.ne.pseudo %v4573
        %v4702 = vround.ne.pseudo %v4574
        %v4703 = vround.ne.pseudo %v4575
        %v4704 = vround.ne.pseudo %v4576
        %v4705 = vround.ne.pseudo %v4577
        %v4706 = vround.ne.pseudo %v4578
        %v4707 = vround.ne.pseudo %v4579
        %v4708 = vround.ne.pseudo %v4580
        %v4709 = vround.ne.pseudo %v4581
        %v4710 = vround.ne.pseudo %v4582
        %v4711 = vround.ne.pseudo %v4583
        %v4712 = vround.ne.pseudo %v4584
        %v4713 = vround.ne.pseudo %v4585
        %v4714 = vround.ne.pseudo %v4586
        %v4715 = vround.ne.pseudo %v4587
        %v4716 = vround.ne.pseudo %v4588
        %v4717 = vround.ne.pseudo %v4589
        %v4718 = vround.ne.pseudo %v4590
        %v4719 = vround.ne.pseudo %v4591
        %v4720 = vround.ne.pseudo %v4592
        %v4721 = vround.ne.pseudo %v4593
        %v4722 = vround.ne.pseudo %v4594
        %v4723 = vround.ne.pseudo %v4595
        %v4724 = vround.ne.pseudo %v4596
        %v4725 = vround.ne.pseudo %v4597
        %v4726 = vround.ne.pseudo %v4598
        %v4727 = vround.ne.pseudo %v4599
        %v4728 = vround.ne.pseudo %v4600
        %v4729 = vround.ne.pseudo %v4601
        %v4730 = vround.ne.pseudo %v4602
        %v4731 = vround.ne.pseudo %v4603
        %v4732 = vround.ne.pseudo %v4604
        %v4733 = vround.ne.pseudo %v4605
        %v4734 = vround.ne.pseudo %v4606
        %v4735 = vround.ne.pseudo %v4607
        %v4736 = vround.ne.pseudo %v4608
        %v4737 = vround.ne.pseudo %v4609
        %v4738 = vround.ne.pseudo %v4610
        %v4739 = vround.ne.pseudo %v4611
        %v4740 = vround.ne.pseudo %v4612
        %v4741 = vround.ne.pseudo %v4613
        %v4742 = vround.ne.pseudo %v4614
        %v4743 = vround.ne.pseudo %v4615
        %v4744 = vround.ne.pseudo %v4616
        %v4745 = vround.ne.pseudo %v4617
        %v4746 = vround.ne.pseudo %v4618
        %v4747 = vround.ne.pseudo %v4619
        %v4748 = vround.ne.pseudo %v4620
        %v4749 = vround.ne.pseudo %v4621
        %v4750 = vround.ne.pseudo %v4622
        %v4751 = vround.ne.pseudo %v4623
        %v4752 = vround.ne.pseudo %v4624
        %v4753 = vround.ne.pseudo %v4625
        %v4754 = vround.ne.pseudo %v4626
        %v4755 = vround.ne.pseudo %v4627
        %v4756 = vround.ne.pseudo %v4628
        %v4757 = vround.ne.pseudo %v4629
        %v4758 = vround.ne.pseudo %v4630
        %v4759 = vround.ne.pseudo %v4631
        %v4760 = vround.ne.pseudo %v4632
        %v4761 = vround.ne.pseudo %v4633
        %v4762 = vround.ne.pseudo %v4634
        %v4763 = vround.ne.pseudo %v4635
        %v4764 = vround.ne.pseudo %v4636
        %v4765 = vround.ne.pseudo %v4637
        %v4766 = vmul.f32 %v414, %v4127
        %v4767 = vmul.f32 %v415, %v4129
        %v4768 = vmul.f32 %v416, %v4131
        %v4769 = vmul.f32 %v417, %v4133
        %v4770 = vmul.f32 %v418, %v4135
        %v4771 = vmul.f32 %v419, %v4137
        %v4772 = vmul.f32 %v420, %v4139
        %v4773 = vmul.f32 %v421, %v4141
        %v4774 = vmul.f32 %v550, %v4143
        %v4775 = vmul.f32 %v551, %v4145
        %v4776 = vmul.f32 %v552, %v4147
        %v4777 = vmul.f32 %v553, %v4149
        %v4778 = vmul.f32 %v554, %v4151
        %v4779 = vmul.f32 %v555, %v4153
        %v4780 = vmul.f32 %v556, %v4155
        %v4781 = vmul.f32 %v557, %v4157
        %v4782 = vmul.f32 %v686, %v4159
        %v4783 = vmul.f32 %v687, %v4161
        %v4784 = vmul.f32 %v688, %v4163
        %v4785 = vmul.f32 %v689, %v4165
        %v4786 = vmul.f32 %v690, %v4167
        %v4787 = vmul.f32 %v691, %v4169
        %v4788 = vmul.f32 %v692, %v4171
        %v4789 = vmul.f32 %v693, %v4173
        %v4790 = vmul.f32 %v822, %v4175
        %v4791 = vmul.f32 %v823, %v4177
        %v4792 = vmul.f32 %v824, %v4179
        %v4793 = vmul.f32 %v825, %v4181
        %v4794 = vmul.f32 %v826, %v4183
        %v4795 = vmul.f32 %v827, %v4185
        %v4796 = vmul.f32 %v828, %v4187
        %v4797 = vmul.f32 %v829, %v4189
        %v4798 = vmul.f32 %v958, %v4191
        %v4799 = vmul.f32 %v959, %v4193
        %v4800 = vmul.f32 %v960, %v4195
        %v4801 = vmul.f32 %v961, %v4197
        %v4802 = vmul.f32 %v962, %v4199
        %v4803 = vmul.f32 %v963, %v4201
        %v4804 = vmul.f32 %v964, %v4203
        %v4805 = vmul.f32 %v965, %v4205
        %v4806 = vmul.f32 %v1094, %v4207
        %v4807 = vmul.f32 %v1095, %v4209
        %v4808 = vmul.f32 %v1096, %v4211
        %v4809 = vmul.f32 %v1097, %v4213
        %v4810 = vmul.f32 %v1098, %v4215
        %v4811 = vmul.f32 %v1099, %v4217
        %v4812 = vmul.f32 %v1100, %v4219
        %v4813 = vmul.f32 %v1101, %v4221
        %v4814 = vmul.f32 %v1230, %v4223
        %v4815 = vmul.f32 %v1231, %v4225
        %v4816 = vmul.f32 %v1232, %v4227
        %v4817 = vmul.f32 %v1233, %v4229
        %v4818 = vmul.f32 %v1234, %v4231
        %v4819 = vmul.f32 %v1235, %v4233
        %v4820 = vmul.f32 %v1236, %v4235
        %v4821 = vmul.f32 %v1237, %v4237
        %v4822 = vmul.f32 %v1366, %v4239
        %v4823 = vmul.f32 %v1367, %v4241
        %v4824 = vmul.f32 %v1368, %v4243
        %v4825 = vmul.f32 %v1369, %v4245
        %v4826 = vmul.f32 %v1370, %v4247
        %v4827 = vmul.f32 %v1371, %v4249
        %v4828 = vmul.f32 %v1372, %v4251
        %v4829 = vmul.f32 %v1373, %v4253
        %v4830 = vmul.f32 %v1502, %v4255
        %v4831 = vmul.f32 %v1503, %v4257
        %v4832 = vmul.f32 %v1504, %v4259
        %v4833 = vmul.f32 %v1505, %v4261
        %v4834 = vmul.f32 %v1506, %v4263
        %v4835 = vmul.f32 %v1507, %v4265
        %v4836 = vmul.f32 %v1508, %v4267
        %v4837 = vmul.f32 %v1509, %v4269
        %v4838 = vmul.f32 %v1638, %v4271
        %v4839 = vmul.f32 %v1639, %v4273
        %v4840 = vmul.f32 %v1640, %v4275
        %v4841 = vmul.f32 %v1641, %v4277
        %v4842 = vmul.f32 %v1642, %v4279
        %v4843 = vmul.f32 %v1643, %v4281
        %v4844 = vmul.f32 %v1644, %v4283
        %v4845 = vmul.f32 %v1645, %v4285
        %v4846 = vmul.f32 %v1774, %v4287
        %v4847 = vmul.f32 %v1775, %v4289
        %v4848 = vmul.f32 %v1776, %v4291
        %v4849 = vmul.f32 %v1777, %v4293
        %v4850 = vmul.f32 %v1778, %v4295
        %v4851 = vmul.f32 %v1779, %v4297
        %v4852 = vmul.f32 %v1780, %v4299
        %v4853 = vmul.f32 %v1781, %v4301
        %v4854 = vmul.f32 %v1910, %v4303
        %v4855 = vmul.f32 %v1911, %v4305
        %v4856 = vmul.f32 %v1912, %v4307
        %v4857 = vmul.f32 %v1913, %v4309
        %v4858 = vmul.f32 %v1914, %v4311
        %v4859 = vmul.f32 %v1915, %v4313
        %v4860 = vmul.f32 %v1916, %v4315
        %v4861 = vmul.f32 %v1917, %v4317
        %v4862 = vmul.f32 %v2046, %v4319
        %v4863 = vmul.f32 %v2047, %v4321
        %v4864 = vmul.f32 %v2048, %v4323
        %v4865 = vmul.f32 %v2049, %v4325
        %v4866 = vmul.f32 %v2050, %v4327
        %v4867 = vmul.f32 %v2051, %v4329
        %v4868 = vmul.f32 %v2052, %v4331
        %v4869 = vmul.f32 %v2053, %v4333
        %v4870 = vmul.f32 %v2182, %v4335
        %v4871 = vmul.f32 %v2183, %v4337
        %v4872 = vmul.f32 %v2184, %v4339
        %v4873 = vmul.f32 %v2185, %v4341
        %v4874 = vmul.f32 %v2186, %v4343
        %v4875 = vmul.f32 %v2187, %v4345
        %v4876 = vmul.f32 %v2188, %v4347
        %v4877 = vmul.f32 %v2189, %v4349
        %v4878 = vmul.f32 %v2318, %v4351
        %v4879 = vmul.f32 %v2319, %v4353
        %v4880 = vmul.f32 %v2320, %v4355
        %v4881 = vmul.f32 %v2321, %v4357
        %v4882 = vmul.f32 %v2322, %v4359
        %v4883 = vmul.f32 %v2323, %v4361
        %v4884 = vmul.f32 %v2324, %v4363
        %v4885 = vmul.f32 %v2325, %v4365
        %v4886 = vmul.f32 %v2454, %v4367
        %v4887 = vmul.f32 %v2455, %v4369
        %v4888 = vmul.f32 %v2456, %v4371
        %v4889 = vmul.f32 %v2457, %v4373
        %v4890 = vmul.f32 %v2458, %v4375
        %v4891 = vmul.f32 %v2459, %v4377
        %v4892 = vmul.f32 %v2460, %v4379
        %v4893 = vmul.f32 %v2461, %v4381
        %v4894 = vround.ne.pseudo %v4766
        %v4895 = vround.ne.pseudo %v4767
        %v4896 = vround.ne.pseudo %v4768
        %v4897 = vround.ne.pseudo %v4769
        %v4898 = vround.ne.pseudo %v4770
        %v4899 = vround.ne.pseudo %v4771
        %v4900 = vround.ne.pseudo %v4772
        %v4901 = vround.ne.pseudo %v4773
        %v4902 = vround.ne.pseudo %v4774
        %v4903 = vround.ne.pseudo %v4775
        %v4904 = vround.ne.pseudo %v4776
        %v4905 = vround.ne.pseudo %v4777
        %v4906 = vround.ne.pseudo %v4778
        %v4907 = vround.ne.pseudo %v4779
        %v4908 = vround.ne.pseudo %v4780
        %v4909 = vround.ne.pseudo %v4781
        %v4910 = vround.ne.pseudo %v4782
        %v4911 = vround.ne.pseudo %v4783
        %v4912 = vround.ne.pseudo %v4784
        %v4913 = vround.ne.pseudo %v4785
        %v4914 = vround.ne.pseudo %v4786
        %v4915 = vround.ne.pseudo %v4787
        %v4916 = vround.ne.pseudo %v4788
        %v4917 = vround.ne.pseudo %v4789
        %v4918 = vround.ne.pseudo %v4790
        %v4919 = vround.ne.pseudo %v4791
        %v4920 = vround.ne.pseudo %v4792
        %v4921 = vround.ne.pseudo %v4793
        %v4922 = vround.ne.pseudo %v4794
        %v4923 = vround.ne.pseudo %v4795
        %v4924 = vround.ne.pseudo %v4796
        %v4925 = vround.ne.pseudo %v4797
        %v4926 = vround.ne.pseudo %v4798
        %v4927 = vround.ne.pseudo %v4799
        %v4928 = vround.ne.pseudo %v4800
        %v4929 = vround.ne.pseudo %v4801
        %v4930 = vround.ne.pseudo %v4802
        %v4931 = vround.ne.pseudo %v4803
        %v4932 = vround.ne.pseudo %v4804
        %v4933 = vround.ne.pseudo %v4805
        %v4934 = vround.ne.pseudo %v4806
        %v4935 = vround.ne.pseudo %v4807
        %v4936 = vround.ne.pseudo %v4808
        %v4937 = vround.ne.pseudo %v4809
        %v4938 = vround.ne.pseudo %v4810
        %v4939 = vround.ne.pseudo %v4811
        %v4940 = vround.ne.pseudo %v4812
        %v4941 = vround.ne.pseudo %v4813
        %v4942 = vround.ne.pseudo %v4814
        %v4943 = vround.ne.pseudo %v4815
        %v4944 = vround.ne.pseudo %v4816
        %v4945 = vround.ne.pseudo %v4817
        %v4946 = vround.ne.pseudo %v4818
        %v4947 = vround.ne.pseudo %v4819
        %v4948 = vround.ne.pseudo %v4820
        %v4949 = vround.ne.pseudo %v4821
        %v4950 = vround.ne.pseudo %v4822
        %v4951 = vround.ne.pseudo %v4823
        %v4952 = vround.ne.pseudo %v4824
        %v4953 = vround.ne.pseudo %v4825
        %v4954 = vround.ne.pseudo %v4826
        %v4955 = vround.ne.pseudo %v4827
        %v4956 = vround.ne.pseudo %v4828
        %v4957 = vround.ne.pseudo %v4829
        %v4958 = vround.ne.pseudo %v4830
        %v4959 = vround.ne.pseudo %v4831
        %v4960 = vround.ne.pseudo %v4832
        %v4961 = vround.ne.pseudo %v4833
        %v4962 = vround.ne.pseudo %v4834
        %v4963 = vround.ne.pseudo %v4835
        %v4964 = vround.ne.pseudo %v4836
        %v4965 = vround.ne.pseudo %v4837
        %v4966 = vround.ne.pseudo %v4838
        %v4967 = vround.ne.pseudo %v4839
        %v4968 = vround.ne.pseudo %v4840
        %v4969 = vround.ne.pseudo %v4841
        %v4970 = vround.ne.pseudo %v4842
        %v4971 = vround.ne.pseudo %v4843
        %v4972 = vround.ne.pseudo %v4844
        %v4973 = vround.ne.pseudo %v4845
        %v4974 = vround.ne.pseudo %v4846
        %v4975 = vround.ne.pseudo %v4847
        %v4976 = vround.ne.pseudo %v4848
        %v4977 = vround.ne.pseudo %v4849
        %v4978 = vround.ne.pseudo %v4850
        %v4979 = vround.ne.pseudo %v4851
        %v4980 = vround.ne.pseudo %v4852
        %v4981 = vround.ne.pseudo %v4853
        %v4982 = vround.ne.pseudo %v4854
        %v4983 = vround.ne.pseudo %v4855
        %v4984 = vround.ne.pseudo %v4856
        %v4985 = vround.ne.pseudo %v4857
        %v4986 = vround.ne.pseudo %v4858
        %v4987 = vround.ne.pseudo %v4859
        %v4988 = vround.ne.pseudo %v4860
        %v4989 = vround.ne.pseudo %v4861
        %v4990 = vround.ne.pseudo %v4862
        %v4991 = vround.ne.pseudo %v4863
        %v4992 = vround.ne.pseudo %v4864
        %v4993 = vround.ne.pseudo %v4865
        %v4994 = vround.ne.pseudo %v4866
        %v4995 = vround.ne.pseudo %v4867
        %v4996 = vround.ne.pseudo %v4868
        %v4997 = vround.ne.pseudo %v4869
        %v4998 = vround.ne.pseudo %v4870
        %v4999 = vround.ne.pseudo %v4871
        %v5000 = vround.ne.pseudo %v4872
        %v5001 = vround.ne.pseudo %v4873
        %v5002 = vround.ne.pseudo %v4874
        %v5003 = vround.ne.pseudo %v4875
        %v5004 = vround.ne.pseudo %v4876
        %v5005 = vround.ne.pseudo %v4877
        %v5006 = vround.ne.pseudo %v4878
        %v5007 = vround.ne.pseudo %v4879
        %v5008 = vround.ne.pseudo %v4880
        %v5009 = vround.ne.pseudo %v4881
        %v5010 = vround.ne.pseudo %v4882
        %v5011 = vround.ne.pseudo %v4883
        %v5012 = vround.ne.pseudo %v4884
        %v5013 = vround.ne.pseudo %v4885
        %v5014 = vround.ne.pseudo %v4886
        %v5015 = vround.ne.pseudo %v4887
        %v5016 = vround.ne.pseudo %v4888
        %v5017 = vround.ne.pseudo %v4889
        %v5018 = vround.ne.pseudo %v4890
        %v5019 = vround.ne.pseudo %v4891
        %v5020 = vround.ne.pseudo %v4892
        %v5021 = vround.ne.pseudo %v4893
        %v5022 = vadd.f32 %v4894, %v4638
        %v5023 = vadd.f32 %v4895, %v4639
        %v5024 = vadd.f32 %v4896, %v4640
        %v5025 = vadd.f32 %v4897, %v4641
        %v5026 = vadd.f32 %v4898, %v4642
        %v5027 = vadd.f32 %v4899, %v4643
        %v5028 = vadd.f32 %v4900, %v4644
        %v5029 = vadd.f32 %v4901, %v4645
        %v5030 = vadd.f32 %v4902, %v4646
        %v5031 = vadd.f32 %v4903, %v4647
        %v5032 = vadd.f32 %v4904, %v4648
        %v5033 = vadd.f32 %v4905, %v4649
        %v5034 = vadd.f32 %v4906, %v4650
        %v5035 = vadd.f32 %v4907, %v4651
        %v5036 = vadd.f32 %v4908, %v4652
        %v5037 = vadd.f32 %v4909, %v4653
        %v5038 = vadd.f32 %v4910, %v4654
        %v5039 = vadd.f32 %v4911, %v4655
        %v5040 = vadd.f32 %v4912, %v4656
        %v5041 = vadd.f32 %v4913, %v4657
        %v5042 = vadd.f32 %v4914, %v4658
        %v5043 = vadd.f32 %v4915, %v4659
        %v5044 = vadd.f32 %v4916, %v4660
        %v5045 = vadd.f32 %v4917, %v4661
        %v5046 = vadd.f32 %v4918, %v4662
        %v5047 = vadd.f32 %v4919, %v4663
        %v5048 = vadd.f32 %v4920, %v4664
        %v5049 = vadd.f32 %v4921, %v4665
        %v5050 = vadd.f32 %v4922, %v4666
        %v5051 = vadd.f32 %v4923, %v4667
        %v5052 = vadd.f32 %v4924, %v4668
        %v5053 = vadd.f32 %v4925, %v4669
        %v5054 = vadd.f32 %v4926, %v4670
        %v5055 = vadd.f32 %v4927, %v4671
        %v5056 = vadd.f32 %v4928, %v4672
        %v5057 = vadd.f32 %v4929, %v4673
        %v5058 = vadd.f32 %v4930, %v4674
        %v5059 = vadd.f32 %v4931, %v4675
        %v5060 = vadd.f32 %v4932, %v4676
        %v5061 = vadd.f32 %v4933, %v4677
        %v5062 = vadd.f32 %v4934, %v4678
        %v5063 = vadd.f32 %v4935, %v4679
        %v5064 = vadd.f32 %v4936, %v4680
        %v5065 = vadd.f32 %v4937, %v4681
        %v5066 = vadd.f32 %v4938, %v4682
        %v5067 = vadd.f32 %v4939, %v4683
        %v5068 = vadd.f32 %v4940, %v4684
        %v5069 = vadd.f32 %v4941, %v4685
        %v5070 = vadd.f32 %v4942, %v4686
        %v5071 = vadd.f32 %v4943, %v4687
        %v5072 = vadd.f32 %v4944, %v4688
        %v5073 = vadd.f32 %v4945, %v4689
        %v5074 = vadd.f32 %v4946, %v4690
        %v5075 = vadd.f32 %v4947, %v4691
        %v5076 = vadd.f32 %v4948, %v4692
        %v5077 = vadd.f32 %v4949, %v4693
        %v5078 = vadd.f32 %v4950, %v4694
        %v5079 = vadd.f32 %v4951, %v4695
        %v5080 = vadd.f32 %v4952, %v4696
        %v5081 = vadd.f32 %v4953, %v4697
        %v5082 = vadd.f32 %v4954, %v4698
        %v5083 = vadd.f32 %v4955, %v4699
        %v5084 = vadd.f32 %v4956, %v4700
        %v5085 = vadd.f32 %v4957, %v4701
        %v5086 = vadd.f32 %v4958, %v4702
        %v5087 = vadd.f32 %v4959, %v4703
        %v5088 = vadd.f32 %v4960, %v4704
        %v5089 = vadd.f32 %v4961, %v4705
        %v5090 = vadd.f32 %v4962, %v4706
        %v5091 = vadd.f32 %v4963, %v4707
        %v5092 = vadd.f32 %v4964, %v4708
        %v5093 = vadd.f32 %v4965, %v4709
        %v5094 = vadd.f32 %v4966, %v4710
        %v5095 = vadd.f32 %v4967, %v4711
        %v5096 = vadd.f32 %v4968, %v4712
        %v5097 = vadd.f32 %v4969, %v4713
        %v5098 = vadd.f32 %v4970, %v4714
        %v5099 = vadd.f32 %v4971, %v4715
        %v5100 = vadd.f32 %v4972, %v4716
        %v5101 = vadd.f32 %v4973, %v4717
        %v5102 = vadd.f32 %v4974, %v4718
        %v5103 = vadd.f32 %v4975, %v4719
        %v5104 = vadd.f32 %v4976, %v4720
        %v5105 = vadd.f32 %v4977, %v4721
        %v5106 = vadd.f32 %v4978, %v4722
        %v5107 = vadd.f32 %v4979, %v4723
        %v5108 = vadd.f32 %v4980, %v4724
        %v5109 = vadd.f32 %v4981, %v4725
        %v5110 = vadd.f32 %v4982, %v4726
        %v5111 = vadd.f32 %v4983, %v4727
        %v5112 = vadd.f32 %v4984, %v4728
        %v5113 = vadd.f32 %v4985, %v4729
        %v5114 = vadd.f32 %v4986, %v4730
        %v5115 = vadd.f32 %v4987, %v4731
        %v5116 = vadd.f32 %v4988, %v4732
        %v5117 = vadd.f32 %v4989, %v4733
        %v5118 = vadd.f32 %v4990, %v4734
        %v5119 = vadd.f32 %v4991, %v4735
        %v5120 = vadd.f32 %v4992, %v4736
        %v5121 = vadd.f32 %v4993, %v4737
        %v5122 = vadd.f32 %v4994, %v4738
        %v5123 = vadd.f32 %v4995, %v4739
        %v5124 = vadd.f32 %v4996, %v4740
        %v5125 = vadd.f32 %v4997, %v4741
        %v5126 = vadd.f32 %v4998, %v4742
        %v5127 = vadd.f32 %v4999, %v4743
        %v5128 = vadd.f32 %v5000, %v4744
        %v5129 = vadd.f32 %v5001, %v4745
        %v5130 = vadd.f32 %v5002, %v4746
        %v5131 = vadd.f32 %v5003, %v4747
        %v5132 = vadd.f32 %v5004, %v4748
        %v5133 = vadd.f32 %v5005, %v4749
        %v5134 = vadd.f32 %v5006, %v4750
        %v5135 = vadd.f32 %v5007, %v4751
        %v5136 = vadd.f32 %v5008, %v4752
        %v5137 = vadd.f32 %v5009, %v4753
        %v5138 = vadd.f32 %v5010, %v4754
        %v5139 = vadd.f32 %v5011, %v4755
        %v5140 = vadd.f32 %v5012, %v4756
        %v5141 = vadd.f32 %v5013, %v4757
        %v5142 = vadd.f32 %v5014, %v4758
        %v5143 = vadd.f32 %v5015, %v4759
        %v5144 = vadd.f32 %v5016, %v4760
        %v5145 = vadd.f32 %v5017, %v4761
        %v5146 = vadd.f32 %v5018, %v4762
        %v5147 = vadd.f32 %v5019, %v4763
        %v5148 = vadd.f32 %v5020, %v4764
        %v5149 = vadd.f32 %v5021, %v4765
        %v5150 = vmax.f32 %v5022, 0.0
        %v5151 = vmax.f32 %v5023, 0.0
        %v5152 = vmax.f32 %v5024, 0.0
        %v5153 = vmax.f32 %v5025, 0.0
        %v5154 = vmax.f32 %v5026, 0.0
        %v5155 = vmax.f32 %v5027, 0.0
        %v5156 = vmax.f32 %v5028, 0.0
        %v5157 = vmax.f32 %v5029, 0.0
        %v5158 = vmax.f32 %v5030, 0.0
        %v5159 = vmax.f32 %v5031, 0.0
        %v5160 = vmax.f32 %v5032, 0.0
        %v5161 = vmax.f32 %v5033, 0.0
        %v5162 = vmax.f32 %v5034, 0.0
        %v5163 = vmax.f32 %v5035, 0.0
        %v5164 = vmax.f32 %v5036, 0.0
        %v5165 = vmax.f32 %v5037, 0.0
        %v5166 = vmax.f32 %v5038, 0.0
        %v5167 = vmax.f32 %v5039, 0.0
        %v5168 = vmax.f32 %v5040, 0.0
        %v5169 = vmax.f32 %v5041, 0.0
        %v5170 = vmax.f32 %v5042, 0.0
        %v5171 = vmax.f32 %v5043, 0.0
        %v5172 = vmax.f32 %v5044, 0.0
        %v5173 = vmax.f32 %v5045, 0.0
        %v5174 = vmax.f32 %v5046, 0.0
        %v5175 = vmax.f32 %v5047, 0.0
        %v5176 = vmax.f32 %v5048, 0.0
        %v5177 = vmax.f32 %v5049, 0.0
        %v5178 = vmax.f32 %v5050, 0.0
        %v5179 = vmax.f32 %v5051, 0.0
        %v5180 = vmax.f32 %v5052, 0.0
        %v5181 = vmax.f32 %v5053, 0.0
        %v5182 = vmax.f32 %v5054, 0.0
        %v5183 = vmax.f32 %v5055, 0.0
        %v5184 = vmax.f32 %v5056, 0.0
        %v5185 = vmax.f32 %v5057, 0.0
        %v5186 = vmax.f32 %v5058, 0.0
        %v5187 = vmax.f32 %v5059, 0.0
        %v5188 = vmax.f32 %v5060, 0.0
        %v5189 = vmax.f32 %v5061, 0.0
        %v5190 = vmax.f32 %v5062, 0.0
        %v5191 = vmax.f32 %v5063, 0.0
        %v5192 = vmax.f32 %v5064, 0.0
        %v5193 = vmax.f32 %v5065, 0.0
        %v5194 = vmax.f32 %v5066, 0.0
        %v5195 = vmax.f32 %v5067, 0.0
        %v5196 = vmax.f32 %v5068, 0.0
        %v5197 = vmax.f32 %v5069, 0.0
        %v5198 = vmax.f32 %v5070, 0.0
        %v5199 = vmax.f32 %v5071, 0.0
        %v5200 = vmax.f32 %v5072, 0.0
        %v5201 = vmax.f32 %v5073, 0.0
        %v5202 = vmax.f32 %v5074, 0.0
        %v5203 = vmax.f32 %v5075, 0.0
        %v5204 = vmax.f32 %v5076, 0.0
        %v5205 = vmax.f32 %v5077, 0.0
        %v5206 = vmax.f32 %v5078, 0.0
        %v5207 = vmax.f32 %v5079, 0.0
        %v5208 = vmax.f32 %v5080, 0.0
        %v5209 = vmax.f32 %v5081, 0.0
        %v5210 = vmax.f32 %v5082, 0.0
        %v5211 = vmax.f32 %v5083, 0.0
        %v5212 = vmax.f32 %v5084, 0.0
        %v5213 = vmax.f32 %v5085, 0.0
        %v5214 = vmax.f32 %v5086, 0.0
        %v5215 = vmax.f32 %v5087, 0.0
        %v5216 = vmax.f32 %v5088, 0.0
        %v5217 = vmax.f32 %v5089, 0.0
        %v5218 = vmax.f32 %v5090, 0.0
        %v5219 = vmax.f32 %v5091, 0.0
        %v5220 = vmax.f32 %v5092, 0.0
        %v5221 = vmax.f32 %v5093, 0.0
        %v5222 = vmax.f32 %v5094, 0.0
        %v5223 = vmax.f32 %v5095, 0.0
        %v5224 = vmax.f32 %v5096, 0.0
        %v5225 = vmax.f32 %v5097, 0.0
        %v5226 = vmax.f32 %v5098, 0.0
        %v5227 = vmax.f32 %v5099, 0.0
        %v5228 = vmax.f32 %v5100, 0.0
        %v5229 = vmax.f32 %v5101, 0.0
        %v5230 = vmax.f32 %v5102, 0.0
        %v5231 = vmax.f32 %v5103, 0.0
        %v5232 = vmax.f32 %v5104, 0.0
        %v5233 = vmax.f32 %v5105, 0.0
        %v5234 = vmax.f32 %v5106, 0.0
        %v5235 = vmax.f32 %v5107, 0.0
        %v5236 = vmax.f32 %v5108, 0.0
        %v5237 = vmax.f32 %v5109, 0.0
        %v5238 = vmax.f32 %v5110, 0.0
        %v5239 = vmax.f32 %v5111, 0.0
        %v5240 = vmax.f32 %v5112, 0.0
        %v5241 = vmax.f32 %v5113, 0.0
        %v5242 = vmax.f32 %v5114, 0.0
        %v5243 = vmax.f32 %v5115, 0.0
        %v5244 = vmax.f32 %v5116, 0.0
        %v5245 = vmax.f32 %v5117, 0.0
        %v5246 = vmax.f32 %v5118, 0.0
        %v5247 = vmax.f32 %v5119, 0.0
        %v5248 = vmax.f32 %v5120, 0.0
        %v5249 = vmax.f32 %v5121, 0.0
        %v5250 = vmax.f32 %v5122, 0.0
        %v5251 = vmax.f32 %v5123, 0.0
        %v5252 = vmax.f32 %v5124, 0.0
        %v5253 = vmax.f32 %v5125, 0.0
        %v5254 = vmax.f32 %v5126, 0.0
        %v5255 = vmax.f32 %v5127, 0.0
        %v5256 = vmax.f32 %v5128, 0.0
        %v5257 = vmax.f32 %v5129, 0.0
        %v5258 = vmax.f32 %v5130, 0.0
        %v5259 = vmax.f32 %v5131, 0.0
        %v5260 = vmax.f32 %v5132, 0.0
        %v5261 = vmax.f32 %v5133, 0.0
        %v5262 = vmax.f32 %v5134, 0.0
        %v5263 = vmax.f32 %v5135, 0.0
        %v5264 = vmax.f32 %v5136, 0.0
        %v5265 = vmax.f32 %v5137, 0.0
        %v5266 = vmax.f32 %v5138, 0.0
        %v5267 = vmax.f32 %v5139, 0.0
        %v5268 = vmax.f32 %v5140, 0.0
        %v5269 = vmax.f32 %v5141, 0.0
        %v5270 = vmax.f32 %v5142, 0.0
        %v5271 = vmax.f32 %v5143, 0.0
        %v5272 = vmax.f32 %v5144, 0.0
        %v5273 = vmax.f32 %v5145, 0.0
        %v5274 = vmax.f32 %v5146, 0.0
        %v5275 = vmax.f32 %v5147, 0.0
        %v5276 = vmax.f32 %v5148, 0.0
        %v5277 = vmax.f32 %v5149, 0.0
        %v5278 = vmin.f32 %v5150, 15.0
        %v5279 = vmin.f32 %v5151, 15.0
        %v5280 = vmin.f32 %v5152, 15.0
        %v5281 = vmin.f32 %v5153, 15.0
        %v5282 = vmin.f32 %v5154, 15.0
        %v5283 = vmin.f32 %v5155, 15.0
        %v5284 = vmin.f32 %v5156, 15.0
        %v5285 = vmin.f32 %v5157, 15.0
        %v5286 = vmin.f32 %v5158, 15.0
        %v5287 = vmin.f32 %v5159, 15.0
        %v5288 = vmin.f32 %v5160, 15.0
        %v5289 = vmin.f32 %v5161, 15.0
        %v5290 = vmin.f32 %v5162, 15.0
        %v5291 = vmin.f32 %v5163, 15.0
        %v5292 = vmin.f32 %v5164, 15.0
        %v5293 = vmin.f32 %v5165, 15.0
        %v5294 = vmin.f32 %v5166, 15.0
        %v5295 = vmin.f32 %v5167, 15.0
        %v5296 = vmin.f32 %v5168, 15.0
        %v5297 = vmin.f32 %v5169, 15.0
        %v5298 = vmin.f32 %v5170, 15.0
        %v5299 = vmin.f32 %v5171, 15.0
        %v5300 = vmin.f32 %v5172, 15.0
        %v5301 = vmin.f32 %v5173, 15.0
        %v5302 = vmin.f32 %v5174, 15.0
        %v5303 = vmin.f32 %v5175, 15.0
        %v5304 = vmin.f32 %v5176, 15.0
        %v5305 = vmin.f32 %v5177, 15.0
        %v5306 = vmin.f32 %v5178, 15.0
        %v5307 = vmin.f32 %v5179, 15.0
        %v5308 = vmin.f32 %v5180, 15.0
        %v5309 = vmin.f32 %v5181, 15.0
        %v5310 = vmin.f32 %v5182, 15.0
        %v5311 = vmin.f32 %v5183, 15.0
        %v5312 = vmin.f32 %v5184, 15.0
        %v5313 = vmin.f32 %v5185, 15.0
        %v5314 = vmin.f32 %v5186, 15.0
        %v5315 = vmin.f32 %v5187, 15.0
        %v5316 = vmin.f32 %v5188, 15.0
        %v5317 = vmin.f32 %v5189, 15.0
        %v5318 = vmin.f32 %v5190, 15.0
        %v5319 = vmin.f32 %v5191, 15.0
        %v5320 = vmin.f32 %v5192, 15.0
        %v5321 = vmin.f32 %v5193, 15.0
        %v5322 = vmin.f32 %v5194, 15.0
        %v5323 = vmin.f32 %v5195, 15.0
        %v5324 = vmin.f32 %v5196, 15.0
        %v5325 = vmin.f32 %v5197, 15.0
        %v5326 = vmin.f32 %v5198, 15.0
        %v5327 = vmin.f32 %v5199, 15.0
        %v5328 = vmin.f32 %v5200, 15.0
        %v5329 = vmin.f32 %v5201, 15.0
        %v5330 = vmin.f32 %v5202, 15.0
        %v5331 = vmin.f32 %v5203, 15.0
        %v5332 = vmin.f32 %v5204, 15.0
        %v5333 = vmin.f32 %v5205, 15.0
        %v5334 = vmin.f32 %v5206, 15.0
        %v5335 = vmin.f32 %v5207, 15.0
        %v5336 = vmin.f32 %v5208, 15.0
        %v5337 = vmin.f32 %v5209, 15.0
        %v5338 = vmin.f32 %v5210, 15.0
        %v5339 = vmin.f32 %v5211, 15.0
        %v5340 = vmin.f32 %v5212, 15.0
        %v5341 = vmin.f32 %v5213, 15.0
        %v5342 = vmin.f32 %v5214, 15.0
        %v5343 = vmin.f32 %v5215, 15.0
        %v5344 = vmin.f32 %v5216, 15.0
        %v5345 = vmin.f32 %v5217, 15.0
        %v5346 = vmin.f32 %v5218, 15.0
        %v5347 = vmin.f32 %v5219, 15.0
        %v5348 = vmin.f32 %v5220, 15.0
        %v5349 = vmin.f32 %v5221, 15.0
        %v5350 = vmin.f32 %v5222, 15.0
        %v5351 = vmin.f32 %v5223, 15.0
        %v5352 = vmin.f32 %v5224, 15.0
        %v5353 = vmin.f32 %v5225, 15.0
        %v5354 = vmin.f32 %v5226, 15.0
        %v5355 = vmin.f32 %v5227, 15.0
        %v5356 = vmin.f32 %v5228, 15.0
        %v5357 = vmin.f32 %v5229, 15.0
        %v5358 = vmin.f32 %v5230, 15.0
        %v5359 = vmin.f32 %v5231, 15.0
        %v5360 = vmin.f32 %v5232, 15.0
        %v5361 = vmin.f32 %v5233, 15.0
        %v5362 = vmin.f32 %v5234, 15.0
        %v5363 = vmin.f32 %v5235, 15.0
        %v5364 = vmin.f32 %v5236, 15.0
        %v5365 = vmin.f32 %v5237, 15.0
        %v5366 = vmin.f32 %v5238, 15.0
        %v5367 = vmin.f32 %v5239, 15.0
        %v5368 = vmin.f32 %v5240, 15.0
        %v5369 = vmin.f32 %v5241, 15.0
        %v5370 = vmin.f32 %v5242, 15.0
        %v5371 = vmin.f32 %v5243, 15.0
        %v5372 = vmin.f32 %v5244, 15.0
        %v5373 = vmin.f32 %v5245, 15.0
        %v5374 = vmin.f32 %v5246, 15.0
        %v5375 = vmin.f32 %v5247, 15.0
        %v5376 = vmin.f32 %v5248, 15.0
        %v5377 = vmin.f32 %v5249, 15.0
        %v5378 = vmin.f32 %v5250, 15.0
        %v5379 = vmin.f32 %v5251, 15.0
        %v5380 = vmin.f32 %v5252, 15.0
        %v5381 = vmin.f32 %v5253, 15.0
        %v5382 = vmin.f32 %v5254, 15.0
        %v5383 = vmin.f32 %v5255, 15.0
        %v5384 = vmin.f32 %v5256, 15.0
        %v5385 = vmin.f32 %v5257, 15.0
        %v5386 = vmin.f32 %v5258, 15.0
        %v5387 = vmin.f32 %v5259, 15.0
        %v5388 = vmin.f32 %v5260, 15.0
        %v5389 = vmin.f32 %v5261, 15.0
        %v5390 = vmin.f32 %v5262, 15.0
        %v5391 = vmin.f32 %v5263, 15.0
        %v5392 = vmin.f32 %v5264, 15.0
        %v5393 = vmin.f32 %v5265, 15.0
        %v5394 = vmin.f32 %v5266, 15.0
        %v5395 = vmin.f32 %v5267, 15.0
        %v5396 = vmin.f32 %v5268, 15.0
        %v5397 = vmin.f32 %v5269, 15.0
        %v5398 = vmin.f32 %v5270, 15.0
        %v5399 = vmin.f32 %v5271, 15.0
        %v5400 = vmin.f32 %v5272, 15.0
        %v5401 = vmin.f32 %v5273, 15.0
        %v5402 = vmin.f32 %v5274, 15.0
        %v5403 = vmin.f32 %v5275, 15.0
        %v5404 = vmin.f32 %v5276, 15.0
        %v5405 = vmin.f32 %v5277, 15.0
        %v5406 = vsub.f32 %v5278, %v4638
        %v5407 = vsub.f32 %v5279, %v4639
        %v5408 = vsub.f32 %v5280, %v4640
        %v5409 = vsub.f32 %v5281, %v4641
        %v5410 = vsub.f32 %v5282, %v4642
        %v5411 = vsub.f32 %v5283, %v4643
        %v5412 = vsub.f32 %v5284, %v4644
        %v5413 = vsub.f32 %v5285, %v4645
        %v5414 = vsub.f32 %v5286, %v4646
        %v5415 = vsub.f32 %v5287, %v4647
        %v5416 = vsub.f32 %v5288, %v4648
        %v5417 = vsub.f32 %v5289, %v4649
        %v5418 = vsub.f32 %v5290, %v4650
        %v5419 = vsub.f32 %v5291, %v4651
        %v5420 = vsub.f32 %v5292, %v4652
        %v5421 = vsub.f32 %v5293, %v4653
        %v5422 = vsub.f32 %v5294, %v4654
        %v5423 = vsub.f32 %v5295, %v4655
        %v5424 = vsub.f32 %v5296, %v4656
        %v5425 = vsub.f32 %v5297, %v4657
        %v5426 = vsub.f32 %v5298, %v4658
        %v5427 = vsub.f32 %v5299, %v4659
        %v5428 = vsub.f32 %v5300, %v4660
        %v5429 = vsub.f32 %v5301, %v4661
        %v5430 = vsub.f32 %v5302, %v4662
        %v5431 = vsub.f32 %v5303, %v4663
        %v5432 = vsub.f32 %v5304, %v4664
        %v5433 = vsub.f32 %v5305, %v4665
        %v5434 = vsub.f32 %v5306, %v4666
        %v5435 = vsub.f32 %v5307, %v4667
        %v5436 = vsub.f32 %v5308, %v4668
        %v5437 = vsub.f32 %v5309, %v4669
        %v5438 = vsub.f32 %v5310, %v4670
        %v5439 = vsub.f32 %v5311, %v4671
        %v5440 = vsub.f32 %v5312, %v4672
        %v5441 = vsub.f32 %v5313, %v4673
        %v5442 = vsub.f32 %v5314, %v4674
        %v5443 = vsub.f32 %v5315, %v4675
        %v5444 = vsub.f32 %v5316, %v4676
        %v5445 = vsub.f32 %v5317, %v4677
        %v5446 = vsub.f32 %v5318, %v4678
        %v5447 = vsub.f32 %v5319, %v4679
        %v5448 = vsub.f32 %v5320, %v4680
        %v5449 = vsub.f32 %v5321, %v4681
        %v5450 = vsub.f32 %v5322, %v4682
        %v5451 = vsub.f32 %v5323, %v4683
        %v5452 = vsub.f32 %v5324, %v4684
        %v5453 = vsub.f32 %v5325, %v4685
        %v5454 = vsub.f32 %v5326, %v4686
        %v5455 = vsub.f32 %v5327, %v4687
        %v5456 = vsub.f32 %v5328, %v4688
        %v5457 = vsub.f32 %v5329, %v4689
        %v5458 = vsub.f32 %v5330, %v4690
        %v5459 = vsub.f32 %v5331, %v4691
        %v5460 = vsub.f32 %v5332, %v4692
        %v5461 = vsub.f32 %v5333, %v4693
        %v5462 = vsub.f32 %v5334, %v4694
        %v5463 = vsub.f32 %v5335, %v4695
        %v5464 = vsub.f32 %v5336, %v4696
        %v5465 = vsub.f32 %v5337, %v4697
        %v5466 = vsub.f32 %v5338, %v4698
        %v5467 = vsub.f32 %v5339, %v4699
        %v5468 = vsub.f32 %v5340, %v4700
        %v5469 = vsub.f32 %v5341, %v4701
        %v5470 = vsub.f32 %v5342, %v4702
        %v5471 = vsub.f32 %v5343, %v4703
        %v5472 = vsub.f32 %v5344, %v4704
        %v5473 = vsub.f32 %v5345, %v4705
        %v5474 = vsub.f32 %v5346, %v4706
        %v5475 = vsub.f32 %v5347, %v4707
        %v5476 = vsub.f32 %v5348, %v4708
        %v5477 = vsub.f32 %v5349, %v4709
        %v5478 = vsub.f32 %v5350, %v4710
        %v5479 = vsub.f32 %v5351, %v4711
        %v5480 = vsub.f32 %v5352, %v4712
        %v5481 = vsub.f32 %v5353, %v4713
        %v5482 = vsub.f32 %v5354, %v4714
        %v5483 = vsub.f32 %v5355, %v4715
        %v5484 = vsub.f32 %v5356, %v4716
        %v5485 = vsub.f32 %v5357, %v4717
        %v5486 = vsub.f32 %v5358, %v4718
        %v5487 = vsub.f32 %v5359, %v4719
        %v5488 = vsub.f32 %v5360, %v4720
        %v5489 = vsub.f32 %v5361, %v4721
        %v5490 = vsub.f32 %v5362, %v4722
        %v5491 = vsub.f32 %v5363, %v4723
        %v5492 = vsub.f32 %v5364, %v4724
        %v5493 = vsub.f32 %v5365, %v4725
        %v5494 = vsub.f32 %v5366, %v4726
        %v5495 = vsub.f32 %v5367, %v4727
        %v5496 = vsub.f32 %v5368, %v4728
        %v5497 = vsub.f32 %v5369, %v4729
        %v5498 = vsub.f32 %v5370, %v4730
        %v5499 = vsub.f32 %v5371, %v4731
        %v5500 = vsub.f32 %v5372, %v4732
        %v5501 = vsub.f32 %v5373, %v4733
        %v5502 = vsub.f32 %v5374, %v4734
        %v5503 = vsub.f32 %v5375, %v4735
        %v5504 = vsub.f32 %v5376, %v4736
        %v5505 = vsub.f32 %v5377, %v4737
        %v5506 = vsub.f32 %v5378, %v4738
        %v5507 = vsub.f32 %v5379, %v4739
        %v5508 = vsub.f32 %v5380, %v4740
        %v5509 = vsub.f32 %v5381, %v4741
        %v5510 = vsub.f32 %v5382, %v4742
        %v5511 = vsub.f32 %v5383, %v4743
        %v5512 = vsub.f32 %v5384, %v4744
        %v5513 = vsub.f32 %v5385, %v4745
        %v5514 = vsub.f32 %v5386, %v4746
        %v5515 = vsub.f32 %v5387, %v4747
        %v5516 = vsub.f32 %v5388, %v4748
        %v5517 = vsub.f32 %v5389, %v4749
        %v5518 = vsub.f32 %v5390, %v4750
        %v5519 = vsub.f32 %v5391, %v4751
        %v5520 = vsub.f32 %v5392, %v4752
        %v5521 = vsub.f32 %v5393, %v4753
        %v5522 = vsub.f32 %v5394, %v4754
        %v5523 = vsub.f32 %v5395, %v4755
        %v5524 = vsub.f32 %v5396, %v4756
        %v5525 = vsub.f32 %v5397, %v4757
        %v5526 = vsub.f32 %v5398, %v4758
        %v5527 = vsub.f32 %v5399, %v4759
        %v5528 = vsub.f32 %v5400, %v4760
        %v5529 = vsub.f32 %v5401, %v4761
        %v5530 = vsub.f32 %v5402, %v4762
        %v5531 = vsub.f32 %v5403, %v4763
        %v5532 = vsub.f32 %v5404, %v4764
        %v5533 = vsub.f32 %v5405, %v4765
        %v5534 = vmul.f32 %v3998, %v5406
        %v5535 = vmul.f32 %v3999, %v5407
        %v5536 = vmul.f32 %v4000, %v5408
        %v5537 = vmul.f32 %v4001, %v5409
        %v5538 = vmul.f32 %v4002, %v5410
        %v5539 = vmul.f32 %v4003, %v5411
        %v5540 = vmul.f32 %v4004, %v5412
        %v5541 = vmul.f32 %v4005, %v5413
        %v5542 = vmul.f32 %v4006, %v5414
        %v5543 = vmul.f32 %v4007, %v5415
        %v5544 = vmul.f32 %v4008, %v5416
        %v5545 = vmul.f32 %v4009, %v5417
        %v5546 = vmul.f32 %v4010, %v5418
        %v5547 = vmul.f32 %v4011, %v5419
        %v5548 = vmul.f32 %v4012, %v5420
        %v5549 = vmul.f32 %v4013, %v5421
        %v5550 = vmul.f32 %v4014, %v5422
        %v5551 = vmul.f32 %v4015, %v5423
        %v5552 = vmul.f32 %v4016, %v5424
        %v5553 = vmul.f32 %v4017, %v5425
        %v5554 = vmul.f32 %v4018, %v5426
        %v5555 = vmul.f32 %v4019, %v5427
        %v5556 = vmul.f32 %v4020, %v5428
        %v5557 = vmul.f32 %v4021, %v5429
        %v5558 = vmul.f32 %v4022, %v5430
        %v5559 = vmul.f32 %v4023, %v5431
        %v5560 = vmul.f32 %v4024, %v5432
        %v5561 = vmul.f32 %v4025, %v5433
        %v5562 = vmul.f32 %v4026, %v5434
        %v5563 = vmul.f32 %v4027, %v5435
        %v5564 = vmul.f32 %v4028, %v5436
        %v5565 = vmul.f32 %v4029, %v5437
        %v5566 = vmul.f32 %v4030, %v5438
        %v5567 = vmul.f32 %v4031, %v5439
        %v5568 = vmul.f32 %v4032, %v5440
        %v5569 = vmul.f32 %v4033, %v5441
        %v5570 = vmul.f32 %v4034, %v5442
        %v5571 = vmul.f32 %v4035, %v5443
        %v5572 = vmul.f32 %v4036, %v5444
        %v5573 = vmul.f32 %v4037, %v5445
        %v5574 = vmul.f32 %v4038, %v5446
        %v5575 = vmul.f32 %v4039, %v5447
        %v5576 = vmul.f32 %v4040, %v5448
        %v5577 = vmul.f32 %v4041, %v5449
        %v5578 = vmul.f32 %v4042, %v5450
        %v5579 = vmul.f32 %v4043, %v5451
        %v5580 = vmul.f32 %v4044, %v5452
        %v5581 = vmul.f32 %v4045, %v5453
        %v5582 = vmul.f32 %v4046, %v5454
        %v5583 = vmul.f32 %v4047, %v5455
        %v5584 = vmul.f32 %v4048, %v5456
        %v5585 = vmul.f32 %v4049, %v5457
        %v5586 = vmul.f32 %v4050, %v5458
        %v5587 = vmul.f32 %v4051, %v5459
        %v5588 = vmul.f32 %v4052, %v5460
        %v5589 = vmul.f32 %v4053, %v5461
        %v5590 = vmul.f32 %v4054, %v5462
        %v5591 = vmul.f32 %v4055, %v5463
        %v5592 = vmul.f32 %v4056, %v5464
        %v5593 = vmul.f32 %v4057, %v5465
        %v5594 = vmul.f32 %v4058, %v5466
        %v5595 = vmul.f32 %v4059, %v5467
        %v5596 = vmul.f32 %v4060, %v5468
        %v5597 = vmul.f32 %v4061, %v5469
        %v5598 = vmul.f32 %v4062, %v5470
        %v5599 = vmul.f32 %v4063, %v5471
        %v5600 = vmul.f32 %v4064, %v5472
        %v5601 = vmul.f32 %v4065, %v5473
        %v5602 = vmul.f32 %v4066, %v5474
        %v5603 = vmul.f32 %v4067, %v5475
        %v5604 = vmul.f32 %v4068, %v5476
        %v5605 = vmul.f32 %v4069, %v5477
        %v5606 = vmul.f32 %v4070, %v5478
        %v5607 = vmul.f32 %v4071, %v5479
        %v5608 = vmul.f32 %v4072, %v5480
        %v5609 = vmul.f32 %v4073, %v5481
        %v5610 = vmul.f32 %v4074, %v5482
        %v5611 = vmul.f32 %v4075, %v5483
        %v5612 = vmul.f32 %v4076, %v5484
        %v5613 = vmul.f32 %v4077, %v5485
        %v5614 = vmul.f32 %v4078, %v5486
        %v5615 = vmul.f32 %v4079, %v5487
        %v5616 = vmul.f32 %v4080, %v5488
        %v5617 = vmul.f32 %v4081, %v5489
        %v5618 = vmul.f32 %v4082, %v5490
        %v5619 = vmul.f32 %v4083, %v5491
        %v5620 = vmul.f32 %v4084, %v5492
        %v5621 = vmul.f32 %v4085, %v5493
        %v5622 = vmul.f32 %v4086, %v5494
        %v5623 = vmul.f32 %v4087, %v5495
        %v5624 = vmul.f32 %v4088, %v5496
        %v5625 = vmul.f32 %v4089, %v5497
        %v5626 = vmul.f32 %v4090, %v5498
        %v5627 = vmul.f32 %v4091, %v5499
        %v5628 = vmul.f32 %v4092, %v5500
        %v5629 = vmul.f32 %v4093, %v5501
        %v5630 = vmul.f32 %v4094, %v5502
        %v5631 = vmul.f32 %v4095, %v5503
        %v5632 = vmul.f32 %v4096, %v5504
        %v5633 = vmul.f32 %v4097, %v5505
        %v5634 = vmul.f32 %v4098, %v5506
        %v5635 = vmul.f32 %v4099, %v5507
        %v5636 = vmul.f32 %v4100, %v5508
        %v5637 = vmul.f32 %v4101, %v5509
        %v5638 = vmul.f32 %v4102, %v5510
        %v5639 = vmul.f32 %v4103, %v5511
        %v5640 = vmul.f32 %v4104, %v5512
        %v5641 = vmul.f32 %v4105, %v5513
        %v5642 = vmul.f32 %v4106, %v5514
        %v5643 = vmul.f32 %v4107, %v5515
        %v5644 = vmul.f32 %v4108, %v5516
        %v5645 = vmul.f32 %v4109, %v5517
        %v5646 = vmul.f32 %v4110, %v5518
        %v5647 = vmul.f32 %v4111, %v5519
        %v5648 = vmul.f32 %v4112, %v5520
        %v5649 = vmul.f32 %v4113, %v5521
        %v5650 = vmul.f32 %v4114, %v5522
        %v5651 = vmul.f32 %v4115, %v5523
        %v5652 = vmul.f32 %v4116, %v5524
        %v5653 = vmul.f32 %v4117, %v5525
        %v5654 = vmul.f32 %v4118, %v5526
        %v5655 = vmul.f32 %v4119, %v5527
        %v5656 = vmul.f32 %v4120, %v5528
        %v5657 = vmul.f32 %v4121, %v5529
        %v5658 = vmul.f32 %v4122, %v5530
        %v5659 = vmul.f32 %v4123, %v5531
        %v5660 = vmul.f32 %v4124, %v5532
        %v5661 = vmul.f32 %v4125, %v5533
        %v5662 = vcombine.low %v5534, %v5536
        %v5663 = vcombine.high %v5534, %v5536
        %v5665 = vunpack.c.l.s4 1983009808
        %v5666 = vunpack.c.0.s8 %v5665
        %v5667 = vlaneseq
        %v5668 = vshrl.u32 %v5667, 7
        %v5669 = vsub.s32 %v5666, %v5668
        %v5670 = vrot.slane %v5662, %v5669
        %v5672 = vunpack.c.l.s4 1983009808
        %v5673 = vunpack.c.0.s8 %v5672
        %v5674 = vlaneseq
        %v5675 = vshrl.u32 %v5674, 7
        %v5676 = vsub.s32 %v5673, %v5675
        %v5677 = vrot.slane %v5663, %v5676
        %v5678 = vcombine.low %v5535, %v5537
        %v5679 = vcombine.high %v5535, %v5537
        %v5681 = vunpack.c.l.s4 1983009808
        %v5682 = vunpack.c.0.s8 %v5681
        %v5683 = vlaneseq
        %v5684 = vshrl.u32 %v5683, 7
        %v5685 = vsub.s32 %v5682, %v5684
        %v5686 = vrot.slane %v5678, %v5685
        %v5688 = vunpack.c.l.s4 1983009808
        %v5689 = vunpack.c.0.s8 %v5688
        %v5690 = vlaneseq
        %v5691 = vshrl.u32 %v5690, 7
        %v5692 = vsub.s32 %v5689, %v5691
        %v5693 = vrot.slane %v5679, %v5692
        %v5694 = vcombine.low %v5538, %v5540
        %v5695 = vcombine.high %v5538, %v5540
        %v5697 = vunpack.c.l.s4 1983009808
        %v5698 = vunpack.c.0.s8 %v5697
        %v5699 = vlaneseq
        %v5700 = vshrl.u32 %v5699, 7
        %v5701 = vsub.s32 %v5698, %v5700
        %v5702 = vrot.slane %v5694, %v5701
        %v5704 = vunpack.c.l.s4 1983009808
        %v5705 = vunpack.c.0.s8 %v5704
        %v5706 = vlaneseq
        %v5707 = vshrl.u32 %v5706, 7
        %v5708 = vsub.s32 %v5705, %v5707
        %v5709 = vrot.slane %v5695, %v5708
        %v5710 = vcombine.low %v5539, %v5541
        %v5711 = vcombine.high %v5539, %v5541
        %v5713 = vunpack.c.l.s4 1983009808
        %v5714 = vunpack.c.0.s8 %v5713
        %v5715 = vlaneseq
        %v5716 = vshrl.u32 %v5715, 7
        %v5717 = vsub.s32 %v5714, %v5716
        %v5718 = vrot.slane %v5710, %v5717
        %v5720 = vunpack.c.l.s4 1983009808
        %v5721 = vunpack.c.0.s8 %v5720
        %v5722 = vlaneseq
        %v5723 = vshrl.u32 %v5722, 7
        %v5724 = vsub.s32 %v5721, %v5723
        %v5725 = vrot.slane %v5711, %v5724
        %v5726 = vcombine.low %v5670, %v5686
        %v5727 = vcombine.high %v5670, %v5686
        %v5729 = vunpack.c.l.s4 1934713408
        %v5730 = vunpack.c.0.s8 %v5729
        %v5731 = vlaneseq
        %v5732 = vshrl.u32 %v5731, 7
        %v5733 = vsub.s32 %v5730, %v5732
        %v5734 = vrot.slane %v5726, %v5733
        %v5736 = vunpack.c.l.s4 1934713408
        %v5737 = vunpack.c.0.s8 %v5736
        %v5738 = vlaneseq
        %v5739 = vshrl.u32 %v5738, 7
        %v5740 = vsub.s32 %v5737, %v5739
        %v5741 = vrot.slane %v5727, %v5740
        %v5742 = vcombine.low %v5677, %v5693
        %v5743 = vcombine.high %v5677, %v5693
        %v5745 = vunpack.c.l.s4 1934713408
        %v5746 = vunpack.c.0.s8 %v5745
        %v5747 = vlaneseq
        %v5748 = vshrl.u32 %v5747, 7
        %v5749 = vsub.s32 %v5746, %v5748
        %v5750 = vrot.slane %v5742, %v5749
        %v5752 = vunpack.c.l.s4 1934713408
        %v5753 = vunpack.c.0.s8 %v5752
        %v5754 = vlaneseq
        %v5755 = vshrl.u32 %v5754, 7
        %v5756 = vsub.s32 %v5753, %v5755
        %v5757 = vrot.slane %v5743, %v5756
        %v5758 = vcombine.low %v5702, %v5718
        %v5759 = vcombine.high %v5702, %v5718
        %v5761 = vunpack.c.l.s4 1934713408
        %v5762 = vunpack.c.0.s8 %v5761
        %v5763 = vlaneseq
        %v5764 = vshrl.u32 %v5763, 7
        %v5765 = vsub.s32 %v5762, %v5764
        %v5766 = vrot.slane %v5758, %v5765
        %v5768 = vunpack.c.l.s4 1934713408
        %v5769 = vunpack.c.0.s8 %v5768
        %v5770 = vlaneseq
        %v5771 = vshrl.u32 %v5770, 7
        %v5772 = vsub.s32 %v5769, %v5771
        %v5773 = vrot.slane %v5759, %v5772
        %v5774 = vcombine.low %v5709, %v5725
        %v5775 = vcombine.high %v5709, %v5725
        %v5777 = vunpack.c.l.s4 1934713408
        %v5778 = vunpack.c.0.s8 %v5777
        %v5779 = vlaneseq
        %v5780 = vshrl.u32 %v5779, 7
        %v5781 = vsub.s32 %v5778, %v5780
        %v5782 = vrot.slane %v5774, %v5781
        %v5784 = vunpack.c.l.s4 1934713408
        %v5785 = vunpack.c.0.s8 %v5784
        %v5786 = vlaneseq
        %v5787 = vshrl.u32 %v5786, 7
        %v5788 = vsub.s32 %v5785, %v5787
        %v5789 = vrot.slane %v5775, %v5788
        %v5790 = vcombine.low %v5734, %v5766
        %v5791 = vcombine.high %v5734, %v5766
        %v5792 = vcombine.low %v5741, %v5773
        %v5793 = vcombine.high %v5741, %v5773
        %v5794 = vcombine.low %v5750, %v5782
        %v5795 = vcombine.high %v5750, %v5782
        %v5796 = vcombine.low %v5757, %v5789
        %v5797 = vcombine.high %v5757, %v5789
        %v5798 = vcombine.low %v5542, %v5544
        %v5799 = vcombine.high %v5542, %v5544
        %v5801 = vunpack.c.l.s4 1983009808
        %v5802 = vunpack.c.0.s8 %v5801
        %v5803 = vlaneseq
        %v5804 = vshrl.u32 %v5803, 7
        %v5805 = vsub.s32 %v5802, %v5804
        %v5806 = vrot.slane %v5798, %v5805
        %v5808 = vunpack.c.l.s4 1983009808
        %v5809 = vunpack.c.0.s8 %v5808
        %v5810 = vlaneseq
        %v5811 = vshrl.u32 %v5810, 7
        %v5812 = vsub.s32 %v5809, %v5811
        %v5813 = vrot.slane %v5799, %v5812
        %v5814 = vcombine.low %v5543, %v5545
        %v5815 = vcombine.high %v5543, %v5545
        %v5817 = vunpack.c.l.s4 1983009808
        %v5818 = vunpack.c.0.s8 %v5817
        %v5819 = vlaneseq
        %v5820 = vshrl.u32 %v5819, 7
        %v5821 = vsub.s32 %v5818, %v5820
        %v5822 = vrot.slane %v5814, %v5821
        %v5824 = vunpack.c.l.s4 1983009808
        %v5825 = vunpack.c.0.s8 %v5824
        %v5826 = vlaneseq
        %v5827 = vshrl.u32 %v5826, 7
        %v5828 = vsub.s32 %v5825, %v5827
        %v5829 = vrot.slane %v5815, %v5828
        %v5830 = vcombine.low %v5546, %v5548
        %v5831 = vcombine.high %v5546, %v5548
        %v5833 = vunpack.c.l.s4 1983009808
        %v5834 = vunpack.c.0.s8 %v5833
        %v5835 = vlaneseq
        %v5836 = vshrl.u32 %v5835, 7
        %v5837 = vsub.s32 %v5834, %v5836
        %v5838 = vrot.slane %v5830, %v5837
        %v5840 = vunpack.c.l.s4 1983009808
        %v5841 = vunpack.c.0.s8 %v5840
        %v5842 = vlaneseq
        %v5843 = vshrl.u32 %v5842, 7
        %v5844 = vsub.s32 %v5841, %v5843
        %v5845 = vrot.slane %v5831, %v5844
        %v5846 = vcombine.low %v5547, %v5549
        %v5847 = vcombine.high %v5547, %v5549
        %v5849 = vunpack.c.l.s4 1983009808
        %v5850 = vunpack.c.0.s8 %v5849
        %v5851 = vlaneseq
        %v5852 = vshrl.u32 %v5851, 7
        %v5853 = vsub.s32 %v5850, %v5852
        %v5854 = vrot.slane %v5846, %v5853
        %v5856 = vunpack.c.l.s4 1983009808
        %v5857 = vunpack.c.0.s8 %v5856
        %v5858 = vlaneseq
        %v5859 = vshrl.u32 %v5858, 7
        %v5860 = vsub.s32 %v5857, %v5859
        %v5861 = vrot.slane %v5847, %v5860
        %v5862 = vcombine.low %v5806, %v5822
        %v5863 = vcombine.high %v5806, %v5822
        %v5865 = vunpack.c.l.s4 1934713408
        %v5866 = vunpack.c.0.s8 %v5865
        %v5867 = vlaneseq
        %v5868 = vshrl.u32 %v5867, 7
        %v5869 = vsub.s32 %v5866, %v5868
        %v5870 = vrot.slane %v5862, %v5869
        %v5872 = vunpack.c.l.s4 1934713408
        %v5873 = vunpack.c.0.s8 %v5872
        %v5874 = vlaneseq
        %v5875 = vshrl.u32 %v5874, 7
        %v5876 = vsub.s32 %v5873, %v5875
        %v5877 = vrot.slane %v5863, %v5876
        %v5878 = vcombine.low %v5813, %v5829
        %v5879 = vcombine.high %v5813, %v5829
        %v5881 = vunpack.c.l.s4 1934713408
        %v5882 = vunpack.c.0.s8 %v5881
        %v5883 = vlaneseq
        %v5884 = vshrl.u32 %v5883, 7
        %v5885 = vsub.s32 %v5882, %v5884
        %v5886 = vrot.slane %v5878, %v5885
        %v5888 = vunpack.c.l.s4 1934713408
        %v5889 = vunpack.c.0.s8 %v5888
        %v5890 = vlaneseq
        %v5891 = vshrl.u32 %v5890, 7
        %v5892 = vsub.s32 %v5889, %v5891
        %v5893 = vrot.slane %v5879, %v5892
        %v5894 = vcombine.low %v5838, %v5854
        %v5895 = vcombine.high %v5838, %v5854
        %v5897 = vunpack.c.l.s4 1934713408
        %v5898 = vunpack.c.0.s8 %v5897
        %v5899 = vlaneseq
        %v5900 = vshrl.u32 %v5899, 7
        %v5901 = vsub.s32 %v5898, %v5900
        %v5902 = vrot.slane %v5894, %v5901
        %v5904 = vunpack.c.l.s4 1934713408
        %v5905 = vunpack.c.0.s8 %v5904
        %v5906 = vlaneseq
        %v5907 = vshrl.u32 %v5906, 7
        %v5908 = vsub.s32 %v5905, %v5907
        %v5909 = vrot.slane %v5895, %v5908
        %v5910 = vcombine.low %v5845, %v5861
        %v5911 = vcombine.high %v5845, %v5861
        %v5913 = vunpack.c.l.s4 1934713408
        %v5914 = vunpack.c.0.s8 %v5913
        %v5915 = vlaneseq
        %v5916 = vshrl.u32 %v5915, 7
        %v5917 = vsub.s32 %v5914, %v5916
        %v5918 = vrot.slane %v5910, %v5917
        %v5920 = vunpack.c.l.s4 1934713408
        %v5921 = vunpack.c.0.s8 %v5920
        %v5922 = vlaneseq
        %v5923 = vshrl.u32 %v5922, 7
        %v5924 = vsub.s32 %v5921, %v5923
        %v5925 = vrot.slane %v5911, %v5924
        %v5926 = vcombine.low %v5870, %v5902
        %v5927 = vcombine.high %v5870, %v5902
        %v5928 = vcombine.low %v5877, %v5909
        %v5929 = vcombine.high %v5877, %v5909
        %v5930 = vcombine.low %v5886, %v5918
        %v5931 = vcombine.high %v5886, %v5918
        %v5932 = vcombine.low %v5893, %v5925
        %v5933 = vcombine.high %v5893, %v5925
        %v5934 = vcombine.low %v5550, %v5552
        %v5935 = vcombine.high %v5550, %v5552
        %v5937 = vunpack.c.l.s4 1983009808
        %v5938 = vunpack.c.0.s8 %v5937
        %v5939 = vlaneseq
        %v5940 = vshrl.u32 %v5939, 7
        %v5941 = vsub.s32 %v5938, %v5940
        %v5942 = vrot.slane %v5934, %v5941
        %v5944 = vunpack.c.l.s4 1983009808
        %v5945 = vunpack.c.0.s8 %v5944
        %v5946 = vlaneseq
        %v5947 = vshrl.u32 %v5946, 7
        %v5948 = vsub.s32 %v5945, %v5947
        %v5949 = vrot.slane %v5935, %v5948
        %v5950 = vcombine.low %v5551, %v5553
        %v5951 = vcombine.high %v5551, %v5553
        %v5953 = vunpack.c.l.s4 1983009808
        %v5954 = vunpack.c.0.s8 %v5953
        %v5955 = vlaneseq
        %v5956 = vshrl.u32 %v5955, 7
        %v5957 = vsub.s32 %v5954, %v5956
        %v5958 = vrot.slane %v5950, %v5957
        %v5960 = vunpack.c.l.s4 1983009808
        %v5961 = vunpack.c.0.s8 %v5960
        %v5962 = vlaneseq
        %v5963 = vshrl.u32 %v5962, 7
        %v5964 = vsub.s32 %v5961, %v5963
        %v5965 = vrot.slane %v5951, %v5964
        %v5966 = vcombine.low %v5554, %v5556
        %v5967 = vcombine.high %v5554, %v5556
        %v5969 = vunpack.c.l.s4 1983009808
        %v5970 = vunpack.c.0.s8 %v5969
        %v5971 = vlaneseq
        %v5972 = vshrl.u32 %v5971, 7
        %v5973 = vsub.s32 %v5970, %v5972
        %v5974 = vrot.slane %v5966, %v5973
        %v5976 = vunpack.c.l.s4 1983009808
        %v5977 = vunpack.c.0.s8 %v5976
        %v5978 = vlaneseq
        %v5979 = vshrl.u32 %v5978, 7
        %v5980 = vsub.s32 %v5977, %v5979
        %v5981 = vrot.slane %v5967, %v5980
        %v5982 = vcombine.low %v5555, %v5557
        %v5983 = vcombine.high %v5555, %v5557
        %v5985 = vunpack.c.l.s4 1983009808
        %v5986 = vunpack.c.0.s8 %v5985
        %v5987 = vlaneseq
        %v5988 = vshrl.u32 %v5987, 7
        %v5989 = vsub.s32 %v5986, %v5988
        %v5990 = vrot.slane %v5982, %v5989
        %v5992 = vunpack.c.l.s4 1983009808
        %v5993 = vunpack.c.0.s8 %v5992
        %v5994 = vlaneseq
        %v5995 = vshrl.u32 %v5994, 7
        %v5996 = vsub.s32 %v5993, %v5995
        %v5997 = vrot.slane %v5983, %v5996
        %v5998 = vcombine.low %v5942, %v5958
        %v5999 = vcombine.high %v5942, %v5958
        %v6001 = vunpack.c.l.s4 1934713408
        %v6002 = vunpack.c.0.s8 %v6001
        %v6003 = vlaneseq
        %v6004 = vshrl.u32 %v6003, 7
        %v6005 = vsub.s32 %v6002, %v6004
        %v6006 = vrot.slane %v5998, %v6005
        %v6008 = vunpack.c.l.s4 1934713408
        %v6009 = vunpack.c.0.s8 %v6008
        %v6010 = vlaneseq
        %v6011 = vshrl.u32 %v6010, 7
        %v6012 = vsub.s32 %v6009, %v6011
        %v6013 = vrot.slane %v5999, %v6012
        %v6014 = vcombine.low %v5949, %v5965
        %v6015 = vcombine.high %v5949, %v5965
        %v6017 = vunpack.c.l.s4 1934713408
        %v6018 = vunpack.c.0.s8 %v6017
        %v6019 = vlaneseq
        %v6020 = vshrl.u32 %v6019, 7
        %v6021 = vsub.s32 %v6018, %v6020
        %v6022 = vrot.slane %v6014, %v6021
        %v6024 = vunpack.c.l.s4 1934713408
        %v6025 = vunpack.c.0.s8 %v6024
        %v6026 = vlaneseq
        %v6027 = vshrl.u32 %v6026, 7
        %v6028 = vsub.s32 %v6025, %v6027
        %v6029 = vrot.slane %v6015, %v6028
        %v6030 = vcombine.low %v5974, %v5990
        %v6031 = vcombine.high %v5974, %v5990
        %v6033 = vunpack.c.l.s4 1934713408
        %v6034 = vunpack.c.0.s8 %v6033
        %v6035 = vlaneseq
        %v6036 = vshrl.u32 %v6035, 7
        %v6037 = vsub.s32 %v6034, %v6036
        %v6038 = vrot.slane %v6030, %v6037
        %v6040 = vunpack.c.l.s4 1934713408
        %v6041 = vunpack.c.0.s8 %v6040
        %v6042 = vlaneseq
        %v6043 = vshrl.u32 %v6042, 7
        %v6044 = vsub.s32 %v6041, %v6043
        %v6045 = vrot.slane %v6031, %v6044
        %v6046 = vcombine.low %v5981, %v5997
        %v6047 = vcombine.high %v5981, %v5997
        %v6049 = vunpack.c.l.s4 1934713408
        %v6050 = vunpack.c.0.s8 %v6049
        %v6051 = vlaneseq
        %v6052 = vshrl.u32 %v6051, 7
        %v6053 = vsub.s32 %v6050, %v6052
        %v6054 = vrot.slane %v6046, %v6053
        %v6056 = vunpack.c.l.s4 1934713408
        %v6057 = vunpack.c.0.s8 %v6056
        %v6058 = vlaneseq
        %v6059 = vshrl.u32 %v6058, 7
        %v6060 = vsub.s32 %v6057, %v6059
        %v6061 = vrot.slane %v6047, %v6060
        %v6062 = vcombine.low %v6006, %v6038
        %v6063 = vcombine.high %v6006, %v6038
        %v6064 = vcombine.low %v6013, %v6045
        %v6065 = vcombine.high %v6013, %v6045
        %v6066 = vcombine.low %v6022, %v6054
        %v6067 = vcombine.high %v6022, %v6054
        %v6068 = vcombine.low %v6029, %v6061
        %v6069 = vcombine.high %v6029, %v6061
        %v6070 = vcombine.low %v5558, %v5560
        %v6071 = vcombine.high %v5558, %v5560
        %v6073 = vunpack.c.l.s4 1983009808
        %v6074 = vunpack.c.0.s8 %v6073
        %v6075 = vlaneseq
        %v6076 = vshrl.u32 %v6075, 7
        %v6077 = vsub.s32 %v6074, %v6076
        %v6078 = vrot.slane %v6070, %v6077
        %v6080 = vunpack.c.l.s4 1983009808
        %v6081 = vunpack.c.0.s8 %v6080
        %v6082 = vlaneseq
        %v6083 = vshrl.u32 %v6082, 7
        %v6084 = vsub.s32 %v6081, %v6083
        %v6085 = vrot.slane %v6071, %v6084
        %v6086 = vcombine.low %v5559, %v5561
        %v6087 = vcombine.high %v5559, %v5561
        %v6089 = vunpack.c.l.s4 1983009808
        %v6090 = vunpack.c.0.s8 %v6089
        %v6091 = vlaneseq
        %v6092 = vshrl.u32 %v6091, 7
        %v6093 = vsub.s32 %v6090, %v6092
        %v6094 = vrot.slane %v6086, %v6093
        %v6096 = vunpack.c.l.s4 1983009808
        %v6097 = vunpack.c.0.s8 %v6096
        %v6098 = vlaneseq
        %v6099 = vshrl.u32 %v6098, 7
        %v6100 = vsub.s32 %v6097, %v6099
        %v6101 = vrot.slane %v6087, %v6100
        %v6102 = vcombine.low %v5562, %v5564
        %v6103 = vcombine.high %v5562, %v5564
        %v6105 = vunpack.c.l.s4 1983009808
        %v6106 = vunpack.c.0.s8 %v6105
        %v6107 = vlaneseq
        %v6108 = vshrl.u32 %v6107, 7
        %v6109 = vsub.s32 %v6106, %v6108
        %v6110 = vrot.slane %v6102, %v6109
        %v6112 = vunpack.c.l.s4 1983009808
        %v6113 = vunpack.c.0.s8 %v6112
        %v6114 = vlaneseq
        %v6115 = vshrl.u32 %v6114, 7
        %v6116 = vsub.s32 %v6113, %v6115
        %v6117 = vrot.slane %v6103, %v6116
        %v6118 = vcombine.low %v5563, %v5565
        %v6119 = vcombine.high %v5563, %v5565
        %v6121 = vunpack.c.l.s4 1983009808
        %v6122 = vunpack.c.0.s8 %v6121
        %v6123 = vlaneseq
        %v6124 = vshrl.u32 %v6123, 7
        %v6125 = vsub.s32 %v6122, %v6124
        %v6126 = vrot.slane %v6118, %v6125
        %v6128 = vunpack.c.l.s4 1983009808
        %v6129 = vunpack.c.0.s8 %v6128
        %v6130 = vlaneseq
        %v6131 = vshrl.u32 %v6130, 7
        %v6132 = vsub.s32 %v6129, %v6131
        %v6133 = vrot.slane %v6119, %v6132
        %v6134 = vcombine.low %v6078, %v6094
        %v6135 = vcombine.high %v6078, %v6094
        %v6137 = vunpack.c.l.s4 1934713408
        %v6138 = vunpack.c.0.s8 %v6137
        %v6139 = vlaneseq
        %v6140 = vshrl.u32 %v6139, 7
        %v6141 = vsub.s32 %v6138, %v6140
        %v6142 = vrot.slane %v6134, %v6141
        %v6144 = vunpack.c.l.s4 1934713408
        %v6145 = vunpack.c.0.s8 %v6144
        %v6146 = vlaneseq
        %v6147 = vshrl.u32 %v6146, 7
        %v6148 = vsub.s32 %v6145, %v6147
        %v6149 = vrot.slane %v6135, %v6148
        %v6150 = vcombine.low %v6085, %v6101
        %v6151 = vcombine.high %v6085, %v6101
        %v6153 = vunpack.c.l.s4 1934713408
        %v6154 = vunpack.c.0.s8 %v6153
        %v6155 = vlaneseq
        %v6156 = vshrl.u32 %v6155, 7
        %v6157 = vsub.s32 %v6154, %v6156
        %v6158 = vrot.slane %v6150, %v6157
        %v6160 = vunpack.c.l.s4 1934713408
        %v6161 = vunpack.c.0.s8 %v6160
        %v6162 = vlaneseq
        %v6163 = vshrl.u32 %v6162, 7
        %v6164 = vsub.s32 %v6161, %v6163
        %v6165 = vrot.slane %v6151, %v6164
        %v6166 = vcombine.low %v6110, %v6126
        %v6167 = vcombine.high %v6110, %v6126
        %v6169 = vunpack.c.l.s4 1934713408
        %v6170 = vunpack.c.0.s8 %v6169
        %v6171 = vlaneseq
        %v6172 = vshrl.u32 %v6171, 7
        %v6173 = vsub.s32 %v6170, %v6172
        %v6174 = vrot.slane %v6166, %v6173
        %v6176 = vunpack.c.l.s4 1934713408
        %v6177 = vunpack.c.0.s8 %v6176
        %v6178 = vlaneseq
        %v6179 = vshrl.u32 %v6178, 7
        %v6180 = vsub.s32 %v6177, %v6179
        %v6181 = vrot.slane %v6167, %v6180
        %v6182 = vcombine.low %v6117, %v6133
        %v6183 = vcombine.high %v6117, %v6133
        %v6185 = vunpack.c.l.s4 1934713408
        %v6186 = vunpack.c.0.s8 %v6185
        %v6187 = vlaneseq
        %v6188 = vshrl.u32 %v6187, 7
        %v6189 = vsub.s32 %v6186, %v6188
        %v6190 = vrot.slane %v6182, %v6189
        %v6192 = vunpack.c.l.s4 1934713408
        %v6193 = vunpack.c.0.s8 %v6192
        %v6194 = vlaneseq
        %v6195 = vshrl.u32 %v6194, 7
        %v6196 = vsub.s32 %v6193, %v6195
        %v6197 = vrot.slane %v6183, %v6196
        %v6198 = vcombine.low %v6142, %v6174
        %v6199 = vcombine.high %v6142, %v6174
        %v6200 = vcombine.low %v6149, %v6181
        %v6201 = vcombine.high %v6149, %v6181
        %v6202 = vcombine.low %v6158, %v6190
        %v6203 = vcombine.high %v6158, %v6190
        %v6204 = vcombine.low %v6165, %v6197
        %v6205 = vcombine.high %v6165, %v6197
        %v6206 = vcombine.low %v5566, %v5568
        %v6207 = vcombine.high %v5566, %v5568
        %v6209 = vunpack.c.l.s4 1983009808
        %v6210 = vunpack.c.0.s8 %v6209
        %v6211 = vlaneseq
        %v6212 = vshrl.u32 %v6211, 7
        %v6213 = vsub.s32 %v6210, %v6212
        %v6214 = vrot.slane %v6206, %v6213
        %v6216 = vunpack.c.l.s4 1983009808
        %v6217 = vunpack.c.0.s8 %v6216
        %v6218 = vlaneseq
        %v6219 = vshrl.u32 %v6218, 7
        %v6220 = vsub.s32 %v6217, %v6219
        %v6221 = vrot.slane %v6207, %v6220
        %v6222 = vcombine.low %v5567, %v5569
        %v6223 = vcombine.high %v5567, %v5569
        %v6225 = vunpack.c.l.s4 1983009808
        %v6226 = vunpack.c.0.s8 %v6225
        %v6227 = vlaneseq
        %v6228 = vshrl.u32 %v6227, 7
        %v6229 = vsub.s32 %v6226, %v6228
        %v6230 = vrot.slane %v6222, %v6229
        %v6232 = vunpack.c.l.s4 1983009808
        %v6233 = vunpack.c.0.s8 %v6232
        %v6234 = vlaneseq
        %v6235 = vshrl.u32 %v6234, 7
        %v6236 = vsub.s32 %v6233, %v6235
        %v6237 = vrot.slane %v6223, %v6236
        %v6238 = vcombine.low %v5570, %v5572
        %v6239 = vcombine.high %v5570, %v5572
        %v6241 = vunpack.c.l.s4 1983009808
        %v6242 = vunpack.c.0.s8 %v6241
        %v6243 = vlaneseq
        %v6244 = vshrl.u32 %v6243, 7
        %v6245 = vsub.s32 %v6242, %v6244
        %v6246 = vrot.slane %v6238, %v6245
        %v6248 = vunpack.c.l.s4 1983009808
        %v6249 = vunpack.c.0.s8 %v6248
        %v6250 = vlaneseq
        %v6251 = vshrl.u32 %v6250, 7
        %v6252 = vsub.s32 %v6249, %v6251
        %v6253 = vrot.slane %v6239, %v6252
        %v6254 = vcombine.low %v5571, %v5573
        %v6255 = vcombine.high %v5571, %v5573
        %v6257 = vunpack.c.l.s4 1983009808
        %v6258 = vunpack.c.0.s8 %v6257
        %v6259 = vlaneseq
        %v6260 = vshrl.u32 %v6259, 7
        %v6261 = vsub.s32 %v6258, %v6260
        %v6262 = vrot.slane %v6254, %v6261
        %v6264 = vunpack.c.l.s4 1983009808
        %v6265 = vunpack.c.0.s8 %v6264
        %v6266 = vlaneseq
        %v6267 = vshrl.u32 %v6266, 7
        %v6268 = vsub.s32 %v6265, %v6267
        %v6269 = vrot.slane %v6255, %v6268
        %v6270 = vcombine.low %v6214, %v6230
        %v6271 = vcombine.high %v6214, %v6230
        %v6273 = vunpack.c.l.s4 1934713408
        %v6274 = vunpack.c.0.s8 %v6273
        %v6275 = vlaneseq
        %v6276 = vshrl.u32 %v6275, 7
        %v6277 = vsub.s32 %v6274, %v6276
        %v6278 = vrot.slane %v6270, %v6277
        %v6280 = vunpack.c.l.s4 1934713408
        %v6281 = vunpack.c.0.s8 %v6280
        %v6282 = vlaneseq
        %v6283 = vshrl.u32 %v6282, 7
        %v6284 = vsub.s32 %v6281, %v6283
        %v6285 = vrot.slane %v6271, %v6284
        %v6286 = vcombine.low %v6221, %v6237
        %v6287 = vcombine.high %v6221, %v6237
        %v6289 = vunpack.c.l.s4 1934713408
        %v6290 = vunpack.c.0.s8 %v6289
        %v6291 = vlaneseq
        %v6292 = vshrl.u32 %v6291, 7
        %v6293 = vsub.s32 %v6290, %v6292
        %v6294 = vrot.slane %v6286, %v6293
        %v6296 = vunpack.c.l.s4 1934713408
        %v6297 = vunpack.c.0.s8 %v6296
        %v6298 = vlaneseq
        %v6299 = vshrl.u32 %v6298, 7
        %v6300 = vsub.s32 %v6297, %v6299
        %v6301 = vrot.slane %v6287, %v6300
        %v6302 = vcombine.low %v6246, %v6262
        %v6303 = vcombine.high %v6246, %v6262
        %v6305 = vunpack.c.l.s4 1934713408
        %v6306 = vunpack.c.0.s8 %v6305
        %v6307 = vlaneseq
        %v6308 = vshrl.u32 %v6307, 7
        %v6309 = vsub.s32 %v6306, %v6308
        %v6310 = vrot.slane %v6302, %v6309
        %v6312 = vunpack.c.l.s4 1934713408
        %v6313 = vunpack.c.0.s8 %v6312
        %v6314 = vlaneseq
        %v6315 = vshrl.u32 %v6314, 7
        %v6316 = vsub.s32 %v6313, %v6315
        %v6317 = vrot.slane %v6303, %v6316
        %v6318 = vcombine.low %v6253, %v6269
        %v6319 = vcombine.high %v6253, %v6269
        %v6321 = vunpack.c.l.s4 1934713408
        %v6322 = vunpack.c.0.s8 %v6321
        %v6323 = vlaneseq
        %v6324 = vshrl.u32 %v6323, 7
        %v6325 = vsub.s32 %v6322, %v6324
        %v6326 = vrot.slane %v6318, %v6325
        %v6328 = vunpack.c.l.s4 1934713408
        %v6329 = vunpack.c.0.s8 %v6328
        %v6330 = vlaneseq
        %v6331 = vshrl.u32 %v6330, 7
        %v6332 = vsub.s32 %v6329, %v6331
        %v6333 = vrot.slane %v6319, %v6332
        %v6334 = vcombine.low %v6278, %v6310
        %v6335 = vcombine.high %v6278, %v6310
        %v6336 = vcombine.low %v6285, %v6317
        %v6337 = vcombine.high %v6285, %v6317
        %v6338 = vcombine.low %v6294, %v6326
        %v6339 = vcombine.high %v6294, %v6326
        %v6340 = vcombine.low %v6301, %v6333
        %v6341 = vcombine.high %v6301, %v6333
        %v6342 = vcombine.low %v5574, %v5576
        %v6343 = vcombine.high %v5574, %v5576
        %v6345 = vunpack.c.l.s4 1983009808
        %v6346 = vunpack.c.0.s8 %v6345
        %v6347 = vlaneseq
        %v6348 = vshrl.u32 %v6347, 7
        %v6349 = vsub.s32 %v6346, %v6348
        %v6350 = vrot.slane %v6342, %v6349
        %v6352 = vunpack.c.l.s4 1983009808
        %v6353 = vunpack.c.0.s8 %v6352
        %v6354 = vlaneseq
        %v6355 = vshrl.u32 %v6354, 7
        %v6356 = vsub.s32 %v6353, %v6355
        %v6357 = vrot.slane %v6343, %v6356
        %v6358 = vcombine.low %v5575, %v5577
        %v6359 = vcombine.high %v5575, %v5577
        %v6361 = vunpack.c.l.s4 1983009808
        %v6362 = vunpack.c.0.s8 %v6361
        %v6363 = vlaneseq
        %v6364 = vshrl.u32 %v6363, 7
        %v6365 = vsub.s32 %v6362, %v6364
        %v6366 = vrot.slane %v6358, %v6365
        %v6368 = vunpack.c.l.s4 1983009808
        %v6369 = vunpack.c.0.s8 %v6368
        %v6370 = vlaneseq
        %v6371 = vshrl.u32 %v6370, 7
        %v6372 = vsub.s32 %v6369, %v6371
        %v6373 = vrot.slane %v6359, %v6372
        %v6374 = vcombine.low %v5578, %v5580
        %v6375 = vcombine.high %v5578, %v5580
        %v6377 = vunpack.c.l.s4 1983009808
        %v6378 = vunpack.c.0.s8 %v6377
        %v6379 = vlaneseq
        %v6380 = vshrl.u32 %v6379, 7
        %v6381 = vsub.s32 %v6378, %v6380
        %v6382 = vrot.slane %v6374, %v6381
        %v6384 = vunpack.c.l.s4 1983009808
        %v6385 = vunpack.c.0.s8 %v6384
        %v6386 = vlaneseq
        %v6387 = vshrl.u32 %v6386, 7
        %v6388 = vsub.s32 %v6385, %v6387
        %v6389 = vrot.slane %v6375, %v6388
        %v6390 = vcombine.low %v5579, %v5581
        %v6391 = vcombine.high %v5579, %v5581
        %v6393 = vunpack.c.l.s4 1983009808
        %v6394 = vunpack.c.0.s8 %v6393
        %v6395 = vlaneseq
        %v6396 = vshrl.u32 %v6395, 7
        %v6397 = vsub.s32 %v6394, %v6396
        %v6398 = vrot.slane %v6390, %v6397
        %v6400 = vunpack.c.l.s4 1983009808
        %v6401 = vunpack.c.0.s8 %v6400
        %v6402 = vlaneseq
        %v6403 = vshrl.u32 %v6402, 7
        %v6404 = vsub.s32 %v6401, %v6403
        %v6405 = vrot.slane %v6391, %v6404
        %v6406 = vcombine.low %v6350, %v6366
        %v6407 = vcombine.high %v6350, %v6366
        %v6409 = vunpack.c.l.s4 1934713408
        %v6410 = vunpack.c.0.s8 %v6409
        %v6411 = vlaneseq
        %v6412 = vshrl.u32 %v6411, 7
        %v6413 = vsub.s32 %v6410, %v6412
        %v6414 = vrot.slane %v6406, %v6413
        %v6416 = vunpack.c.l.s4 1934713408
        %v6417 = vunpack.c.0.s8 %v6416
        %v6418 = vlaneseq
        %v6419 = vshrl.u32 %v6418, 7
        %v6420 = vsub.s32 %v6417, %v6419
        %v6421 = vrot.slane %v6407, %v6420
        %v6422 = vcombine.low %v6357, %v6373
        %v6423 = vcombine.high %v6357, %v6373
        %v6425 = vunpack.c.l.s4 1934713408
        %v6426 = vunpack.c.0.s8 %v6425
        %v6427 = vlaneseq
        %v6428 = vshrl.u32 %v6427, 7
        %v6429 = vsub.s32 %v6426, %v6428
        %v6430 = vrot.slane %v6422, %v6429
        %v6432 = vunpack.c.l.s4 1934713408
        %v6433 = vunpack.c.0.s8 %v6432
        %v6434 = vlaneseq
        %v6435 = vshrl.u32 %v6434, 7
        %v6436 = vsub.s32 %v6433, %v6435
        %v6437 = vrot.slane %v6423, %v6436
        %v6438 = vcombine.low %v6382, %v6398
        %v6439 = vcombine.high %v6382, %v6398
        %v6441 = vunpack.c.l.s4 1934713408
        %v6442 = vunpack.c.0.s8 %v6441
        %v6443 = vlaneseq
        %v6444 = vshrl.u32 %v6443, 7
        %v6445 = vsub.s32 %v6442, %v6444
        %v6446 = vrot.slane %v6438, %v6445
        %v6448 = vunpack.c.l.s4 1934713408
        %v6449 = vunpack.c.0.s8 %v6448
        %v6450 = vlaneseq
        %v6451 = vshrl.u32 %v6450, 7
        %v6452 = vsub.s32 %v6449, %v6451
        %v6453 = vrot.slane %v6439, %v6452
        %v6454 = vcombine.low %v6389, %v6405
        %v6455 = vcombine.high %v6389, %v6405
        %v6457 = vunpack.c.l.s4 1934713408
        %v6458 = vunpack.c.0.s8 %v6457
        %v6459 = vlaneseq
        %v6460 = vshrl.u32 %v6459, 7
        %v6461 = vsub.s32 %v6458, %v6460
        %v6462 = vrot.slane %v6454, %v6461
        %v6464 = vunpack.c.l.s4 1934713408
        %v6465 = vunpack.c.0.s8 %v6464
        %v6466 = vlaneseq
        %v6467 = vshrl.u32 %v6466, 7
        %v6468 = vsub.s32 %v6465, %v6467
        %v6469 = vrot.slane %v6455, %v6468
        %v6470 = vcombine.low %v6414, %v6446
        %v6471 = vcombine.high %v6414, %v6446
        %v6472 = vcombine.low %v6421, %v6453
        %v6473 = vcombine.high %v6421, %v6453
        %v6474 = vcombine.low %v6430, %v6462
        %v6475 = vcombine.high %v6430, %v6462
        %v6476 = vcombine.low %v6437, %v6469
        %v6477 = vcombine.high %v6437, %v6469
        %v6478 = vcombine.low %v5582, %v5584
        %v6479 = vcombine.high %v5582, %v5584
        %v6481 = vunpack.c.l.s4 1983009808
        %v6482 = vunpack.c.0.s8 %v6481
        %v6483 = vlaneseq
        %v6484 = vshrl.u32 %v6483, 7
        %v6485 = vsub.s32 %v6482, %v6484
        %v6486 = vrot.slane %v6478, %v6485
        %v6488 = vunpack.c.l.s4 1983009808
        %v6489 = vunpack.c.0.s8 %v6488
        %v6490 = vlaneseq
        %v6491 = vshrl.u32 %v6490, 7
        %v6492 = vsub.s32 %v6489, %v6491
        %v6493 = vrot.slane %v6479, %v6492
        %v6494 = vcombine.low %v5583, %v5585
        %v6495 = vcombine.high %v5583, %v5585
        %v6497 = vunpack.c.l.s4 1983009808
        %v6498 = vunpack.c.0.s8 %v6497
        %v6499 = vlaneseq
        %v6500 = vshrl.u32 %v6499, 7
        %v6501 = vsub.s32 %v6498, %v6500
        %v6502 = vrot.slane %v6494, %v6501
        %v6504 = vunpack.c.l.s4 1983009808
        %v6505 = vunpack.c.0.s8 %v6504
        %v6506 = vlaneseq
        %v6507 = vshrl.u32 %v6506, 7
        %v6508 = vsub.s32 %v6505, %v6507
        %v6509 = vrot.slane %v6495, %v6508
        %v6510 = vcombine.low %v5586, %v5588
        %v6511 = vcombine.high %v5586, %v5588
        %v6513 = vunpack.c.l.s4 1983009808
        %v6514 = vunpack.c.0.s8 %v6513
        %v6515 = vlaneseq
        %v6516 = vshrl.u32 %v6515, 7
        %v6517 = vsub.s32 %v6514, %v6516
        %v6518 = vrot.slane %v6510, %v6517
        %v6520 = vunpack.c.l.s4 1983009808
        %v6521 = vunpack.c.0.s8 %v6520
        %v6522 = vlaneseq
        %v6523 = vshrl.u32 %v6522, 7
        %v6524 = vsub.s32 %v6521, %v6523
        %v6525 = vrot.slane %v6511, %v6524
        %v6526 = vcombine.low %v5587, %v5589
        %v6527 = vcombine.high %v5587, %v5589
        %v6529 = vunpack.c.l.s4 1983009808
        %v6530 = vunpack.c.0.s8 %v6529
        %v6531 = vlaneseq
        %v6532 = vshrl.u32 %v6531, 7
        %v6533 = vsub.s32 %v6530, %v6532
        %v6534 = vrot.slane %v6526, %v6533
        %v6536 = vunpack.c.l.s4 1983009808
        %v6537 = vunpack.c.0.s8 %v6536
        %v6538 = vlaneseq
        %v6539 = vshrl.u32 %v6538, 7
        %v6540 = vsub.s32 %v6537, %v6539
        %v6541 = vrot.slane %v6527, %v6540
        %v6542 = vcombine.low %v6486, %v6502
        %v6543 = vcombine.high %v6486, %v6502
        %v6545 = vunpack.c.l.s4 1934713408
        %v6546 = vunpack.c.0.s8 %v6545
        %v6547 = vlaneseq
        %v6548 = vshrl.u32 %v6547, 7
        %v6549 = vsub.s32 %v6546, %v6548
        %v6550 = vrot.slane %v6542, %v6549
        %v6552 = vunpack.c.l.s4 1934713408
        %v6553 = vunpack.c.0.s8 %v6552
        %v6554 = vlaneseq
        %v6555 = vshrl.u32 %v6554, 7
        %v6556 = vsub.s32 %v6553, %v6555
        %v6557 = vrot.slane %v6543, %v6556
        %v6558 = vcombine.low %v6493, %v6509
        %v6559 = vcombine.high %v6493, %v6509
        %v6561 = vunpack.c.l.s4 1934713408
        %v6562 = vunpack.c.0.s8 %v6561
        %v6563 = vlaneseq
        %v6564 = vshrl.u32 %v6563, 7
        %v6565 = vsub.s32 %v6562, %v6564
        %v6566 = vrot.slane %v6558, %v6565
        %v6568 = vunpack.c.l.s4 1934713408
        %v6569 = vunpack.c.0.s8 %v6568
        %v6570 = vlaneseq
        %v6571 = vshrl.u32 %v6570, 7
        %v6572 = vsub.s32 %v6569, %v6571
        %v6573 = vrot.slane %v6559, %v6572
        %v6574 = vcombine.low %v6518, %v6534
        %v6575 = vcombine.high %v6518, %v6534
        %v6577 = vunpack.c.l.s4 1934713408
        %v6578 = vunpack.c.0.s8 %v6577
        %v6579 = vlaneseq
        %v6580 = vshrl.u32 %v6579, 7
        %v6581 = vsub.s32 %v6578, %v6580
        %v6582 = vrot.slane %v6574, %v6581
        %v6584 = vunpack.c.l.s4 1934713408
        %v6585 = vunpack.c.0.s8 %v6584
        %v6586 = vlaneseq
        %v6587 = vshrl.u32 %v6586, 7
        %v6588 = vsub.s32 %v6585, %v6587
        %v6589 = vrot.slane %v6575, %v6588
        %v6590 = vcombine.low %v6525, %v6541
        %v6591 = vcombine.high %v6525, %v6541
        %v6593 = vunpack.c.l.s4 1934713408
        %v6594 = vunpack.c.0.s8 %v6593
        %v6595 = vlaneseq
        %v6596 = vshrl.u32 %v6595, 7
        %v6597 = vsub.s32 %v6594, %v6596
        %v6598 = vrot.slane %v6590, %v6597
        %v6600 = vunpack.c.l.s4 1934713408
        %v6601 = vunpack.c.0.s8 %v6600
        %v6602 = vlaneseq
        %v6603 = vshrl.u32 %v6602, 7
        %v6604 = vsub.s32 %v6601, %v6603
        %v6605 = vrot.slane %v6591, %v6604
        %v6606 = vcombine.low %v6550, %v6582
        %v6607 = vcombine.high %v6550, %v6582
        %v6608 = vcombine.low %v6557, %v6589
        %v6609 = vcombine.high %v6557, %v6589
        %v6610 = vcombine.low %v6566, %v6598
        %v6611 = vcombine.high %v6566, %v6598
        %v6612 = vcombine.low %v6573, %v6605
        %v6613 = vcombine.high %v6573, %v6605
        %v6614 = vcombine.low %v5590, %v5592
        %v6615 = vcombine.high %v5590, %v5592
        %v6617 = vunpack.c.l.s4 1983009808
        %v6618 = vunpack.c.0.s8 %v6617
        %v6619 = vlaneseq
        %v6620 = vshrl.u32 %v6619, 7
        %v6621 = vsub.s32 %v6618, %v6620
        %v6622 = vrot.slane %v6614, %v6621
        %v6624 = vunpack.c.l.s4 1983009808
        %v6625 = vunpack.c.0.s8 %v6624
        %v6626 = vlaneseq
        %v6627 = vshrl.u32 %v6626, 7
        %v6628 = vsub.s32 %v6625, %v6627
        %v6629 = vrot.slane %v6615, %v6628
        %v6630 = vcombine.low %v5591, %v5593
        %v6631 = vcombine.high %v5591, %v5593
        %v6633 = vunpack.c.l.s4 1983009808
        %v6634 = vunpack.c.0.s8 %v6633
        %v6635 = vlaneseq
        %v6636 = vshrl.u32 %v6635, 7
        %v6637 = vsub.s32 %v6634, %v6636
        %v6638 = vrot.slane %v6630, %v6637
        %v6640 = vunpack.c.l.s4 1983009808
        %v6641 = vunpack.c.0.s8 %v6640
        %v6642 = vlaneseq
        %v6643 = vshrl.u32 %v6642, 7
        %v6644 = vsub.s32 %v6641, %v6643
        %v6645 = vrot.slane %v6631, %v6644
        %v6646 = vcombine.low %v5594, %v5596
        %v6647 = vcombine.high %v5594, %v5596
        %v6649 = vunpack.c.l.s4 1983009808
        %v6650 = vunpack.c.0.s8 %v6649
        %v6651 = vlaneseq
        %v6652 = vshrl.u32 %v6651, 7
        %v6653 = vsub.s32 %v6650, %v6652
        %v6654 = vrot.slane %v6646, %v6653
        %v6656 = vunpack.c.l.s4 1983009808
        %v6657 = vunpack.c.0.s8 %v6656
        %v6658 = vlaneseq
        %v6659 = vshrl.u32 %v6658, 7
        %v6660 = vsub.s32 %v6657, %v6659
        %v6661 = vrot.slane %v6647, %v6660
        %v6662 = vcombine.low %v5595, %v5597
        %v6663 = vcombine.high %v5595, %v5597
        %v6665 = vunpack.c.l.s4 1983009808
        %v6666 = vunpack.c.0.s8 %v6665
        %v6667 = vlaneseq
        %v6668 = vshrl.u32 %v6667, 7
        %v6669 = vsub.s32 %v6666, %v6668
        %v6670 = vrot.slane %v6662, %v6669
        %v6672 = vunpack.c.l.s4 1983009808
        %v6673 = vunpack.c.0.s8 %v6672
        %v6674 = vlaneseq
        %v6675 = vshrl.u32 %v6674, 7
        %v6676 = vsub.s32 %v6673, %v6675
        %v6677 = vrot.slane %v6663, %v6676
        %v6678 = vcombine.low %v6622, %v6638
        %v6679 = vcombine.high %v6622, %v6638
        %v6681 = vunpack.c.l.s4 1934713408
        %v6682 = vunpack.c.0.s8 %v6681
        %v6683 = vlaneseq
        %v6684 = vshrl.u32 %v6683, 7
        %v6685 = vsub.s32 %v6682, %v6684
        %v6686 = vrot.slane %v6678, %v6685
        %v6688 = vunpack.c.l.s4 1934713408
        %v6689 = vunpack.c.0.s8 %v6688
        %v6690 = vlaneseq
        %v6691 = vshrl.u32 %v6690, 7
        %v6692 = vsub.s32 %v6689, %v6691
        %v6693 = vrot.slane %v6679, %v6692
        %v6694 = vcombine.low %v6629, %v6645
        %v6695 = vcombine.high %v6629, %v6645
        %v6697 = vunpack.c.l.s4 1934713408
        %v6698 = vunpack.c.0.s8 %v6697
        %v6699 = vlaneseq
        %v6700 = vshrl.u32 %v6699, 7
        %v6701 = vsub.s32 %v6698, %v6700
        %v6702 = vrot.slane %v6694, %v6701
        %v6704 = vunpack.c.l.s4 1934713408
        %v6705 = vunpack.c.0.s8 %v6704
        %v6706 = vlaneseq
        %v6707 = vshrl.u32 %v6706, 7
        %v6708 = vsub.s32 %v6705, %v6707
        %v6709 = vrot.slane %v6695, %v6708
        %v6710 = vcombine.low %v6654, %v6670
        %v6711 = vcombine.high %v6654, %v6670
        %v6713 = vunpack.c.l.s4 1934713408
        %v6714 = vunpack.c.0.s8 %v6713
        %v6715 = vlaneseq
        %v6716 = vshrl.u32 %v6715, 7
        %v6717 = vsub.s32 %v6714, %v6716
        %v6718 = vrot.slane %v6710, %v6717
        %v6720 = vunpack.c.l.s4 1934713408
        %v6721 = vunpack.c.0.s8 %v6720
        %v6722 = vlaneseq
        %v6723 = vshrl.u32 %v6722, 7
        %v6724 = vsub.s32 %v6721, %v6723
        %v6725 = vrot.slane %v6711, %v6724
        %v6726 = vcombine.low %v6661, %v6677
        %v6727 = vcombine.high %v6661, %v6677
        %v6729 = vunpack.c.l.s4 1934713408
        %v6730 = vunpack.c.0.s8 %v6729
        %v6731 = vlaneseq
        %v6732 = vshrl.u32 %v6731, 7
        %v6733 = vsub.s32 %v6730, %v6732
        %v6734 = vrot.slane %v6726, %v6733
        %v6736 = vunpack.c.l.s4 1934713408
        %v6737 = vunpack.c.0.s8 %v6736
        %v6738 = vlaneseq
        %v6739 = vshrl.u32 %v6738, 7
        %v6740 = vsub.s32 %v6737, %v6739
        %v6741 = vrot.slane %v6727, %v6740
        %v6742 = vcombine.low %v6686, %v6718
        %v6743 = vcombine.high %v6686, %v6718
        %v6744 = vcombine.low %v6693, %v6725
        %v6745 = vcombine.high %v6693, %v6725
        %v6746 = vcombine.low %v6702, %v6734
        %v6747 = vcombine.high %v6702, %v6734
        %v6748 = vcombine.low %v6709, %v6741
        %v6749 = vcombine.high %v6709, %v6741
        %v6750 = vcombine.low %v5598, %v5600
        %v6751 = vcombine.high %v5598, %v5600
        %v6753 = vunpack.c.l.s4 1983009808
        %v6754 = vunpack.c.0.s8 %v6753
        %v6755 = vlaneseq
        %v6756 = vshrl.u32 %v6755, 7
        %v6757 = vsub.s32 %v6754, %v6756
        %v6758 = vrot.slane %v6750, %v6757
        %v6760 = vunpack.c.l.s4 1983009808
        %v6761 = vunpack.c.0.s8 %v6760
        %v6762 = vlaneseq
        %v6763 = vshrl.u32 %v6762, 7
        %v6764 = vsub.s32 %v6761, %v6763
        %v6765 = vrot.slane %v6751, %v6764
        %v6766 = vcombine.low %v5599, %v5601
        %v6767 = vcombine.high %v5599, %v5601
        %v6769 = vunpack.c.l.s4 1983009808
        %v6770 = vunpack.c.0.s8 %v6769
        %v6771 = vlaneseq
        %v6772 = vshrl.u32 %v6771, 7
        %v6773 = vsub.s32 %v6770, %v6772
        %v6774 = vrot.slane %v6766, %v6773
        %v6776 = vunpack.c.l.s4 1983009808
        %v6777 = vunpack.c.0.s8 %v6776
        %v6778 = vlaneseq
        %v6779 = vshrl.u32 %v6778, 7
        %v6780 = vsub.s32 %v6777, %v6779
        %v6781 = vrot.slane %v6767, %v6780
        %v6782 = vcombine.low %v5602, %v5604
        %v6783 = vcombine.high %v5602, %v5604
        %v6785 = vunpack.c.l.s4 1983009808
        %v6786 = vunpack.c.0.s8 %v6785
        %v6787 = vlaneseq
        %v6788 = vshrl.u32 %v6787, 7
        %v6789 = vsub.s32 %v6786, %v6788
        %v6790 = vrot.slane %v6782, %v6789
        %v6792 = vunpack.c.l.s4 1983009808
        %v6793 = vunpack.c.0.s8 %v6792
        %v6794 = vlaneseq
        %v6795 = vshrl.u32 %v6794, 7
        %v6796 = vsub.s32 %v6793, %v6795
        %v6797 = vrot.slane %v6783, %v6796
        %v6798 = vcombine.low %v5603, %v5605
        %v6799 = vcombine.high %v5603, %v5605
        %v6801 = vunpack.c.l.s4 1983009808
        %v6802 = vunpack.c.0.s8 %v6801
        %v6803 = vlaneseq
        %v6804 = vshrl.u32 %v6803, 7
        %v6805 = vsub.s32 %v6802, %v6804
        %v6806 = vrot.slane %v6798, %v6805
        %v6808 = vunpack.c.l.s4 1983009808
        %v6809 = vunpack.c.0.s8 %v6808
        %v6810 = vlaneseq
        %v6811 = vshrl.u32 %v6810, 7
        %v6812 = vsub.s32 %v6809, %v6811
        %v6813 = vrot.slane %v6799, %v6812
        %v6814 = vcombine.low %v6758, %v6774
        %v6815 = vcombine.high %v6758, %v6774
        %v6817 = vunpack.c.l.s4 1934713408
        %v6818 = vunpack.c.0.s8 %v6817
        %v6819 = vlaneseq
        %v6820 = vshrl.u32 %v6819, 7
        %v6821 = vsub.s32 %v6818, %v6820
        %v6822 = vrot.slane %v6814, %v6821
        %v6824 = vunpack.c.l.s4 1934713408
        %v6825 = vunpack.c.0.s8 %v6824
        %v6826 = vlaneseq
        %v6827 = vshrl.u32 %v6826, 7
        %v6828 = vsub.s32 %v6825, %v6827
        %v6829 = vrot.slane %v6815, %v6828
        %v6830 = vcombine.low %v6765, %v6781
        %v6831 = vcombine.high %v6765, %v6781
        %v6833 = vunpack.c.l.s4 1934713408
        %v6834 = vunpack.c.0.s8 %v6833
        %v6835 = vlaneseq
        %v6836 = vshrl.u32 %v6835, 7
        %v6837 = vsub.s32 %v6834, %v6836
        %v6838 = vrot.slane %v6830, %v6837
        %v6840 = vunpack.c.l.s4 1934713408
        %v6841 = vunpack.c.0.s8 %v6840
        %v6842 = vlaneseq
        %v6843 = vshrl.u32 %v6842, 7
        %v6844 = vsub.s32 %v6841, %v6843
        %v6845 = vrot.slane %v6831, %v6844
        %v6846 = vcombine.low %v6790, %v6806
        %v6847 = vcombine.high %v6790, %v6806
        %v6849 = vunpack.c.l.s4 1934713408
        %v6850 = vunpack.c.0.s8 %v6849
        %v6851 = vlaneseq
        %v6852 = vshrl.u32 %v6851, 7
        %v6853 = vsub.s32 %v6850, %v6852
        %v6854 = vrot.slane %v6846, %v6853
        %v6856 = vunpack.c.l.s4 1934713408
        %v6857 = vunpack.c.0.s8 %v6856
        %v6858 = vlaneseq
        %v6859 = vshrl.u32 %v6858, 7
        %v6860 = vsub.s32 %v6857, %v6859
        %v6861 = vrot.slane %v6847, %v6860
        %v6862 = vcombine.low %v6797, %v6813
        %v6863 = vcombine.high %v6797, %v6813
        %v6865 = vunpack.c.l.s4 1934713408
        %v6866 = vunpack.c.0.s8 %v6865
        %v6867 = vlaneseq
        %v6868 = vshrl.u32 %v6867, 7
        %v6869 = vsub.s32 %v6866, %v6868
        %v6870 = vrot.slane %v6862, %v6869
        %v6872 = vunpack.c.l.s4 1934713408
        %v6873 = vunpack.c.0.s8 %v6872
        %v6874 = vlaneseq
        %v6875 = vshrl.u32 %v6874, 7
        %v6876 = vsub.s32 %v6873, %v6875
        %v6877 = vrot.slane %v6863, %v6876
        %v6878 = vcombine.low %v6822, %v6854
        %v6879 = vcombine.high %v6822, %v6854
        %v6880 = vcombine.low %v6829, %v6861
        %v6881 = vcombine.high %v6829, %v6861
        %v6882 = vcombine.low %v6838, %v6870
        %v6883 = vcombine.high %v6838, %v6870
        %v6884 = vcombine.low %v6845, %v6877
        %v6885 = vcombine.high %v6845, %v6877
        %v6886 = vcombine.low %v5606, %v5608
        %v6887 = vcombine.high %v5606, %v5608
        %v6889 = vunpack.c.l.s4 1983009808
        %v6890 = vunpack.c.0.s8 %v6889
        %v6891 = vlaneseq
        %v6892 = vshrl.u32 %v6891, 7
        %v6893 = vsub.s32 %v6890, %v6892
        %v6894 = vrot.slane %v6886, %v6893
        %v6896 = vunpack.c.l.s4 1983009808
        %v6897 = vunpack.c.0.s8 %v6896
        %v6898 = vlaneseq
        %v6899 = vshrl.u32 %v6898, 7
        %v6900 = vsub.s32 %v6897, %v6899
        %v6901 = vrot.slane %v6887, %v6900
        %v6902 = vcombine.low %v5607, %v5609
        %v6903 = vcombine.high %v5607, %v5609
        %v6905 = vunpack.c.l.s4 1983009808
        %v6906 = vunpack.c.0.s8 %v6905
        %v6907 = vlaneseq
        %v6908 = vshrl.u32 %v6907, 7
        %v6909 = vsub.s32 %v6906, %v6908
        %v6910 = vrot.slane %v6902, %v6909
        %v6912 = vunpack.c.l.s4 1983009808
        %v6913 = vunpack.c.0.s8 %v6912
        %v6914 = vlaneseq
        %v6915 = vshrl.u32 %v6914, 7
        %v6916 = vsub.s32 %v6913, %v6915
        %v6917 = vrot.slane %v6903, %v6916
        %v6918 = vcombine.low %v5610, %v5612
        %v6919 = vcombine.high %v5610, %v5612
        %v6921 = vunpack.c.l.s4 1983009808
        %v6922 = vunpack.c.0.s8 %v6921
        %v6923 = vlaneseq
        %v6924 = vshrl.u32 %v6923, 7
        %v6925 = vsub.s32 %v6922, %v6924
        %v6926 = vrot.slane %v6918, %v6925
        %v6928 = vunpack.c.l.s4 1983009808
        %v6929 = vunpack.c.0.s8 %v6928
        %v6930 = vlaneseq
        %v6931 = vshrl.u32 %v6930, 7
        %v6932 = vsub.s32 %v6929, %v6931
        %v6933 = vrot.slane %v6919, %v6932
        %v6934 = vcombine.low %v5611, %v5613
        %v6935 = vcombine.high %v5611, %v5613
        %v6937 = vunpack.c.l.s4 1983009808
        %v6938 = vunpack.c.0.s8 %v6937
        %v6939 = vlaneseq
        %v6940 = vshrl.u32 %v6939, 7
        %v6941 = vsub.s32 %v6938, %v6940
        %v6942 = vrot.slane %v6934, %v6941
        %v6944 = vunpack.c.l.s4 1983009808
        %v6945 = vunpack.c.0.s8 %v6944
        %v6946 = vlaneseq
        %v6947 = vshrl.u32 %v6946, 7
        %v6948 = vsub.s32 %v6945, %v6947
        %v6949 = vrot.slane %v6935, %v6948
        %v6950 = vcombine.low %v6894, %v6910
        %v6951 = vcombine.high %v6894, %v6910
        %v6953 = vunpack.c.l.s4 1934713408
        %v6954 = vunpack.c.0.s8 %v6953
        %v6955 = vlaneseq
        %v6956 = vshrl.u32 %v6955, 7
        %v6957 = vsub.s32 %v6954, %v6956
        %v6958 = vrot.slane %v6950, %v6957
        %v6960 = vunpack.c.l.s4 1934713408
        %v6961 = vunpack.c.0.s8 %v6960
        %v6962 = vlaneseq
        %v6963 = vshrl.u32 %v6962, 7
        %v6964 = vsub.s32 %v6961, %v6963
        %v6965 = vrot.slane %v6951, %v6964
        %v6966 = vcombine.low %v6901, %v6917
        %v6967 = vcombine.high %v6901, %v6917
        %v6969 = vunpack.c.l.s4 1934713408
        %v6970 = vunpack.c.0.s8 %v6969
        %v6971 = vlaneseq
        %v6972 = vshrl.u32 %v6971, 7
        %v6973 = vsub.s32 %v6970, %v6972
        %v6974 = vrot.slane %v6966, %v6973
        %v6976 = vunpack.c.l.s4 1934713408
        %v6977 = vunpack.c.0.s8 %v6976
        %v6978 = vlaneseq
        %v6979 = vshrl.u32 %v6978, 7
        %v6980 = vsub.s32 %v6977, %v6979
        %v6981 = vrot.slane %v6967, %v6980
        %v6982 = vcombine.low %v6926, %v6942
        %v6983 = vcombine.high %v6926, %v6942
        %v6985 = vunpack.c.l.s4 1934713408
        %v6986 = vunpack.c.0.s8 %v6985
        %v6987 = vlaneseq
        %v6988 = vshrl.u32 %v6987, 7
        %v6989 = vsub.s32 %v6986, %v6988
        %v6990 = vrot.slane %v6982, %v6989
        %v6992 = vunpack.c.l.s4 1934713408
        %v6993 = vunpack.c.0.s8 %v6992
        %v6994 = vlaneseq
        %v6995 = vshrl.u32 %v6994, 7
        %v6996 = vsub.s32 %v6993, %v6995
        %v6997 = vrot.slane %v6983, %v6996
        %v6998 = vcombine.low %v6933, %v6949
        %v6999 = vcombine.high %v6933, %v6949
        %v7001 = vunpack.c.l.s4 1934713408
        %v7002 = vunpack.c.0.s8 %v7001
        %v7003 = vlaneseq
        %v7004 = vshrl.u32 %v7003, 7
        %v7005 = vsub.s32 %v7002, %v7004
        %v7006 = vrot.slane %v6998, %v7005
        %v7008 = vunpack.c.l.s4 1934713408
        %v7009 = vunpack.c.0.s8 %v7008
        %v7010 = vlaneseq
        %v7011 = vshrl.u32 %v7010, 7
        %v7012 = vsub.s32 %v7009, %v7011
        %v7013 = vrot.slane %v6999, %v7012
        %v7014 = vcombine.low %v6958, %v6990
        %v7015 = vcombine.high %v6958, %v6990
        %v7016 = vcombine.low %v6965, %v6997
        %v7017 = vcombine.high %v6965, %v6997
        %v7018 = vcombine.low %v6974, %v7006
        %v7019 = vcombine.high %v6974, %v7006
        %v7020 = vcombine.low %v6981, %v7013
        %v7021 = vcombine.high %v6981, %v7013
        %v7022 = vcombine.low %v5614, %v5616
        %v7023 = vcombine.high %v5614, %v5616
        %v7025 = vunpack.c.l.s4 1983009808
        %v7026 = vunpack.c.0.s8 %v7025
        %v7027 = vlaneseq
        %v7028 = vshrl.u32 %v7027, 7
        %v7029 = vsub.s32 %v7026, %v7028
        %v7030 = vrot.slane %v7022, %v7029
        %v7032 = vunpack.c.l.s4 1983009808
        %v7033 = vunpack.c.0.s8 %v7032
        %v7034 = vlaneseq
        %v7035 = vshrl.u32 %v7034, 7
        %v7036 = vsub.s32 %v7033, %v7035
        %v7037 = vrot.slane %v7023, %v7036
        %v7038 = vcombine.low %v5615, %v5617
        %v7039 = vcombine.high %v5615, %v5617
        %v7041 = vunpack.c.l.s4 1983009808
        %v7042 = vunpack.c.0.s8 %v7041
        %v7043 = vlaneseq
        %v7044 = vshrl.u32 %v7043, 7
        %v7045 = vsub.s32 %v7042, %v7044
        %v7046 = vrot.slane %v7038, %v7045
        %v7048 = vunpack.c.l.s4 1983009808
        %v7049 = vunpack.c.0.s8 %v7048
        %v7050 = vlaneseq
        %v7051 = vshrl.u32 %v7050, 7
        %v7052 = vsub.s32 %v7049, %v7051
        %v7053 = vrot.slane %v7039, %v7052
        %v7054 = vcombine.low %v5618, %v5620
        %v7055 = vcombine.high %v5618, %v5620
        %v7057 = vunpack.c.l.s4 1983009808
        %v7058 = vunpack.c.0.s8 %v7057
        %v7059 = vlaneseq
        %v7060 = vshrl.u32 %v7059, 7
        %v7061 = vsub.s32 %v7058, %v7060
        %v7062 = vrot.slane %v7054, %v7061
        %v7064 = vunpack.c.l.s4 1983009808
        %v7065 = vunpack.c.0.s8 %v7064
        %v7066 = vlaneseq
        %v7067 = vshrl.u32 %v7066, 7
        %v7068 = vsub.s32 %v7065, %v7067
        %v7069 = vrot.slane %v7055, %v7068
        %v7070 = vcombine.low %v5619, %v5621
        %v7071 = vcombine.high %v5619, %v5621
        %v7073 = vunpack.c.l.s4 1983009808
        %v7074 = vunpack.c.0.s8 %v7073
        %v7075 = vlaneseq
        %v7076 = vshrl.u32 %v7075, 7
        %v7077 = vsub.s32 %v7074, %v7076
        %v7078 = vrot.slane %v7070, %v7077
        %v7080 = vunpack.c.l.s4 1983009808
        %v7081 = vunpack.c.0.s8 %v7080
        %v7082 = vlaneseq
        %v7083 = vshrl.u32 %v7082, 7
        %v7084 = vsub.s32 %v7081, %v7083
        %v7085 = vrot.slane %v7071, %v7084
        %v7086 = vcombine.low %v7030, %v7046
        %v7087 = vcombine.high %v7030, %v7046
        %v7089 = vunpack.c.l.s4 1934713408
        %v7090 = vunpack.c.0.s8 %v7089
        %v7091 = vlaneseq
        %v7092 = vshrl.u32 %v7091, 7
        %v7093 = vsub.s32 %v7090, %v7092
        %v7094 = vrot.slane %v7086, %v7093
        %v7096 = vunpack.c.l.s4 1934713408
        %v7097 = vunpack.c.0.s8 %v7096
        %v7098 = vlaneseq
        %v7099 = vshrl.u32 %v7098, 7
        %v7100 = vsub.s32 %v7097, %v7099
        %v7101 = vrot.slane %v7087, %v7100
        %v7102 = vcombine.low %v7037, %v7053
        %v7103 = vcombine.high %v7037, %v7053
        %v7105 = vunpack.c.l.s4 1934713408
        %v7106 = vunpack.c.0.s8 %v7105
        %v7107 = vlaneseq
        %v7108 = vshrl.u32 %v7107, 7
        %v7109 = vsub.s32 %v7106, %v7108
        %v7110 = vrot.slane %v7102, %v7109
        %v7112 = vunpack.c.l.s4 1934713408
        %v7113 = vunpack.c.0.s8 %v7112
        %v7114 = vlaneseq
        %v7115 = vshrl.u32 %v7114, 7
        %v7116 = vsub.s32 %v7113, %v7115
        %v7117 = vrot.slane %v7103, %v7116
        %v7118 = vcombine.low %v7062, %v7078
        %v7119 = vcombine.high %v7062, %v7078
        %v7121 = vunpack.c.l.s4 1934713408
        %v7122 = vunpack.c.0.s8 %v7121
        %v7123 = vlaneseq
        %v7124 = vshrl.u32 %v7123, 7
        %v7125 = vsub.s32 %v7122, %v7124
        %v7126 = vrot.slane %v7118, %v7125
        %v7128 = vunpack.c.l.s4 1934713408
        %v7129 = vunpack.c.0.s8 %v7128
        %v7130 = vlaneseq
        %v7131 = vshrl.u32 %v7130, 7
        %v7132 = vsub.s32 %v7129, %v7131
        %v7133 = vrot.slane %v7119, %v7132
        %v7134 = vcombine.low %v7069, %v7085
        %v7135 = vcombine.high %v7069, %v7085
        %v7137 = vunpack.c.l.s4 1934713408
        %v7138 = vunpack.c.0.s8 %v7137
        %v7139 = vlaneseq
        %v7140 = vshrl.u32 %v7139, 7
        %v7141 = vsub.s32 %v7138, %v7140
        %v7142 = vrot.slane %v7134, %v7141
        %v7144 = vunpack.c.l.s4 1934713408
        %v7145 = vunpack.c.0.s8 %v7144
        %v7146 = vlaneseq
        %v7147 = vshrl.u32 %v7146, 7
        %v7148 = vsub.s32 %v7145, %v7147
        %v7149 = vrot.slane %v7135, %v7148
        %v7150 = vcombine.low %v7094, %v7126
        %v7151 = vcombine.high %v7094, %v7126
        %v7152 = vcombine.low %v7101, %v7133
        %v7153 = vcombine.high %v7101, %v7133
        %v7154 = vcombine.low %v7110, %v7142
        %v7155 = vcombine.high %v7110, %v7142
        %v7156 = vcombine.low %v7117, %v7149
        %v7157 = vcombine.high %v7117, %v7149
        %v7158 = vcombine.low %v5622, %v5624
        %v7159 = vcombine.high %v5622, %v5624
        %v7161 = vunpack.c.l.s4 1983009808
        %v7162 = vunpack.c.0.s8 %v7161
        %v7163 = vlaneseq
        %v7164 = vshrl.u32 %v7163, 7
        %v7165 = vsub.s32 %v7162, %v7164
        %v7166 = vrot.slane %v7158, %v7165
        %v7168 = vunpack.c.l.s4 1983009808
        %v7169 = vunpack.c.0.s8 %v7168
        %v7170 = vlaneseq
        %v7171 = vshrl.u32 %v7170, 7
        %v7172 = vsub.s32 %v7169, %v7171
        %v7173 = vrot.slane %v7159, %v7172
        %v7174 = vcombine.low %v5623, %v5625
        %v7175 = vcombine.high %v5623, %v5625
        %v7177 = vunpack.c.l.s4 1983009808
        %v7178 = vunpack.c.0.s8 %v7177
        %v7179 = vlaneseq
        %v7180 = vshrl.u32 %v7179, 7
        %v7181 = vsub.s32 %v7178, %v7180
        %v7182 = vrot.slane %v7174, %v7181
        %v7184 = vunpack.c.l.s4 1983009808
        %v7185 = vunpack.c.0.s8 %v7184
        %v7186 = vlaneseq
        %v7187 = vshrl.u32 %v7186, 7
        %v7188 = vsub.s32 %v7185, %v7187
        %v7189 = vrot.slane %v7175, %v7188
        %v7190 = vcombine.low %v5626, %v5628
        %v7191 = vcombine.high %v5626, %v5628
        %v7193 = vunpack.c.l.s4 1983009808
        %v7194 = vunpack.c.0.s8 %v7193
        %v7195 = vlaneseq
        %v7196 = vshrl.u32 %v7195, 7
        %v7197 = vsub.s32 %v7194, %v7196
        %v7198 = vrot.slane %v7190, %v7197
        %v7200 = vunpack.c.l.s4 1983009808
        %v7201 = vunpack.c.0.s8 %v7200
        %v7202 = vlaneseq
        %v7203 = vshrl.u32 %v7202, 7
        %v7204 = vsub.s32 %v7201, %v7203
        %v7205 = vrot.slane %v7191, %v7204
        %v7206 = vcombine.low %v5627, %v5629
        %v7207 = vcombine.high %v5627, %v5629
        %v7209 = vunpack.c.l.s4 1983009808
        %v7210 = vunpack.c.0.s8 %v7209
        %v7211 = vlaneseq
        %v7212 = vshrl.u32 %v7211, 7
        %v7213 = vsub.s32 %v7210, %v7212
        %v7214 = vrot.slane %v7206, %v7213
        %v7216 = vunpack.c.l.s4 1983009808
        %v7217 = vunpack.c.0.s8 %v7216
        %v7218 = vlaneseq
        %v7219 = vshrl.u32 %v7218, 7
        %v7220 = vsub.s32 %v7217, %v7219
        %v7221 = vrot.slane %v7207, %v7220
        %v7222 = vcombine.low %v7166, %v7182
        %v7223 = vcombine.high %v7166, %v7182
        %v7225 = vunpack.c.l.s4 1934713408
        %v7226 = vunpack.c.0.s8 %v7225
        %v7227 = vlaneseq
        %v7228 = vshrl.u32 %v7227, 7
        %v7229 = vsub.s32 %v7226, %v7228
        %v7230 = vrot.slane %v7222, %v7229
        %v7232 = vunpack.c.l.s4 1934713408
        %v7233 = vunpack.c.0.s8 %v7232
        %v7234 = vlaneseq
        %v7235 = vshrl.u32 %v7234, 7
        %v7236 = vsub.s32 %v7233, %v7235
        %v7237 = vrot.slane %v7223, %v7236
        %v7238 = vcombine.low %v7173, %v7189
        %v7239 = vcombine.high %v7173, %v7189
        %v7241 = vunpack.c.l.s4 1934713408
        %v7242 = vunpack.c.0.s8 %v7241
        %v7243 = vlaneseq
        %v7244 = vshrl.u32 %v7243, 7
        %v7245 = vsub.s32 %v7242, %v7244
        %v7246 = vrot.slane %v7238, %v7245
        %v7248 = vunpack.c.l.s4 1934713408
        %v7249 = vunpack.c.0.s8 %v7248
        %v7250 = vlaneseq
        %v7251 = vshrl.u32 %v7250, 7
        %v7252 = vsub.s32 %v7249, %v7251
        %v7253 = vrot.slane %v7239, %v7252
        %v7254 = vcombine.low %v7198, %v7214
        %v7255 = vcombine.high %v7198, %v7214
        %v7257 = vunpack.c.l.s4 1934713408
        %v7258 = vunpack.c.0.s8 %v7257
        %v7259 = vlaneseq
        %v7260 = vshrl.u32 %v7259, 7
        %v7261 = vsub.s32 %v7258, %v7260
        %v7262 = vrot.slane %v7254, %v7261
        %v7264 = vunpack.c.l.s4 1934713408
        %v7265 = vunpack.c.0.s8 %v7264
        %v7266 = vlaneseq
        %v7267 = vshrl.u32 %v7266, 7
        %v7268 = vsub.s32 %v7265, %v7267
        %v7269 = vrot.slane %v7255, %v7268
        %v7270 = vcombine.low %v7205, %v7221
        %v7271 = vcombine.high %v7205, %v7221
        %v7273 = vunpack.c.l.s4 1934713408
        %v7274 = vunpack.c.0.s8 %v7273
        %v7275 = vlaneseq
        %v7276 = vshrl.u32 %v7275, 7
        %v7277 = vsub.s32 %v7274, %v7276
        %v7278 = vrot.slane %v7270, %v7277
        %v7280 = vunpack.c.l.s4 1934713408
        %v7281 = vunpack.c.0.s8 %v7280
        %v7282 = vlaneseq
        %v7283 = vshrl.u32 %v7282, 7
        %v7284 = vsub.s32 %v7281, %v7283
        %v7285 = vrot.slane %v7271, %v7284
        %v7286 = vcombine.low %v7230, %v7262
        %v7287 = vcombine.high %v7230, %v7262
        %v7288 = vcombine.low %v7237, %v7269
        %v7289 = vcombine.high %v7237, %v7269
        %v7290 = vcombine.low %v7246, %v7278
        %v7291 = vcombine.high %v7246, %v7278
        %v7292 = vcombine.low %v7253, %v7285
        %v7293 = vcombine.high %v7253, %v7285
        %v7294 = vcombine.low %v5630, %v5632
        %v7295 = vcombine.high %v5630, %v5632
        %v7297 = vunpack.c.l.s4 1983009808
        %v7298 = vunpack.c.0.s8 %v7297
        %v7299 = vlaneseq
        %v7300 = vshrl.u32 %v7299, 7
        %v7301 = vsub.s32 %v7298, %v7300
        %v7302 = vrot.slane %v7294, %v7301
        %v7304 = vunpack.c.l.s4 1983009808
        %v7305 = vunpack.c.0.s8 %v7304
        %v7306 = vlaneseq
        %v7307 = vshrl.u32 %v7306, 7
        %v7308 = vsub.s32 %v7305, %v7307
        %v7309 = vrot.slane %v7295, %v7308
        %v7310 = vcombine.low %v5631, %v5633
        %v7311 = vcombine.high %v5631, %v5633
        %v7313 = vunpack.c.l.s4 1983009808
        %v7314 = vunpack.c.0.s8 %v7313
        %v7315 = vlaneseq
        %v7316 = vshrl.u32 %v7315, 7
        %v7317 = vsub.s32 %v7314, %v7316
        %v7318 = vrot.slane %v7310, %v7317
        %v7320 = vunpack.c.l.s4 1983009808
        %v7321 = vunpack.c.0.s8 %v7320
        %v7322 = vlaneseq
        %v7323 = vshrl.u32 %v7322, 7
        %v7324 = vsub.s32 %v7321, %v7323
        %v7325 = vrot.slane %v7311, %v7324
        %v7326 = vcombine.low %v5634, %v5636
        %v7327 = vcombine.high %v5634, %v5636
        %v7329 = vunpack.c.l.s4 1983009808
        %v7330 = vunpack.c.0.s8 %v7329
        %v7331 = vlaneseq
        %v7332 = vshrl.u32 %v7331, 7
        %v7333 = vsub.s32 %v7330, %v7332
        %v7334 = vrot.slane %v7326, %v7333
        %v7336 = vunpack.c.l.s4 1983009808
        %v7337 = vunpack.c.0.s8 %v7336
        %v7338 = vlaneseq
        %v7339 = vshrl.u32 %v7338, 7
        %v7340 = vsub.s32 %v7337, %v7339
        %v7341 = vrot.slane %v7327, %v7340
        %v7342 = vcombine.low %v5635, %v5637
        %v7343 = vcombine.high %v5635, %v5637
        %v7345 = vunpack.c.l.s4 1983009808
        %v7346 = vunpack.c.0.s8 %v7345
        %v7347 = vlaneseq
        %v7348 = vshrl.u32 %v7347, 7
        %v7349 = vsub.s32 %v7346, %v7348
        %v7350 = vrot.slane %v7342, %v7349
        %v7352 = vunpack.c.l.s4 1983009808
        %v7353 = vunpack.c.0.s8 %v7352
        %v7354 = vlaneseq
        %v7355 = vshrl.u32 %v7354, 7
        %v7356 = vsub.s32 %v7353, %v7355
        %v7357 = vrot.slane %v7343, %v7356
        %v7358 = vcombine.low %v7302, %v7318
        %v7359 = vcombine.high %v7302, %v7318
        %v7361 = vunpack.c.l.s4 1934713408
        %v7362 = vunpack.c.0.s8 %v7361
        %v7363 = vlaneseq
        %v7364 = vshrl.u32 %v7363, 7
        %v7365 = vsub.s32 %v7362, %v7364
        %v7366 = vrot.slane %v7358, %v7365
        %v7368 = vunpack.c.l.s4 1934713408
        %v7369 = vunpack.c.0.s8 %v7368
        %v7370 = vlaneseq
        %v7371 = vshrl.u32 %v7370, 7
        %v7372 = vsub.s32 %v7369, %v7371
        %v7373 = vrot.slane %v7359, %v7372
        %v7374 = vcombine.low %v7309, %v7325
        %v7375 = vcombine.high %v7309, %v7325
        %v7377 = vunpack.c.l.s4 1934713408
        %v7378 = vunpack.c.0.s8 %v7377
        %v7379 = vlaneseq
        %v7380 = vshrl.u32 %v7379, 7
        %v7381 = vsub.s32 %v7378, %v7380
        %v7382 = vrot.slane %v7374, %v7381
        %v7384 = vunpack.c.l.s4 1934713408
        %v7385 = vunpack.c.0.s8 %v7384
        %v7386 = vlaneseq
        %v7387 = vshrl.u32 %v7386, 7
        %v7388 = vsub.s32 %v7385, %v7387
        %v7389 = vrot.slane %v7375, %v7388
        %v7390 = vcombine.low %v7334, %v7350
        %v7391 = vcombine.high %v7334, %v7350
        %v7393 = vunpack.c.l.s4 1934713408
        %v7394 = vunpack.c.0.s8 %v7393
        %v7395 = vlaneseq
        %v7396 = vshrl.u32 %v7395, 7
        %v7397 = vsub.s32 %v7394, %v7396
        %v7398 = vrot.slane %v7390, %v7397
        %v7400 = vunpack.c.l.s4 1934713408
        %v7401 = vunpack.c.0.s8 %v7400
        %v7402 = vlaneseq
        %v7403 = vshrl.u32 %v7402, 7
        %v7404 = vsub.s32 %v7401, %v7403
        %v7405 = vrot.slane %v7391, %v7404
        %v7406 = vcombine.low %v7341, %v7357
        %v7407 = vcombine.high %v7341, %v7357
        %v7409 = vunpack.c.l.s4 1934713408
        %v7410 = vunpack.c.0.s8 %v7409
        %v7411 = vlaneseq
        %v7412 = vshrl.u32 %v7411, 7
        %v7413 = vsub.s32 %v7410, %v7412
        %v7414 = vrot.slane %v7406, %v7413
        %v7416 = vunpack.c.l.s4 1934713408
        %v7417 = vunpack.c.0.s8 %v7416
        %v7418 = vlaneseq
        %v7419 = vshrl.u32 %v7418, 7
        %v7420 = vsub.s32 %v7417, %v7419
        %v7421 = vrot.slane %v7407, %v7420
        %v7422 = vcombine.low %v7366, %v7398
        %v7423 = vcombine.high %v7366, %v7398
        %v7424 = vcombine.low %v7373, %v7405
        %v7425 = vcombine.high %v7373, %v7405
        %v7426 = vcombine.low %v7382, %v7414
        %v7427 = vcombine.high %v7382, %v7414
        %v7428 = vcombine.low %v7389, %v7421
        %v7429 = vcombine.high %v7389, %v7421
        %v7430 = vcombine.low %v5638, %v5640
        %v7431 = vcombine.high %v5638, %v5640
        %v7433 = vunpack.c.l.s4 1983009808
        %v7434 = vunpack.c.0.s8 %v7433
        %v7435 = vlaneseq
        %v7436 = vshrl.u32 %v7435, 7
        %v7437 = vsub.s32 %v7434, %v7436
        %v7438 = vrot.slane %v7430, %v7437
        %v7440 = vunpack.c.l.s4 1983009808
        %v7441 = vunpack.c.0.s8 %v7440
        %v7442 = vlaneseq
        %v7443 = vshrl.u32 %v7442, 7
        %v7444 = vsub.s32 %v7441, %v7443
        %v7445 = vrot.slane %v7431, %v7444
        %v7446 = vcombine.low %v5639, %v5641
        %v7447 = vcombine.high %v5639, %v5641
        %v7449 = vunpack.c.l.s4 1983009808
        %v7450 = vunpack.c.0.s8 %v7449
        %v7451 = vlaneseq
        %v7452 = vshrl.u32 %v7451, 7
        %v7453 = vsub.s32 %v7450, %v7452
        %v7454 = vrot.slane %v7446, %v7453
        %v7456 = vunpack.c.l.s4 1983009808
        %v7457 = vunpack.c.0.s8 %v7456
        %v7458 = vlaneseq
        %v7459 = vshrl.u32 %v7458, 7
        %v7460 = vsub.s32 %v7457, %v7459
        %v7461 = vrot.slane %v7447, %v7460
        %v7462 = vcombine.low %v5642, %v5644
        %v7463 = vcombine.high %v5642, %v5644
        %v7465 = vunpack.c.l.s4 1983009808
        %v7466 = vunpack.c.0.s8 %v7465
        %v7467 = vlaneseq
        %v7468 = vshrl.u32 %v7467, 7
        %v7469 = vsub.s32 %v7466, %v7468
        %v7470 = vrot.slane %v7462, %v7469
        %v7472 = vunpack.c.l.s4 1983009808
        %v7473 = vunpack.c.0.s8 %v7472
        %v7474 = vlaneseq
        %v7475 = vshrl.u32 %v7474, 7
        %v7476 = vsub.s32 %v7473, %v7475
        %v7477 = vrot.slane %v7463, %v7476
        %v7478 = vcombine.low %v5643, %v5645
        %v7479 = vcombine.high %v5643, %v5645
        %v7481 = vunpack.c.l.s4 1983009808
        %v7482 = vunpack.c.0.s8 %v7481
        %v7483 = vlaneseq
        %v7484 = vshrl.u32 %v7483, 7
        %v7485 = vsub.s32 %v7482, %v7484
        %v7486 = vrot.slane %v7478, %v7485
        %v7488 = vunpack.c.l.s4 1983009808
        %v7489 = vunpack.c.0.s8 %v7488
        %v7490 = vlaneseq
        %v7491 = vshrl.u32 %v7490, 7
        %v7492 = vsub.s32 %v7489, %v7491
        %v7493 = vrot.slane %v7479, %v7492
        %v7494 = vcombine.low %v7438, %v7454
        %v7495 = vcombine.high %v7438, %v7454
        %v7497 = vunpack.c.l.s4 1934713408
        %v7498 = vunpack.c.0.s8 %v7497
        %v7499 = vlaneseq
        %v7500 = vshrl.u32 %v7499, 7
        %v7501 = vsub.s32 %v7498, %v7500
        %v7502 = vrot.slane %v7494, %v7501
        %v7504 = vunpack.c.l.s4 1934713408
        %v7505 = vunpack.c.0.s8 %v7504
        %v7506 = vlaneseq
        %v7507 = vshrl.u32 %v7506, 7
        %v7508 = vsub.s32 %v7505, %v7507
        %v7509 = vrot.slane %v7495, %v7508
        %v7510 = vcombine.low %v7445, %v7461
        %v7511 = vcombine.high %v7445, %v7461
        %v7513 = vunpack.c.l.s4 1934713408
        %v7514 = vunpack.c.0.s8 %v7513
        %v7515 = vlaneseq
        %v7516 = vshrl.u32 %v7515, 7
        %v7517 = vsub.s32 %v7514, %v7516
        %v7518 = vrot.slane %v7510, %v7517
        %v7520 = vunpack.c.l.s4 1934713408
        %v7521 = vunpack.c.0.s8 %v7520
        %v7522 = vlaneseq
        %v7523 = vshrl.u32 %v7522, 7
        %v7524 = vsub.s32 %v7521, %v7523
        %v7525 = vrot.slane %v7511, %v7524
        %v7526 = vcombine.low %v7470, %v7486
        %v7527 = vcombine.high %v7470, %v7486
        %v7529 = vunpack.c.l.s4 1934713408
        %v7530 = vunpack.c.0.s8 %v7529
        %v7531 = vlaneseq
        %v7532 = vshrl.u32 %v7531, 7
        %v7533 = vsub.s32 %v7530, %v7532
        %v7534 = vrot.slane %v7526, %v7533
        %v7536 = vunpack.c.l.s4 1934713408
        %v7537 = vunpack.c.0.s8 %v7536
        %v7538 = vlaneseq
        %v7539 = vshrl.u32 %v7538, 7
        %v7540 = vsub.s32 %v7537, %v7539
        %v7541 = vrot.slane %v7527, %v7540
        %v7542 = vcombine.low %v7477, %v7493
        %v7543 = vcombine.high %v7477, %v7493
        %v7545 = vunpack.c.l.s4 1934713408
        %v7546 = vunpack.c.0.s8 %v7545
        %v7547 = vlaneseq
        %v7548 = vshrl.u32 %v7547, 7
        %v7549 = vsub.s32 %v7546, %v7548
        %v7550 = vrot.slane %v7542, %v7549
        %v7552 = vunpack.c.l.s4 1934713408
        %v7553 = vunpack.c.0.s8 %v7552
        %v7554 = vlaneseq
        %v7555 = vshrl.u32 %v7554, 7
        %v7556 = vsub.s32 %v7553, %v7555
        %v7557 = vrot.slane %v7543, %v7556
        %v7558 = vcombine.low %v7502, %v7534
        %v7559 = vcombine.high %v7502, %v7534
        %v7560 = vcombine.low %v7509, %v7541
        %v7561 = vcombine.high %v7509, %v7541
        %v7562 = vcombine.low %v7518, %v7550
        %v7563 = vcombine.high %v7518, %v7550
        %v7564 = vcombine.low %v7525, %v7557
        %v7565 = vcombine.high %v7525, %v7557
        %v7566 = vcombine.low %v5646, %v5648
        %v7567 = vcombine.high %v5646, %v5648
        %v7569 = vunpack.c.l.s4 1983009808
        %v7570 = vunpack.c.0.s8 %v7569
        %v7571 = vlaneseq
        %v7572 = vshrl.u32 %v7571, 7
        %v7573 = vsub.s32 %v7570, %v7572
        %v7574 = vrot.slane %v7566, %v7573
        %v7576 = vunpack.c.l.s4 1983009808
        %v7577 = vunpack.c.0.s8 %v7576
        %v7578 = vlaneseq
        %v7579 = vshrl.u32 %v7578, 7
        %v7580 = vsub.s32 %v7577, %v7579
        %v7581 = vrot.slane %v7567, %v7580
        %v7582 = vcombine.low %v5647, %v5649
        %v7583 = vcombine.high %v5647, %v5649
        %v7585 = vunpack.c.l.s4 1983009808
        %v7586 = vunpack.c.0.s8 %v7585
        %v7587 = vlaneseq
        %v7588 = vshrl.u32 %v7587, 7
        %v7589 = vsub.s32 %v7586, %v7588
        %v7590 = vrot.slane %v7582, %v7589
        %v7592 = vunpack.c.l.s4 1983009808
        %v7593 = vunpack.c.0.s8 %v7592
        %v7594 = vlaneseq
        %v7595 = vshrl.u32 %v7594, 7
        %v7596 = vsub.s32 %v7593, %v7595
        %v7597 = vrot.slane %v7583, %v7596
        %v7598 = vcombine.low %v5650, %v5652
        %v7599 = vcombine.high %v5650, %v5652
        %v7601 = vunpack.c.l.s4 1983009808
        %v7602 = vunpack.c.0.s8 %v7601
        %v7603 = vlaneseq
        %v7604 = vshrl.u32 %v7603, 7
        %v7605 = vsub.s32 %v7602, %v7604
        %v7606 = vrot.slane %v7598, %v7605
        %v7608 = vunpack.c.l.s4 1983009808
        %v7609 = vunpack.c.0.s8 %v7608
        %v7610 = vlaneseq
        %v7611 = vshrl.u32 %v7610, 7
        %v7612 = vsub.s32 %v7609, %v7611
        %v7613 = vrot.slane %v7599, %v7612
        %v7614 = vcombine.low %v5651, %v5653
        %v7615 = vcombine.high %v5651, %v5653
        %v7617 = vunpack.c.l.s4 1983009808
        %v7618 = vunpack.c.0.s8 %v7617
        %v7619 = vlaneseq
        %v7620 = vshrl.u32 %v7619, 7
        %v7621 = vsub.s32 %v7618, %v7620
        %v7622 = vrot.slane %v7614, %v7621
        %v7624 = vunpack.c.l.s4 1983009808
        %v7625 = vunpack.c.0.s8 %v7624
        %v7626 = vlaneseq
        %v7627 = vshrl.u32 %v7626, 7
        %v7628 = vsub.s32 %v7625, %v7627
        %v7629 = vrot.slane %v7615, %v7628
        %v7630 = vcombine.low %v7574, %v7590
        %v7631 = vcombine.high %v7574, %v7590
        %v7633 = vunpack.c.l.s4 1934713408
        %v7634 = vunpack.c.0.s8 %v7633
        %v7635 = vlaneseq
        %v7636 = vshrl.u32 %v7635, 7
        %v7637 = vsub.s32 %v7634, %v7636
        %v7638 = vrot.slane %v7630, %v7637
        %v7640 = vunpack.c.l.s4 1934713408
        %v7641 = vunpack.c.0.s8 %v7640
        %v7642 = vlaneseq
        %v7643 = vshrl.u32 %v7642, 7
        %v7644 = vsub.s32 %v7641, %v7643
        %v7645 = vrot.slane %v7631, %v7644
        %v7646 = vcombine.low %v7581, %v7597
        %v7647 = vcombine.high %v7581, %v7597
        %v7649 = vunpack.c.l.s4 1934713408
        %v7650 = vunpack.c.0.s8 %v7649
        %v7651 = vlaneseq
        %v7652 = vshrl.u32 %v7651, 7
        %v7653 = vsub.s32 %v7650, %v7652
        %v7654 = vrot.slane %v7646, %v7653
        %v7656 = vunpack.c.l.s4 1934713408
        %v7657 = vunpack.c.0.s8 %v7656
        %v7658 = vlaneseq
        %v7659 = vshrl.u32 %v7658, 7
        %v7660 = vsub.s32 %v7657, %v7659
        %v7661 = vrot.slane %v7647, %v7660
        %v7662 = vcombine.low %v7606, %v7622
        %v7663 = vcombine.high %v7606, %v7622
        %v7665 = vunpack.c.l.s4 1934713408
        %v7666 = vunpack.c.0.s8 %v7665
        %v7667 = vlaneseq
        %v7668 = vshrl.u32 %v7667, 7
        %v7669 = vsub.s32 %v7666, %v7668
        %v7670 = vrot.slane %v7662, %v7669
        %v7672 = vunpack.c.l.s4 1934713408
        %v7673 = vunpack.c.0.s8 %v7672
        %v7674 = vlaneseq
        %v7675 = vshrl.u32 %v7674, 7
        %v7676 = vsub.s32 %v7673, %v7675
        %v7677 = vrot.slane %v7663, %v7676
        %v7678 = vcombine.low %v7613, %v7629
        %v7679 = vcombine.high %v7613, %v7629
        %v7681 = vunpack.c.l.s4 1934713408
        %v7682 = vunpack.c.0.s8 %v7681
        %v7683 = vlaneseq
        %v7684 = vshrl.u32 %v7683, 7
        %v7685 = vsub.s32 %v7682, %v7684
        %v7686 = vrot.slane %v7678, %v7685
        %v7688 = vunpack.c.l.s4 1934713408
        %v7689 = vunpack.c.0.s8 %v7688
        %v7690 = vlaneseq
        %v7691 = vshrl.u32 %v7690, 7
        %v7692 = vsub.s32 %v7689, %v7691
        %v7693 = vrot.slane %v7679, %v7692
        %v7694 = vcombine.low %v7638, %v7670
        %v7695 = vcombine.high %v7638, %v7670
        %v7696 = vcombine.low %v7645, %v7677
        %v7697 = vcombine.high %v7645, %v7677
        %v7698 = vcombine.low %v7654, %v7686
        %v7699 = vcombine.high %v7654, %v7686
        %v7700 = vcombine.low %v7661, %v7693
        %v7701 = vcombine.high %v7661, %v7693
        %v7702 = vcombine.low %v5654, %v5656
        %v7703 = vcombine.high %v5654, %v5656
        %v7705 = vunpack.c.l.s4 1983009808
        %v7706 = vunpack.c.0.s8 %v7705
        %v7707 = vlaneseq
        %v7708 = vshrl.u32 %v7707, 7
        %v7709 = vsub.s32 %v7706, %v7708
        %v7710 = vrot.slane %v7702, %v7709
        %v7712 = vunpack.c.l.s4 1983009808
        %v7713 = vunpack.c.0.s8 %v7712
        %v7714 = vlaneseq
        %v7715 = vshrl.u32 %v7714, 7
        %v7716 = vsub.s32 %v7713, %v7715
        %v7717 = vrot.slane %v7703, %v7716
        %v7718 = vcombine.low %v5655, %v5657
        %v7719 = vcombine.high %v5655, %v5657
        %v7721 = vunpack.c.l.s4 1983009808
        %v7722 = vunpack.c.0.s8 %v7721
        %v7723 = vlaneseq
        %v7724 = vshrl.u32 %v7723, 7
        %v7725 = vsub.s32 %v7722, %v7724
        %v7726 = vrot.slane %v7718, %v7725
        %v7728 = vunpack.c.l.s4 1983009808
        %v7729 = vunpack.c.0.s8 %v7728
        %v7730 = vlaneseq
        %v7731 = vshrl.u32 %v7730, 7
        %v7732 = vsub.s32 %v7729, %v7731
        %v7733 = vrot.slane %v7719, %v7732
        %v7734 = vcombine.low %v5658, %v5660
        %v7735 = vcombine.high %v5658, %v5660
        %v7737 = vunpack.c.l.s4 1983009808
        %v7738 = vunpack.c.0.s8 %v7737
        %v7739 = vlaneseq
        %v7740 = vshrl.u32 %v7739, 7
        %v7741 = vsub.s32 %v7738, %v7740
        %v7742 = vrot.slane %v7734, %v7741
        %v7744 = vunpack.c.l.s4 1983009808
        %v7745 = vunpack.c.0.s8 %v7744
        %v7746 = vlaneseq
        %v7747 = vshrl.u32 %v7746, 7
        %v7748 = vsub.s32 %v7745, %v7747
        %v7749 = vrot.slane %v7735, %v7748
        %v7750 = vcombine.low %v5659, %v5661
        %v7751 = vcombine.high %v5659, %v5661
        %v7753 = vunpack.c.l.s4 1983009808
        %v7754 = vunpack.c.0.s8 %v7753
        %v7755 = vlaneseq
        %v7756 = vshrl.u32 %v7755, 7
        %v7757 = vsub.s32 %v7754, %v7756
        %v7758 = vrot.slane %v7750, %v7757
        %v7760 = vunpack.c.l.s4 1983009808
        %v7761 = vunpack.c.0.s8 %v7760
        %v7762 = vlaneseq
        %v7763 = vshrl.u32 %v7762, 7
        %v7764 = vsub.s32 %v7761, %v7763
        %v7765 = vrot.slane %v7751, %v7764
        %v7766 = vcombine.low %v7710, %v7726
        %v7767 = vcombine.high %v7710, %v7726
        %v7769 = vunpack.c.l.s4 1934713408
        %v7770 = vunpack.c.0.s8 %v7769
        %v7771 = vlaneseq
        %v7772 = vshrl.u32 %v7771, 7
        %v7773 = vsub.s32 %v7770, %v7772
        %v7774 = vrot.slane %v7766, %v7773
        %v7776 = vunpack.c.l.s4 1934713408
        %v7777 = vunpack.c.0.s8 %v7776
        %v7778 = vlaneseq
        %v7779 = vshrl.u32 %v7778, 7
        %v7780 = vsub.s32 %v7777, %v7779
        %v7781 = vrot.slane %v7767, %v7780
        %v7782 = vcombine.low %v7717, %v7733
        %v7783 = vcombine.high %v7717, %v7733
        %v7785 = vunpack.c.l.s4 1934713408
        %v7786 = vunpack.c.0.s8 %v7785
        %v7787 = vlaneseq
        %v7788 = vshrl.u32 %v7787, 7
        %v7789 = vsub.s32 %v7786, %v7788
        %v7790 = vrot.slane %v7782, %v7789
        %v7792 = vunpack.c.l.s4 1934713408
        %v7793 = vunpack.c.0.s8 %v7792
        %v7794 = vlaneseq
        %v7795 = vshrl.u32 %v7794, 7
        %v7796 = vsub.s32 %v7793, %v7795
        %v7797 = vrot.slane %v7783, %v7796
        %v7798 = vcombine.low %v7742, %v7758
        %v7799 = vcombine.high %v7742, %v7758
        %v7801 = vunpack.c.l.s4 1934713408
        %v7802 = vunpack.c.0.s8 %v7801
        %v7803 = vlaneseq
        %v7804 = vshrl.u32 %v7803, 7
        %v7805 = vsub.s32 %v7802, %v7804
        %v7806 = vrot.slane %v7798, %v7805
        %v7808 = vunpack.c.l.s4 1934713408
        %v7809 = vunpack.c.0.s8 %v7808
        %v7810 = vlaneseq
        %v7811 = vshrl.u32 %v7810, 7
        %v7812 = vsub.s32 %v7809, %v7811
        %v7813 = vrot.slane %v7799, %v7812
        %v7814 = vcombine.low %v7749, %v7765
        %v7815 = vcombine.high %v7749, %v7765
        %v7817 = vunpack.c.l.s4 1934713408
        %v7818 = vunpack.c.0.s8 %v7817
        %v7819 = vlaneseq
        %v7820 = vshrl.u32 %v7819, 7
        %v7821 = vsub.s32 %v7818, %v7820
        %v7822 = vrot.slane %v7814, %v7821
        %v7824 = vunpack.c.l.s4 1934713408
        %v7825 = vunpack.c.0.s8 %v7824
        %v7826 = vlaneseq
        %v7827 = vshrl.u32 %v7826, 7
        %v7828 = vsub.s32 %v7825, %v7827
        %v7829 = vrot.slane %v7815, %v7828
        %v7830 = vcombine.low %v7774, %v7806
        %v7831 = vcombine.high %v7774, %v7806
        %v7832 = vcombine.low %v7781, %v7813
        %v7833 = vcombine.high %v7781, %v7813
        %v7834 = vcombine.low %v7790, %v7822
        %v7835 = vcombine.high %v7790, %v7822
        %v7836 = vcombine.low %v7797, %v7829
        %v7837 = vcombine.high %v7797, %v7829
        %v7838 = vpack.c.bf16 %v5926, %v5790
        %v7839 = vpack.c.bf16 %v5927, %v5791
        %v7840 = vpack.c.bf16 %v5928, %v5792
        %v7841 = vpack.c.bf16 %v5929, %v5793
        %v7842 = vpack.c.bf16 %v5930, %v5794
        %v7843 = vpack.c.bf16 %v5931, %v5795
        %v7844 = vpack.c.bf16 %v5932, %v5796
        %v7845 = vpack.c.bf16 %v5933, %v5797
        %v7846 = vpack.c.bf16 %v6198, %v6062
        %v7847 = vpack.c.bf16 %v6199, %v6063
        %v7848 = vpack.c.bf16 %v6200, %v6064
        %v7849 = vpack.c.bf16 %v6201, %v6065
        %v7850 = vpack.c.bf16 %v6202, %v6066
        %v7851 = vpack.c.bf16 %v6203, %v6067
        %v7852 = vpack.c.bf16 %v6204, %v6068
        %v7853 = vpack.c.bf16 %v6205, %v6069
        %v7854 = vpack.c.bf16 %v6470, %v6334
        %v7855 = vpack.c.bf16 %v6471, %v6335
        %v7856 = vpack.c.bf16 %v6472, %v6336
        %v7857 = vpack.c.bf16 %v6473, %v6337
        %v7858 = vpack.c.bf16 %v6474, %v6338
        %v7859 = vpack.c.bf16 %v6475, %v6339
        %v7860 = vpack.c.bf16 %v6476, %v6340
        %v7861 = vpack.c.bf16 %v6477, %v6341
        %v7862 = vpack.c.bf16 %v6742, %v6606
        %v7863 = vpack.c.bf16 %v6743, %v6607
        %v7864 = vpack.c.bf16 %v6744, %v6608
        %v7865 = vpack.c.bf16 %v6745, %v6609
        %v7866 = vpack.c.bf16 %v6746, %v6610
        %v7867 = vpack.c.bf16 %v6747, %v6611
        %v7868 = vpack.c.bf16 %v6748, %v6612
        %v7869 = vpack.c.bf16 %v6749, %v6613
        %v7870 = vpack.c.bf16 %v7014, %v6878
        %v7871 = vpack.c.bf16 %v7015, %v6879
        %v7872 = vpack.c.bf16 %v7016, %v6880
        %v7873 = vpack.c.bf16 %v7017, %v6881
        %v7874 = vpack.c.bf16 %v7018, %v6882
        %v7875 = vpack.c.bf16 %v7019, %v6883
        %v7876 = vpack.c.bf16 %v7020, %v6884
        %v7877 = vpack.c.bf16 %v7021, %v6885
        %v7878 = vpack.c.bf16 %v7286, %v7150
        %v7879 = vpack.c.bf16 %v7287, %v7151
        %v7880 = vpack.c.bf16 %v7288, %v7152
        %v7881 = vpack.c.bf16 %v7289, %v7153
        %v7882 = vpack.c.bf16 %v7290, %v7154
        %v7883 = vpack.c.bf16 %v7291, %v7155
        %v7884 = vpack.c.bf16 %v7292, %v7156
        %v7885 = vpack.c.bf16 %v7293, %v7157
        %v7886 = vpack.c.bf16 %v7558, %v7422
        %v7887 = vpack.c.bf16 %v7559, %v7423
        %v7888 = vpack.c.bf16 %v7560, %v7424
        %v7889 = vpack.c.bf16 %v7561, %v7425
        %v7890 = vpack.c.bf16 %v7562, %v7426
        %v7891 = vpack.c.bf16 %v7563, %v7427
        %v7892 = vpack.c.bf16 %v7564, %v7428
        %v7893 = vpack.c.bf16 %v7565, %v7429
        %v7894 = vpack.c.bf16 %v7830, %v7694
        %v7895 = vpack.c.bf16 %v7831, %v7695
        %v7896 = vpack.c.bf16 %v7832, %v7696
        %v7897 = vpack.c.bf16 %v7833, %v7697
        %v7898 = vpack.c.bf16 %v7834, %v7698
        %v7899 = vpack.c.bf16 %v7835, %v7699
        %v7900 = vpack.c.bf16 %v7836, %v7700
        %v7901 = vpack.c.bf16 %v7837, %v7701
        %v7966 = vunpack.c.l.b16 %v7838
        %v7967 = vunpack.c.l.b16 %v7839
        %v7968 = vunpack.c.l.b16 %v7840
        %v7969 = vunpack.c.l.b16 %v7841
        %v7970 = vunpack.c.l.b16 %v7842
        %v7971 = vunpack.c.l.b16 %v7843
        %v7972 = vunpack.c.l.b16 %v7844
        %v7973 = vunpack.c.l.b16 %v7845
        %v7974 = vunpack.c.h.b16 %v7838
        %v7975 = vunpack.c.h.b16 %v7839
        %v7976 = vunpack.c.h.b16 %v7840
        %v7977 = vunpack.c.h.b16 %v7841
        %v7978 = vunpack.c.h.b16 %v7842
        %v7979 = vunpack.c.h.b16 %v7843
        %v7980 = vunpack.c.h.b16 %v7844
        %v7981 = vunpack.c.h.b16 %v7845
        %v7982 = vunpack.c.l.b16 %v7846
        %v7983 = vunpack.c.l.b16 %v7847
        %v7984 = vunpack.c.l.b16 %v7848
        %v7985 = vunpack.c.l.b16 %v7849
        %v7986 = vunpack.c.l.b16 %v7850
        %v7987 = vunpack.c.l.b16 %v7851
        %v7988 = vunpack.c.l.b16 %v7852
        %v7989 = vunpack.c.l.b16 %v7853
        %v7990 = vunpack.c.h.b16 %v7846
        %v7991 = vunpack.c.h.b16 %v7847
        %v7992 = vunpack.c.h.b16 %v7848
        %v7993 = vunpack.c.h.b16 %v7849
        %v7994 = vunpack.c.h.b16 %v7850
        %v7995 = vunpack.c.h.b16 %v7851
        %v7996 = vunpack.c.h.b16 %v7852
        %v7997 = vunpack.c.h.b16 %v7853
        %v7998 = vunpack.c.l.b16 %v7854
        %v7999 = vunpack.c.l.b16 %v7855
        %v8000 = vunpack.c.l.b16 %v7856
        %v8001 = vunpack.c.l.b16 %v7857
        %v8002 = vunpack.c.l.b16 %v7858
        %v8003 = vunpack.c.l.b16 %v7859
        %v8004 = vunpack.c.l.b16 %v7860
        %v8005 = vunpack.c.l.b16 %v7861
        %v8006 = vunpack.c.h.b16 %v7854
        %v8007 = vunpack.c.h.b16 %v7855
        %v8008 = vunpack.c.h.b16 %v7856
        %v8009 = vunpack.c.h.b16 %v7857
        %v8010 = vunpack.c.h.b16 %v7858
        %v8011 = vunpack.c.h.b16 %v7859
        %v8012 = vunpack.c.h.b16 %v7860
        %v8013 = vunpack.c.h.b16 %v7861
        %v8014 = vunpack.c.l.b16 %v7862
        %v8015 = vunpack.c.l.b16 %v7863
        %v8016 = vunpack.c.l.b16 %v7864
        %v8017 = vunpack.c.l.b16 %v7865
        %v8018 = vunpack.c.l.b16 %v7866
        %v8019 = vunpack.c.l.b16 %v7867
        %v8020 = vunpack.c.l.b16 %v7868
        %v8021 = vunpack.c.l.b16 %v7869
        %v8022 = vunpack.c.h.b16 %v7862
        %v8023 = vunpack.c.h.b16 %v7863
        %v8024 = vunpack.c.h.b16 %v7864
        %v8025 = vunpack.c.h.b16 %v7865
        %v8026 = vunpack.c.h.b16 %v7866
        %v8027 = vunpack.c.h.b16 %v7867
        %v8028 = vunpack.c.h.b16 %v7868
        %v8029 = vunpack.c.h.b16 %v7869
        %v8030 = vunpack.c.l.b16 %v7870
        %v8031 = vunpack.c.l.b16 %v7871
        %v8032 = vunpack.c.l.b16 %v7872
        %v8033 = vunpack.c.l.b16 %v7873
        %v8034 = vunpack.c.l.b16 %v7874
        %v8035 = vunpack.c.l.b16 %v7875
        %v8036 = vunpack.c.l.b16 %v7876
        %v8037 = vunpack.c.l.b16 %v7877
        %v8038 = vunpack.c.h.b16 %v7870
        %v8039 = vunpack.c.h.b16 %v7871
        %v8040 = vunpack.c.h.b16 %v7872
        %v8041 = vunpack.c.h.b16 %v7873
        %v8042 = vunpack.c.h.b16 %v7874
        %v8043 = vunpack.c.h.b16 %v7875
        %v8044 = vunpack.c.h.b16 %v7876
        %v8045 = vunpack.c.h.b16 %v7877
        %v8046 = vunpack.c.l.b16 %v7878
        %v8047 = vunpack.c.l.b16 %v7879
        %v8048 = vunpack.c.l.b16 %v7880
        %v8049 = vunpack.c.l.b16 %v7881
        %v8050 = vunpack.c.l.b16 %v7882
        %v8051 = vunpack.c.l.b16 %v7883
        %v8052 = vunpack.c.l.b16 %v7884
        %v8053 = vunpack.c.l.b16 %v7885
        %v8054 = vunpack.c.h.b16 %v7878
        %v8055 = vunpack.c.h.b16 %v7879
        %v8056 = vunpack.c.h.b16 %v7880
        %v8057 = vunpack.c.h.b16 %v7881
        %v8058 = vunpack.c.h.b16 %v7882
        %v8059 = vunpack.c.h.b16 %v7883
        %v8060 = vunpack.c.h.b16 %v7884
        %v8061 = vunpack.c.h.b16 %v7885
        %v8062 = vunpack.c.l.b16 %v7886
        %v8063 = vunpack.c.l.b16 %v7887
        %v8064 = vunpack.c.l.b16 %v7888
        %v8065 = vunpack.c.l.b16 %v7889
        %v8066 = vunpack.c.l.b16 %v7890
        %v8067 = vunpack.c.l.b16 %v7891
        %v8068 = vunpack.c.l.b16 %v7892
        %v8069 = vunpack.c.l.b16 %v7893
        %v8070 = vunpack.c.h.b16 %v7886
        %v8071 = vunpack.c.h.b16 %v7887
        %v8072 = vunpack.c.h.b16 %v7888
        %v8073 = vunpack.c.h.b16 %v7889
        %v8074 = vunpack.c.h.b16 %v7890
        %v8075 = vunpack.c.h.b16 %v7891
        %v8076 = vunpack.c.h.b16 %v7892
        %v8077 = vunpack.c.h.b16 %v7893
        %v8078 = vunpack.c.l.b16 %v7894
        %v8079 = vunpack.c.l.b16 %v7895
        %v8080 = vunpack.c.l.b16 %v7896
        %v8081 = vunpack.c.l.b16 %v7897
        %v8082 = vunpack.c.l.b16 %v7898
        %v8083 = vunpack.c.l.b16 %v7899
        %v8084 = vunpack.c.l.b16 %v7900
        %v8085 = vunpack.c.l.b16 %v7901
        %v8086 = vunpack.c.h.b16 %v7894
        %v8087 = vunpack.c.h.b16 %v7895
        %v8088 = vunpack.c.h.b16 %v7896
        %v8089 = vunpack.c.h.b16 %v7897
        %v8090 = vunpack.c.h.b16 %v7898
        %v8091 = vunpack.c.h.b16 %v7899
        %v8092 = vunpack.c.h.b16 %v7900
        %v8093 = vunpack.c.h.b16 %v7901
        %v8094 = vpack.c.b16 %v7967, %v7966
        %v8095 = vpack.c.b16 %v7969, %v7968
        %v8096 = vpack.c.b16 %v7971, %v7970
        %v8097 = vpack.c.b16 %v7973, %v7972
        %v8098 = vpack.c.b16 %v7975, %v7974
        %v8099 = vpack.c.b16 %v7977, %v7976
        %v8100 = vpack.c.b16 %v7979, %v7978
        %v8101 = vpack.c.b16 %v7981, %v7980
        %v8102 = vpack.c.b16 %v7983, %v7982
        %v8103 = vpack.c.b16 %v7985, %v7984
        %v8104 = vpack.c.b16 %v7987, %v7986
        %v8105 = vpack.c.b16 %v7989, %v7988
        %v8106 = vpack.c.b16 %v7991, %v7990
        %v8107 = vpack.c.b16 %v7993, %v7992
        %v8108 = vpack.c.b16 %v7995, %v7994
        %v8109 = vpack.c.b16 %v7997, %v7996
        %v8110 = vpack.c.b16 %v7999, %v7998
        %v8111 = vpack.c.b16 %v8001, %v8000
        %v8112 = vpack.c.b16 %v8003, %v8002
        %v8113 = vpack.c.b16 %v8005, %v8004
        %v8114 = vpack.c.b16 %v8007, %v8006
        %v8115 = vpack.c.b16 %v8009, %v8008
        %v8116 = vpack.c.b16 %v8011, %v8010
        %v8117 = vpack.c.b16 %v8013, %v8012
        %v8118 = vpack.c.b16 %v8015, %v8014
        %v8119 = vpack.c.b16 %v8017, %v8016
        %v8120 = vpack.c.b16 %v8019, %v8018
        %v8121 = vpack.c.b16 %v8021, %v8020
        %v8122 = vpack.c.b16 %v8023, %v8022
        %v8123 = vpack.c.b16 %v8025, %v8024
        %v8124 = vpack.c.b16 %v8027, %v8026
        %v8125 = vpack.c.b16 %v8029, %v8028
        %v8126 = vpack.c.b16 %v8031, %v8030
        %v8127 = vpack.c.b16 %v8033, %v8032
        %v8128 = vpack.c.b16 %v8035, %v8034
        %v8129 = vpack.c.b16 %v8037, %v8036
        %v8130 = vpack.c.b16 %v8039, %v8038
        %v8131 = vpack.c.b16 %v8041, %v8040
        %v8132 = vpack.c.b16 %v8043, %v8042
        %v8133 = vpack.c.b16 %v8045, %v8044
        %v8134 = vpack.c.b16 %v8047, %v8046
        %v8135 = vpack.c.b16 %v8049, %v8048
        %v8136 = vpack.c.b16 %v8051, %v8050
        %v8137 = vpack.c.b16 %v8053, %v8052
        %v8138 = vpack.c.b16 %v8055, %v8054
        %v8139 = vpack.c.b16 %v8057, %v8056
        %v8140 = vpack.c.b16 %v8059, %v8058
        %v8141 = vpack.c.b16 %v8061, %v8060
        %v8142 = vpack.c.b16 %v8063, %v8062
        %v8143 = vpack.c.b16 %v8065, %v8064
        %v8144 = vpack.c.b16 %v8067, %v8066
        %v8145 = vpack.c.b16 %v8069, %v8068
        %v8146 = vpack.c.b16 %v8071, %v8070
        %v8147 = vpack.c.b16 %v8073, %v8072
        %v8148 = vpack.c.b16 %v8075, %v8074
        %v8149 = vpack.c.b16 %v8077, %v8076
        %v8150 = vpack.c.b16 %v8079, %v8078
        %v8151 = vpack.c.b16 %v8081, %v8080
        %v8152 = vpack.c.b16 %v8083, %v8082
        %v8153 = vpack.c.b16 %v8085, %v8084
        %v8154 = vpack.c.b16 %v8087, %v8086
        %v8155 = vpack.c.b16 %v8089, %v8088
        %v8156 = vpack.c.b16 %v8091, %v8090
        %v8157 = vpack.c.b16 %v8093, %v8092
        %8222 = vst [vmem:[%s153] sm:$0xff] %v8094
        %8223 = vst [vmem:[%s153 + $0x8] sm:$0xff] %v8095
        %8224 = vst [vmem:[%s153 + $0x10] sm:$0xff] %v8096
        %8225 = vst [vmem:[%s153 + $0x18] sm:$0xff] %v8097
        %8226 = vst [vmem:[%s153 + $0x20] sm:$0xff] %v8098
        %8227 = vst [vmem:[%s153 + $0x28] sm:$0xff] %v8099
        %8228 = vst [vmem:[%s153 + $0x30] sm:$0xff] %v8100
        %8229 = vst [vmem:[%s153 + $0x38] sm:$0xff] %v8101
        %8230 = vst [vmem:[%s153 + $0x40] sm:$0xff] %v8102
        %8231 = vst [vmem:[%s153 + $0x48] sm:$0xff] %v8103
        %8232 = vst [vmem:[%s153 + $0x50] sm:$0xff] %v8104
        %8233 = vst [vmem:[%s153 + $0x58] sm:$0xff] %v8105
        %8234 = vst [vmem:[%s153 + $0x60] sm:$0xff] %v8106
        %8235 = vst [vmem:[%s153 + $0x68] sm:$0xff] %v8107
        %8236 = vst [vmem:[%s153 + $0x70] sm:$0xff] %v8108
        %8237 = vst [vmem:[%s153 + $0x78] sm:$0xff] %v8109
        %8238 = vst [vmem:[%s153 + $0x80] sm:$0xff] %v8110
        %8239 = vst [vmem:[%s153 + $0x88] sm:$0xff] %v8111
        %8240 = vst [vmem:[%s153 + $0x90] sm:$0xff] %v8112
        %8241 = vst [vmem:[%s153 + $0x98] sm:$0xff] %v8113
        %8242 = vst [vmem:[%s153 + $0xa0] sm:$0xff] %v8114
        %8243 = vst [vmem:[%s153 + $0xa8] sm:$0xff] %v8115
        %8244 = vst [vmem:[%s153 + $0xb0] sm:$0xff] %v8116
        %8245 = vst [vmem:[%s153 + $0xb8] sm:$0xff] %v8117
        %8246 = vst [vmem:[%s153 + $0xc0] sm:$0xff] %v8118
        %8247 = vst [vmem:[%s153 + $0xc8] sm:$0xff] %v8119
        %8248 = vst [vmem:[%s153 + $0xd0] sm:$0xff] %v8120
        %8249 = vst [vmem:[%s153 + $0xd8] sm:$0xff] %v8121
        %8250 = vst [vmem:[%s153 + $0xe0] sm:$0xff] %v8122
        %8251 = vst [vmem:[%s153 + $0xe8] sm:$0xff] %v8123
        %8252 = vst [vmem:[%s153 + $0xf0] sm:$0xff] %v8124
        %8253 = vst [vmem:[%s153 + $0xf8] sm:$0xff] %v8125
        %8254 = vst [vmem:[%s153 + $0x100] sm:$0xff] %v8126
        %8255 = vst [vmem:[%s153 + $0x108] sm:$0xff] %v8127
        %8256 = vst [vmem:[%s153 + $0x110] sm:$0xff] %v8128
        %8257 = vst [vmem:[%s153 + $0x118] sm:$0xff] %v8129
        %8258 = vst [vmem:[%s153 + $0x120] sm:$0xff] %v8130
        %8259 = vst [vmem:[%s153 + $0x128] sm:$0xff] %v8131
        %8260 = vst [vmem:[%s153 + $0x130] sm:$0xff] %v8132
        %8261 = vst [vmem:[%s153 + $0x138] sm:$0xff] %v8133
        %8262 = vst [vmem:[%s153 + $0x140] sm:$0xff] %v8134
        %8263 = vst [vmem:[%s153 + $0x148] sm:$0xff] %v8135
        %8264 = vst [vmem:[%s153 + $0x150] sm:$0xff] %v8136
        %8265 = vst [vmem:[%s153 + $0x158] sm:$0xff] %v8137
        %8266 = vst [vmem:[%s153 + $0x160] sm:$0xff] %v8138
        %8267 = vst [vmem:[%s153 + $0x168] sm:$0xff] %v8139
        %8268 = vst [vmem:[%s153 + $0x170] sm:$0xff] %v8140
        %8269 = vst [vmem:[%s153 + $0x178] sm:$0xff] %v8141
        %8270 = vst [vmem:[%s153 + $0x180] sm:$0xff] %v8142
        %8271 = vst [vmem:[%s153 + $0x188] sm:$0xff] %v8143
        %8272 = vst [vmem:[%s153 + $0x190] sm:$0xff] %v8144
        %8273 = vst [vmem:[%s153 + $0x198] sm:$0xff] %v8145
        %8274 = vst [vmem:[%s153 + $0x1a0] sm:$0xff] %v8146
        %8275 = vst [vmem:[%s153 + $0x1a8] sm:$0xff] %v8147
        %8276 = vst [vmem:[%s153 + $0x1b0] sm:$0xff] %v8148
        %8277 = vst [vmem:[%s153 + $0x1b8] sm:$0xff] %v8149
        %8278 = vst [vmem:[%s153 + $0x1c0] sm:$0xff] %v8150
        %8279 = vst [vmem:[%s153 + $0x1c8] sm:$0xff] %v8151
        %8280 = vst [vmem:[%s153 + $0x1d0] sm:$0xff] %v8152
        %8281 = vst [vmem:[%s153 + $0x1d8] sm:$0xff] %v8153
        %8282 = vst [vmem:[%s153 + $0x1e0] sm:$0xff] %v8154
        %8283 = vst [vmem:[%s153 + $0x1e8] sm:$0xff] %v8155
        %8284 = vst [vmem:[%s153 + $0x1f0] sm:$0xff] %v8156
        %8285 = vst [vmem:[%s153 + $0x1f8] sm:$0xff] %v8157
        %s8286 = sand.u32 %s68, 1
        %s8287 = scalar_lea.sflag [#allocation4], %s8286
        %s8288 = sand.u32 %s68, 1
        %s8289 = smul.addr %s8288, 512
        %s8290 = scalar_lea.vmem [#allocation5], %s8289
        // Predicated region
        $region29: #{tpu_custom_call.1} parent=23 // pred_check
          %p8291 = pneg %p78
        $region30: #{tpu_custom_call.1} parent=23 // pred_check_branch
          %8293 = sbr.rel (%p8291) target = $region32
        $region31: #{tpu_custom_call.1} parent=23 // pred_region
          %s8294 = smul.u32 16, %s22
          %s8295 = smul.u32 8, %s23
          %s8297 = ssub.s32 8192, 8192
          %8298 = vsyncadd %s8287, %s8297
          %s8299 = smul.addr %s8294, 8
          %s8300 = sadd.s32 %s8295, %s8299
          %s8301 = smul.addr %s8300, 64
          %s8302 = scalar_lea.hbm %s1, %s8301
          %s8303 = sshll.u32 %s8290, 4
          %s8304 = int_to_ptr.vmem [resolvable:$true] %s8303
          %8309 = dma.vmem_to_hbm [thread:$0]  %s8304, 8192, %s8302, %s8287, 512, 512, 32
        $region32: #{tpu_custom_call.1} parent=23 // pred_fallthru
          _
      $region24: #{tpu_custom_call.1} parent=5 // pred_fallthru
        _
      %p8310 = scmp.le.s32.totalorder 2, %s13
      // Predicated region
      $region33: #{tpu_custom_call.1} parent=5 // pred_check
        %p8311 = pneg %p8310
      $region34: #{tpu_custom_call.1} parent=5 // pred_check_branch
        %8313 = sbr.rel (%p8311) target = $region36
      $region35: #{tpu_custom_call.1} parent=5 // pred_region
        %s8314 = ssub.s32 %s13, 2
        // Predicated region
        $region37: #{tpu_custom_call.1} parent=35 // pred_check
          %p8315 = pneg %p84
        $region38: #{tpu_custom_call.1} parent=35 // pred_check_branch
          %8317 = sbr.rel (%p8315) target = $region40
        $region39: #{tpu_custom_call.1} parent=35 // pred_region
          %s8318 = sand.u32 %s69, 1
          %s8319 = scalar_lea.sflag [#allocation4], %s8318
          %s8320 = sand.u32 %s69, 1
          %s8321 = smul.addr %s8320, 512
          %s8322 = scalar_lea.vmem [#allocation5], %s8321
          %8323 = dma.done %s8319, 8192
        $region40: #{tpu_custom_call.1} parent=35 // pred_fallthru
          _
      $region36: #{tpu_custom_call.1} parent=5 // pred_fallthru
        _
    $region6: #{tpu_custom_call.1} parent=1 // loop_footer
      %s17 = sadd.s32 1, %s13
    $region7: #{tpu_custom_call.1} parent=1 // loop_footer_branch
      %12 = sbr.rel target = $region3
    $region8: #{tpu_custom_call.1} parent=1 // loop_exit
      _
    %8324 = vsyncpa [#allocation3], 1
    %s8325 = scalar_lea.sflag [#allocation3], 1
    %8326 = vsyncpa %s8325, 1
    %8327 = vsyncpa [#allocation4], 1
    %s8328 = scalar_lea.sflag [#allocation4], 1
    %8329 = vsyncpa %s8328, 1

</llo_original>
